<compile_context>
chip_gen: v7x
topology: tpu7x:2x2x1
jax: 0.10.0
libtpu: 0.0.40
codegen_flags: <defaults>
</compile_context>

<pallas_src>
import functools
import math

import jax
import jax.numpy as jnp
from jax.experimental import pallas as pl
from jax.experimental.pallas import tpu as pltpu


# ----------------------------- Pallas kernels ------------------------------

def conv3x3_relu_kernel(x_ref, w_ref, b_ref, y_ref, *, wp, cin, chunk):
    """Fused 3x3 conv (9 shifted matmuls) + bias + ReLU for one image.

    x_ref: (1, P, cin)      bf16, P = Hp*Wp + 2*(Wp+1)  (flat padded image + halo)
    w_ref: (9*cin, cout)    bf16, rows ordered (ky, kx, cin)
    b_ref: (1, cout)        f32
    y_ref: (1, Hp*Wp, cout) bf16 -- conv+ReLU at every padded position; the
                            border rows are garbage and cropped by the caller.
    """
    n_rows = y_ref.shape[1]
    bias = b_ref[...]                                        # (1, cout) f32
    offs = [ky * wp + kx for ky in range(3) for kx in range(3)]

    # Chunk the output rows so the f32 accumulator stays within the vreg file.
    for c0 in range(0, n_rows, chunk):
        cs = min(chunk, n_rows - c0)
        acc = None
        for t, off in enumerate(offs):
            xs = x_ref[0, c0 + off:c0 + off + cs, :]          # (cs, cin)  bf16
            wt = w_ref[t * cin:(t + 1) * cin, :]              # (cin, cout) bf16
            if cin == 1:
                # K=1 "matmul" -> lane-broadcast multiply on the VPU.
                part = xs.astype(jnp.float32) * wt.astype(jnp.float32)
            else:
                part = jnp.dot(xs, wt, preferred_element_type=jnp.float32)
            acc = part if acc is None else acc + part
        y = jnp.maximum(acc + bias, 0.0)
        y_ref[0, c0:c0 + cs, :] = y.astype(y_ref.dtype)


def attn_pool_fc_kernel(x_ref, w_in_ref, b_in_ref, w_out_ref, b_out_ref,
                        w_fc_ref, b_fc_ref, o_ref, *, num_heads):
    """Fused MultiheadAttention + mean over seq + Linear for one image.

    x_ref: (1, L, E) bf16.  Everything (qkv split, head split, softmax, mean,
    out-projection, fc) stays in VMEM/vregs -- one HBM round trip per image.
    """
    L, E = x_ref.shape[1], x_ref.shape[2]
    dh = E // num_heads

    x = x_ref[0]                                                     # (L, E) bf16
    qkv = jnp.dot(x, w_in_ref[...],
                  preferred_element_type=jnp.float32) + b_in_ref[...]  # (L, 3E) f32
    q = qkv[:, :E]           # 1/sqrt(dh) already folded into q weights / bias
    k = qkv[:, E:2 * E]
    v = qkv[:, 2 * E:]

    acc = None
    for h in range(num_heads):
        hs = slice(h * dh, (h + 1) * dh)
        qh, kh, vh = q[:, hs], k[:, hs], v[:, hs]                    # (L, dh) f32
        s = jax.lax.dot_general(qh, kh, (((1,), (1,)), ((), ())),
                                preferred_element_type=jnp.float32)   # (L, L)
        s = s - jnp.max(s, axis=-1, keepdims=True)
        p = jnp.exp(s)
        p = p * pl.reciprocal(jnp.sum(p, axis=-1, keepdims=True), approx=True)
        ch = jnp.dot(p, vh, preferred_element_type=jnp.float32)       # (L, dh)
        hm = jnp.mean(ch, axis=0, keepdims=True)                      # (1, dh)  mean over seq
        # Output projection accumulated per head (block-matmul form -> no concat).
        part = jnp.dot(hm, w_out_ref[hs, :],
                       preferred_element_type=jnp.float32)            # (1, E)
        acc = part if acc is None else acc + part

    a = acc + b_out_ref[...]                                          # (1, E)
    # Dropout(p=0.5) is identity at inference time.
    # TODO(synk): training-mode stochastic dropout mask not implemented.
    o = jnp.dot(a, w_fc_ref[...],
                preferred_element_type=jnp.float32) + b_fc_ref[...]   # (1, num_classes)
    o_ref[0] = o


# ------------------------------- model glue --------------------------------

def conv_relu_pool(x_nhwc, w_mat, b_row, *, chunk=128):
    """Conv2d(3x3, pad=1) + ReLU + MaxPool(2,2). (N,H,W,Cin) bf16 -> (N,H/2,W/2,Cout) bf16."""
    N, H, W, Cin = x_nhwc.shape
    Cout = w_mat.shape[1]
    Hp, Wp = H + 2, W + 2
    n_rows = Hp * Wp
    P = n_rows + 2 * (Wp + 1)

    xp = jnp.pad(x_nhwc, ((0, 0), (1, 1), (1, 1), (0, 0)))         # SAME spatial pad
    x2 = xp.reshape(N, n_rows, Cin)
    x2 = jnp.pad(x2, ((0, 0), (Wp + 1, Wp + 1), (0, 0)))           # halo for the 9 row shifts

    kernel = functools.partial(conv3x3_relu_kernel, wp=Wp, cin=Cin, chunk=chunk)
    yfull = pl.pallas_call(
        kernel,
        out_shape=jax.ShapeDtypeStruct((N, n_rows, Cout), jnp.bfloat16),
        grid_spec=pltpu.PrefetchScalarGridSpec(
            num_scalar_prefetch=0,
            grid=(N,),
            in_specs=[pl.BlockSpec((1, P, Cin), lambda n: (n, 0, 0)),
                      pl.BlockSpec((9 * Cin, Cout), lambda n: (0, 0)),
                      pl.BlockSpec((1, Cout), lambda n: (0, 0))],
            out_specs=pl.BlockSpec((1, n_rows, Cout), lambda n: (n, 0, 0))),
        compiler_params=pltpu.CompilerParams(
            dimension_semantics=("parallel",)),   # v7x megacore: images across cores
    )(x2, w_mat, b_row)

    # Crop the padded-border garbage rows, then 2x2 max-pool.  This is pure
    # strided data movement that XLA fuses; all FLOPs stayed in the kernel.
    y = yfull.reshape(N, Hp, Wp, Cout)[:, 1:H + 1, 1:W + 1, :]
    pooled = jnp.maximum(
        jnp.maximum(y[:, 0::2, 0::2, :], y[:, 0::2, 1::2, :]),
        jnp.maximum(y[:, 1::2, 0::2, :], y[:, 1::2, 1::2, :]))
    return pooled


def attention_pool_fc(x_nle, prep, num_heads):
    """Fused attention + mean-over-seq + fc head. x: (N, L, E) bf16 -> (N, num_classes) f32."""
    N, L, E = x_nle.shape
    NC = prep['fc_w'].shape[1]
    kernel = functools.partial(attn_pool_fc_kernel, num_heads=num_heads)
    out = pl.pallas_call(
        kernel,
        out_shape=jax.ShapeDtypeStruct((N, 1, NC), jnp.float32),
        grid_spec=pltpu.PrefetchScalarGridSpec(
            num_scalar_prefetch=0,
            grid=(N,),
            in_specs=[pl.BlockSpec((1, L, E), lambda n: (n, 0, 0)),
                      pl.BlockSpec((E, 3 * E), lambda n: (0, 0)),
                      pl.BlockSpec((1, 3 * E), lambda n: (0, 0)),
                      pl.BlockSpec((E, E), lambda n: (0, 0)),
                      pl.BlockSpec((1, E), lambda n: (0, 0)),
                      pl.BlockSpec((E, NC), lambda n: (0, 0)),
                      pl.BlockSpec((1, NC), lambda n: (0, 0))],
            out_specs=pl.BlockSpec((1, 1, NC), lambda n: (n, 0, 0))),
        compiler_params=pltpu.CompilerParams(
            dimension_semantics=("parallel",)),
    )(x_nle, prep['attn_in_w'], prep['attn_in_b'],
      prep['attn_out_w'], prep['attn_out_b'], prep['fc_w'], prep['fc_b'])
    return out.reshape(N, NC)


def handwriting_feature_extractor(x_nchw, prep, num_heads=8):
    # NCHW -> NHWC; activations carried in bf16 (matmuls accumulate in f32).
    x = jnp.transpose(x_nchw, (0, 2, 3, 1)).astype(jnp.bfloat16)

    x = conv_relu_pool(x, prep['c1_w'], prep['c1_b'])
    x = conv_relu_pool(x, prep['c2_w'], prep['c2_b'])
    x = conv_relu_pool(x, prep['c3_w'], prep['c3_b'])

    N, Ho, Wo, C = x.shape
    # torch: view(N, C, H*W).permute(2, 0, 1) -> seq index l = h*W + w; the
    # NHWC reshape below produces exactly that (n, l) row order.
    # NOTE: the torch `h*w == 0` fallback branch is unreachable at these shapes.
    x_seq = x.reshape(N, Ho * Wo, C)

    return attention_pool_fc(x_seq, prep, num_heads)


# ------------------------- one-time parameter repack -------------------------

def prepare_params(params, num_heads=8):
    """Repack torch-layout params into kernel layout (done once, outside forward):
    conv weights -> (9*Cin_padded, Cout_padded=128) bf16 matrices with lane-padded
    output channels; attention/fc weights pre-transposed to (in, out) and the q
    projection pre-scaled by 1/sqrt(head_dim)."""
    f32, bf16 = jnp.float32, jnp.bfloat16

    def conv_pack(w, b, cin_pad, cout_pad):
        cout, cin, kh, kw = w.shape
        w_hwio = jnp.transpose(w, (2, 3, 1, 0))                       # (3,3,cin,cout)
        wp = jnp.zeros((kh, kw, cin_pad, cout_pad), f32)
        wp = wp.at[:, :, :cin, :cout].set(w_hwio)
        bp = jnp.zeros((cout_pad,), f32).at[:cout].set(b)
        return (wp.reshape(kh * kw * cin_pad, cout_pad).astype(bf16),
                bp.reshape(1, cout_pad))

    c1_w, c1_b = conv_pack(params['conv1_w'], params['conv1_b'], 1, 128)
    c2_w, c2_b = conv_pack(params['conv2_w'], params['conv2_b'], 128, 128)
    c3_w, c3_b = conv_pack(params['conv3_w'], params['conv3_b'], 128, 128)

    E = params['attn_out_w'].shape[0]
    dh = E // num_heads
    scale = 1.0 / math.sqrt(dh)
    w_in = params['attn_in_w'].T                                      # (E, 3E)
    w_in = jnp.concatenate([w_in[:, :E] * scale, w_in[:, E:]], axis=1)
    b_in = jnp.concatenate([params['attn_in_b'][:E] * scale,
                            params['attn_in_b'][E:]])

    return {
        'c1_w': c1_w, 'c1_b': c1_b,
        'c2_w': c2_w, 'c2_b': c2_b,
        'c3_w': c3_w, 'c3_b': c3_b,
        'attn_in_w': w_in.astype(bf16),
        'attn_in_b': b_in.reshape(1, 3 * E).astype(f32),
        'attn_out_w': params['attn_out_w'].T.astype(bf16),
        'attn_out_b': params['attn_out_b'].reshape(1, E).astype(f32),
        'fc_w': params['fc_w'].T.astype(bf16),
        'fc_b': params['fc_b'].reshape(1, -1).astype(f32),
    }


# ------------------------- pure-JAX f32 reference ---------------------------

def reference_forward(x_nchw, params, num_heads=8):
    x = jnp.transpose(x_nchw, (0, 2, 3, 1)).astype(jnp.float32)

    def conv_block(x, w, b):
        wh = jnp.transpose(w, (2, 3, 1, 0))
        y = jax.lax.conv_general_dilated(
            x, wh, (1, 1), 'SAME',
            dimension_numbers=('NHWC', 'HWIO', 'NHWC')) + b
        y = jnp.maximum(y, 0.0)
        N, H, W, C = y.shape
        return y.reshape(N, H // 2, 2, W // 2, 2, C).max(axis=(2, 4))

    x = conv_block(x, params['conv1_w'], params['conv1_b'])
    x = conv_block(x, params['conv2_w'], params['conv2_b'])
    x = conv_block(x, params['conv3_w'], params['conv3_b'])

    N, H, W, C = x.shape
    xs = jnp.transpose(x, (1, 2, 0, 3)).reshape(H * W, N, C)
    L, E = H * W, C
    Dh = E // num_heads

    qkv = xs @ params['attn_in_w'].T + params['attn_in_b']
    q, k, v = qkv[..., :E], qkv[..., E:2 * E], qkv[..., 2 * E:]

    def th(t):
        return t.reshape(L, N, num_heads, Dh).transpose(1, 2, 0, 3)

    qh, kh, vh = th(q), th(k), th(v)
    s = jnp.einsum('nhld,nhmd->nhlm', qh, kh) / math.sqrt(Dh)
    p = jax.nn.softmax(s, axis=-1)
    ctx = jnp.einsum('nhlm,nhmd->nhld', p, vh)
    ctx = ctx.transpose(2, 0, 1, 3).reshape(L, N, E)
    attn = ctx @ params['attn_out_w'].T + params['attn_out_b']
    xm = attn.mean(axis=0)
    return xm @ params['fc_w'].T + params['fc_b']


# ---------------------------------- main ------------------------------------

def init_params(key, num_classes=128):
    ks = jax.random.split(key, 12)
    s = 0.1

    def nrm(k, shape):
        return (s * jax.random.normal(k, shape)).astype(jnp.float32)

    return {
        'conv1_w': nrm(ks[0], (32, 1, 3, 3)),   'conv1_b': nrm(ks[1], (32,)),
        'conv2_w': nrm(ks[2], (64, 32, 3, 3)),  'conv2_b': nrm(ks[3], (64,)),
        'conv3_w': nrm(ks[4], (128, 64, 3, 3)), 'conv3_b': nrm(ks[5], (128,)),
        'attn_in_w':  nrm(ks[6], (3 * 128, 128)),
        'attn_in_b':  nrm(ks[7], (3 * 128,)),
        'attn_out_w': nrm(ks[8], (128, 128)),
        'attn_out_b': nrm(ks[9], (128,)),
        'fc_w': nrm(ks[10], (num_classes, 128)),
        'fc_b': nrm(ks[11], (num_classes,)),
    }


if __name__ == "__main__":
    key = jax.random.PRNGKey(0)
    kx, kp = jax.random.split(key)

    # batch=2, 1 input channel (required by conv1), 16x16 spatial
    x = jax.random.normal(kx, (2, 1, 16, 16), dtype=jnp.float32)
    params = init_params(kp, num_classes=128)
    prep = prepare_params(params, num_heads=8)

    fwd = jax.jit(functools.partial(handwriting_feature_extractor, num_heads=8))
    out = jax.block_until_ready(fwd(x, prep))

    ref = jax.block_until_ready(reference_forward(x, params))
    assert out.shape == (2, 128), out.shape
    assert bool(jnp.all(jnp.isfinite(out)))
    # bf16 operands in the stacked conv / qkv matmuls -> compare against the
    # f32 reference at bf16-level accuracy (max-norm relative check).
    err = float(jnp.max(jnp.abs(out - ref)))
    scale = float(jnp.max(jnp.abs(ref)))
    assert err <= 5e-2 * scale + 2e-2, (err, scale)

    print("KERNEL_OK")
</pallas_src>

<mosaic_0001>
module attributes {stable_mosaic.version = 11 : i64} {
  func.func @conv3x3_relu_kernel(%arg0: i32, %arg1: memref<1x362x1xbf16, #tpu.memory_space<vmem>>, %arg2: memref<9x128xbf16, #tpu.memory_space<vmem>>, %arg3: memref<1x128xf32, #tpu.memory_space<vmem>>, %arg4: memref<1x324x128xbf16, #tpu.memory_space<vmem>>) attributes {dimension_semantics = [#tpu.dimension_semantics<parallel>], iteration_bounds = array<i64: 2>, scalar_prefetch = 0 : i64, scratch_operands = 0 : i64, tpu.core_type = #tpu.core_type<tc>, window_params = [{transform_indices = @transform_0, window_bounds = array<i64: 1, 362, 1>}, {pipeline_mode = #tpu.pipeline_mode<synchronous>, transform_indices = @transform_1, window_bounds = array<i64: 9, 128>}, {pipeline_mode = #tpu.pipeline_mode<synchronous>, transform_indices = @transform_2, window_bounds = array<i64: 1, 128>}, {transform_indices = @transform_3, window_bounds = array<i64: 1, 324, 128>}]} {
    %c0 = arith.constant 0 : index
    %c0_0 = arith.constant 0 : index
    %0 = vector.load %arg3[%c0, %c0_0] : memref<1x128xf32, #tpu.memory_space<vmem>>, vector<1x128xf32>
    %c0_1 = arith.constant 0 : index
    %c0_2 = arith.constant 0 : index
    %c0_3 = arith.constant 0 : index
    %1 = vector.load %arg1[%c0_1, %c0_2, %c0_3] : memref<1x362x1xbf16, #tpu.memory_space<vmem>>, vector<1x128x1xbf16>
    %2 = vector.shape_cast %1 : vector<1x128x1xbf16> to vector<128x1xbf16>
    %c0_4 = arith.constant 0 : index
    %c0_5 = arith.constant 0 : index
    %3 = vector.load %arg2[%c0_4, %c0_5] : memref<9x128xbf16, #tpu.memory_space<vmem>>, vector<1x128xbf16>
    %4 = arith.extf %2 : vector<128x1xbf16> to vector<128x1xf32>
    %5 = arith.extf %3 : vector<1x128xbf16> to vector<1x128xf32>
    %6 = vector.broadcast %4 : vector<128x1xf32> to vector<128x128xf32>
    %7 = vector.broadcast %5 : vector<1x128xf32> to vector<128x128xf32>
    %8 = arith.mulf %6, %7 : vector<128x128xf32>
    %c0_6 = arith.constant 0 : index
    %c1 = arith.constant 1 : index
    %c0_7 = arith.constant 0 : index
    %9 = vector.load %arg1[%c0_6, %c1, %c0_7] : memref<1x362x1xbf16, #tpu.memory_space<vmem>>, vector<1x128x1xbf16>
    %10 = vector.shape_cast %9 : vector<1x128x1xbf16> to vector<128x1xbf16>
    %c1_8 = arith.constant 1 : index
    %c0_9 = arith.constant 0 : index
    %11 = vector.load %arg2[%c1_8, %c0_9] : memref<9x128xbf16, #tpu.memory_space<vmem>>, vector<1x128xbf16>
    %12 = arith.extf %10 : vector<128x1xbf16> to vector<128x1xf32>
    %13 = arith.extf %11 : vector<1x128xbf16> to vector<1x128xf32>
    %14 = vector.broadcast %12 : vector<128x1xf32> to vector<128x128xf32>
    %15 = vector.broadcast %13 : vector<1x128xf32> to vector<128x128xf32>
    %16 = arith.mulf %14, %15 : vector<128x128xf32>
    %17 = arith.addf %8, %16 : vector<128x128xf32>
    %c0_10 = arith.constant 0 : index
    %c2 = arith.constant 2 : index
    %c0_11 = arith.constant 0 : index
    %18 = vector.load %arg1[%c0_10, %c2, %c0_11] : memref<1x362x1xbf16, #tpu.memory_space<vmem>>, vector<1x128x1xbf16>
    %19 = vector.shape_cast %18 : vector<1x128x1xbf16> to vector<128x1xbf16>
    %c2_12 = arith.constant 2 : index
    %c0_13 = arith.constant 0 : index
    %20 = vector.load %arg2[%c2_12, %c0_13] : memref<9x128xbf16, #tpu.memory_space<vmem>>, vector<1x128xbf16>
    %21 = arith.extf %19 : vector<128x1xbf16> to vector<128x1xf32>
    %22 = arith.extf %20 : vector<1x128xbf16> to vector<1x128xf32>
    %23 = vector.broadcast %21 : vector<128x1xf32> to vector<128x128xf32>
    %24 = vector.broadcast %22 : vector<1x128xf32> to vector<128x128xf32>
    %25 = arith.mulf %23, %24 : vector<128x128xf32>
    %26 = arith.addf %17, %25 : vector<128x128xf32>
    %c0_14 = arith.constant 0 : index
    %c18 = arith.constant 18 : index
    %c0_15 = arith.constant 0 : index
    %27 = vector.load %arg1[%c0_14, %c18, %c0_15] : memref<1x362x1xbf16, #tpu.memory_space<vmem>>, vector<1x128x1xbf16>
    %28 = vector.shape_cast %27 : vector<1x128x1xbf16> to vector<128x1xbf16>
    %c3 = arith.constant 3 : index
    %c0_16 = arith.constant 0 : index
    %29 = vector.load %arg2[%c3, %c0_16] : memref<9x128xbf16, #tpu.memory_space<vmem>>, vector<1x128xbf16>
    %30 = arith.extf %28 : vector<128x1xbf16> to vector<128x1xf32>
    %31 = arith.extf %29 : vector<1x128xbf16> to vector<1x128xf32>
    %32 = vector.broadcast %30 : vector<128x1xf32> to vector<128x128xf32>
    %33 = vector.broadcast %31 : vector<1x128xf32> to vector<128x128xf32>
    %34 = arith.mulf %32, %33 : vector<128x128xf32>
    %35 = arith.addf %26, %34 : vector<128x128xf32>
    %c0_17 = arith.constant 0 : index
    %c19 = arith.constant 19 : index
    %c0_18 = arith.constant 0 : index
    %36 = vector.load %arg1[%c0_17, %c19, %c0_18] : memref<1x362x1xbf16, #tpu.memory_space<vmem>>, vector<1x128x1xbf16>
    %37 = vector.shape_cast %36 : vector<1x128x1xbf16> to vector<128x1xbf16>
    %c4 = arith.constant 4 : index
    %c0_19 = arith.constant 0 : index
    %38 = vector.load %arg2[%c4, %c0_19] : memref<9x128xbf16, #tpu.memory_space<vmem>>, vector<1x128xbf16>
    %39 = arith.extf %37 : vector<128x1xbf16> to vector<128x1xf32>
    %40 = arith.extf %38 : vector<1x128xbf16> to vector<1x128xf32>
    %41 = vector.broadcast %39 : vector<128x1xf32> to vector<128x128xf32>
    %42 = vector.broadcast %40 : vector<1x128xf32> to vector<128x128xf32>
    %43 = arith.mulf %41, %42 : vector<128x128xf32>
    %44 = arith.addf %35, %43 : vector<128x128xf32>
    %c0_20 = arith.constant 0 : index
    %c20 = arith.constant 20 : index
    %c0_21 = arith.constant 0 : index
    %45 = vector.load %arg1[%c0_20, %c20, %c0_21] : memref<1x362x1xbf16, #tpu.memory_space<vmem>>, vector<1x128x1xbf16>
    %46 = vector.shape_cast %45 : vector<1x128x1xbf16> to vector<128x1xbf16>
    %c5 = arith.constant 5 : index
    %c0_22 = arith.constant 0 : index
    %47 = vector.load %arg2[%c5, %c0_22] : memref<9x128xbf16, #tpu.memory_space<vmem>>, vector<1x128xbf16>
    %48 = arith.extf %46 : vector<128x1xbf16> to vector<128x1xf32>
    %49 = arith.extf %47 : vector<1x128xbf16> to vector<1x128xf32>
    %50 = vector.broadcast %48 : vector<128x1xf32> to vector<128x128xf32>
    %51 = vector.broadcast %49 : vector<1x128xf32> to vector<128x128xf32>
    %52 = arith.mulf %50, %51 : vector<128x128xf32>
    %53 = arith.addf %44, %52 : vector<128x128xf32>
    %c0_23 = arith.constant 0 : index
    %c36 = arith.constant 36 : index
    %c0_24 = arith.constant 0 : index
    %54 = vector.load %arg1[%c0_23, %c36, %c0_24] : memref<1x362x1xbf16, #tpu.memory_space<vmem>>, vector<1x128x1xbf16>
    %55 = vector.shape_cast %54 : vector<1x128x1xbf16> to vector<128x1xbf16>
    %c6 = arith.constant 6 : index
    %c0_25 = arith.constant 0 : index
    %56 = vector.load %arg2[%c6, %c0_25] : memref<9x128xbf16, #tpu.memory_space<vmem>>, vector<1x128xbf16>
    %57 = arith.extf %55 : vector<128x1xbf16> to vector<128x1xf32>
    %58 = arith.extf %56 : vector<1x128xbf16> to vector<1x128xf32>
    %59 = vector.broadcast %57 : vector<128x1xf32> to vector<128x128xf32>
    %60 = vector.broadcast %58 : vector<1x128xf32> to vector<128x128xf32>
    %61 = arith.mulf %59, %60 : vector<128x128xf32>
    %62 = arith.addf %53, %61 : vector<128x128xf32>
    %c0_26 = arith.constant 0 : index
    %c37 = arith.constant 37 : index
    %c0_27 = arith.constant 0 : index
    %63 = vector.load %arg1[%c0_26, %c37, %c0_27] : memref<1x362x1xbf16, #tpu.memory_space<vmem>>, vector<1x128x1xbf16>
    %64 = vector.shape_cast %63 : vector<1x128x1xbf16> to vector<128x1xbf16>
    %c7 = arith.constant 7 : index
    %c0_28 = arith.constant 0 : index
    %65 = vector.load %arg2[%c7, %c0_28] : memref<9x128xbf16, #tpu.memory_space<vmem>>, vector<1x128xbf16>
    %66 = arith.extf %64 : vector<128x1xbf16> to vector<128x1xf32>
    %67 = arith.extf %65 : vector<1x128xbf16> to vector<1x128xf32>
    %68 = vector.broadcast %66 : vector<128x1xf32> to vector<128x128xf32>
    %69 = vector.broadcast %67 : vector<1x128xf32> to vector<128x128xf32>
    %70 = arith.mulf %68, %69 : vector<128x128xf32>
    %71 = arith.addf %62, %70 : vector<128x128xf32>
    %c0_29 = arith.constant 0 : index
    %c38 = arith.constant 38 : index
    %c0_30 = arith.constant 0 : index
    %72 = vector.load %arg1[%c0_29, %c38, %c0_30] : memref<1x362x1xbf16, #tpu.memory_space<vmem>>, vector<1x128x1xbf16>
    %73 = vector.shape_cast %72 : vector<1x128x1xbf16> to vector<128x1xbf16>
    %c8 = arith.constant 8 : index
    %c0_31 = arith.constant 0 : index
    %74 = vector.load %arg2[%c8, %c0_31] : memref<9x128xbf16, #tpu.memory_space<vmem>>, vector<1x128xbf16>
    %75 = arith.extf %73 : vector<128x1xbf16> to vector<128x1xf32>
    %76 = arith.extf %74 : vector<1x128xbf16> to vector<1x128xf32>
    %77 = vector.broadcast %75 : vector<128x1xf32> to vector<128x128xf32>
    %78 = vector.broadcast %76 : vector<1x128xf32> to vector<128x128xf32>
    %79 = arith.mulf %77, %78 : vector<128x128xf32>
    %80 = arith.addf %71, %79 : vector<128x128xf32>
    %81 = vector.broadcast %0 : vector<1x128xf32> to vector<128x128xf32>
    %82 = arith.addf %80, %81 : vector<128x128xf32>
    %cst = arith.constant 0.000000e+00 : f32
    %83 = vector.broadcast %cst : f32 to vector<128x128xf32>
    %84 = arith.maximumf %82, %83 : vector<128x128xf32>
    %85 = arith.truncf %84 : vector<128x128xf32> to vector<128x128xbf16>
    %c0_32 = arith.constant 0 : index
    %c0_33 = arith.constant 0 : index
    %c0_34 = arith.constant 0 : index
    %86 = vector.load %arg4[%c0_32, %c0_33, %c0_34] : memref<1x324x128xbf16, #tpu.memory_space<vmem>>, vector<1x128x128xbf16>
    %87 = vector.shape_cast %86 : vector<1x128x128xbf16> to vector<128x128xbf16>
    %88 = vector.shape_cast %85 : vector<128x128xbf16> to vector<1x128x128xbf16>
    tpu.vector_store %arg4[%c0_32, %c0_33, %c0_34], %88 {strides = array<i32>} : memref<1x324x128xbf16, #tpu.memory_space<vmem>>, vector<1x128x128xbf16>,
    %c0_35 = arith.constant 0 : index
    %c128 = arith.constant 128 : index
    %c0_36 = arith.constant 0 : index
    %89 = vector.load %arg1[%c0_35, %c128, %c0_36] : memref<1x362x1xbf16, #tpu.memory_space<vmem>>, vector<1x128x1xbf16>
    %90 = vector.shape_cast %89 : vector<1x128x1xbf16> to vector<128x1xbf16>
    %c0_37 = arith.constant 0 : index
    %c0_38 = arith.constant 0 : index
    %91 = vector.load %arg2[%c0_37, %c0_38] : memref<9x128xbf16, #tpu.memory_space<vmem>>, vector<1x128xbf16>
    %92 = arith.extf %90 : vector<128x1xbf16> to vector<128x1xf32>
    %93 = arith.extf %91 : vector<1x128xbf16> to vector<1x128xf32>
    %94 = vector.broadcast %92 : vector<128x1xf32> to vector<128x128xf32>
    %95 = vector.broadcast %93 : vector<1x128xf32> to vector<128x128xf32>
    %96 = arith.mulf %94, %95 : vector<128x128xf32>
    %c0_39 = arith.constant 0 : index
    %c129 = arith.constant 129 : index
    %c0_40 = arith.constant 0 : index
    %97 = vector.load %arg1[%c0_39, %c129, %c0_40] : memref<1x362x1xbf16, #tpu.memory_space<vmem>>, vector<1x128x1xbf16>
    %98 = vector.shape_cast %97 : vector<1x128x1xbf16> to vector<128x1xbf16>
    %c1_41 = arith.constant 1 : index
    %c0_42 = arith.constant 0 : index
    %99 = vector.load %arg2[%c1_41, %c0_42] : memref<9x128xbf16, #tpu.memory_space<vmem>>, vector<1x128xbf16>
    %100 = arith.extf %98 : vector<128x1xbf16> to vector<128x1xf32>
    %101 = arith.extf %99 : vector<1x128xbf16> to vector<1x128xf32>
    %102 = vector.broadcast %100 : vector<128x1xf32> to vector<128x128xf32>
    %103 = vector.broadcast %101 : vector<1x128xf32> to vector<128x128xf32>
    %104 = arith.mulf %102, %103 : vector<128x128xf32>
    %105 = arith.addf %96, %104 : vector<128x128xf32>
    %c0_43 = arith.constant 0 : index
    %c130 = arith.constant 130 : index
    %c0_44 = arith.constant 0 : index
    %106 = vector.load %arg1[%c0_43, %c130, %c0_44] : memref<1x362x1xbf16, #tpu.memory_space<vmem>>, vector<1x128x1xbf16>
    %107 = vector.shape_cast %106 : vector<1x128x1xbf16> to vector<128x1xbf16>
    %c2_45 = arith.constant 2 : index
    %c0_46 = arith.constant 0 : index
    %108 = vector.load %arg2[%c2_45, %c0_46] : memref<9x128xbf16, #tpu.memory_space<vmem>>, vector<1x128xbf16>
    %109 = arith.extf %107 : vector<128x1xbf16> to vector<128x1xf32>
    %110 = arith.extf %108 : vector<1x128xbf16> to vector<1x128xf32>
    %111 = vector.broadcast %109 : vector<128x1xf32> to vector<128x128xf32>
    %112 = vector.broadcast %110 : vector<1x128xf32> to vector<128x128xf32>
    %113 = arith.mulf %111, %112 : vector<128x128xf32>
    %114 = arith.addf %105, %113 : vector<128x128xf32>
    %c0_47 = arith.constant 0 : index
    %c146 = arith.constant 146 : index
    %c0_48 = arith.constant 0 : index
    %115 = vector.load %arg1[%c0_47, %c146, %c0_48] : memref<1x362x1xbf16, #tpu.memory_space<vmem>>, vector<1x128x1xbf16>
    %116 = vector.shape_cast %115 : vector<1x128x1xbf16> to vector<128x1xbf16>
    %c3_49 = arith.constant 3 : index
    %c0_50 = arith.constant 0 : index
    %117 = vector.load %arg2[%c3_49, %c0_50] : memref<9x128xbf16, #tpu.memory_space<vmem>>, vector<1x128xbf16>
    %118 = arith.extf %116 : vector<128x1xbf16> to vector<128x1xf32>
    %119 = arith.extf %117 : vector<1x128xbf16> to vector<1x128xf32>
    %120 = vector.broadcast %118 : vector<128x1xf32> to vector<128x128xf32>
    %121 = vector.broadcast %119 : vector<1x128xf32> to vector<128x128xf32>
    %122 = arith.mulf %120, %121 : vector<128x128xf32>
    %123 = arith.addf %114, %122 : vector<128x128xf32>
    %c0_51 = arith.constant 0 : index
    %c147 = arith.constant 147 : index
    %c0_52 = arith.constant 0 : index
    %124 = vector.load %arg1[%c0_51, %c147, %c0_52] : memref<1x362x1xbf16, #tpu.memory_space<vmem>>, vector<1x128x1xbf16>
    %125 = vector.shape_cast %124 : vector<1x128x1xbf16> to vector<128x1xbf16>
    %c4_53 = arith.constant 4 : index
    %c0_54 = arith.constant 0 : index
    %126 = vector.load %arg2[%c4_53, %c0_54] : memref<9x128xbf16, #tpu.memory_space<vmem>>, vector<1x128xbf16>
    %127 = arith.extf %125 : vector<128x1xbf16> to vector<128x1xf32>
    %128 = arith.extf %126 : vector<1x128xbf16> to vector<1x128xf32>
    %129 = vector.broadcast %127 : vector<128x1xf32> to vector<128x128xf32>
    %130 = vector.broadcast %128 : vector<1x128xf32> to vector<128x128xf32>
    %131 = arith.mulf %129, %130 : vector<128x128xf32>
    %132 = arith.addf %123, %131 : vector<128x128xf32>
    %c0_55 = arith.constant 0 : index
    %c148 = arith.constant 148 : index
    %c0_56 = arith.constant 0 : index
    %133 = vector.load %arg1[%c0_55, %c148, %c0_56] : memref<1x362x1xbf16, #tpu.memory_space<vmem>>, vector<1x128x1xbf16>
    %134 = vector.shape_cast %133 : vector<1x128x1xbf16> to vector<128x1xbf16>
    %c5_57 = arith.constant 5 : index
    %c0_58 = arith.constant 0 : index
    %135 = vector.load %arg2[%c5_57, %c0_58] : memref<9x128xbf16, #tpu.memory_space<vmem>>, vector<1x128xbf16>
    %136 = arith.extf %134 : vector<128x1xbf16> to vector<128x1xf32>
    %137 = arith.extf %135 : vector<1x128xbf16> to vector<1x128xf32>
    %138 = vector.broadcast %136 : vector<128x1xf32> to vector<128x128xf32>
    %139 = vector.broadcast %137 : vector<1x128xf32> to vector<128x128xf32>
    %140 = arith.mulf %138, %139 : vector<128x128xf32>
    %141 = arith.addf %132, %140 : vector<128x128xf32>
    %c0_59 = arith.constant 0 : index
    %c164 = arith.constant 164 : index
    %c0_60 = arith.constant 0 : index
    %142 = vector.load %arg1[%c0_59, %c164, %c0_60] : memref<1x362x1xbf16, #tpu.memory_space<vmem>>, vector<1x128x1xbf16>
    %143 = vector.shape_cast %142 : vector<1x128x1xbf16> to vector<128x1xbf16>
    %c6_61 = arith.constant 6 : index
    %c0_62 = arith.constant 0 : index
    %144 = vector.load %arg2[%c6_61, %c0_62] : memref<9x128xbf16, #tpu.memory_space<vmem>>, vector<1x128xbf16>
    %145 = arith.extf %143 : vector<128x1xbf16> to vector<128x1xf32>
    %146 = arith.extf %144 : vector<1x128xbf16> to vector<1x128xf32>
    %147 = vector.broadcast %145 : vector<128x1xf32> to vector<128x128xf32>
    %148 = vector.broadcast %146 : vector<1x128xf32> to vector<128x128xf32>
    %149 = arith.mulf %147, %148 : vector<128x128xf32>
    %150 = arith.addf %141, %149 : vector<128x128xf32>
    %c0_63 = arith.constant 0 : index
    %c165 = arith.constant 165 : index
    %c0_64 = arith.constant 0 : index
    %151 = vector.load %arg1[%c0_63, %c165, %c0_64] : memref<1x362x1xbf16, #tpu.memory_space<vmem>>, vector<1x128x1xbf16>
    %152 = vector.shape_cast %151 : vector<1x128x1xbf16> to vector<128x1xbf16>
    %c7_65 = arith.constant 7 : index
    %c0_66 = arith.constant 0 : index
    %153 = vector.load %arg2[%c7_65, %c0_66] : memref<9x128xbf16, #tpu.memory_space<vmem>>, vector<1x128xbf16>
    %154 = arith.extf %152 : vector<128x1xbf16> to vector<128x1xf32>
    %155 = arith.extf %153 : vector<1x128xbf16> to vector<1x128xf32>
    %156 = vector.broadcast %154 : vector<128x1xf32> to vector<128x128xf32>
    %157 = vector.broadcast %155 : vector<1x128xf32> to vector<128x128xf32>
    %158 = arith.mulf %156, %157 : vector<128x128xf32>
    %159 = arith.addf %150, %158 : vector<128x128xf32>
    %c0_67 = arith.constant 0 : index
    %c166 = arith.constant 166 : index
    %c0_68 = arith.constant 0 : index
    %160 = vector.load %arg1[%c0_67, %c166, %c0_68] : memref<1x362x1xbf16, #tpu.memory_space<vmem>>, vector<1x128x1xbf16>
    %161 = vector.shape_cast %160 : vector<1x128x1xbf16> to vector<128x1xbf16>
    %c8_69 = arith.constant 8 : index
    %c0_70 = arith.constant 0 : index
    %162 = vector.load %arg2[%c8_69, %c0_70] : memref<9x128xbf16, #tpu.memory_space<vmem>>, vector<1x128xbf16>
    %163 = arith.extf %161 : vector<128x1xbf16> to vector<128x1xf32>
    %164 = arith.extf %162 : vector<1x128xbf16> to vector<1x128xf32>
    %165 = vector.broadcast %163 : vector<128x1xf32> to vector<128x128xf32>
    %166 = vector.broadcast %164 : vector<1x128xf32> to vector<128x128xf32>
    %167 = arith.mulf %165, %166 : vector<128x128xf32>
    %168 = arith.addf %159, %167 : vector<128x128xf32>
    %169 = vector.broadcast %0 : vector<1x128xf32> to vector<128x128xf32>
    %170 = arith.addf %168, %169 : vector<128x128xf32>
    %cst_71 = arith.constant 0.000000e+00 : f32
    %171 = vector.broadcast %cst_71 : f32 to vector<128x128xf32>
    %172 = arith.maximumf %170, %171 : vector<128x128xf32>
    %173 = arith.truncf %172 : vector<128x128xf32> to vector<128x128xbf16>
    %c0_72 = arith.constant 0 : index
    %c128_73 = arith.constant 128 : index
    %c0_74 = arith.constant 0 : index
    %174 = vector.load %arg4[%c0_72, %c128_73, %c0_74] : memref<1x324x128xbf16, #tpu.memory_space<vmem>>, vector<1x128x128xbf16>
    %175 = vector.shape_cast %174 : vector<1x128x128xbf16> to vector<128x128xbf16>
    %176 = vector.shape_cast %173 : vector<128x128xbf16> to vector<1x128x128xbf16>
    tpu.vector_store %arg4[%c0_72, %c128_73, %c0_74], %176 {strides = array<i32>} : memref<1x324x128xbf16, #tpu.memory_space<vmem>>, vector<1x128x128xbf16>,
    %c0_75 = arith.constant 0 : index
    %c256 = arith.constant 256 : index
    %c0_76 = arith.constant 0 : index
    %177 = vector.load %arg1[%c0_75, %c256, %c0_76] : memref<1x362x1xbf16, #tpu.memory_space<vmem>>, vector<1x68x1xbf16>
    %178 = vector.shape_cast %177 : vector<1x68x1xbf16> to vector<68x1xbf16>
    %c0_77 = arith.constant 0 : index
    %c0_78 = arith.constant 0 : index
    %179 = vector.load %arg2[%c0_77, %c0_78] : memref<9x128xbf16, #tpu.memory_space<vmem>>, vector<1x128xbf16>
    %180 = arith.extf %178 : vector<68x1xbf16> to vector<68x1xf32>
    %181 = arith.extf %179 : vector<1x128xbf16> to vector<1x128xf32>
    %182 = vector.broadcast %180 : vector<68x1xf32> to vector<68x128xf32>
    %183 = vector.broadcast %181 : vector<1x128xf32> to vector<68x128xf32>
    %184 = arith.mulf %182, %183 : vector<68x128xf32>
    %c0_79 = arith.constant 0 : index
    %c257 = arith.constant 257 : index
    %c0_80 = arith.constant 0 : index
    %185 = vector.load %arg1[%c0_79, %c257, %c0_80] : memref<1x362x1xbf16, #tpu.memory_space<vmem>>, vector<1x68x1xbf16>
    %186 = vector.shape_cast %185 : vector<1x68x1xbf16> to vector<68x1xbf16>
    %c1_81 = arith.constant 1 : index
    %c0_82 = arith.constant 0 : index
    %187 = vector.load %arg2[%c1_81, %c0_82] : memref<9x128xbf16, #tpu.memory_space<vmem>>, vector<1x128xbf16>
    %188 = arith.extf %186 : vector<68x1xbf16> to vector<68x1xf32>
    %189 = arith.extf %187 : vector<1x128xbf16> to vector<1x128xf32>
    %190 = vector.broadcast %188 : vector<68x1xf32> to vector<68x128xf32>
    %191 = vector.broadcast %189 : vector<1x128xf32> to vector<68x128xf32>
    %192 = arith.mulf %190, %191 : vector<68x128xf32>
    %193 = arith.addf %184, %192 : vector<68x128xf32>
    %c0_83 = arith.constant 0 : index
    %c258 = arith.constant 258 : index
    %c0_84 = arith.constant 0 : index
    %194 = vector.load %arg1[%c0_83, %c258, %c0_84] : memref<1x362x1xbf16, #tpu.memory_space<vmem>>, vector<1x68x1xbf16>
    %195 = vector.shape_cast %194 : vector<1x68x1xbf16> to vector<68x1xbf16>
    %c2_85 = arith.constant 2 : index
    %c0_86 = arith.constant 0 : index
    %196 = vector.load %arg2[%c2_85, %c0_86] : memref<9x128xbf16, #tpu.memory_space<vmem>>, vector<1x128xbf16>
    %197 = arith.extf %195 : vector<68x1xbf16> to vector<68x1xf32>
    %198 = arith.extf %196 : vector<1x128xbf16> to vector<1x128xf32>
    %199 = vector.broadcast %197 : vector<68x1xf32> to vector<68x128xf32>
    %200 = vector.broadcast %198 : vector<1x128xf32> to vector<68x128xf32>
    %201 = arith.mulf %199, %200 : vector<68x128xf32>
    %202 = arith.addf %193, %201 : vector<68x128xf32>
    %c0_87 = arith.constant 0 : index
    %c274 = arith.constant 274 : index
    %c0_88 = arith.constant 0 : index
    %203 = vector.load %arg1[%c0_87, %c274, %c0_88] : memref<1x362x1xbf16, #tpu.memory_space<vmem>>, vector<1x68x1xbf16>
    %204 = vector.shape_cast %203 : vector<1x68x1xbf16> to vector<68x1xbf16>
    %c3_89 = arith.constant 3 : index
    %c0_90 = arith.constant 0 : index
    %205 = vector.load %arg2[%c3_89, %c0_90] : memref<9x128xbf16, #tpu.memory_space<vmem>>, vector<1x128xbf16>
    %206 = arith.extf %204 : vector<68x1xbf16> to vector<68x1xf32>
    %207 = arith.extf %205 : vector<1x128xbf16> to vector<1x128xf32>
    %208 = vector.broadcast %206 : vector<68x1xf32> to vector<68x128xf32>
    %209 = vector.broadcast %207 : vector<1x128xf32> to vector<68x128xf32>
    %210 = arith.mulf %208, %209 : vector<68x128xf32>
    %211 = arith.addf %202, %210 : vector<68x128xf32>
    %c0_91 = arith.constant 0 : index
    %c275 = arith.constant 275 : index
    %c0_92 = arith.constant 0 : index
    %212 = vector.load %arg1[%c0_91, %c275, %c0_92] : memref<1x362x1xbf16, #tpu.memory_space<vmem>>, vector<1x68x1xbf16>
    %213 = vector.shape_cast %212 : vector<1x68x1xbf16> to vector<68x1xbf16>
    %c4_93 = arith.constant 4 : index
    %c0_94 = arith.constant 0 : index
    %214 = vector.load %arg2[%c4_93, %c0_94] : memref<9x128xbf16, #tpu.memory_space<vmem>>, vector<1x128xbf16>
    %215 = arith.extf %213 : vector<68x1xbf16> to vector<68x1xf32>
    %216 = arith.extf %214 : vector<1x128xbf16> to vector<1x128xf32>
    %217 = vector.broadcast %215 : vector<68x1xf32> to vector<68x128xf32>
    %218 = vector.broadcast %216 : vector<1x128xf32> to vector<68x128xf32>
    %219 = arith.mulf %217, %218 : vector<68x128xf32>
    %220 = arith.addf %211, %219 : vector<68x128xf32>
    %c0_95 = arith.constant 0 : index
    %c276 = arith.constant 276 : index
    %c0_96 = arith.constant 0 : index
    %221 = vector.load %arg1[%c0_95, %c276, %c0_96] : memref<1x362x1xbf16, #tpu.memory_space<vmem>>, vector<1x68x1xbf16>
    %222 = vector.shape_cast %221 : vector<1x68x1xbf16> to vector<68x1xbf16>
    %c5_97 = arith.constant 5 : index
    %c0_98 = arith.constant 0 : index
    %223 = vector.load %arg2[%c5_97, %c0_98] : memref<9x128xbf16, #tpu.memory_space<vmem>>, vector<1x128xbf16>
    %224 = arith.extf %222 : vector<68x1xbf16> to vector<68x1xf32>
    %225 = arith.extf %223 : vector<1x128xbf16> to vector<1x128xf32>
    %226 = vector.broadcast %224 : vector<68x1xf32> to vector<68x128xf32>
    %227 = vector.broadcast %225 : vector<1x128xf32> to vector<68x128xf32>
    %228 = arith.mulf %226, %227 : vector<68x128xf32>
    %229 = arith.addf %220, %228 : vector<68x128xf32>
    %c0_99 = arith.constant 0 : index
    %c292 = arith.constant 292 : index
    %c0_100 = arith.constant 0 : index
    %230 = vector.load %arg1[%c0_99, %c292, %c0_100] : memref<1x362x1xbf16, #tpu.memory_space<vmem>>, vector<1x68x1xbf16>
    %231 = vector.shape_cast %230 : vector<1x68x1xbf16> to vector<68x1xbf16>
    %c6_101 = arith.constant 6 : index
    %c0_102 = arith.constant 0 : index
    %232 = vector.load %arg2[%c6_101, %c0_102] : memref<9x128xbf16, #tpu.memory_space<vmem>>, vector<1x128xbf16>
    %233 = arith.extf %231 : vector<68x1xbf16> to vector<68x1xf32>
    %234 = arith.extf %232 : vector<1x128xbf16> to vector<1x128xf32>
    %235 = vector.broadcast %233 : vector<68x1xf32> to vector<68x128xf32>
    %236 = vector.broadcast %234 : vector<1x128xf32> to vector<68x128xf32>
    %237 = arith.mulf %235, %236 : vector<68x128xf32>
    %238 = arith.addf %229, %237 : vector<68x128xf32>
    %c0_103 = arith.constant 0 : index
    %c293 = arith.constant 293 : index
    %c0_104 = arith.constant 0 : index
    %239 = vector.load %arg1[%c0_103, %c293, %c0_104] : memref<1x362x1xbf16, #tpu.memory_space<vmem>>, vector<1x68x1xbf16>
    %240 = vector.shape_cast %239 : vector<1x68x1xbf16> to vector<68x1xbf16>
    %c7_105 = arith.constant 7 : index
    %c0_106 = arith.constant 0 : index
    %241 = vector.load %arg2[%c7_105, %c0_106] : memref<9x128xbf16, #tpu.memory_space<vmem>>, vector<1x128xbf16>
    %242 = arith.extf %240 : vector<68x1xbf16> to vector<68x1xf32>
    %243 = arith.extf %241 : vector<1x128xbf16> to vector<1x128xf32>
    %244 = vector.broadcast %242 : vector<68x1xf32> to vector<68x128xf32>
    %245 = vector.broadcast %243 : vector<1x128xf32> to vector<68x128xf32>
    %246 = arith.mulf %244, %245 : vector<68x128xf32>
    %247 = arith.addf %238, %246 : vector<68x128xf32>
    %c0_107 = arith.constant 0 : index
    %c294 = arith.constant 294 : index
    %c0_108 = arith.constant 0 : index
    %248 = vector.load %arg1[%c0_107, %c294, %c0_108] : memref<1x362x1xbf16, #tpu.memory_space<vmem>>, vector<1x68x1xbf16>
    %249 = vector.shape_cast %248 : vector<1x68x1xbf16> to vector<68x1xbf16>
    %c8_109 = arith.constant 8 : index
    %c0_110 = arith.constant 0 : index
    %250 = vector.load %arg2[%c8_109, %c0_110] : memref<9x128xbf16, #tpu.memory_space<vmem>>, vector<1x128xbf16>
    %251 = arith.extf %249 : vector<68x1xbf16> to vector<68x1xf32>
    %252 = arith.extf %250 : vector<1x128xbf16> to vector<1x128xf32>
    %253 = vector.broadcast %251 : vector<68x1xf32> to vector<68x128xf32>
    %254 = vector.broadcast %252 : vector<1x128xf32> to vector<68x128xf32>
    %255 = arith.mulf %253, %254 : vector<68x128xf32>
    %256 = arith.addf %247, %255 : vector<68x128xf32>
    %257 = vector.broadcast %0 : vector<1x128xf32> to vector<68x128xf32>
    %258 = arith.addf %256, %257 : vector<68x128xf32>
    %cst_111 = arith.constant 0.000000e+00 : f32
    %259 = vector.broadcast %cst_111 : f32 to vector<68x128xf32>
    %260 = arith.maximumf %258, %259 : vector<68x128xf32>
    %261 = arith.truncf %260 : vector<68x128xf32> to vector<68x128xbf16>
    %c0_112 = arith.constant 0 : index
    %c256_113 = arith.constant 256 : index
    %c0_114 = arith.constant 0 : index
    %262 = vector.load %arg4[%c0_112, %c256_113, %c0_114] : memref<1x324x128xbf16, #tpu.memory_space<vmem>>, vector<1x68x128xbf16>
    %263 = vector.shape_cast %262 : vector<1x68x128xbf16> to vector<68x128xbf16>
    %264 = vector.shape_cast %261 : vector<68x128xbf16> to vector<1x68x128xbf16>
    tpu.vector_store %arg4[%c0_112, %c256_113, %c0_114], %264 {strides = array<i32>} : memref<1x324x128xbf16, #tpu.memory_space<vmem>>, vector<1x68x128xbf16>,
    return
  }
  func.func @transform_0(%arg0: i32) -> (i32, i32, i32) {
    %c0_i32 = arith.constant 0 : i32
    %c0_i32_0 = arith.constant 0 : i32
    %c0_i32_1 = arith.constant 0 : i32
    return %arg0, %c0_i32, %c0_i32_0 : i32, i32, i32
  }
  func.func @transform_1(%arg0: i32) -> (i32, i32) {
    %c0_i32 = arith.constant 0 : i32
    %c0_i32_0 = arith.constant 0 : i32
    %c0_i32_1 = arith.constant 0 : i32
    return %c0_i32, %c0_i32_0 : i32, i32
  }
  func.func @transform_2(%arg0: i32) -> (i32, i32) {
    %c0_i32 = arith.constant 0 : i32
    %c0_i32_0 = arith.constant 0 : i32
    %c0_i32_1 = arith.constant 0 : i32
    return %c0_i32, %c0_i32_0 : i32, i32
  }
  func.func @transform_3(%arg0: i32) -> (i32, i32, i32) {
    %c0_i32 = arith.constant 0 : i32
    %c0_i32_0 = arith.constant 0 : i32
    %c0_i32_1 = arith.constant 0 : i32
    return %arg0, %c0_i32, %c0_i32_0 : i32, i32, i32
  }
}

module attributes {stable_mosaic.version = 11 : i64} {
  func.func @conv3x3_relu_kernel(%arg0: i32, %arg1: memref<1x122x128xbf16, #tpu.memory_space<vmem>>, %arg2: memref<1152x128xbf16, #tpu.memory_space<vmem>>, %arg3: memref<1x128xf32, #tpu.memory_space<vmem>>, %arg4: memref<1x100x128xbf16, #tpu.memory_space<vmem>>) attributes {dimension_semantics = [#tpu.dimension_semantics<parallel>], iteration_bounds = array<i64: 2>, scalar_prefetch = 0 : i64, scratch_operands = 0 : i64, tpu.core_type = #tpu.core_type<tc>, window_params = [{transform_indices = @transform_0, window_bounds = array<i64: 1, 122, 128>}, {pipeline_mode = #tpu.pipeline_mode<synchronous>, transform_indices = @transform_1, window_bounds = array<i64: 1152, 128>}, {pipeline_mode = #tpu.pipeline_mode<synchronous>, transform_indices = @transform_2, window_bounds = array<i64: 1, 128>}, {transform_indices = @transform_3, window_bounds = array<i64: 1, 100, 128>}]} {
    %c0 = arith.constant 0 : index
    %c0_0 = arith.constant 0 : index
    %0 = vector.load %arg3[%c0, %c0_0] : memref<1x128xf32, #tpu.memory_space<vmem>>, vector<1x128xf32>
    %c0_1 = arith.constant 0 : index
    %c0_2 = arith.constant 0 : index
    %c0_3 = arith.constant 0 : index
    %1 = vector.load %arg1[%c0_1, %c0_2, %c0_3] : memref<1x122x128xbf16, #tpu.memory_space<vmem>>, vector<1x100x128xbf16>
    %2 = vector.shape_cast %1 : vector<1x100x128xbf16> to vector<100x128xbf16>
    %c0_4 = arith.constant 0 : index
    %c0_5 = arith.constant 0 : index
    %3 = vector.load %arg2[%c0_4, %c0_5] : memref<1152x128xbf16, #tpu.memory_space<vmem>>, vector<128x128xbf16>
    %cst = arith.constant dense<0.000000e+00> : vector<100x128xf32>
    %4 = tpu.matmul %2, %3, %cst {dimension_numbers = #tpu.dot_dimension_numbers<[1], [0], [0], [1], [0, 0, 1, 1], [], []>} : vector<100x128xbf16>, vector<128x128xbf16>, vector<100x128xf32> -> vector<100x128xf32>
    %c0_6 = arith.constant 0 : index
    %c1 = arith.constant 1 : index
    %c0_7 = arith.constant 0 : index
    %5 = vector.load %arg1[%c0_6, %c1, %c0_7] : memref<1x122x128xbf16, #tpu.memory_space<vmem>>, vector<1x100x128xbf16>
    %6 = vector.shape_cast %5 : vector<1x100x128xbf16> to vector<100x128xbf16>
    %c128 = arith.constant 128 : index
    %c0_8 = arith.constant 0 : index
    %7 = vector.load %arg2[%c128, %c0_8] : memref<1152x128xbf16, #tpu.memory_space<vmem>>, vector<128x128xbf16>
    %cst_9 = arith.constant dense<0.000000e+00> : vector<100x128xf32>
    %8 = tpu.matmul %6, %7, %cst_9 {dimension_numbers = #tpu.dot_dimension_numbers<[1], [0], [0], [1], [0, 0, 1, 1], [], []>} : vector<100x128xbf16>, vector<128x128xbf16>, vector<100x128xf32> -> vector<100x128xf32>
    %9 = arith.addf %4, %8 : vector<100x128xf32>
    %c0_10 = arith.constant 0 : index
    %c2 = arith.constant 2 : index
    %c0_11 = arith.constant 0 : index
    %10 = vector.load %arg1[%c0_10, %c2, %c0_11] : memref<1x122x128xbf16, #tpu.memory_space<vmem>>, vector<1x100x128xbf16>
    %11 = vector.shape_cast %10 : vector<1x100x128xbf16> to vector<100x128xbf16>
    %c256 = arith.constant 256 : index
    %c0_12 = arith.constant 0 : index
    %12 = vector.load %arg2[%c256, %c0_12] : memref<1152x128xbf16, #tpu.memory_space<vmem>>, vector<128x128xbf16>
    %cst_13 = arith.constant dense<0.000000e+00> : vector<100x128xf32>
    %13 = tpu.matmul %11, %12, %cst_13 {dimension_numbers = #tpu.dot_dimension_numbers<[1], [0], [0], [1], [0, 0, 1, 1], [], []>} : vector<100x128xbf16>, vector<128x128xbf16>, vector<100x128xf32> -> vector<100x128xf32>
    %14 = arith.addf %9, %13 : vector<100x128xf32>
    %c0_14 = arith.constant 0 : index
    %c10 = arith.constant 10 : index
    %c0_15 = arith.constant 0 : index
    %15 = vector.load %arg1[%c0_14, %c10, %c0_15] : memref<1x122x128xbf16, #tpu.memory_space<vmem>>, vector<1x100x128xbf16>
    %16 = vector.shape_cast %15 : vector<1x100x128xbf16> to vector<100x128xbf16>
    %c384 = arith.constant 384 : index
    %c0_16 = arith.constant 0 : index
    %17 = vector.load %arg2[%c384, %c0_16] : memref<1152x128xbf16, #tpu.memory_space<vmem>>, vector<128x128xbf16>
    %cst_17 = arith.constant dense<0.000000e+00> : vector<100x128xf32>
    %18 = tpu.matmul %16, %17, %cst_17 {dimension_numbers = #tpu.dot_dimension_numbers<[1], [0], [0], [1], [0, 0, 1, 1], [], []>} : vector<100x128xbf16>, vector<128x128xbf16>, vector<100x128xf32> -> vector<100x128xf32>
    %19 = arith.addf %14, %18 : vector<100x128xf32>
    %c0_18 = arith.constant 0 : index
    %c11 = arith.constant 11 : index
    %c0_19 = arith.constant 0 : index
    %20 = vector.load %arg1[%c0_18, %c11, %c0_19] : memref<1x122x128xbf16, #tpu.memory_space<vmem>>, vector<1x100x128xbf16>
    %21 = vector.shape_cast %20 : vector<1x100x128xbf16> to vector<100x128xbf16>
    %c512 = arith.constant 512 : index
    %c0_20 = arith.constant 0 : index
    %22 = vector.load %arg2[%c512, %c0_20] : memref<1152x128xbf16, #tpu.memory_space<vmem>>, vector<128x128xbf16>
    %cst_21 = arith.constant dense<0.000000e+00> : vector<100x128xf32>
    %23 = tpu.matmul %21, %22, %cst_21 {dimension_numbers = #tpu.dot_dimension_numbers<[1], [0], [0], [1], [0, 0, 1, 1], [], []>} : vector<100x128xbf16>, vector<128x128xbf16>, vector<100x128xf32> -> vector<100x128xf32>
    %24 = arith.addf %19, %23 : vector<100x128xf32>
    %c0_22 = arith.constant 0 : index
    %c12 = arith.constant 12 : index
    %c0_23 = arith.constant 0 : index
    %25 = vector.load %arg1[%c0_22, %c12, %c0_23] : memref<1x122x128xbf16, #tpu.memory_space<vmem>>, vector<1x100x128xbf16>
    %26 = vector.shape_cast %25 : vector<1x100x128xbf16> to vector<100x128xbf16>
    %c640 = arith.constant 640 : index
    %c0_24 = arith.constant 0 : index
    %27 = vector.load %arg2[%c640, %c0_24] : memref<1152x128xbf16, #tpu.memory_space<vmem>>, vector<128x128xbf16>
    %cst_25 = arith.constant dense<0.000000e+00> : vector<100x128xf32>
    %28 = tpu.matmul %26, %27, %cst_25 {dimension_numbers = #tpu.dot_dimension_numbers<[1], [0], [0], [1], [0, 0, 1, 1], [], []>} : vector<100x128xbf16>, vector<128x128xbf16>, vector<100x128xf32> -> vector<100x128xf32>
    %29 = arith.addf %24, %28 : vector<100x128xf32>
    %c0_26 = arith.constant 0 : index
    %c20 = arith.constant 20 : index
    %c0_27 = arith.constant 0 : index
    %30 = vector.load %arg1[%c0_26, %c20, %c0_27] : memref<1x122x128xbf16, #tpu.memory_space<vmem>>, vector<1x100x128xbf16>
    %31 = vector.shape_cast %30 : vector<1x100x128xbf16> to vector<100x128xbf16>
    %c768 = arith.constant 768 : index
    %c0_28 = arith.constant 0 : index
    %32 = vector.load %arg2[%c768, %c0_28] : memref<1152x128xbf16, #tpu.memory_space<vmem>>, vector<128x128xbf16>
    %cst_29 = arith.constant dense<0.000000e+00> : vector<100x128xf32>
    %33 = tpu.matmul %31, %32, %cst_29 {dimension_numbers = #tpu.dot_dimension_numbers<[1], [0], [0], [1], [0, 0, 1, 1], [], []>} : vector<100x128xbf16>, vector<128x128xbf16>, vector<100x128xf32> -> vector<100x128xf32>
    %34 = arith.addf %29, %33 : vector<100x128xf32>
    %c0_30 = arith.constant 0 : index
    %c21 = arith.constant 21 : index
    %c0_31 = arith.constant 0 : index
    %35 = vector.load %arg1[%c0_30, %c21, %c0_31] : memref<1x122x128xbf16, #tpu.memory_space<vmem>>, vector<1x100x128xbf16>
    %36 = vector.shape_cast %35 : vector<1x100x128xbf16> to vector<100x128xbf16>
    %c896 = arith.constant 896 : index
    %c0_32 = arith.constant 0 : index
    %37 = vector.load %arg2[%c896, %c0_32] : memref<1152x128xbf16, #tpu.memory_space<vmem>>, vector<128x128xbf16>
    %cst_33 = arith.constant dense<0.000000e+00> : vector<100x128xf32>
    %38 = tpu.matmul %36, %37, %cst_33 {dimension_numbers = #tpu.dot_dimension_numbers<[1], [0], [0], [1], [0, 0, 1, 1], [], []>} : vector<100x128xbf16>, vector<128x128xbf16>, vector<100x128xf32> -> vector<100x128xf32>
    %39 = arith.addf %34, %38 : vector<100x128xf32>
    %c0_34 = arith.constant 0 : index
    %c22 = arith.constant 22 : index
    %c0_35 = arith.constant 0 : index
    %40 = vector.load %arg1[%c0_34, %c22, %c0_35] : memref<1x122x128xbf16, #tpu.memory_space<vmem>>, vector<1x100x128xbf16>
    %41 = vector.shape_cast %40 : vector<1x100x128xbf16> to vector<100x128xbf16>
    %c1024 = arith.constant 1024 : index
    %c0_36 = arith.constant 0 : index
    %42 = vector.load %arg2[%c1024, %c0_36] : memref<1152x128xbf16, #tpu.memory_space<vmem>>, vector<128x128xbf16>
    %cst_37 = arith.constant dense<0.000000e+00> : vector<100x128xf32>
    %43 = tpu.matmul %41, %42, %cst_37 {dimension_numbers = #tpu.dot_dimension_numbers<[1], [0], [0], [1], [0, 0, 1, 1], [], []>} : vector<100x128xbf16>, vector<128x128xbf16>, vector<100x128xf32> -> vector<100x128xf32>
    %44 = arith.addf %39, %43 : vector<100x128xf32>
    %45 = vector.broadcast %0 : vector<1x128xf32> to vector<100x128xf32>
    %46 = arith.addf %44, %45 : vector<100x128xf32>
    %cst_38 = arith.constant 0.000000e+00 : f32
    %47 = vector.broadcast %cst_38 : f32 to vector<100x128xf32>
    %48 = arith.maximumf %46, %47 : vector<100x128xf32>
    %49 = arith.truncf %48 : vector<100x128xf32> to vector<100x128xbf16>
    %c0_39 = arith.constant 0 : index
    %c0_40 = arith.constant 0 : index
    %c0_41 = arith.constant 0 : index
    %50 = vector.load %arg4[%c0_39, %c0_40, %c0_41] : memref<1x100x128xbf16, #tpu.memory_space<vmem>>, vector<1x100x128xbf16>
    %51 = vector.shape_cast %50 : vector<1x100x128xbf16> to vector<100x128xbf16>
    %52 = vector.shape_cast %49 : vector<100x128xbf16> to vector<1x100x128xbf16>
    tpu.vector_store %arg4[%c0_39, %c0_40, %c0_41], %52 {strides = array<i32>} : memref<1x100x128xbf16, #tpu.memory_space<vmem>>, vector<1x100x128xbf16>,
    return
  }
  func.func @transform_0(%arg0: i32) -> (i32, i32, i32) {
    %c0_i32 = arith.constant 0 : i32
    %c0_i32_0 = arith.constant 0 : i32
    %c0_i32_1 = arith.constant 0 : i32
    return %arg0, %c0_i32, %c0_i32_0 : i32, i32, i32
  }
  func.func @transform_1(%arg0: i32) -> (i32, i32) {
    %c0_i32 = arith.constant 0 : i32
    %c0_i32_0 = arith.constant 0 : i32
    %c0_i32_1 = arith.constant 0 : i32
    return %c0_i32, %c0_i32_0 : i32, i32
  }
  func.func @transform_2(%arg0: i32) -> (i32, i32) {
    %c0_i32 = arith.constant 0 : i32
    %c0_i32_0 = arith.constant 0 : i32
    %c0_i32_1 = arith.constant 0 : i32
    return %c0_i32, %c0_i32_0 : i32, i32
  }
  func.func @transform_3(%arg0: i32) -> (i32, i32, i32) {
    %c0_i32 = arith.constant 0 : i32
    %c0_i32_0 = arith.constant 0 : i32
    %c0_i32_1 = arith.constant 0 : i32
    return %arg0, %c0_i32, %c0_i32_0 : i32, i32, i32
  }
}

module attributes {stable_mosaic.version = 11 : i64} {
  func.func @conv3x3_relu_kernel(%arg0: i32, %arg1: memref<1x50x128xbf16, #tpu.memory_space<vmem>>, %arg2: memref<1152x128xbf16, #tpu.memory_space<vmem>>, %arg3: memref<1x128xf32, #tpu.memory_space<vmem>>, %arg4: memref<1x36x128xbf16, #tpu.memory_space<vmem>>) attributes {dimension_semantics = [#tpu.dimension_semantics<parallel>], iteration_bounds = array<i64: 2>, scalar_prefetch = 0 : i64, scratch_operands = 0 : i64, tpu.core_type = #tpu.core_type<tc>, window_params = [{transform_indices = @transform_0, window_bounds = array<i64: 1, 50, 128>}, {pipeline_mode = #tpu.pipeline_mode<synchronous>, transform_indices = @transform_1, window_bounds = array<i64: 1152, 128>}, {pipeline_mode = #tpu.pipeline_mode<synchronous>, transform_indices = @transform_2, window_bounds = array<i64: 1, 128>}, {transform_indices = @transform_3, window_bounds = array<i64: 1, 36, 128>}]} {
    %c0 = arith.constant 0 : index
    %c0_0 = arith.constant 0 : index
    %0 = vector.load %arg3[%c0, %c0_0] : memref<1x128xf32, #tpu.memory_space<vmem>>, vector<1x128xf32>
    %c0_1 = arith.constant 0 : index
    %c0_2 = arith.constant 0 : index
    %c0_3 = arith.constant 0 : index
    %1 = vector.load %arg1[%c0_1, %c0_2, %c0_3] : memref<1x50x128xbf16, #tpu.memory_space<vmem>>, vector<1x36x128xbf16>
    %2 = vector.shape_cast %1 : vector<1x36x128xbf16> to vector<36x128xbf16>
    %c0_4 = arith.constant 0 : index
    %c0_5 = arith.constant 0 : index
    %3 = vector.load %arg2[%c0_4, %c0_5] : memref<1152x128xbf16, #tpu.memory_space<vmem>>, vector<128x128xbf16>
    %cst = arith.constant dense<0.000000e+00> : vector<36x128xf32>
    %4 = tpu.matmul %2, %3, %cst {dimension_numbers = #tpu.dot_dimension_numbers<[1], [0], [0], [1], [0, 0, 1, 1], [], []>} : vector<36x128xbf16>, vector<128x128xbf16>, vector<36x128xf32> -> vector<36x128xf32>
    %c0_6 = arith.constant 0 : index
    %c1 = arith.constant 1 : index
    %c0_7 = arith.constant 0 : index
    %5 = vector.load %arg1[%c0_6, %c1, %c0_7] : memref<1x50x128xbf16, #tpu.memory_space<vmem>>, vector<1x36x128xbf16>
    %6 = vector.shape_cast %5 : vector<1x36x128xbf16> to vector<36x128xbf16>
    %c128 = arith.constant 128 : index
    %c0_8 = arith.constant 0 : index
    %7 = vector.load %arg2[%c128, %c0_8] : memref<1152x128xbf16, #tpu.memory_space<vmem>>, vector<128x128xbf16>
    %cst_9 = arith.constant dense<0.000000e+00> : vector<36x128xf32>
    %8 = tpu.matmul %6, %7, %cst_9 {dimension_numbers = #tpu.dot_dimension_numbers<[1], [0], [0], [1], [0, 0, 1, 1], [], []>} : vector<36x128xbf16>, vector<128x128xbf16>, vector<36x128xf32> -> vector<36x128xf32>
    %9 = arith.addf %4, %8 : vector<36x128xf32>
    %c0_10 = arith.constant 0 : index
    %c2 = arith.constant 2 : index
    %c0_11 = arith.constant 0 : index
    %10 = vector.load %arg1[%c0_10, %c2, %c0_11] : memref<1x50x128xbf16, #tpu.memory_space<vmem>>, vector<1x36x128xbf16>
    %11 = vector.shape_cast %10 : vector<1x36x128xbf16> to vector<36x128xbf16>
    %c256 = arith.constant 256 : index
    %c0_12 = arith.constant 0 : index
    %12 = vector.load %arg2[%c256, %c0_12] : memref<1152x128xbf16, #tpu.memory_space<vmem>>, vector<128x128xbf16>
    %cst_13 = arith.constant dense<0.000000e+00> : vector<36x128xf32>
    %13 = tpu.matmul %11, %12, %cst_13 {dimension_numbers = #tpu.dot_dimension_numbers<[1], [0], [0], [1], [0, 0, 1, 1], [], []>} : vector<36x128xbf16>, vector<128x128xbf16>, vector<36x128xf32> -> vector<36x128xf32>
    %14 = arith.addf %9, %13 : vector<36x128xf32>
    %c0_14 = arith.constant 0 : index
    %c6 = arith.constant 6 : index
    %c0_15 = arith.constant 0 : index
    %15 = vector.load %arg1[%c0_14, %c6, %c0_15] : memref<1x50x128xbf16, #tpu.memory_space<vmem>>, vector<1x36x128xbf16>
    %16 = vector.shape_cast %15 : vector<1x36x128xbf16> to vector<36x128xbf16>
    %c384 = arith.constant 384 : index
    %c0_16 = arith.constant 0 : index
    %17 = vector.load %arg2[%c384, %c0_16] : memref<1152x128xbf16, #tpu.memory_space<vmem>>, vector<128x128xbf16>
    %cst_17 = arith.constant dense<0.000000e+00> : vector<36x128xf32>
    %18 = tpu.matmul %16, %17, %cst_17 {dimension_numbers = #tpu.dot_dimension_numbers<[1], [0], [0], [1], [0, 0, 1, 1], [], []>} : vector<36x128xbf16>, vector<128x128xbf16>, vector<36x128xf32> -> vector<36x128xf32>
    %19 = arith.addf %14, %18 : vector<36x128xf32>
    %c0_18 = arith.constant 0 : index
    %c7 = arith.constant 7 : index
    %c0_19 = arith.constant 0 : index
    %20 = vector.load %arg1[%c0_18, %c7, %c0_19] : memref<1x50x128xbf16, #tpu.memory_space<vmem>>, vector<1x36x128xbf16>
    %21 = vector.shape_cast %20 : vector<1x36x128xbf16> to vector<36x128xbf16>
    %c512 = arith.constant 512 : index
    %c0_20 = arith.constant 0 : index
    %22 = vector.load %arg2[%c512, %c0_20] : memref<1152x128xbf16, #tpu.memory_space<vmem>>, vector<128x128xbf16>
    %cst_21 = arith.constant dense<0.000000e+00> : vector<36x128xf32>
    %23 = tpu.matmul %21, %22, %cst_21 {dimension_numbers = #tpu.dot_dimension_numbers<[1], [0], [0], [1], [0, 0, 1, 1], [], []>} : vector<36x128xbf16>, vector<128x128xbf16>, vector<36x128xf32> -> vector<36x128xf32>
    %24 = arith.addf %19, %23 : vector<36x128xf32>
    %c0_22 = arith.constant 0 : index
    %c8 = arith.constant 8 : index
    %c0_23 = arith.constant 0 : index
    %25 = vector.load %arg1[%c0_22, %c8, %c0_23] : memref<1x50x128xbf16, #tpu.memory_space<vmem>>, vector<1x36x128xbf16>
    %26 = vector.shape_cast %25 : vector<1x36x128xbf16> to vector<36x128xbf16>
    %c640 = arith.constant 640 : index
    %c0_24 = arith.constant 0 : index
    %27 = vector.load %arg2[%c640, %c0_24] : memref<1152x128xbf16, #tpu.memory_space<vmem>>, vector<128x128xbf16>
    %cst_25 = arith.constant dense<0.000000e+00> : vector<36x128xf32>
    %28 = tpu.matmul %26, %27, %cst_25 {dimension_numbers = #tpu.dot_dimension_numbers<[1], [0], [0], [1], [0, 0, 1, 1], [], []>} : vector<36x128xbf16>, vector<128x128xbf16>, vector<36x128xf32> -> vector<36x128xf32>
    %29 = arith.addf %24, %28 : vector<36x128xf32>
    %c0_26 = arith.constant 0 : index
    %c12 = arith.constant 12 : index
    %c0_27 = arith.constant 0 : index
    %30 = vector.load %arg1[%c0_26, %c12, %c0_27] : memref<1x50x128xbf16, #tpu.memory_space<vmem>>, vector<1x36x128xbf16>
    %31 = vector.shape_cast %30 : vector<1x36x128xbf16> to vector<36x128xbf16>
    %c768 = arith.constant 768 : index
    %c0_28 = arith.constant 0 : index
    %32 = vector.load %arg2[%c768, %c0_28] : memref<1152x128xbf16, #tpu.memory_space<vmem>>, vector<128x128xbf16>
    %cst_29 = arith.constant dense<0.000000e+00> : vector<36x128xf32>
    %33 = tpu.matmul %31, %32, %cst_29 {dimension_numbers = #tpu.dot_dimension_numbers<[1], [0], [0], [1], [0, 0, 1, 1], [], []>} : vector<36x128xbf16>, vector<128x128xbf16>, vector<36x128xf32> -> vector<36x128xf32>
    %34 = arith.addf %29, %33 : vector<36x128xf32>
    %c0_30 = arith.constant 0 : index
    %c13 = arith.constant 13 : index
    %c0_31 = arith.constant 0 : index
    %35 = vector.load %arg1[%c0_30, %c13, %c0_31] : memref<1x50x128xbf16, #tpu.memory_space<vmem>>, vector<1x36x128xbf16>
    %36 = vector.shape_cast %35 : vector<1x36x128xbf16> to vector<36x128xbf16>
    %c896 = arith.constant 896 : index
    %c0_32 = arith.constant 0 : index
    %37 = vector.load %arg2[%c896, %c0_32] : memref<1152x128xbf16, #tpu.memory_space<vmem>>, vector<128x128xbf16>
    %cst_33 = arith.constant dense<0.000000e+00> : vector<36x128xf32>
    %38 = tpu.matmul %36, %37, %cst_33 {dimension_numbers = #tpu.dot_dimension_numbers<[1], [0], [0], [1], [0, 0, 1, 1], [], []>} : vector<36x128xbf16>, vector<128x128xbf16>, vector<36x128xf32> -> vector<36x128xf32>
    %39 = arith.addf %34, %38 : vector<36x128xf32>
    %c0_34 = arith.constant 0 : index
    %c14 = arith.constant 14 : index
    %c0_35 = arith.constant 0 : index
    %40 = vector.load %arg1[%c0_34, %c14, %c0_35] : memref<1x50x128xbf16, #tpu.memory_space<vmem>>, vector<1x36x128xbf16>
    %41 = vector.shape_cast %40 : vector<1x36x128xbf16> to vector<36x128xbf16>
    %c1024 = arith.constant 1024 : index
    %c0_36 = arith.constant 0 : index
    %42 = vector.load %arg2[%c1024, %c0_36] : memref<1152x128xbf16, #tpu.memory_space<vmem>>, vector<128x128xbf16>
    %cst_37 = arith.constant dense<0.000000e+00> : vector<36x128xf32>
    %43 = tpu.matmul %41, %42, %cst_37 {dimension_numbers = #tpu.dot_dimension_numbers<[1], [0], [0], [1], [0, 0, 1, 1], [], []>} : vector<36x128xbf16>, vector<128x128xbf16>, vector<36x128xf32> -> vector<36x128xf32>
    %44 = arith.addf %39, %43 : vector<36x128xf32>
    %45 = vector.broadcast %0 : vector<1x128xf32> to vector<36x128xf32>
    %46 = arith.addf %44, %45 : vector<36x128xf32>
    %cst_38 = arith.constant 0.000000e+00 : f32
    %47 = vector.broadcast %cst_38 : f32 to vector<36x128xf32>
    %48 = arith.maximumf %46, %47 : vector<36x128xf32>
    %49 = arith.truncf %48 : vector<36x128xf32> to vector<36x128xbf16>
    %c0_39 = arith.constant 0 : index
    %c0_40 = arith.constant 0 : index
    %c0_41 = arith.constant 0 : index
    %50 = vector.load %arg4[%c0_39, %c0_40, %c0_41] : memref<1x36x128xbf16, #tpu.memory_space<vmem>>, vector<1x36x128xbf16>
    %51 = vector.shape_cast %50 : vector<1x36x128xbf16> to vector<36x128xbf16>
    %52 = vector.shape_cast %49 : vector<36x128xbf16> to vector<1x36x128xbf16>
    tpu.vector_store %arg4[%c0_39, %c0_40, %c0_41], %52 {strides = array<i32>} : memref<1x36x128xbf16, #tpu.memory_space<vmem>>, vector<1x36x128xbf16>,
    return
  }
  func.func @transform_0(%arg0: i32) -> (i32, i32, i32) {
    %c0_i32 = arith.constant 0 : i32
    %c0_i32_0 = arith.constant 0 : i32
    %c0_i32_1 = arith.constant 0 : i32
    return %arg0, %c0_i32, %c0_i32_0 : i32, i32, i32
  }
  func.func @transform_1(%arg0: i32) -> (i32, i32) {
    %c0_i32 = arith.constant 0 : i32
    %c0_i32_0 = arith.constant 0 : i32
    %c0_i32_1 = arith.constant 0 : i32
    return %c0_i32, %c0_i32_0 : i32, i32
  }
  func.func @transform_2(%arg0: i32) -> (i32, i32) {
    %c0_i32 = arith.constant 0 : i32
    %c0_i32_0 = arith.constant 0 : i32
    %c0_i32_1 = arith.constant 0 : i32
    return %c0_i32, %c0_i32_0 : i32, i32
  }
  func.func @transform_3(%arg0: i32) -> (i32, i32, i32) {
    %c0_i32 = arith.constant 0 : i32
    %c0_i32_0 = arith.constant 0 : i32
    %c0_i32_1 = arith.constant 0 : i32
    return %arg0, %c0_i32, %c0_i32_0 : i32, i32, i32
  }
}

module attributes {stable_mosaic.version = 11 : i64} {
  func.func @attn_pool_fc_kernel(%arg0: i32, %arg1: memref<1x4x128xbf16, #tpu.memory_space<vmem>>, %arg2: memref<128x384xbf16, #tpu.memory_space<vmem>>, %arg3: memref<1x384xf32, #tpu.memory_space<vmem>>, %arg4: memref<128x128xbf16, #tpu.memory_space<vmem>>, %arg5: memref<1x128xf32, #tpu.memory_space<vmem>>, %arg6: memref<128x128xbf16, #tpu.memory_space<vmem>>, %arg7: memref<1x128xf32, #tpu.memory_space<vmem>>, %arg8: memref<1x1x128xf32, #tpu.memory_space<vmem>>) attributes {dimension_semantics = [#tpu.dimension_semantics<parallel>], iteration_bounds = array<i64: 2>, scalar_prefetch = 0 : i64, scratch_operands = 0 : i64, tpu.core_type = #tpu.core_type<tc>, window_params = [{transform_indices = @transform_0, window_bounds = array<i64: 1, 4, 128>}, {pipeline_mode = #tpu.pipeline_mode<synchronous>, transform_indices = @transform_1, window_bounds = array<i64: 128, 384>}, {pipeline_mode = #tpu.pipeline_mode<synchronous>, transform_indices = @transform_2, window_bounds = array<i64: 1, 384>}, {pipeline_mode = #tpu.pipeline_mode<synchronous>, transform_indices = @transform_3, window_bounds = array<i64: 128, 128>}, {pipeline_mode = #tpu.pipeline_mode<synchronous>, transform_indices = @transform_4, window_bounds = array<i64: 1, 128>}, {pipeline_mode = #tpu.pipeline_mode<synchronous>, transform_indices = @transform_5, window_bounds = array<i64: 128, 128>}, {pipeline_mode = #tpu.pipeline_mode<synchronous>, transform_indices = @transform_6, window_bounds = array<i64: 1, 128>}, {transform_indices = @transform_7, window_bounds = array<i64: 1, 1, 128>}]} {
    %c0 = arith.constant 0 : index
    %c0_0 = arith.constant 0 : index
    %c0_1 = arith.constant 0 : index
    %0 = vector.load %arg1[%c0, %c0_0, %c0_1] : memref<1x4x128xbf16, #tpu.memory_space<vmem>>, vector<1x4x128xbf16>
    %1 = vector.shape_cast %0 : vector<1x4x128xbf16> to vector<4x128xbf16>
    %c0_2 = arith.constant 0 : index
    %c0_3 = arith.constant 0 : index
    %2 = vector.load %arg2[%c0_2, %c0_3] : memref<128x384xbf16, #tpu.memory_space<vmem>>, vector<128x384xbf16>
    %cst = arith.constant dense<0.000000e+00> : vector<4x384xf32>
    %3 = tpu.matmul %1, %2, %cst {dimension_numbers = #tpu.dot_dimension_numbers<[1], [0], [0], [1], [0, 0, 1, 1], [], []>} : vector<4x128xbf16>, vector<128x384xbf16>, vector<4x384xf32> -> vector<4x384xf32>
    %c0_4 = arith.constant 0 : index
    %c0_5 = arith.constant 0 : index
    %4 = vector.load %arg3[%c0_4, %c0_5] : memref<1x384xf32, #tpu.memory_space<vmem>>, vector<1x384xf32>
    %5 = vector.broadcast %4 : vector<1x384xf32> to vector<4x384xf32>
    %6 = arith.addf %3, %5 : vector<4x384xf32>
    %7 = vector.extract_strided_slice %6 {offsets = [0, 0], sizes = [4, 128], strides = [1, 1]} : vector<4x384xf32> to vector<4x128xf32>
    %8 = vector.extract_strided_slice %6 {offsets = [0, 128], sizes = [4, 128], strides = [1, 1]} : vector<4x384xf32> to vector<4x128xf32>
    %9 = vector.extract_strided_slice %6 {offsets = [0, 256], sizes = [4, 128], strides = [1, 1]} : vector<4x384xf32> to vector<4x128xf32>
    %10 = vector.extract_strided_slice %7 {offsets = [0, 0], sizes = [4, 16], strides = [1, 1]} : vector<4x128xf32> to vector<4x16xf32>
    %11 = vector.extract_strided_slice %8 {offsets = [0, 0], sizes = [4, 16], strides = [1, 1]} : vector<4x128xf32> to vector<4x16xf32>
    %12 = vector.extract_strided_slice %9 {offsets = [0, 0], sizes = [4, 16], strides = [1, 1]} : vector<4x128xf32> to vector<4x16xf32>
    %cst_6 = arith.constant dense<0.000000e+00> : vector<4x4xf32>
    %13 = tpu.matmul %10, %11, %cst_6 {dimension_numbers = #tpu.dot_dimension_numbers<[1], [1], [0], [0], [0, 0, 1, 0], [], []>} : vector<4x16xf32>, vector<4x16xf32>, vector<4x4xf32> -> vector<4x4xf32>
    %cst_7 = arith.constant dense<0xFF800000> : vector<4xf32>
    %14 = vector.multi_reduction <maximumf>, %13, %cst_7 [1] : vector<4x4xf32> to vector<4xf32>
    %15 = vector.shape_cast %14 : vector<4xf32> to vector<4x1xf32>
    %16 = vector.broadcast %15 : vector<4x1xf32> to vector<4x4xf32>
    %17 = arith.subf %13, %16 : vector<4x4xf32>
    %18 = math.exp %17 : vector<4x4xf32>
    %cst_8 = arith.constant dense<0.000000e+00> : vector<4xf32>
    %19 = vector.multi_reduction <add>, %18, %cst_8 [1] : vector<4x4xf32> to vector<4xf32>
    %20 = vector.shape_cast %19 : vector<4xf32> to vector<4x1xf32>
    %21 = tpu.reciprocal %20 {approx = true} : vector<4x1xf32> -> vector<4x1xf32>
    %22 = vector.broadcast %21 : vector<4x1xf32> to vector<4x4xf32>
    %23 = arith.mulf %18, %22 : vector<4x4xf32>
    %cst_9 = arith.constant dense<0.000000e+00> : vector<4x16xf32>
    %24 = tpu.matmul %23, %12, %cst_9 {dimension_numbers = #tpu.dot_dimension_numbers<[1], [0], [0], [1], [0, 0, 1, 1], [], []>} : vector<4x4xf32>, vector<4x16xf32>, vector<4x16xf32> -> vector<4x16xf32>
    %cst_10 = arith.constant dense<0.000000e+00> : vector<16xf32>
    %25 = vector.multi_reduction <add>, %24, %cst_10 [0] : vector<4x16xf32> to vector<16xf32>
    %26 = vector.shape_cast %25 : vector<16xf32> to vector<1x16xf32>
    %cst_11 = arith.constant 4.000000e+00 : f32
    %27 = vector.broadcast %cst_11 : f32 to vector<1x16xf32>
    %28 = arith.divf %26, %27 : vector<1x16xf32>
    %c0_12 = arith.constant 0 : index
    %c0_13 = arith.constant 0 : index
    %29 = vector.load %arg4[%c0_12, %c0_13] : memref<128x128xbf16, #tpu.memory_space<vmem>>, vector<16x128xbf16>
    %cst_14 = arith.constant dense<0.000000e+00> : vector<1x128xf32>
    %30 = tpu.matmul %28, %29, %cst_14 {dimension_numbers = #tpu.dot_dimension_numbers<[1], [0], [0], [1], [0, 0, 1, 1], [], []>} : vector<1x16xf32>, vector<16x128xbf16>, vector<1x128xf32> -> vector<1x128xf32>
    %31 = vector.extract_strided_slice %7 {offsets = [0, 16], sizes = [4, 16], strides = [1, 1]} : vector<4x128xf32> to vector<4x16xf32>
    %32 = vector.extract_strided_slice %8 {offsets = [0, 16], sizes = [4, 16], strides = [1, 1]} : vector<4x128xf32> to vector<4x16xf32>
    %33 = vector.extract_strided_slice %9 {offsets = [0, 16], sizes = [4, 16], strides = [1, 1]} : vector<4x128xf32> to vector<4x16xf32>
    %cst_15 = arith.constant dense<0.000000e+00> : vector<4x4xf32>
    %34 = tpu.matmul %31, %32, %cst_15 {dimension_numbers = #tpu.dot_dimension_numbers<[1], [1], [0], [0], [0, 0, 1, 0], [], []>} : vector<4x16xf32>, vector<4x16xf32>, vector<4x4xf32> -> vector<4x4xf32>
    %cst_16 = arith.constant dense<0xFF800000> : vector<4xf32>
    %35 = vector.multi_reduction <maximumf>, %34, %cst_16 [1] : vector<4x4xf32> to vector<4xf32>
    %36 = vector.shape_cast %35 : vector<4xf32> to vector<4x1xf32>
    %37 = vector.broadcast %36 : vector<4x1xf32> to vector<4x4xf32>
    %38 = arith.subf %34, %37 : vector<4x4xf32>
    %39 = math.exp %38 : vector<4x4xf32>
    %cst_17 = arith.constant dense<0.000000e+00> : vector<4xf32>
    %40 = vector.multi_reduction <add>, %39, %cst_17 [1] : vector<4x4xf32> to vector<4xf32>
    %41 = vector.shape_cast %40 : vector<4xf32> to vector<4x1xf32>
    %42 = tpu.reciprocal %41 {approx = true} : vector<4x1xf32> -> vector<4x1xf32>
    %43 = vector.broadcast %42 : vector<4x1xf32> to vector<4x4xf32>
    %44 = arith.mulf %39, %43 : vector<4x4xf32>
    %cst_18 = arith.constant dense<0.000000e+00> : vector<4x16xf32>
    %45 = tpu.matmul %44, %33, %cst_18 {dimension_numbers = #tpu.dot_dimension_numbers<[1], [0], [0], [1], [0, 0, 1, 1], [], []>} : vector<4x4xf32>, vector<4x16xf32>, vector<4x16xf32> -> vector<4x16xf32>
    %cst_19 = arith.constant dense<0.000000e+00> : vector<16xf32>
    %46 = vector.multi_reduction <add>, %45, %cst_19 [0] : vector<4x16xf32> to vector<16xf32>
    %47 = vector.shape_cast %46 : vector<16xf32> to vector<1x16xf32>
    %cst_20 = arith.constant 4.000000e+00 : f32
    %48 = vector.broadcast %cst_20 : f32 to vector<1x16xf32>
    %49 = arith.divf %47, %48 : vector<1x16xf32>
    %c16 = arith.constant 16 : index
    %c0_21 = arith.constant 0 : index
    %50 = vector.load %arg4[%c16, %c0_21] : memref<128x128xbf16, #tpu.memory_space<vmem>>, vector<16x128xbf16>
    %cst_22 = arith.constant dense<0.000000e+00> : vector<1x128xf32>
    %51 = tpu.matmul %49, %50, %cst_22 {dimension_numbers = #tpu.dot_dimension_numbers<[1], [0], [0], [1], [0, 0, 1, 1], [], []>} : vector<1x16xf32>, vector<16x128xbf16>, vector<1x128xf32> -> vector<1x128xf32>
    %52 = arith.addf %30, %51 : vector<1x128xf32>
    %53 = vector.extract_strided_slice %7 {offsets = [0, 32], sizes = [4, 16], strides = [1, 1]} : vector<4x128xf32> to vector<4x16xf32>
    %54 = vector.extract_strided_slice %8 {offsets = [0, 32], sizes = [4, 16], strides = [1, 1]} : vector<4x128xf32> to vector<4x16xf32>
    %55 = vector.extract_strided_slice %9 {offsets = [0, 32], sizes = [4, 16], strides = [1, 1]} : vector<4x128xf32> to vector<4x16xf32>
    %cst_23 = arith.constant dense<0.000000e+00> : vector<4x4xf32>
    %56 = tpu.matmul %53, %54, %cst_23 {dimension_numbers = #tpu.dot_dimension_numbers<[1], [1], [0], [0], [0, 0, 1, 0], [], []>} : vector<4x16xf32>, vector<4x16xf32>, vector<4x4xf32> -> vector<4x4xf32>
    %cst_24 = arith.constant dense<0xFF800000> : vector<4xf32>
    %57 = vector.multi_reduction <maximumf>, %56, %cst_24 [1] : vector<4x4xf32> to vector<4xf32>
    %58 = vector.shape_cast %57 : vector<4xf32> to vector<4x1xf32>
    %59 = vector.broadcast %58 : vector<4x1xf32> to vector<4x4xf32>
    %60 = arith.subf %56, %59 : vector<4x4xf32>
    %61 = math.exp %60 : vector<4x4xf32>
    %cst_25 = arith.constant dense<0.000000e+00> : vector<4xf32>
    %62 = vector.multi_reduction <add>, %61, %cst_25 [1] : vector<4x4xf32> to vector<4xf32>
    %63 = vector.shape_cast %62 : vector<4xf32> to vector<4x1xf32>
    %64 = tpu.reciprocal %63 {approx = true} : vector<4x1xf32> -> vector<4x1xf32>
    %65 = vector.broadcast %64 : vector<4x1xf32> to vector<4x4xf32>
    %66 = arith.mulf %61, %65 : vector<4x4xf32>
    %cst_26 = arith.constant dense<0.000000e+00> : vector<4x16xf32>
    %67 = tpu.matmul %66, %55, %cst_26 {dimension_numbers = #tpu.dot_dimension_numbers<[1], [0], [0], [1], [0, 0, 1, 1], [], []>} : vector<4x4xf32>, vector<4x16xf32>, vector<4x16xf32> -> vector<4x16xf32>
    %cst_27 = arith.constant dense<0.000000e+00> : vector<16xf32>
    %68 = vector.multi_reduction <add>, %67, %cst_27 [0] : vector<4x16xf32> to vector<16xf32>
    %69 = vector.shape_cast %68 : vector<16xf32> to vector<1x16xf32>
    %cst_28 = arith.constant 4.000000e+00 : f32
    %70 = vector.broadcast %cst_28 : f32 to vector<1x16xf32>
    %71 = arith.divf %69, %70 : vector<1x16xf32>
    %c32 = arith.constant 32 : index
    %c0_29 = arith.constant 0 : index
    %72 = vector.load %arg4[%c32, %c0_29] : memref<128x128xbf16, #tpu.memory_space<vmem>>, vector<16x128xbf16>
    %cst_30 = arith.constant dense<0.000000e+00> : vector<1x128xf32>
    %73 = tpu.matmul %71, %72, %cst_30 {dimension_numbers = #tpu.dot_dimension_numbers<[1], [0], [0], [1], [0, 0, 1, 1], [], []>} : vector<1x16xf32>, vector<16x128xbf16>, vector<1x128xf32> -> vector<1x128xf32>
    %74 = arith.addf %52, %73 : vector<1x128xf32>
    %75 = vector.extract_strided_slice %7 {offsets = [0, 48], sizes = [4, 16], strides = [1, 1]} : vector<4x128xf32> to vector<4x16xf32>
    %76 = vector.extract_strided_slice %8 {offsets = [0, 48], sizes = [4, 16], strides = [1, 1]} : vector<4x128xf32> to vector<4x16xf32>
    %77 = vector.extract_strided_slice %9 {offsets = [0, 48], sizes = [4, 16], strides = [1, 1]} : vector<4x128xf32> to vector<4x16xf32>
    %cst_31 = arith.constant dense<0.000000e+00> : vector<4x4xf32>
    %78 = tpu.matmul %75, %76, %cst_31 {dimension_numbers = #tpu.dot_dimension_numbers<[1], [1], [0], [0], [0, 0, 1, 0], [], []>} : vector<4x16xf32>, vector<4x16xf32>, vector<4x4xf32> -> vector<4x4xf32>
    %cst_32 = arith.constant dense<0xFF800000> : vector<4xf32>
    %79 = vector.multi_reduction <maximumf>, %78, %cst_32 [1] : vector<4x4xf32> to vector<4xf32>
    %80 = vector.shape_cast %79 : vector<4xf32> to vector<4x1xf32>
    %81 = vector.broadcast %80 : vector<4x1xf32> to vector<4x4xf32>
    %82 = arith.subf %78, %81 : vector<4x4xf32>
    %83 = math.exp %82 : vector<4x4xf32>
    %cst_33 = arith.constant dense<0.000000e+00> : vector<4xf32>
    %84 = vector.multi_reduction <add>, %83, %cst_33 [1] : vector<4x4xf32> to vector<4xf32>
    %85 = vector.shape_cast %84 : vector<4xf32> to vector<4x1xf32>
    %86 = tpu.reciprocal %85 {approx = true} : vector<4x1xf32> -> vector<4x1xf32>
    %87 = vector.broadcast %86 : vector<4x1xf32> to vector<4x4xf32>
    %88 = arith.mulf %83, %87 : vector<4x4xf32>
    %cst_34 = arith.constant dense<0.000000e+00> : vector<4x16xf32>
    %89 = tpu.matmul %88, %77, %cst_34 {dimension_numbers = #tpu.dot_dimension_numbers<[1], [0], [0], [1], [0, 0, 1, 1], [], []>} : vector<4x4xf32>, vector<4x16xf32>, vector<4x16xf32> -> vector<4x16xf32>
    %cst_35 = arith.constant dense<0.000000e+00> : vector<16xf32>
    %90 = vector.multi_reduction <add>, %89, %cst_35 [0] : vector<4x16xf32> to vector<16xf32>
    %91 = vector.shape_cast %90 : vector<16xf32> to vector<1x16xf32>
    %cst_36 = arith.constant 4.000000e+00 : f32
    %92 = vector.broadcast %cst_36 : f32 to vector<1x16xf32>
    %93 = arith.divf %91, %92 : vector<1x16xf32>
    %c48 = arith.constant 48 : index
    %c0_37 = arith.constant 0 : index
    %94 = vector.load %arg4[%c48, %c0_37] : memref<128x128xbf16, #tpu.memory_space<vmem>>, vector<16x128xbf16>
    %cst_38 = arith.constant dense<0.000000e+00> : vector<1x128xf32>
    %95 = tpu.matmul %93, %94, %cst_38 {dimension_numbers = #tpu.dot_dimension_numbers<[1], [0], [0], [1], [0, 0, 1, 1], [], []>} : vector<1x16xf32>, vector<16x128xbf16>, vector<1x128xf32> -> vector<1x128xf32>
    %96 = arith.addf %74, %95 : vector<1x128xf32>
    %97 = vector.extract_strided_slice %7 {offsets = [0, 64], sizes = [4, 16], strides = [1, 1]} : vector<4x128xf32> to vector<4x16xf32>
    %98 = vector.extract_strided_slice %8 {offsets = [0, 64], sizes = [4, 16], strides = [1, 1]} : vector<4x128xf32> to vector<4x16xf32>
    %99 = vector.extract_strided_slice %9 {offsets = [0, 64], sizes = [4, 16], strides = [1, 1]} : vector<4x128xf32> to vector<4x16xf32>
    %cst_39 = arith.constant dense<0.000000e+00> : vector<4x4xf32>
    %100 = tpu.matmul %97, %98, %cst_39 {dimension_numbers = #tpu.dot_dimension_numbers<[1], [1], [0], [0], [0, 0, 1, 0], [], []>} : vector<4x16xf32>, vector<4x16xf32>, vector<4x4xf32> -> vector<4x4xf32>
    %cst_40 = arith.constant dense<0xFF800000> : vector<4xf32>
    %101 = vector.multi_reduction <maximumf>, %100, %cst_40 [1] : vector<4x4xf32> to vector<4xf32>
    %102 = vector.shape_cast %101 : vector<4xf32> to vector<4x1xf32>
    %103 = vector.broadcast %102 : vector<4x1xf32> to vector<4x4xf32>
    %104 = arith.subf %100, %103 : vector<4x4xf32>
    %105 = math.exp %104 : vector<4x4xf32>
    %cst_41 = arith.constant dense<0.000000e+00> : vector<4xf32>
    %106 = vector.multi_reduction <add>, %105, %cst_41 [1] : vector<4x4xf32> to vector<4xf32>
    %107 = vector.shape_cast %106 : vector<4xf32> to vector<4x1xf32>
    %108 = tpu.reciprocal %107 {approx = true} : vector<4x1xf32> -> vector<4x1xf32>
    %109 = vector.broadcast %108 : vector<4x1xf32> to vector<4x4xf32>
    %110 = arith.mulf %105, %109 : vector<4x4xf32>
    %cst_42 = arith.constant dense<0.000000e+00> : vector<4x16xf32>
    %111 = tpu.matmul %110, %99, %cst_42 {dimension_numbers = #tpu.dot_dimension_numbers<[1], [0], [0], [1], [0, 0, 1, 1], [], []>} : vector<4x4xf32>, vector<4x16xf32>, vector<4x16xf32> -> vector<4x16xf32>
    %cst_43 = arith.constant dense<0.000000e+00> : vector<16xf32>
    %112 = vector.multi_reduction <add>, %111, %cst_43 [0] : vector<4x16xf32> to vector<16xf32>
    %113 = vector.shape_cast %112 : vector<16xf32> to vector<1x16xf32>
    %cst_44 = arith.constant 4.000000e+00 : f32
    %114 = vector.broadcast %cst_44 : f32 to vector<1x16xf32>
    %115 = arith.divf %113, %114 : vector<1x16xf32>
    %c64 = arith.constant 64 : index
    %c0_45 = arith.constant 0 : index
    %116 = vector.load %arg4[%c64, %c0_45] : memref<128x128xbf16, #tpu.memory_space<vmem>>, vector<16x128xbf16>
    %cst_46 = arith.constant dense<0.000000e+00> : vector<1x128xf32>
    %117 = tpu.matmul %115, %116, %cst_46 {dimension_numbers = #tpu.dot_dimension_numbers<[1], [0], [0], [1], [0, 0, 1, 1], [], []>} : vector<1x16xf32>, vector<16x128xbf16>, vector<1x128xf32> -> vector<1x128xf32>
    %118 = arith.addf %96, %117 : vector<1x128xf32>
    %119 = vector.extract_strided_slice %7 {offsets = [0, 80], sizes = [4, 16], strides = [1, 1]} : vector<4x128xf32> to vector<4x16xf32>
    %120 = vector.extract_strided_slice %8 {offsets = [0, 80], sizes = [4, 16], strides = [1, 1]} : vector<4x128xf32> to vector<4x16xf32>
    %121 = vector.extract_strided_slice %9 {offsets = [0, 80], sizes = [4, 16], strides = [1, 1]} : vector<4x128xf32> to vector<4x16xf32>
    %cst_47 = arith.constant dense<0.000000e+00> : vector<4x4xf32>
    %122 = tpu.matmul %119, %120, %cst_47 {dimension_numbers = #tpu.dot_dimension_numbers<[1], [1], [0], [0], [0, 0, 1, 0], [], []>} : vector<4x16xf32>, vector<4x16xf32>, vector<4x4xf32> -> vector<4x4xf32>
    %cst_48 = arith.constant dense<0xFF800000> : vector<4xf32>
    %123 = vector.multi_reduction <maximumf>, %122, %cst_48 [1] : vector<4x4xf32> to vector<4xf32>
    %124 = vector.shape_cast %123 : vector<4xf32> to vector<4x1xf32>
    %125 = vector.broadcast %124 : vector<4x1xf32> to vector<4x4xf32>
    %126 = arith.subf %122, %125 : vector<4x4xf32>
    %127 = math.exp %126 : vector<4x4xf32>
    %cst_49 = arith.constant dense<0.000000e+00> : vector<4xf32>
    %128 = vector.multi_reduction <add>, %127, %cst_49 [1] : vector<4x4xf32> to vector<4xf32>
    %129 = vector.shape_cast %128 : vector<4xf32> to vector<4x1xf32>
    %130 = tpu.reciprocal %129 {approx = true} : vector<4x1xf32> -> vector<4x1xf32>
    %131 = vector.broadcast %130 : vector<4x1xf32> to vector<4x4xf32>
    %132 = arith.mulf %127, %131 : vector<4x4xf32>
    %cst_50 = arith.constant dense<0.000000e+00> : vector<4x16xf32>
    %133 = tpu.matmul %132, %121, %cst_50 {dimension_numbers = #tpu.dot_dimension_numbers<[1], [0], [0], [1], [0, 0, 1, 1], [], []>} : vector<4x4xf32>, vector<4x16xf32>, vector<4x16xf32> -> vector<4x16xf32>
    %cst_51 = arith.constant dense<0.000000e+00> : vector<16xf32>
    %134 = vector.multi_reduction <add>, %133, %cst_51 [0] : vector<4x16xf32> to vector<16xf32>
    %135 = vector.shape_cast %134 : vector<16xf32> to vector<1x16xf32>
    %cst_52 = arith.constant 4.000000e+00 : f32
    %136 = vector.broadcast %cst_52 : f32 to vector<1x16xf32>
    %137 = arith.divf %135, %136 : vector<1x16xf32>
    %c80 = arith.constant 80 : index
    %c0_53 = arith.constant 0 : index
    %138 = vector.load %arg4[%c80, %c0_53] : memref<128x128xbf16, #tpu.memory_space<vmem>>, vector<16x128xbf16>
    %cst_54 = arith.constant dense<0.000000e+00> : vector<1x128xf32>
    %139 = tpu.matmul %137, %138, %cst_54 {dimension_numbers = #tpu.dot_dimension_numbers<[1], [0], [0], [1], [0, 0, 1, 1], [], []>} : vector<1x16xf32>, vector<16x128xbf16>, vector<1x128xf32> -> vector<1x128xf32>
    %140 = arith.addf %118, %139 : vector<1x128xf32>
    %141 = vector.extract_strided_slice %7 {offsets = [0, 96], sizes = [4, 16], strides = [1, 1]} : vector<4x128xf32> to vector<4x16xf32>
    %142 = vector.extract_strided_slice %8 {offsets = [0, 96], sizes = [4, 16], strides = [1, 1]} : vector<4x128xf32> to vector<4x16xf32>
    %143 = vector.extract_strided_slice %9 {offsets = [0, 96], sizes = [4, 16], strides = [1, 1]} : vector<4x128xf32> to vector<4x16xf32>
    %cst_55 = arith.constant dense<0.000000e+00> : vector<4x4xf32>
    %144 = tpu.matmul %141, %142, %cst_55 {dimension_numbers = #tpu.dot_dimension_numbers<[1], [1], [0], [0], [0, 0, 1, 0], [], []>} : vector<4x16xf32>, vector<4x16xf32>, vector<4x4xf32> -> vector<4x4xf32>
    %cst_56 = arith.constant dense<0xFF800000> : vector<4xf32>
    %145 = vector.multi_reduction <maximumf>, %144, %cst_56 [1] : vector<4x4xf32> to vector<4xf32>
    %146 = vector.shape_cast %145 : vector<4xf32> to vector<4x1xf32>
    %147 = vector.broadcast %146 : vector<4x1xf32> to vector<4x4xf32>
    %148 = arith.subf %144, %147 : vector<4x4xf32>
    %149 = math.exp %148 : vector<4x4xf32>
    %cst_57 = arith.constant dense<0.000000e+00> : vector<4xf32>
    %150 = vector.multi_reduction <add>, %149, %cst_57 [1] : vector<4x4xf32> to vector<4xf32>
    %151 = vector.shape_cast %150 : vector<4xf32> to vector<4x1xf32>
    %152 = tpu.reciprocal %151 {approx = true} : vector<4x1xf32> -> vector<4x1xf32>
    %153 = vector.broadcast %152 : vector<4x1xf32> to vector<4x4xf32>
    %154 = arith.mulf %149, %153 : vector<4x4xf32>
    %cst_58 = arith.constant dense<0.000000e+00> : vector<4x16xf32>
    %155 = tpu.matmul %154, %143, %cst_58 {dimension_numbers = #tpu.dot_dimension_numbers<[1], [0], [0], [1], [0, 0, 1, 1], [], []>} : vector<4x4xf32>, vector<4x16xf32>, vector<4x16xf32> -> vector<4x16xf32>
    %cst_59 = arith.constant dense<0.000000e+00> : vector<16xf32>
    %156 = vector.multi_reduction <add>, %155, %cst_59 [0] : vector<4x16xf32> to vector<16xf32>
    %157 = vector.shape_cast %156 : vector<16xf32> to vector<1x16xf32>
    %cst_60 = arith.constant 4.000000e+00 : f32
    %158 = vector.broadcast %cst_60 : f32 to vector<1x16xf32>
    %159 = arith.divf %157, %158 : vector<1x16xf32>
    %c96 = arith.constant 96 : index
    %c0_61 = arith.constant 0 : index
    %160 = vector.load %arg4[%c96, %c0_61] : memref<128x128xbf16, #tpu.memory_space<vmem>>, vector<16x128xbf16>
    %cst_62 = arith.constant dense<0.000000e+00> : vector<1x128xf32>
    %161 = tpu.matmul %159, %160, %cst_62 {dimension_numbers = #tpu.dot_dimension_numbers<[1], [0], [0], [1], [0, 0, 1, 1], [], []>} : vector<1x16xf32>, vector<16x128xbf16>, vector<1x128xf32> -> vector<1x128xf32>
    %162 = arith.addf %140, %161 : vector<1x128xf32>
    %163 = vector.extract_strided_slice %7 {offsets = [0, 112], sizes = [4, 16], strides = [1, 1]} : vector<4x128xf32> to vector<4x16xf32>
    %164 = vector.extract_strided_slice %8 {offsets = [0, 112], sizes = [4, 16], strides = [1, 1]} : vector<4x128xf32> to vector<4x16xf32>
    %165 = vector.extract_strided_slice %9 {offsets = [0, 112], sizes = [4, 16], strides = [1, 1]} : vector<4x128xf32> to vector<4x16xf32>
    %cst_63 = arith.constant dense<0.000000e+00> : vector<4x4xf32>
    %166 = tpu.matmul %163, %164, %cst_63 {dimension_numbers = #tpu.dot_dimension_numbers<[1], [1], [0], [0], [0, 0, 1, 0], [], []>} : vector<4x16xf32>, vector<4x16xf32>, vector<4x4xf32> -> vector<4x4xf32>
    %cst_64 = arith.constant dense<0xFF800000> : vector<4xf32>
    %167 = vector.multi_reduction <maximumf>, %166, %cst_64 [1] : vector<4x4xf32> to vector<4xf32>
    %168 = vector.shape_cast %167 : vector<4xf32> to vector<4x1xf32>
    %169 = vector.broadcast %168 : vector<4x1xf32> to vector<4x4xf32>
    %170 = arith.subf %166, %169 : vector<4x4xf32>
    %171 = math.exp %170 : vector<4x4xf32>
    %cst_65 = arith.constant dense<0.000000e+00> : vector<4xf32>
    %172 = vector.multi_reduction <add>, %171, %cst_65 [1] : vector<4x4xf32> to vector<4xf32>
    %173 = vector.shape_cast %172 : vector<4xf32> to vector<4x1xf32>
    %174 = tpu.reciprocal %173 {approx = true} : vector<4x1xf32> -> vector<4x1xf32>
    %175 = vector.broadcast %174 : vector<4x1xf32> to vector<4x4xf32>
    %176 = arith.mulf %171, %175 : vector<4x4xf32>
    %cst_66 = arith.constant dense<0.000000e+00> : vector<4x16xf32>
    %177 = tpu.matmul %176, %165, %cst_66 {dimension_numbers = #tpu.dot_dimension_numbers<[1], [0], [0], [1], [0, 0, 1, 1], [], []>} : vector<4x4xf32>, vector<4x16xf32>, vector<4x16xf32> -> vector<4x16xf32>
    %cst_67 = arith.constant dense<0.000000e+00> : vector<16xf32>
    %178 = vector.multi_reduction <add>, %177, %cst_67 [0] : vector<4x16xf32> to vector<16xf32>
    %179 = vector.shape_cast %178 : vector<16xf32> to vector<1x16xf32>
    %cst_68 = arith.constant 4.000000e+00 : f32
    %180 = vector.broadcast %cst_68 : f32 to vector<1x16xf32>
    %181 = arith.divf %179, %180 : vector<1x16xf32>
    %c112 = arith.constant 112 : index
    %c0_69 = arith.constant 0 : index
    %182 = vector.load %arg4[%c112, %c0_69] : memref<128x128xbf16, #tpu.memory_space<vmem>>, vector<16x128xbf16>
    %cst_70 = arith.constant dense<0.000000e+00> : vector<1x128xf32>
    %183 = tpu.matmul %181, %182, %cst_70 {dimension_numbers = #tpu.dot_dimension_numbers<[1], [0], [0], [1], [0, 0, 1, 1], [], []>} : vector<1x16xf32>, vector<16x128xbf16>, vector<1x128xf32> -> vector<1x128xf32>
    %184 = arith.addf %162, %183 : vector<1x128xf32>
    %c0_71 = arith.constant 0 : index
    %c0_72 = arith.constant 0 : index
    %185 = vector.load %arg5[%c0_71, %c0_72] : memref<1x128xf32, #tpu.memory_space<vmem>>, vector<1x128xf32>
    %186 = arith.addf %184, %185 : vector<1x128xf32>
    %c0_73 = arith.constant 0 : index
    %c0_74 = arith.constant 0 : index
    %187 = vector.load %arg6[%c0_73, %c0_74] : memref<128x128xbf16, #tpu.memory_space<vmem>>, vector<128x128xbf16>
    %cst_75 = arith.constant dense<0.000000e+00> : vector<1x128xf32>
    %188 = tpu.matmul %186, %187, %cst_75 {dimension_numbers = #tpu.dot_dimension_numbers<[1], [0], [0], [1], [0, 0, 1, 1], [], []>} : vector<1x128xf32>, vector<128x128xbf16>, vector<1x128xf32> -> vector<1x128xf32>
    %c0_76 = arith.constant 0 : index
    %c0_77 = arith.constant 0 : index
    %189 = vector.load %arg7[%c0_76, %c0_77] : memref<1x128xf32, #tpu.memory_space<vmem>>, vector<1x128xf32>
    %190 = arith.addf %188, %189 : vector<1x128xf32>
    %c0_78 = arith.constant 0 : index
    %c0_79 = arith.constant 0 : index
    %c0_80 = arith.constant 0 : index
    %191 = vector.load %arg8[%c0_78, %c0_79, %c0_80] : memref<1x1x128xf32, #tpu.memory_space<vmem>>, vector<1x1x128xf32>
    %192 = vector.shape_cast %191 : vector<1x1x128xf32> to vector<1x128xf32>
    %193 = vector.shape_cast %190 : vector<1x128xf32> to vector<1x1x128xf32>
    tpu.vector_store %arg8[%c0_78, %c0_79, %c0_80], %193 {strides = array<i32>} : memref<1x1x128xf32, #tpu.memory_space<vmem>>, vector<1x1x128xf32>,
    return
  }
  func.func @transform_0(%arg0: i32) -> (i32, i32, i32) {
    %c0_i32 = arith.constant 0 : i32
    %c0_i32_0 = arith.constant 0 : i32
    %c0_i32_1 = arith.constant 0 : i32
    return %arg0, %c0_i32, %c0_i32_0 : i32, i32, i32
  }
  func.func @transform_1(%arg0: i32) -> (i32, i32) {
    %c0_i32 = arith.constant 0 : i32
    %c0_i32_0 = arith.constant 0 : i32
    %c0_i32_1 = arith.constant 0 : i32
    return %c0_i32, %c0_i32_0 : i32, i32
  }
  func.func @transform_2(%arg0: i32) -> (i32, i32) {
    %c0_i32 = arith.constant 0 : i32
    %c0_i32_0 = arith.constant 0 : i32
    %c0_i32_1 = arith.constant 0 : i32
    return %c0_i32, %c0_i32_0 : i32, i32
  }
  func.func @transform_3(%arg0: i32) -> (i32, i32) {
    %c0_i32 = arith.constant 0 : i32
    %c0_i32_0 = arith.constant 0 : i32
    %c0_i32_1 = arith.constant 0 : i32
    return %c0_i32, %c0_i32_0 : i32, i32
  }
  func.func @transform_4(%arg0: i32) -> (i32, i32) {
    %c0_i32 = arith.constant 0 : i32
    %c0_i32_0 = arith.constant 0 : i32
    %c0_i32_1 = arith.constant 0 : i32
    return %c0_i32, %c0_i32_0 : i32, i32
  }
  func.func @transform_5(%arg0: i32) -> (i32, i32) {
    %c0_i32 = arith.constant 0 : i32
    %c0_i32_0 = arith.constant 0 : i32
    %c0_i32_1 = arith.constant 0 : i32
    return %c0_i32, %c0_i32_0 : i32, i32
  }
  func.func @transform_6(%arg0: i32) -> (i32, i32) {
    %c0_i32 = arith.constant 0 : i32
    %c0_i32_0 = arith.constant 0 : i32
    %c0_i32_1 = arith.constant 0 : i32
    return %c0_i32, %c0_i32_0 : i32, i32
  }
  func.func @transform_7(%arg0: i32) -> (i32, i32, i32) {
    %c0_i32 = arith.constant 0 : i32
    %c0_i32_0 = arith.constant 0 : i32
    %c0_i32_1 = arith.constant 0 : i32
    return %arg0, %c0_i32, %c0_i32_0 : i32, i32, i32
  }
}

</mosaic_0001>

<llo_original>
// kernel: handwriting_feature_extractor.5
$region0: #{handwriting_feature_extractor.5}
  #allocation0 [shape = 'u32[]', space=smem, size = 0x4, offset = 0x4, fixed_abs, tag = 'smem constant byte address 0x4 - core index']
  #allocation1 [shape = 'u32[144,128]{1,0:T(1,128)}', space=vmem, size = 0x12000, scoped, tag = 'internal scratch']
  %s0 = inlined_call_operand.vmem [shape: bf16[2,122,128], index: 0, kind: input, shape index: {}]
  %s1 = inlined_call_operand.vmem [shape: bf16[1152,128], index: 1, kind: input, shape index: {}]
  %s2 = inlined_call_operand.vmem [shape: f32[1,128], index: 2, kind: input, shape index: {}]
  %s3 = inlined_call_operand.vmem [shape: bf16[2,100,128], index: 3, kind: output, shape index: {}]
  %s4 = sld [smem:[#allocation0]]
  $region45: #{handwriting_feature_extractor.5} parent=0
    _
  %s6 = ssub.s32 1, %s4
  %s7 = scalar_select 0, %s6, %s4
  loop: start=0, step=1, limit=4
  $region2: #{handwriting_feature_extractor.5} parent=0 // loop_pre_header
    _
  $region3: #{handwriting_feature_extractor.5} parent=0 // loop_header
    %s9 = sphi 0, %s13
    %p10 = scmp.ge.s32.totalorder %s9, 4
    %s19 = sphi 0, %s21
    %s22 = sphi 0, %s19
    %s23 = sphi 0, %s22
    %s39 = sphi 0, %s23
    %s43 = sphi 0, %s43
    %s45 = sphi 0, %s43
    %s46 = sphi 0, %s45
    %s60 = sphi 0, %s46
    %s64 = sphi 0, %s64
    %s66 = sphi 0, %s64
    %s67 = sphi 0, %s66
    %s81 = sphi 0, %s67
    %s87 = sphi 0, %s89
    %s90 = sphi 0, %s87
    %s91 = sphi 0, %s90
    %s107 = sphi 0, %s91
  $region4: #{handwriting_feature_extractor.5} parent=0 // loop_header_branch
    %12 = sbr.rel (%p10) target = $region8
  $region5: #{handwriting_feature_extractor.5} parent=0 // loop_body
    %s14 = ssub.s32 %s9, 1
    %s15 = ssub.s32 %s9, 2
    %s16 = sadd.s32 %s9, 1
    %s17 = ssub.s32 %s9, %s16
    %p18 = scmp.eq.s32.totalorder %s17, 0
    %s20 = sadd.s32 %s19, 1
    %s21 = scalar_select %p18, %s19, %s20
    %p24 = pneg %p18
    %p25 = scmp.eq.s32.totalorder %s9, 1
    %p26 = por %p24, %p25
    %p27 = scmp.ne.s32.totalorder %s19, %s22
    %p28 = scmp.eq.s32.totalorder %s9, 0
    %p29 = por %p27, %p28
    %p30 = scmp.ne.s32.totalorder %s19, %s22
    %p31 = scmp.eq.s32.totalorder %s14, 1
    %p32 = por %p30, %p31
    %p33 = scmp.ne.s32.totalorder %s22, %s23
    %p34 = scmp.eq.s32.totalorder %s14, 0
    %p35 = por %p33, %p34
    %p36 = scmp.ne.s32.totalorder %s22, %s23
    %p37 = scmp.eq.s32.totalorder %s15, 1
    %p38 = por %p36, %p37
    %p40 = scmp.ne.s32.totalorder %s23, %s39
    %p41 = scmp.eq.s32.totalorder %s15, 0
    %p42 = por %p40, %p41
    %s44 = sadd.s32 %s43, 1
    %p47 = scmp.eq.s32.totalorder %s9, 1
    %p48 = scmp.ne.s32.totalorder %s43, %s45
    %p49 = scmp.eq.s32.totalorder %s9, 0
    %p50 = por %p48, %p49
    %p51 = scmp.ne.s32.totalorder %s43, %s45
    %p52 = scmp.eq.s32.totalorder %s14, 1
    %p53 = por %p51, %p52
    %p54 = scmp.ne.s32.totalorder %s45, %s46
    %p55 = scmp.eq.s32.totalorder %s14, 0
    %p56 = por %p54, %p55
    %p57 = scmp.ne.s32.totalorder %s45, %s46
    %p58 = scmp.eq.s32.totalorder %s15, 1
    %p59 = por %p57, %p58
    %p61 = scmp.ne.s32.totalorder %s46, %s60
    %p62 = scmp.eq.s32.totalorder %s15, 0
    %p63 = por %p61, %p62
    %s65 = sadd.s32 %s64, 1
    %p68 = scmp.eq.s32.totalorder %s9, 1
    %p69 = scmp.ne.s32.totalorder %s64, %s66
    %p70 = scmp.eq.s32.totalorder %s9, 0
    %p71 = por %p69, %p70
    %p72 = scmp.ne.s32.totalorder %s64, %s66
    %p73 = scmp.eq.s32.totalorder %s14, 1
    %p74 = por %p72, %p73
    %p75 = scmp.ne.s32.totalorder %s66, %s67
    %p76 = scmp.eq.s32.totalorder %s14, 0
    %p77 = por %p75, %p76
    %p78 = scmp.ne.s32.totalorder %s66, %s67
    %p79 = scmp.eq.s32.totalorder %s15, 1
    %p80 = por %p78, %p79
    %p82 = scmp.ne.s32.totalorder %s67, %s81
    %p83 = scmp.eq.s32.totalorder %s15, 0
    %p84 = por %p82, %p83
    %s85 = ssub.s32 %s9, %s16
    %p86 = scmp.eq.s32.totalorder %s85, 0
    %s88 = sadd.s32 %s87, 1
    %s89 = scalar_select %p86, %s87, %s88
    %p92 = pneg %p86
    %p93 = scmp.eq.s32.totalorder %s9, 1
    %p94 = por %p92, %p93
    %p95 = scmp.ne.s32.totalorder %s87, %s90
    %p96 = scmp.eq.s32.totalorder %s9, 0
    %p97 = por %p95, %p96
    %p98 = scmp.ne.s32.totalorder %s87, %s90
    %p99 = scmp.eq.s32.totalorder %s14, 1
    %p100 = por %p98, %p99
    %p101 = scmp.ne.s32.totalorder %s90, %s91
    %p102 = scmp.eq.s32.totalorder %s14, 0
    %p103 = por %p101, %p102
    %p104 = scmp.ne.s32.totalorder %s90, %s91
    %p105 = scmp.eq.s32.totalorder %s15, 1
    %p106 = por %p104, %p105
    %p108 = scmp.ne.s32.totalorder %s91, %s107
    %p109 = scmp.eq.s32.totalorder %s15, 0
    %p110 = por %p108, %p109
    %p111 = scmp.le.s32.totalorder 1, %s9
    %p112 = scmp.lt.s32.totalorder %s9, 3
    %p113 = pnand %p111, %p112
    %p114 = pneg %p113
    // Predicated region
    $region9: #{handwriting_feature_extractor.5} parent=5 // pred_check
      _
    $region10: #{handwriting_feature_extractor.5} parent=5 // pred_check_branch
      %116 = sbr.rel (%p113) target = $region12
    $region11: #{handwriting_feature_extractor.5} parent=5 // pred_region
      %s117 = ssub.s32 %s9, 1
      // Predicated region
      $region13: #{handwriting_feature_extractor.5} parent=11 // pred_check
        %p118 = pneg %p56
      $region14: #{handwriting_feature_extractor.5} parent=11 // pred_check_branch
        %120 = sbr.rel (%p118) target = $region16
      $region15: #{handwriting_feature_extractor.5} parent=11 // pred_region
        _
      $region16: #{handwriting_feature_extractor.5} parent=11 // pred_fallthru
        _
      // Predicated region
      $region17: #{handwriting_feature_extractor.5} parent=11 // pred_check
        %p121 = pneg %p77
      $region18: #{handwriting_feature_extractor.5} parent=11 // pred_check_branch
        %123 = sbr.rel (%p121) target = $region20
      $region19: #{handwriting_feature_extractor.5} parent=11 // pred_region
        _
      $region20: #{handwriting_feature_extractor.5} parent=11 // pred_fallthru
        _
    $region12: #{handwriting_feature_extractor.5} parent=5 // pred_fallthru
      _
    %p124 = scmp.lt.s32.totalorder %s9, 2
    // Predicated region
    $region21: #{handwriting_feature_extractor.5} parent=5 // pred_check
      %p125 = pneg %p124
    $region22: #{handwriting_feature_extractor.5} parent=5 // pred_check_branch
      %127 = sbr.rel (%p125) target = $region24
    $region23: #{handwriting_feature_extractor.5} parent=5 // pred_region
      // Predicated region
      $region25: #{handwriting_feature_extractor.5} parent=23 // pred_check
        %p128 = pneg %p29
      $region26: #{handwriting_feature_extractor.5} parent=23 // pred_check_branch
        %130 = sbr.rel (%p128) target = $region28
      $region27: #{handwriting_feature_extractor.5} parent=23 // pred_region
        %p131 = scmp.lt.s32.totalorder %s9, 1
        %s132 = scalar_select %p131, %s9, 1
        %s133 = smul.addr %s132, 16
        %s134 = smul.addr %s133, 4
        %s135 = scalar_lea.vmem %s0, %s134
      $region28: #{handwriting_feature_extractor.5} parent=23 // pred_fallthru
        _
    $region24: #{handwriting_feature_extractor.5} parent=5 // pred_fallthru
      _
    %p136 = scmp.le.s32.totalorder 1, %s9
    %p137 = scmp.lt.s32.totalorder %s9, 3
    %p138 = pnand %p136, %p137
    %p139 = pneg %p138
    // Predicated region
    $region29: #{handwriting_feature_extractor.5} parent=5 // pred_check
      _
    $region30: #{handwriting_feature_extractor.5} parent=5 // pred_check_branch
      %141 = sbr.rel (%p138) target = $region32
    $region31: #{handwriting_feature_extractor.5} parent=5 // pred_region
      %s142 = ssub.s32 %s9, 1
      %p143 = scmp.lt.s32.totalorder %s14, 1
      %s144 = scalar_select %p143, %s14, 1
      %s145 = smul.addr %s144, 16
      %s146 = smul.addr %s145, 4
      %s147 = scalar_lea.vmem %s0, %s146
      %p148 = pneg %p35
      %p149 = pneg %p32
      %p150 = pneg %p56
      %p151 = pneg %p53
      %p152 = pneg %p77
      %p153 = pneg %p74
      %p154 = pneg %p103
      %p155 = pneg %p100
      %p156 = scmp.lt.s32.totalorder %s14, 1
      %s157 = scalar_select %p156, %s14, 1
      %s158 = smul.addr %s157, 13
      %s159 = smul.addr %s158, 4
      %s160 = scalar_lea.vmem %s3, %s159
      %p161 = scmp.lt.s32.totalorder %s14, 1
      %s162 = scalar_select %p161, %s14, 1
      %s163 = smul.addr %s162, 16
      %s164 = smul.addr %s163, 4
      %s165 = scalar_lea.vmem %s0, %s164
      %p166 = scmp.lt.s32.totalorder %s14, 1
      %s167 = scalar_select %p166, %s14, 1
      %s168 = smul.addr %s167, 13
      %s169 = smul.addr %s168, 4
      %s170 = scalar_lea.vmem %s3, %s169
      %v172 = vld [vmem:[%s2] sm:$0x1]
      %v173 = vld [vmem:[%s165] sm:$0xf]
      %v174 = vld [vmem:[%s165 + $0x4] sm:$0xf]
      %v175 = vld [vmem:[%s165 + $0x8] sm:$0xf]
      %v176 = vld [vmem:[%s165 + $0xc] sm:$0xf]
      %v177 = vld [vmem:[%s165 + $0x10] sm:$0xf]
      %v178 = vld [vmem:[%s165 + $0x14] sm:$0xf]
      %v179 = vld [vmem:[%s165 + $0x18] sm:$0xf]
      %v180 = vld [vmem:[%s165 + $0x1c] sm:$0xf]
      %v181 = vld [vmem:[%s165 + $0x20] sm:$0xf]
      %v182 = vld [vmem:[%s165 + $0x24] sm:$0xf]
      %v183 = vld [vmem:[%s165 + $0x28] sm:$0xf]
      %v184 = vld [vmem:[%s165 + $0x2c] sm:$0xf]
      %v185 = vld [vmem:[%s165 + $0x30] sm:$0x3]
      %v186 = vld [vmem:[%s1] sm:$0xf]
      %v187 = vld [vmem:[%s1 + $0x4] sm:$0xf]
      %v188 = vld [vmem:[%s1 + $0x8] sm:$0xf]
      %v189 = vld [vmem:[%s1 + $0xc] sm:$0xf]
      %v190 = vld [vmem:[%s1 + $0x10] sm:$0xf]
      %v191 = vld [vmem:[%s1 + $0x14] sm:$0xf]
      %v192 = vld [vmem:[%s1 + $0x18] sm:$0xf]
      %v193 = vld [vmem:[%s1 + $0x1c] sm:$0xf]
      %v194 = vld [vmem:[%s1 + $0x20] sm:$0xf]
      %v195 = vld [vmem:[%s1 + $0x24] sm:$0xf]
      %v196 = vld [vmem:[%s1 + $0x28] sm:$0xf]
      %v197 = vld [vmem:[%s1 + $0x2c] sm:$0xf]
      %v198 = vld [vmem:[%s1 + $0x30] sm:$0xf]
      %v199 = vld [vmem:[%s1 + $0x34] sm:$0xf]
      %v200 = vld [vmem:[%s1 + $0x38] sm:$0xf]
      %v201 = vld [vmem:[%s1 + $0x3c] sm:$0xf]
      %v202 = vld [vmem:[%s165 + $0x30] sm:$0x7]
      %v203 = vld [vmem:[%s1 + $0x40] sm:$0xf]
      %v204 = vld [vmem:[%s1 + $0x44] sm:$0xf]
      %v205 = vld [vmem:[%s1 + $0x48] sm:$0xf]
      %v206 = vld [vmem:[%s1 + $0x4c] sm:$0xf]
      %v207 = vld [vmem:[%s1 + $0x50] sm:$0xf]
      %v208 = vld [vmem:[%s1 + $0x54] sm:$0xf]
      %v209 = vld [vmem:[%s1 + $0x58] sm:$0xf]
      %v210 = vld [vmem:[%s1 + $0x5c] sm:$0xf]
      %v211 = vld [vmem:[%s1 + $0x60] sm:$0xf]
      %v212 = vld [vmem:[%s1 + $0x64] sm:$0xf]
      %v213 = vld [vmem:[%s1 + $0x68] sm:$0xf]
      %v214 = vld [vmem:[%s1 + $0x6c] sm:$0xf]
      %v215 = vld [vmem:[%s1 + $0x70] sm:$0xf]
      %v216 = vld [vmem:[%s1 + $0x74] sm:$0xf]
      %v217 = vld [vmem:[%s1 + $0x78] sm:$0xf]
      %v218 = vld [vmem:[%s1 + $0x7c] sm:$0xf]
      %v232 = vunpack.c.l.b16 %v173
      %v233 = vunpack.c.l.b16 %v174
      %v234 = vunpack.c.l.b16 %v175
      %v235 = vunpack.c.l.b16 %v176
      %v236 = vunpack.c.l.b16 %v177
      %v237 = vunpack.c.l.b16 %v178
      %v238 = vunpack.c.l.b16 %v179
      %v239 = vunpack.c.l.b16 %v180
      %v240 = vunpack.c.l.b16 %v181
      %v241 = vunpack.c.l.b16 %v182
      %v242 = vunpack.c.l.b16 %v183
      %v243 = vunpack.c.l.b16 %v184
      %v244 = vunpack.c.l.b16 %v202
      %v245 = vpack.c.b16 %v233, %v232
      %v246 = vpack.c.b16 %v235, %v234
      %v247 = vpack.c.b16 %v237, %v236
      %v248 = vpack.c.b16 %v239, %v238
      %v249 = vpack.c.b16 %v241, %v240
      %v250 = vpack.c.b16 %v243, %v242
      %v251 = vpack.c.b16 %v244, %v244
      %vm252 = vsmask.f32 7424
      %v254 = vshrl.u32 %v245, 16
      %v256 = vshll.u32 %v245, 16
      %v258 = vrot.slane %v256, 1
      %v259 = vor.u32 %v254, %v258
      %v261 = vshll.u32 %v246, 16
      %v263 = vrot.slane %v261, 1
      %v264 = vsel %vm252, %v259, %v263
      %v265 = vshrl.u32 %v246, 16
      %v267 = vor.u32 %v265, %v263
      %v269 = vshll.u32 %v247, 16
      %v271 = vrot.slane %v269, 1
      %v272 = vsel %vm252, %v267, %v271
      %v273 = vshrl.u32 %v247, 16
      %v275 = vor.u32 %v273, %v271
      %v277 = vshll.u32 %v248, 16
      %v279 = vrot.slane %v277, 1
      %v280 = vsel %vm252, %v275, %v279
      %v281 = vshrl.u32 %v248, 16
      %v283 = vor.u32 %v281, %v279
      %v285 = vshll.u32 %v249, 16
      %v287 = vrot.slane %v285, 1
      %v288 = vsel %vm252, %v283, %v287
      %v289 = vshrl.u32 %v249, 16
      %v291 = vor.u32 %v289, %v287
      %v293 = vshll.u32 %v250, 16
      %v295 = vrot.slane %v293, 1
      %v296 = vsel %vm252, %v291, %v295
      %v297 = vshrl.u32 %v250, 16
      %v299 = vor.u32 %v297, %v295
      %v301 = vshll.u32 %v251, 16
      %v303 = vrot.slane %v301, 1
      %v304 = vsel %vm252, %v299, %v303
      %v305 = vshrl.u32 %v251, 16
      %v307 = vor.u32 %v305, %v303
      %v331 = vunpack.c.l.b16 %v203
      %v332 = vunpack.c.l.b16 %v204
      %v333 = vunpack.c.l.b16 %v205
      %v334 = vunpack.c.l.b16 %v206
      %v335 = vunpack.c.l.b16 %v207
      %v336 = vunpack.c.l.b16 %v208
      %v337 = vunpack.c.l.b16 %v209
      %v338 = vunpack.c.l.b16 %v210
      %v339 = vunpack.c.l.b16 %v211
      %v340 = vunpack.c.l.b16 %v212
      %v341 = vunpack.c.l.b16 %v213
      %v342 = vunpack.c.l.b16 %v214
      %v343 = vunpack.c.l.b16 %v215
      %v344 = vunpack.c.l.b16 %v216
      %v345 = vunpack.c.l.b16 %v217
      %v346 = vunpack.c.l.b16 %v218
      %v347 = vpack.c.b16 %v332, %v331
      %v348 = vpack.c.b16 %v334, %v333
      %v349 = vpack.c.b16 %v336, %v335
      %v350 = vpack.c.b16 %v338, %v337
      %v351 = vpack.c.b16 %v340, %v339
      %v352 = vpack.c.b16 %v342, %v341
      %v353 = vpack.c.b16 %v344, %v343
      %v354 = vpack.c.b16 %v346, %v345
      %363 = vmatprep.subr.bf16.mxu0 0
      %364 = vmatpush1.bf16.msra.mxu0 %v347
      %365 = vmatprep.subr.bf16.mxu0 0
      %366 = vmatpush1.bf16.msra.mxu0 %v348
      %367 = vmatprep.subr.bf16.mxu0 0
      %368 = vmatpush1.bf16.msra.mxu0 %v349
      %369 = vmatprep.subr.bf16.mxu0 0
      %370 = vmatpush1.bf16.msra.mxu0 %v350
      %371 = vmatprep.subr.bf16.mxu0 0
      %372 = vmatpush1.bf16.msra.mxu0 %v351
      %373 = vmatprep.subr.bf16.mxu0 0
      %374 = vmatpush1.bf16.msra.mxu0 %v352
      %375 = vmatprep.subr.bf16.mxu0 0
      %376 = vmatpush1.bf16.msra.mxu0 %v353
      %377 = vmatprep.subr.bf16.mxu0 0
      %378 = vmatpush1.bf16.msra.mxu0 %v354
      %379 = vmatprep.subr.bf16.mxu0 0
      %380 = vmatpush1.bf16.msra.mxu0 0
      %381 = vmatprep.subr.bf16.mxu0 0
      %382 = vmatpush1.bf16.msra.mxu0 0
      %383 = vmatprep.subr.bf16.mxu0 0
      %384 = vmatpush1.bf16.msra.mxu0 0
      %385 = vmatprep.subr.bf16.mxu0 0
      %386 = vmatpush1.bf16.msra.mxu0 0
      %387 = vmatprep.subr.bf16.mxu0 0
      %388 = vmatpush1.bf16.msra.mxu0 0
      %389 = vmatprep.subr.bf16.mxu0 0
      %390 = vmatpush1.bf16.msra.mxu0 0
      %391 = vmatprep.subr.bf16.mxu0 0
      %392 = vmatpush1.bf16.msra.mxu0 0
      %393 = vmatprep.subr.bf16.mxu0 0
      %394 = vmatpush1.bf16.msra.mxu0 0
      %395 = vmatprep.mubr.bf16.mxu0 0
      %396 = vmatmul.mubr.bf16.gmra.mrb[0].mxu0 %v264
      %v397 = vpop.f32.mrb[0].mxu0
      %v398 = vadd.f32 0.0, %v397
      %v399 = vpop.f32.mrb[0].mxu0
      %v400 = vpop.f32.mrb[0].mxu0
      %v401 = vadd.f32 0.0, %v400
      %v402 = vpop.f32.mrb[0].mxu0
      %403 = vmatprep.mubr.bf16.mxu0 0
      %404 = vmatmul.mubr.bf16.gmra.mrb[0].mxu0 %v272
      %v405 = vpop.f32.mrb[0].mxu0
      %v406 = vadd.f32 0.0, %v405
      %v407 = vpop.f32.mrb[0].mxu0
      %v408 = vpop.f32.mrb[0].mxu0
      %v409 = vadd.f32 0.0, %v408
      %v410 = vpop.f32.mrb[0].mxu0
      %411 = vmatprep.mubr.bf16.mxu0 0
      %412 = vmatmul.mubr.bf16.gmra.mrb[0].mxu0 %v280
      %v413 = vpop.f32.mrb[0].mxu0
      %v414 = vadd.f32 0.0, %v413
      %v415 = vpop.f32.mrb[0].mxu0
      %v416 = vpop.f32.mrb[0].mxu0
      %v417 = vadd.f32 0.0, %v416
      %v418 = vpop.f32.mrb[0].mxu0
      %419 = vmatprep.mubr.bf16.mxu0 0
      %420 = vmatmul.mubr.bf16.gmra.mrb[0].mxu0 %v288
      %v421 = vpop.f32.mrb[0].mxu0
      %v422 = vadd.f32 0.0, %v421
      %v423 = vpop.f32.mrb[0].mxu0
      %v424 = vpop.f32.mrb[0].mxu0
      %v425 = vadd.f32 0.0, %v424
      %v426 = vpop.f32.mrb[0].mxu0
      %427 = vmatprep.mubr.bf16.mxu0 0
      %428 = vmatmul.mubr.bf16.gmra.mrb[0].mxu0 %v296
      %v429 = vpop.f32.mrb[0].mxu0
      %v430 = vadd.f32 0.0, %v429
      %v431 = vpop.f32.mrb[0].mxu0
      %v432 = vpop.f32.mrb[0].mxu0
      %v433 = vadd.f32 0.0, %v432
      %v434 = vpop.f32.mrb[0].mxu0
      %435 = vmatprep.mubr.bf16.mxu0 0
      %436 = vmatmul.mubr.bf16.gmra.mrb[0].mxu0 %v304
      %v437 = vpop.f32.mrb[0].mxu0
      %v438 = vadd.f32 0.0, %v437
      %v439 = vpop.f32.mrb[0].mxu0
      %v440 = vpop.f32.mrb[0].mxu0
      %v441 = vadd.f32 0.0, %v440
      %v442 = vpop.f32.mrb[0].mxu0
      %443 = vmatprep.mubr.bf16.mxu0 0
      %444 = vmatmul.mubr.bf16.gmra.mrb[0].mxu0 %v307
      %v445 = vpop.f32.mrb[0].mxu0
      %v446 = vadd.f32 0.0, %v445
      %v447 = vpop.f32.mrb[0].mxu0
      %v448 = vpop.f32.mrb[0].mxu0
      %v449 = vpop.f32.mrb[0].mxu0
      %450 = vdwg.mxu0
      %v452 = vunpack.c.l.b16 %v185
      %v453 = vpack.c.b16 %v452, %v452
      %v477 = vunpack.c.l.b16 %v186
      %v478 = vunpack.c.l.b16 %v187
      %v479 = vunpack.c.l.b16 %v188
      %v480 = vunpack.c.l.b16 %v189
      %v481 = vunpack.c.l.b16 %v190
      %v482 = vunpack.c.l.b16 %v191
      %v483 = vunpack.c.l.b16 %v192
      %v484 = vunpack.c.l.b16 %v193
      %v485 = vunpack.c.l.b16 %v194
      %v486 = vunpack.c.l.b16 %v195
      %v487 = vunpack.c.l.b16 %v196
      %v488 = vunpack.c.l.b16 %v197
      %v489 = vunpack.c.l.b16 %v198
      %v490 = vunpack.c.l.b16 %v199
      %v491 = vunpack.c.l.b16 %v200
      %v492 = vunpack.c.l.b16 %v201
      %v493 = vpack.c.b16 %v478, %v477
      %v494 = vpack.c.b16 %v480, %v479
      %v495 = vpack.c.b16 %v482, %v481
      %v496 = vpack.c.b16 %v484, %v483
      %v497 = vpack.c.b16 %v486, %v485
      %v498 = vpack.c.b16 %v488, %v487
      %v499 = vpack.c.b16 %v490, %v489
      %v500 = vpack.c.b16 %v492, %v491
      %509 = vmatprep.subr.bf16.mxu0 0
      %510 = vmatpush1.bf16.msra.mxu0 %v493
      %511 = vmatprep.subr.bf16.mxu0 0
      %512 = vmatpush1.bf16.msra.mxu0 %v494
      %513 = vmatprep.subr.bf16.mxu0 0
      %514 = vmatpush1.bf16.msra.mxu0 %v495
      %515 = vmatprep.subr.bf16.mxu0 0
      %516 = vmatpush1.bf16.msra.mxu0 %v496
      %517 = vmatprep.subr.bf16.mxu0 0
      %518 = vmatpush1.bf16.msra.mxu0 %v497
      %519 = vmatprep.subr.bf16.mxu0 0
      %520 = vmatpush1.bf16.msra.mxu0 %v498
      %521 = vmatprep.subr.bf16.mxu0 0
      %522 = vmatpush1.bf16.msra.mxu0 %v499
      %523 = vmatprep.subr.bf16.mxu0 0
      %524 = vmatpush1.bf16.msra.mxu0 %v500
      %525 = vmatprep.subr.bf16.mxu0 0
      %526 = vmatpush1.bf16.msra.mxu0 0
      %527 = vmatprep.subr.bf16.mxu0 0
      %528 = vmatpush1.bf16.msra.mxu0 0
      %529 = vmatprep.subr.bf16.mxu0 0
      %530 = vmatpush1.bf16.msra.mxu0 0
      %531 = vmatprep.subr.bf16.mxu0 0
      %532 = vmatpush1.bf16.msra.mxu0 0
      %533 = vmatprep.subr.bf16.mxu0 0
      %534 = vmatpush1.bf16.msra.mxu0 0
      %535 = vmatprep.subr.bf16.mxu0 0
      %536 = vmatpush1.bf16.msra.mxu0 0
      %537 = vmatprep.subr.bf16.mxu0 0
      %538 = vmatpush1.bf16.msra.mxu0 0
      %539 = vmatprep.subr.bf16.mxu0 0
      %540 = vmatpush1.bf16.msra.mxu0 0
      %541 = vmatprep.mubr.bf16.mxu0 0
      %542 = vmatmul.mubr.bf16.gmra.mrb[0].mxu0 %v245
      %v543 = vpop.f32.mrb[0].mxu0
      %v544 = vadd.f32 %v398, %v543
      %v545 = vpop.f32.mrb[0].mxu0
      %v546 = vpop.f32.mrb[0].mxu0
      %v547 = vadd.f32 %v401, %v546
      %v548 = vpop.f32.mrb[0].mxu0
      %549 = vmatprep.mubr.bf16.mxu0 0
      %550 = vmatmul.mubr.bf16.gmra.mrb[0].mxu0 %v246
      %v551 = vpop.f32.mrb[0].mxu0
      %v552 = vadd.f32 %v406, %v551
      %v553 = vpop.f32.mrb[0].mxu0
      %v554 = vpop.f32.mrb[0].mxu0
      %v555 = vadd.f32 %v409, %v554
      %v556 = vpop.f32.mrb[0].mxu0
      %557 = vmatprep.mubr.bf16.mxu0 0
      %558 = vmatmul.mubr.bf16.gmra.mrb[0].mxu0 %v247
      %v559 = vpop.f32.mrb[0].mxu0
      %v560 = vadd.f32 %v414, %v559
      %v561 = vpop.f32.mrb[0].mxu0
      %v562 = vpop.f32.mrb[0].mxu0
      %v563 = vadd.f32 %v417, %v562
      %v564 = vpop.f32.mrb[0].mxu0
      %565 = vmatprep.mubr.bf16.mxu0 0
      %566 = vmatmul.mubr.bf16.gmra.mrb[0].mxu0 %v248
      %v567 = vpop.f32.mrb[0].mxu0
      %v568 = vadd.f32 %v422, %v567
      %v569 = vpop.f32.mrb[0].mxu0
      %v570 = vpop.f32.mrb[0].mxu0
      %v571 = vadd.f32 %v425, %v570
      %v572 = vpop.f32.mrb[0].mxu0
      %573 = vmatprep.mubr.bf16.mxu0 0
      %574 = vmatmul.mubr.bf16.gmra.mrb[0].mxu0 %v249
      %v575 = vpop.f32.mrb[0].mxu0
      %v576 = vadd.f32 %v430, %v575
      %v577 = vpop.f32.mrb[0].mxu0
      %v578 = vpop.f32.mrb[0].mxu0
      %v579 = vadd.f32 %v433, %v578
      %v580 = vpop.f32.mrb[0].mxu0
      %581 = vmatprep.mubr.bf16.mxu0 0
      %582 = vmatmul.mubr.bf16.gmra.mrb[0].mxu0 %v250
      %v583 = vpop.f32.mrb[0].mxu0
      %v584 = vadd.f32 %v438, %v583
      %v585 = vpop.f32.mrb[0].mxu0
      %v586 = vpop.f32.mrb[0].mxu0
      %v587 = vadd.f32 %v441, %v586
      %v588 = vpop.f32.mrb[0].mxu0
      %589 = vmatprep.mubr.bf16.mxu0 0
      %590 = vmatmul.mubr.bf16.gmra.mrb[0].mxu0 %v453
      %v591 = vpop.f32.mrb[0].mxu0
      %v592 = vadd.f32 %v446, %v591
      %v593 = vpop.f32.mrb[0].mxu0
      %v594 = vpop.f32.mrb[0].mxu0
      %v595 = vpop.f32.mrb[0].mxu0
      %596 = vdwg.mxu0
      %v597 = vld [vmem:[%s165] sm:$0xe]
      %v598 = vld [vmem:[%s1 + $0x80] sm:$0xf]
      %v599 = vld [vmem:[%s1 + $0x84] sm:$0xf]
      %v600 = vld [vmem:[%s1 + $0x88] sm:$0xf]
      %v601 = vld [vmem:[%s1 + $0x8c] sm:$0xf]
      %v602 = vld [vmem:[%s1 + $0x90] sm:$0xf]
      %v603 = vld [vmem:[%s1 + $0x94] sm:$0xf]
      %v604 = vld [vmem:[%s1 + $0x98] sm:$0xf]
      %v605 = vld [vmem:[%s1 + $0x9c] sm:$0xf]
      %v606 = vld [vmem:[%s1 + $0xa0] sm:$0xf]
      %v607 = vld [vmem:[%s1 + $0xa4] sm:$0xf]
      %v608 = vld [vmem:[%s1 + $0xa8] sm:$0xf]
      %v609 = vld [vmem:[%s1 + $0xac] sm:$0xf]
      %v610 = vld [vmem:[%s1 + $0xb0] sm:$0xf]
      %v611 = vld [vmem:[%s1 + $0xb4] sm:$0xf]
      %v612 = vld [vmem:[%s1 + $0xb8] sm:$0xf]
      %v613 = vld [vmem:[%s1 + $0xbc] sm:$0xf]
      %v615 = vunpack.c.l.b16 %v597
      %v616 = vpack.c.b16 %v233, %v615
      %vm617 = vcmask 1046528
      %v618 = vrot.slane %v616, 1
      %v619 = vrot.slane %v246, 1
      %v620 = vsel %vm617, %v618, %v619
      %v621 = vrot.slane %v247, 1
      %v622 = vsel %vm617, %v619, %v621
      %v623 = vrot.slane %v248, 1
      %v624 = vsel %vm617, %v621, %v623
      %v625 = vrot.slane %v249, 1
      %v626 = vsel %vm617, %v623, %v625
      %v627 = vrot.slane %v250, 1
      %v628 = vsel %vm617, %v625, %v627
      %v629 = vrot.slane %v251, 1
      %v630 = vsel %vm617, %v627, %v629
      %v654 = vunpack.c.l.b16 %v598
      %v655 = vunpack.c.l.b16 %v599
      %v656 = vunpack.c.l.b16 %v600
      %v657 = vunpack.c.l.b16 %v601
      %v658 = vunpack.c.l.b16 %v602
      %v659 = vunpack.c.l.b16 %v603
      %v660 = vunpack.c.l.b16 %v604
      %v661 = vunpack.c.l.b16 %v605
      %v662 = vunpack.c.l.b16 %v606
      %v663 = vunpack.c.l.b16 %v607
      %v664 = vunpack.c.l.b16 %v608
      %v665 = vunpack.c.l.b16 %v609
      %v666 = vunpack.c.l.b16 %v610
      %v667 = vunpack.c.l.b16 %v611
      %v668 = vunpack.c.l.b16 %v612
      %v669 = vunpack.c.l.b16 %v613
      %v670 = vpack.c.b16 %v655, %v654
      %v671 = vpack.c.b16 %v657, %v656
      %v672 = vpack.c.b16 %v659, %v658
      %v673 = vpack.c.b16 %v661, %v660
      %v674 = vpack.c.b16 %v663, %v662
      %v675 = vpack.c.b16 %v665, %v664
      %v676 = vpack.c.b16 %v667, %v666
      %v677 = vpack.c.b16 %v669, %v668
      %686 = vmatprep.subr.bf16.mxu0 0
      %687 = vmatpush1.bf16.msra.mxu0 %v670
      %688 = vmatprep.subr.bf16.mxu0 0
      %689 = vmatpush1.bf16.msra.mxu0 %v671
      %690 = vmatprep.subr.bf16.mxu0 0
      %691 = vmatpush1.bf16.msra.mxu0 %v672
      %692 = vmatprep.subr.bf16.mxu0 0
      %693 = vmatpush1.bf16.msra.mxu0 %v673
      %694 = vmatprep.subr.bf16.mxu0 0
      %695 = vmatpush1.bf16.msra.mxu0 %v674
      %696 = vmatprep.subr.bf16.mxu0 0
      %697 = vmatpush1.bf16.msra.mxu0 %v675
      %698 = vmatprep.subr.bf16.mxu0 0
      %699 = vmatpush1.bf16.msra.mxu0 %v676
      %700 = vmatprep.subr.bf16.mxu0 0
      %701 = vmatpush1.bf16.msra.mxu0 %v677
      %702 = vmatprep.subr.bf16.mxu0 0
      %703 = vmatpush1.bf16.msra.mxu0 0
      %704 = vmatprep.subr.bf16.mxu0 0
      %705 = vmatpush1.bf16.msra.mxu0 0
      %706 = vmatprep.subr.bf16.mxu0 0
      %707 = vmatpush1.bf16.msra.mxu0 0
      %708 = vmatprep.subr.bf16.mxu0 0
      %709 = vmatpush1.bf16.msra.mxu0 0
      %710 = vmatprep.subr.bf16.mxu0 0
      %711 = vmatpush1.bf16.msra.mxu0 0
      %712 = vmatprep.subr.bf16.mxu0 0
      %713 = vmatpush1.bf16.msra.mxu0 0
      %714 = vmatprep.subr.bf16.mxu0 0
      %715 = vmatpush1.bf16.msra.mxu0 0
      %716 = vmatprep.subr.bf16.mxu0 0
      %717 = vmatpush1.bf16.msra.mxu0 0
      %718 = vmatprep.mubr.bf16.mxu0 0
      %719 = vmatmul.mubr.bf16.gmra.mrb[0].mxu0 %v620
      %v720 = vpop.f32.mrb[0].mxu0
      %v721 = vadd.f32 0.0, %v720
      %v722 = vpop.f32.mrb[0].mxu0
      %v723 = vpop.f32.mrb[0].mxu0
      %v724 = vadd.f32 0.0, %v723
      %v725 = vpop.f32.mrb[0].mxu0
      %726 = vmatprep.mubr.bf16.mxu0 0
      %727 = vmatmul.mubr.bf16.gmra.mrb[0].mxu0 %v622
      %v728 = vpop.f32.mrb[0].mxu0
      %v729 = vadd.f32 0.0, %v728
      %v730 = vpop.f32.mrb[0].mxu0
      %v731 = vpop.f32.mrb[0].mxu0
      %v732 = vadd.f32 0.0, %v731
      %v733 = vpop.f32.mrb[0].mxu0
      %734 = vmatprep.mubr.bf16.mxu0 0
      %735 = vmatmul.mubr.bf16.gmra.mrb[0].mxu0 %v624
      %v736 = vpop.f32.mrb[0].mxu0
      %v737 = vadd.f32 0.0, %v736
      %v738 = vpop.f32.mrb[0].mxu0
      %v739 = vpop.f32.mrb[0].mxu0
      %v740 = vadd.f32 0.0, %v739
      %v741 = vpop.f32.mrb[0].mxu0
      %742 = vmatprep.mubr.bf16.mxu0 0
      %743 = vmatmul.mubr.bf16.gmra.mrb[0].mxu0 %v626
      %v744 = vpop.f32.mrb[0].mxu0
      %v745 = vadd.f32 0.0, %v744
      %v746 = vpop.f32.mrb[0].mxu0
      %v747 = vpop.f32.mrb[0].mxu0
      %v748 = vadd.f32 0.0, %v747
      %v749 = vpop.f32.mrb[0].mxu0
      %750 = vmatprep.mubr.bf16.mxu0 0
      %751 = vmatmul.mubr.bf16.gmra.mrb[0].mxu0 %v628
      %v752 = vpop.f32.mrb[0].mxu0
      %v753 = vadd.f32 0.0, %v752
      %v754 = vpop.f32.mrb[0].mxu0
      %v755 = vpop.f32.mrb[0].mxu0
      %v756 = vadd.f32 0.0, %v755
      %v757 = vpop.f32.mrb[0].mxu0
      %758 = vmatprep.mubr.bf16.mxu0 0
      %759 = vmatmul.mubr.bf16.gmra.mrb[0].mxu0 %v630
      %v760 = vpop.f32.mrb[0].mxu0
      %v761 = vadd.f32 0.0, %v760
      %v762 = vpop.f32.mrb[0].mxu0
      %v763 = vpop.f32.mrb[0].mxu0
      %v764 = vadd.f32 0.0, %v763
      %v765 = vpop.f32.mrb[0].mxu0
      %766 = vmatprep.mubr.bf16.mxu0 0
      %767 = vmatmul.mubr.bf16.gmra.mrb[0].mxu0 %v629
      %v768 = vpop.f32.mrb[0].mxu0
      %v769 = vadd.f32 0.0, %v768
      %v770 = vpop.f32.mrb[0].mxu0
      %v771 = vpop.f32.mrb[0].mxu0
      %v772 = vpop.f32.mrb[0].mxu0
      %773 = vdwg.mxu0
      %v774 = vadd.f32 %v544, %v721
      %v775 = vadd.f32 %v547, %v724
      %v776 = vadd.f32 %v552, %v729
      %v777 = vadd.f32 %v555, %v732
      %v778 = vadd.f32 %v560, %v737
      %v779 = vadd.f32 %v563, %v740
      %v780 = vadd.f32 %v568, %v745
      %v781 = vadd.f32 %v571, %v748
      %v782 = vadd.f32 %v576, %v753
      %v783 = vadd.f32 %v579, %v756
      %v784 = vadd.f32 %v584, %v761
      %v785 = vadd.f32 %v587, %v764
      %v786 = vadd.f32 %v592, %v769
      %v787 = vld [vmem:[%s165 + $0x4] sm:$0xe]
      %v788 = vld [vmem:[%s165 + $0x8] sm:$0xf]
      %v789 = vld [vmem:[%s165 + $0xc] sm:$0xf]
      %v790 = vld [vmem:[%s165 + $0x10] sm:$0xf]
      %v791 = vld [vmem:[%s165 + $0x14] sm:$0xf]
      %v792 = vld [vmem:[%s165 + $0x18] sm:$0xf]
      %v793 = vld [vmem:[%s165 + $0x1c] sm:$0xf]
      %v794 = vld [vmem:[%s165 + $0x20] sm:$0xf]
      %v795 = vld [vmem:[%s165 + $0x24] sm:$0xf]
      %v796 = vld [vmem:[%s165 + $0x28] sm:$0xf]
      %v797 = vld [vmem:[%s165 + $0x2c] sm:$0xf]
      %v798 = vld [vmem:[%s165 + $0x30] sm:$0xf]
      %v799 = vld [vmem:[%s165 + $0x34] sm:$0x7]
      %v800 = vld [vmem:[%s1 + $0xc0] sm:$0xf]
      %v801 = vld [vmem:[%s1 + $0xc4] sm:$0xf]
      %v802 = vld [vmem:[%s1 + $0xc8] sm:$0xf]
      %v803 = vld [vmem:[%s1 + $0xcc] sm:$0xf]
      %v804 = vld [vmem:[%s1 + $0xd0] sm:$0xf]
      %v805 = vld [vmem:[%s1 + $0xd4] sm:$0xf]
      %v806 = vld [vmem:[%s1 + $0xd8] sm:$0xf]
      %v807 = vld [vmem:[%s1 + $0xdc] sm:$0xf]
      %v808 = vld [vmem:[%s1 + $0xe0] sm:$0xf]
      %v809 = vld [vmem:[%s1 + $0xe4] sm:$0xf]
      %v810 = vld [vmem:[%s1 + $0xe8] sm:$0xf]
      %v811 = vld [vmem:[%s1 + $0xec] sm:$0xf]
      %v812 = vld [vmem:[%s1 + $0xf0] sm:$0xf]
      %v813 = vld [vmem:[%s1 + $0xf4] sm:$0xf]
      %v814 = vld [vmem:[%s1 + $0xf8] sm:$0xf]
      %v815 = vld [vmem:[%s1 + $0xfc] sm:$0xf]
      %v829 = vunpack.c.l.b16 %v787
      %v830 = vunpack.c.l.b16 %v788
      %v831 = vunpack.c.l.b16 %v789
      %v832 = vunpack.c.l.b16 %v790
      %v833 = vunpack.c.l.b16 %v791
      %v834 = vunpack.c.l.b16 %v792
      %v835 = vunpack.c.l.b16 %v793
      %v836 = vunpack.c.l.b16 %v794
      %v837 = vunpack.c.l.b16 %v795
      %v838 = vunpack.c.l.b16 %v796
      %v839 = vunpack.c.l.b16 %v797
      %v840 = vunpack.c.l.b16 %v798
      %v841 = vunpack.c.l.b16 %v799
      %v842 = vpack.c.b16 %v830, %v829
      %v843 = vpack.c.b16 %v832, %v831
      %v844 = vpack.c.b16 %v834, %v833
      %v845 = vpack.c.b16 %v836, %v835
      %v846 = vpack.c.b16 %v838, %v837
      %v847 = vpack.c.b16 %v840, %v839
      %v848 = vpack.c.b16 %v841, %v841
      %v849 = vrot.slane %v842, 1
      %v850 = vrot.slane %v843, 1
      %v851 = vsel %vm617, %v849, %v850
      %v852 = vrot.slane %v844, 1
      %v853 = vsel %vm617, %v850, %v852
      %v854 = vrot.slane %v845, 1
      %v855 = vsel %vm617, %v852, %v854
      %v856 = vrot.slane %v846, 1
      %v857 = vsel %vm617, %v854, %v856
      %v858 = vrot.slane %v847, 1
      %v859 = vsel %vm617, %v856, %v858
      %v860 = vrot.slane %v848, 1
      %v861 = vsel %vm617, %v858, %v860
      %v885 = vunpack.c.l.b16 %v800
      %v886 = vunpack.c.l.b16 %v801
      %v887 = vunpack.c.l.b16 %v802
      %v888 = vunpack.c.l.b16 %v803
      %v889 = vunpack.c.l.b16 %v804
      %v890 = vunpack.c.l.b16 %v805
      %v891 = vunpack.c.l.b16 %v806
      %v892 = vunpack.c.l.b16 %v807
      %v893 = vunpack.c.l.b16 %v808
      %v894 = vunpack.c.l.b16 %v809
      %v895 = vunpack.c.l.b16 %v810
      %v896 = vunpack.c.l.b16 %v811
      %v897 = vunpack.c.l.b16 %v812
      %v898 = vunpack.c.l.b16 %v813
      %v899 = vunpack.c.l.b16 %v814
      %v900 = vunpack.c.l.b16 %v815
      %v901 = vpack.c.b16 %v886, %v885
      %v902 = vpack.c.b16 %v888, %v887
      %v903 = vpack.c.b16 %v890, %v889
      %v904 = vpack.c.b16 %v892, %v891
      %v905 = vpack.c.b16 %v894, %v893
      %v906 = vpack.c.b16 %v896, %v895
      %v907 = vpack.c.b16 %v898, %v897
      %v908 = vpack.c.b16 %v900, %v899
      %917 = vmatprep.subr.bf16.mxu0 0
      %918 = vmatpush1.bf16.msra.mxu0 %v901
      %919 = vmatprep.subr.bf16.mxu0 0
      %920 = vmatpush1.bf16.msra.mxu0 %v902
      %921 = vmatprep.subr.bf16.mxu0 0
      %922 = vmatpush1.bf16.msra.mxu0 %v903
      %923 = vmatprep.subr.bf16.mxu0 0
      %924 = vmatpush1.bf16.msra.mxu0 %v904
      %925 = vmatprep.subr.bf16.mxu0 0
      %926 = vmatpush1.bf16.msra.mxu0 %v905
      %927 = vmatprep.subr.bf16.mxu0 0
      %928 = vmatpush1.bf16.msra.mxu0 %v906
      %929 = vmatprep.subr.bf16.mxu0 0
      %930 = vmatpush1.bf16.msra.mxu0 %v907
      %931 = vmatprep.subr.bf16.mxu0 0
      %932 = vmatpush1.bf16.msra.mxu0 %v908
      %933 = vmatprep.subr.bf16.mxu0 0
      %934 = vmatpush1.bf16.msra.mxu0 0
      %935 = vmatprep.subr.bf16.mxu0 0
      %936 = vmatpush1.bf16.msra.mxu0 0
      %937 = vmatprep.subr.bf16.mxu0 0
      %938 = vmatpush1.bf16.msra.mxu0 0
      %939 = vmatprep.subr.bf16.mxu0 0
      %940 = vmatpush1.bf16.msra.mxu0 0
      %941 = vmatprep.subr.bf16.mxu0 0
      %942 = vmatpush1.bf16.msra.mxu0 0
      %943 = vmatprep.subr.bf16.mxu0 0
      %944 = vmatpush1.bf16.msra.mxu0 0
      %945 = vmatprep.subr.bf16.mxu0 0
      %946 = vmatpush1.bf16.msra.mxu0 0
      %947 = vmatprep.subr.bf16.mxu0 0
      %948 = vmatpush1.bf16.msra.mxu0 0
      %949 = vmatprep.mubr.bf16.mxu0 0
      %950 = vmatmul.mubr.bf16.gmra.mrb[0].mxu0 %v851
      %v951 = vpop.f32.mrb[0].mxu0
      %v952 = vadd.f32 0.0, %v951
      %v953 = vpop.f32.mrb[0].mxu0
      %v954 = vpop.f32.mrb[0].mxu0
      %v955 = vadd.f32 0.0, %v954
      %v956 = vpop.f32.mrb[0].mxu0
      %957 = vmatprep.mubr.bf16.mxu0 0
      %958 = vmatmul.mubr.bf16.gmra.mrb[0].mxu0 %v853
      %v959 = vpop.f32.mrb[0].mxu0
      %v960 = vadd.f32 0.0, %v959
      %v961 = vpop.f32.mrb[0].mxu0
      %v962 = vpop.f32.mrb[0].mxu0
      %v963 = vadd.f32 0.0, %v962
      %v964 = vpop.f32.mrb[0].mxu0
      %965 = vmatprep.mubr.bf16.mxu0 0
      %966 = vmatmul.mubr.bf16.gmra.mrb[0].mxu0 %v855
      %v967 = vpop.f32.mrb[0].mxu0
      %v968 = vadd.f32 0.0, %v967
      %v969 = vpop.f32.mrb[0].mxu0
      %v970 = vpop.f32.mrb[0].mxu0
      %v971 = vadd.f32 0.0, %v970
      %v972 = vpop.f32.mrb[0].mxu0
      %973 = vmatprep.mubr.bf16.mxu0 0
      %974 = vmatmul.mubr.bf16.gmra.mrb[0].mxu0 %v857
      %v975 = vpop.f32.mrb[0].mxu0
      %v976 = vadd.f32 0.0, %v975
      %v977 = vpop.f32.mrb[0].mxu0
      %v978 = vpop.f32.mrb[0].mxu0
      %v979 = vadd.f32 0.0, %v978
      %v980 = vpop.f32.mrb[0].mxu0
      %981 = vmatprep.mubr.bf16.mxu0 0
      %982 = vmatmul.mubr.bf16.gmra.mrb[0].mxu0 %v859
      %v983 = vpop.f32.mrb[0].mxu0
      %v984 = vadd.f32 0.0, %v983
      %v985 = vpop.f32.mrb[0].mxu0
      %v986 = vpop.f32.mrb[0].mxu0
      %v987 = vadd.f32 0.0, %v986
      %v988 = vpop.f32.mrb[0].mxu0
      %989 = vmatprep.mubr.bf16.mxu0 0
      %990 = vmatmul.mubr.bf16.gmra.mrb[0].mxu0 %v861
      %v991 = vpop.f32.mrb[0].mxu0
      %v992 = vadd.f32 0.0, %v991
      %v993 = vpop.f32.mrb[0].mxu0
      %v994 = vpop.f32.mrb[0].mxu0
      %v995 = vadd.f32 0.0, %v994
      %v996 = vpop.f32.mrb[0].mxu0
      %997 = vmatprep.mubr.bf16.mxu0 0
      %998 = vmatmul.mubr.bf16.gmra.mrb[0].mxu0 %v860
      %v999 = vpop.f32.mrb[0].mxu0
      %v1000 = vadd.f32 0.0, %v999
      %v1001 = vpop.f32.mrb[0].mxu0
      %v1002 = vpop.f32.mrb[0].mxu0
      %v1003 = vpop.f32.mrb[0].mxu0
      %1004 = vdwg.mxu0
      %v1005 = vadd.f32 %v774, %v952
      %v1006 = vadd.f32 %v775, %v955
      %v1007 = vadd.f32 %v776, %v960
      %v1008 = vadd.f32 %v777, %v963
      %v1009 = vadd.f32 %v778, %v968
      %v1010 = vadd.f32 %v779, %v971
      %v1011 = vadd.f32 %v780, %v976
      %v1012 = vadd.f32 %v781, %v979
      %v1013 = vadd.f32 %v782, %v984
      %v1014 = vadd.f32 %v783, %v987
      %v1015 = vadd.f32 %v784, %v992
      %v1016 = vadd.f32 %v785, %v995
      %v1017 = vadd.f32 %v786, %v1000
      %v1018 = vld [vmem:[%s165 + $0x34] sm:$0xf]
      %v1019 = vld [vmem:[%s1 + $0x100] sm:$0xf]
      %v1020 = vld [vmem:[%s1 + $0x104] sm:$0xf]
      %v1021 = vld [vmem:[%s1 + $0x108] sm:$0xf]
      %v1022 = vld [vmem:[%s1 + $0x10c] sm:$0xf]
      %v1023 = vld [vmem:[%s1 + $0x110] sm:$0xf]
      %v1024 = vld [vmem:[%s1 + $0x114] sm:$0xf]
      %v1025 = vld [vmem:[%s1 + $0x118] sm:$0xf]
      %v1026 = vld [vmem:[%s1 + $0x11c] sm:$0xf]
      %v1027 = vld [vmem:[%s1 + $0x120] sm:$0xf]
      %v1028 = vld [vmem:[%s1 + $0x124] sm:$0xf]
      %v1029 = vld [vmem:[%s1 + $0x128] sm:$0xf]
      %v1030 = vld [vmem:[%s1 + $0x12c] sm:$0xf]
      %v1031 = vld [vmem:[%s1 + $0x130] sm:$0xf]
      %v1032 = vld [vmem:[%s1 + $0x134] sm:$0xf]
      %v1033 = vld [vmem:[%s1 + $0x138] sm:$0xf]
      %v1034 = vld [vmem:[%s1 + $0x13c] sm:$0xf]
      %v1036 = vunpack.c.l.b16 %v1018
      %v1037 = vpack.c.b16 %v1036, %v1036
      %vm1038 = vsmask.f32 6400
      %v1040 = vshrl.u32 %v842, 16
      %v1042 = vrot.slane %v1040, 1
      %v1043 = vshll.u32 %v842, 16
      %v1045 = vrot.slane %v1043, 2
      %v1046 = vor.u32 %v1042, %v1045
      %v1048 = vshrl.u32 %v843, 16
      %v1050 = vrot.slane %v1048, 1
      %v1051 = vshll.u32 %v843, 16
      %v1053 = vrot.slane %v1051, 2
      %v1054 = vor.u32 %v1050, %v1053
      %v1055 = vsel %vm1038, %v1046, %v1054
      %v1057 = vshrl.u32 %v844, 16
      %v1059 = vrot.slane %v1057, 1
      %v1060 = vshll.u32 %v844, 16
      %v1062 = vrot.slane %v1060, 2
      %v1063 = vor.u32 %v1059, %v1062
      %v1064 = vsel %vm1038, %v1054, %v1063
      %v1066 = vshrl.u32 %v845, 16
      %v1068 = vrot.slane %v1066, 1
      %v1069 = vshll.u32 %v845, 16
      %v1071 = vrot.slane %v1069, 2
      %v1072 = vor.u32 %v1068, %v1071
      %v1073 = vsel %vm1038, %v1063, %v1072
      %v1075 = vshrl.u32 %v846, 16
      %v1077 = vrot.slane %v1075, 1
      %v1078 = vshll.u32 %v846, 16
      %v1080 = vrot.slane %v1078, 2
      %v1081 = vor.u32 %v1077, %v1080
      %v1082 = vsel %vm1038, %v1072, %v1081
      %v1084 = vshrl.u32 %v847, 16
      %v1086 = vrot.slane %v1084, 1
      %v1087 = vshll.u32 %v847, 16
      %v1089 = vrot.slane %v1087, 2
      %v1090 = vor.u32 %v1086, %v1089
      %v1091 = vsel %vm1038, %v1081, %v1090
      %v1093 = vshrl.u32 %v1037, 16
      %v1095 = vrot.slane %v1093, 1
      %v1096 = vshll.u32 %v1037, 16
      %v1098 = vrot.slane %v1096, 2
      %v1099 = vor.u32 %v1095, %v1098
      %v1100 = vsel %vm1038, %v1090, %v1099
      %v1124 = vunpack.c.l.b16 %v1019
      %v1125 = vunpack.c.l.b16 %v1020
      %v1126 = vunpack.c.l.b16 %v1021
      %v1127 = vunpack.c.l.b16 %v1022
      %v1128 = vunpack.c.l.b16 %v1023
      %v1129 = vunpack.c.l.b16 %v1024
      %v1130 = vunpack.c.l.b16 %v1025
      %v1131 = vunpack.c.l.b16 %v1026
      %v1132 = vunpack.c.l.b16 %v1027
      %v1133 = vunpack.c.l.b16 %v1028
      %v1134 = vunpack.c.l.b16 %v1029
      %v1135 = vunpack.c.l.b16 %v1030
      %v1136 = vunpack.c.l.b16 %v1031
      %v1137 = vunpack.c.l.b16 %v1032
      %v1138 = vunpack.c.l.b16 %v1033
      %v1139 = vunpack.c.l.b16 %v1034
      %v1140 = vpack.c.b16 %v1125, %v1124
      %v1141 = vpack.c.b16 %v1127, %v1126
      %v1142 = vpack.c.b16 %v1129, %v1128
      %v1143 = vpack.c.b16 %v1131, %v1130
      %v1144 = vpack.c.b16 %v1133, %v1132
      %v1145 = vpack.c.b16 %v1135, %v1134
      %v1146 = vpack.c.b16 %v1137, %v1136
      %v1147 = vpack.c.b16 %v1139, %v1138
      %1156 = vmatprep.subr.bf16.mxu0 0
      %1157 = vmatpush1.bf16.msra.mxu0 %v1140
      %1158 = vmatprep.subr.bf16.mxu0 0
      %1159 = vmatpush1.bf16.msra.mxu0 %v1141
      %1160 = vmatprep.subr.bf16.mxu0 0
      %1161 = vmatpush1.bf16.msra.mxu0 %v1142
      %1162 = vmatprep.subr.bf16.mxu0 0
      %1163 = vmatpush1.bf16.msra.mxu0 %v1143
      %1164 = vmatprep.subr.bf16.mxu0 0
      %1165 = vmatpush1.bf16.msra.mxu0 %v1144
      %1166 = vmatprep.subr.bf16.mxu0 0
      %1167 = vmatpush1.bf16.msra.mxu0 %v1145
      %1168 = vmatprep.subr.bf16.mxu0 0
      %1169 = vmatpush1.bf16.msra.mxu0 %v1146
      %1170 = vmatprep.subr.bf16.mxu0 0
      %1171 = vmatpush1.bf16.msra.mxu0 %v1147
      %1172 = vmatprep.subr.bf16.mxu0 0
      %1173 = vmatpush1.bf16.msra.mxu0 0
      %1174 = vmatprep.subr.bf16.mxu0 0
      %1175 = vmatpush1.bf16.msra.mxu0 0
      %1176 = vmatprep.subr.bf16.mxu0 0
      %1177 = vmatpush1.bf16.msra.mxu0 0
      %1178 = vmatprep.subr.bf16.mxu0 0
      %1179 = vmatpush1.bf16.msra.mxu0 0
      %1180 = vmatprep.subr.bf16.mxu0 0
      %1181 = vmatpush1.bf16.msra.mxu0 0
      %1182 = vmatprep.subr.bf16.mxu0 0
      %1183 = vmatpush1.bf16.msra.mxu0 0
      %1184 = vmatprep.subr.bf16.mxu0 0
      %1185 = vmatpush1.bf16.msra.mxu0 0
      %1186 = vmatprep.subr.bf16.mxu0 0
      %1187 = vmatpush1.bf16.msra.mxu0 0
      %1188 = vmatprep.mubr.bf16.mxu0 0
      %1189 = vmatmul.mubr.bf16.gmra.mrb[0].mxu0 %v1055
      %v1190 = vpop.f32.mrb[0].mxu0
      %v1191 = vadd.f32 0.0, %v1190
      %v1192 = vpop.f32.mrb[0].mxu0
      %v1193 = vpop.f32.mrb[0].mxu0
      %v1194 = vadd.f32 0.0, %v1193
      %v1195 = vpop.f32.mrb[0].mxu0
      %1196 = vmatprep.mubr.bf16.mxu0 0
      %1197 = vmatmul.mubr.bf16.gmra.mrb[0].mxu0 %v1064
      %v1198 = vpop.f32.mrb[0].mxu0
      %v1199 = vadd.f32 0.0, %v1198
      %v1200 = vpop.f32.mrb[0].mxu0
      %v1201 = vpop.f32.mrb[0].mxu0
      %v1202 = vadd.f32 0.0, %v1201
      %v1203 = vpop.f32.mrb[0].mxu0
      %1204 = vmatprep.mubr.bf16.mxu0 0
      %1205 = vmatmul.mubr.bf16.gmra.mrb[0].mxu0 %v1073
      %v1206 = vpop.f32.mrb[0].mxu0
      %v1207 = vadd.f32 0.0, %v1206
      %v1208 = vpop.f32.mrb[0].mxu0
      %v1209 = vpop.f32.mrb[0].mxu0
      %v1210 = vadd.f32 0.0, %v1209
      %v1211 = vpop.f32.mrb[0].mxu0
      %1212 = vmatprep.mubr.bf16.mxu0 0
      %1213 = vmatmul.mubr.bf16.gmra.mrb[0].mxu0 %v1082
      %v1214 = vpop.f32.mrb[0].mxu0
      %v1215 = vadd.f32 0.0, %v1214
      %v1216 = vpop.f32.mrb[0].mxu0
      %v1217 = vpop.f32.mrb[0].mxu0
      %v1218 = vadd.f32 0.0, %v1217
      %v1219 = vpop.f32.mrb[0].mxu0
      %1220 = vmatprep.mubr.bf16.mxu0 0
      %1221 = vmatmul.mubr.bf16.gmra.mrb[0].mxu0 %v1091
      %v1222 = vpop.f32.mrb[0].mxu0
      %v1223 = vadd.f32 0.0, %v1222
      %v1224 = vpop.f32.mrb[0].mxu0
      %v1225 = vpop.f32.mrb[0].mxu0
      %v1226 = vadd.f32 0.0, %v1225
      %v1227 = vpop.f32.mrb[0].mxu0
      %1228 = vmatprep.mubr.bf16.mxu0 0
      %1229 = vmatmul.mubr.bf16.gmra.mrb[0].mxu0 %v1100
      %v1230 = vpop.f32.mrb[0].mxu0
      %v1231 = vadd.f32 0.0, %v1230
      %v1232 = vpop.f32.mrb[0].mxu0
      %v1233 = vpop.f32.mrb[0].mxu0
      %v1234 = vadd.f32 0.0, %v1233
      %v1235 = vpop.f32.mrb[0].mxu0
      %1236 = vmatprep.mubr.bf16.mxu0 0
      %1237 = vmatmul.mubr.bf16.gmra.mrb[0].mxu0 %v1099
      %v1238 = vpop.f32.mrb[0].mxu0
      %v1239 = vadd.f32 0.0, %v1238
      %v1240 = vpop.f32.mrb[0].mxu0
      %v1241 = vpop.f32.mrb[0].mxu0
      %v1242 = vpop.f32.mrb[0].mxu0
      %1243 = vdwg.mxu0
      %v1244 = vadd.f32 %v1005, %v1191
      %v1245 = vadd.f32 %v1006, %v1194
      %v1246 = vadd.f32 %v1007, %v1199
      %v1247 = vadd.f32 %v1008, %v1202
      %v1248 = vadd.f32 %v1009, %v1207
      %v1249 = vadd.f32 %v1010, %v1210
      %v1250 = vadd.f32 %v1011, %v1215
      %v1251 = vadd.f32 %v1012, %v1218
      %v1252 = vadd.f32 %v1013, %v1223
      %v1253 = vadd.f32 %v1014, %v1226
      %v1254 = vadd.f32 %v1015, %v1231
      %v1255 = vadd.f32 %v1016, %v1234
      %v1256 = vadd.f32 %v1017, %v1239
      %v1257 = vld [vmem:[%s165 + $0x4] sm:$0xc]
      %v1258 = vld [vmem:[%s1 + $0x140] sm:$0xf]
      %v1259 = vld [vmem:[%s1 + $0x144] sm:$0xf]
      %v1260 = vld [vmem:[%s1 + $0x148] sm:$0xf]
      %v1261 = vld [vmem:[%s1 + $0x14c] sm:$0xf]
      %v1262 = vld [vmem:[%s1 + $0x150] sm:$0xf]
      %v1263 = vld [vmem:[%s1 + $0x154] sm:$0xf]
      %v1264 = vld [vmem:[%s1 + $0x158] sm:$0xf]
      %v1265 = vld [vmem:[%s1 + $0x15c] sm:$0xf]
      %v1266 = vld [vmem:[%s1 + $0x160] sm:$0xf]
      %v1267 = vld [vmem:[%s1 + $0x164] sm:$0xf]
      %v1268 = vld [vmem:[%s1 + $0x168] sm:$0xf]
      %v1269 = vld [vmem:[%s1 + $0x16c] sm:$0xf]
      %v1270 = vld [vmem:[%s1 + $0x170] sm:$0xf]
      %v1271 = vld [vmem:[%s1 + $0x174] sm:$0xf]
      %v1272 = vld [vmem:[%s1 + $0x178] sm:$0xf]
      %v1273 = vld [vmem:[%s1 + $0x17c] sm:$0xf]
      %v1275 = vunpack.c.l.b16 %v1257
      %v1276 = vpack.c.b16 %v830, %v1275
      %vm1277 = vcmask 1045504
      %v1278 = vrot.slane %v1276, 2
      %v1279 = vrot.slane %v843, 2
      %v1280 = vsel %vm1277, %v1278, %v1279
      %v1281 = vrot.slane %v844, 2
      %v1282 = vsel %vm1277, %v1279, %v1281
      %v1283 = vrot.slane %v845, 2
      %v1284 = vsel %vm1277, %v1281, %v1283
      %v1285 = vrot.slane %v846, 2
      %v1286 = vsel %vm1277, %v1283, %v1285
      %v1287 = vrot.slane %v847, 2
      %v1288 = vsel %vm1277, %v1285, %v1287
      %v1289 = vrot.slane %v1037, 2
      %v1290 = vsel %vm1277, %v1287, %v1289
      %v1314 = vunpack.c.l.b16 %v1258
      %v1315 = vunpack.c.l.b16 %v1259
      %v1316 = vunpack.c.l.b16 %v1260
      %v1317 = vunpack.c.l.b16 %v1261
      %v1318 = vunpack.c.l.b16 %v1262
      %v1319 = vunpack.c.l.b16 %v1263
      %v1320 = vunpack.c.l.b16 %v1264
      %v1321 = vunpack.c.l.b16 %v1265
      %v1322 = vunpack.c.l.b16 %v1266
      %v1323 = vunpack.c.l.b16 %v1267
      %v1324 = vunpack.c.l.b16 %v1268
      %v1325 = vunpack.c.l.b16 %v1269
      %v1326 = vunpack.c.l.b16 %v1270
      %v1327 = vunpack.c.l.b16 %v1271
      %v1328 = vunpack.c.l.b16 %v1272
      %v1329 = vunpack.c.l.b16 %v1273
      %v1330 = vpack.c.b16 %v1315, %v1314
      %v1331 = vpack.c.b16 %v1317, %v1316
      %v1332 = vpack.c.b16 %v1319, %v1318
      %v1333 = vpack.c.b16 %v1321, %v1320
      %v1334 = vpack.c.b16 %v1323, %v1322
      %v1335 = vpack.c.b16 %v1325, %v1324
      %v1336 = vpack.c.b16 %v1327, %v1326
      %v1337 = vpack.c.b16 %v1329, %v1328
      %1346 = vmatprep.subr.bf16.mxu0 0
      %1347 = vmatpush1.bf16.msra.mxu0 %v1330
      %1348 = vmatprep.subr.bf16.mxu0 0
      %1349 = vmatpush1.bf16.msra.mxu0 %v1331
      %1350 = vmatprep.subr.bf16.mxu0 0
      %1351 = vmatpush1.bf16.msra.mxu0 %v1332
      %1352 = vmatprep.subr.bf16.mxu0 0
      %1353 = vmatpush1.bf16.msra.mxu0 %v1333
      %1354 = vmatprep.subr.bf16.mxu0 0
      %1355 = vmatpush1.bf16.msra.mxu0 %v1334
      %1356 = vmatprep.subr.bf16.mxu0 0
      %1357 = vmatpush1.bf16.msra.mxu0 %v1335
      %1358 = vmatprep.subr.bf16.mxu0 0
      %1359 = vmatpush1.bf16.msra.mxu0 %v1336
      %1360 = vmatprep.subr.bf16.mxu0 0
      %1361 = vmatpush1.bf16.msra.mxu0 %v1337
      %1362 = vmatprep.subr.bf16.mxu0 0
      %1363 = vmatpush1.bf16.msra.mxu0 0
      %1364 = vmatprep.subr.bf16.mxu0 0
      %1365 = vmatpush1.bf16.msra.mxu0 0
      %1366 = vmatprep.subr.bf16.mxu0 0
      %1367 = vmatpush1.bf16.msra.mxu0 0
      %1368 = vmatprep.subr.bf16.mxu0 0
      %1369 = vmatpush1.bf16.msra.mxu0 0
      %1370 = vmatprep.subr.bf16.mxu0 0
      %1371 = vmatpush1.bf16.msra.mxu0 0
      %1372 = vmatprep.subr.bf16.mxu0 0
      %1373 = vmatpush1.bf16.msra.mxu0 0
      %1374 = vmatprep.subr.bf16.mxu0 0
      %1375 = vmatpush1.bf16.msra.mxu0 0
      %1376 = vmatprep.subr.bf16.mxu0 0
      %1377 = vmatpush1.bf16.msra.mxu0 0
      %1378 = vmatprep.mubr.bf16.mxu0 0
      %1379 = vmatmul.mubr.bf16.gmra.mrb[0].mxu0 %v1280
      %v1380 = vpop.f32.mrb[0].mxu0
      %v1381 = vadd.f32 0.0, %v1380
      %v1382 = vpop.f32.mrb[0].mxu0
      %v1383 = vpop.f32.mrb[0].mxu0
      %v1384 = vadd.f32 0.0, %v1383
      %v1385 = vpop.f32.mrb[0].mxu0
      %1386 = vmatprep.mubr.bf16.mxu0 0
      %1387 = vmatmul.mubr.bf16.gmra.mrb[0].mxu0 %v1282
      %v1388 = vpop.f32.mrb[0].mxu0
      %v1389 = vadd.f32 0.0, %v1388
      %v1390 = vpop.f32.mrb[0].mxu0
      %v1391 = vpop.f32.mrb[0].mxu0
      %v1392 = vadd.f32 0.0, %v1391
      %v1393 = vpop.f32.mrb[0].mxu0
      %1394 = vmatprep.mubr.bf16.mxu0 0
      %1395 = vmatmul.mubr.bf16.gmra.mrb[0].mxu0 %v1284
      %v1396 = vpop.f32.mrb[0].mxu0
      %v1397 = vadd.f32 0.0, %v1396
      %v1398 = vpop.f32.mrb[0].mxu0
      %v1399 = vpop.f32.mrb[0].mxu0
      %v1400 = vadd.f32 0.0, %v1399
      %v1401 = vpop.f32.mrb[0].mxu0
      %1402 = vmatprep.mubr.bf16.mxu0 0
      %1403 = vmatmul.mubr.bf16.gmra.mrb[0].mxu0 %v1286
      %v1404 = vpop.f32.mrb[0].mxu0
      %v1405 = vadd.f32 0.0, %v1404
      %v1406 = vpop.f32.mrb[0].mxu0
      %v1407 = vpop.f32.mrb[0].mxu0
      %v1408 = vadd.f32 0.0, %v1407
      %v1409 = vpop.f32.mrb[0].mxu0
      %1410 = vmatprep.mubr.bf16.mxu0 0
      %1411 = vmatmul.mubr.bf16.gmra.mrb[0].mxu0 %v1288
      %v1412 = vpop.f32.mrb[0].mxu0
      %v1413 = vadd.f32 0.0, %v1412
      %v1414 = vpop.f32.mrb[0].mxu0
      %v1415 = vpop.f32.mrb[0].mxu0
      %v1416 = vadd.f32 0.0, %v1415
      %v1417 = vpop.f32.mrb[0].mxu0
      %1418 = vmatprep.mubr.bf16.mxu0 0
      %1419 = vmatmul.mubr.bf16.gmra.mrb[0].mxu0 %v1290
      %v1420 = vpop.f32.mrb[0].mxu0
      %v1421 = vadd.f32 0.0, %v1420
      %v1422 = vpop.f32.mrb[0].mxu0
      %v1423 = vpop.f32.mrb[0].mxu0
      %v1424 = vadd.f32 0.0, %v1423
      %v1425 = vpop.f32.mrb[0].mxu0
      %1426 = vmatprep.mubr.bf16.mxu0 0
      %1427 = vmatmul.mubr.bf16.gmra.mrb[0].mxu0 %v1289
      %v1428 = vpop.f32.mrb[0].mxu0
      %v1429 = vadd.f32 0.0, %v1428
      %v1430 = vpop.f32.mrb[0].mxu0
      %v1431 = vpop.f32.mrb[0].mxu0
      %v1432 = vpop.f32.mrb[0].mxu0
      %1433 = vdwg.mxu0
      %v1434 = vadd.f32 %v1244, %v1381
      %v1435 = vadd.f32 %v1245, %v1384
      %v1436 = vadd.f32 %v1246, %v1389
      %v1437 = vadd.f32 %v1247, %v1392
      %v1438 = vadd.f32 %v1248, %v1397
      %v1439 = vadd.f32 %v1249, %v1400
      %v1440 = vadd.f32 %v1250, %v1405
      %v1441 = vadd.f32 %v1251, %v1408
      %v1442 = vadd.f32 %v1252, %v1413
      %v1443 = vadd.f32 %v1253, %v1416
      %v1444 = vadd.f32 %v1254, %v1421
      %v1445 = vadd.f32 %v1255, %v1424
      %v1446 = vadd.f32 %v1256, %v1429
      %v1447 = vld [vmem:[%s165 + $0x8] sm:$0xc]
      %v1448 = vld [vmem:[%s165 + $0xc] sm:$0xf]
      %v1449 = vld [vmem:[%s165 + $0x10] sm:$0xf]
      %v1450 = vld [vmem:[%s165 + $0x14] sm:$0xf]
      %v1451 = vld [vmem:[%s165 + $0x18] sm:$0xf]
      %v1452 = vld [vmem:[%s165 + $0x1c] sm:$0xf]
      %v1453 = vld [vmem:[%s165 + $0x20] sm:$0xf]
      %v1454 = vld [vmem:[%s165 + $0x24] sm:$0xf]
      %v1455 = vld [vmem:[%s165 + $0x28] sm:$0xf]
      %v1456 = vld [vmem:[%s165 + $0x2c] sm:$0xf]
      %v1457 = vld [vmem:[%s165 + $0x30] sm:$0xf]
      %v1458 = vld [vmem:[%s165 + $0x34] sm:$0xf]
      %v1459 = vld [vmem:[%s165 + $0x38] sm:$0xf]
      %v1460 = vld [vmem:[%s1 + $0x180] sm:$0xf]
      %v1461 = vld [vmem:[%s1 + $0x184] sm:$0xf]
      %v1462 = vld [vmem:[%s1 + $0x188] sm:$0xf]
      %v1463 = vld [vmem:[%s1 + $0x18c] sm:$0xf]
      %v1464 = vld [vmem:[%s1 + $0x190] sm:$0xf]
      %v1465 = vld [vmem:[%s1 + $0x194] sm:$0xf]
      %v1466 = vld [vmem:[%s1 + $0x198] sm:$0xf]
      %v1467 = vld [vmem:[%s1 + $0x19c] sm:$0xf]
      %v1468 = vld [vmem:[%s1 + $0x1a0] sm:$0xf]
      %v1469 = vld [vmem:[%s1 + $0x1a4] sm:$0xf]
      %v1470 = vld [vmem:[%s1 + $0x1a8] sm:$0xf]
      %v1471 = vld [vmem:[%s1 + $0x1ac] sm:$0xf]
      %v1472 = vld [vmem:[%s1 + $0x1b0] sm:$0xf]
      %v1473 = vld [vmem:[%s1 + $0x1b4] sm:$0xf]
      %v1474 = vld [vmem:[%s1 + $0x1b8] sm:$0xf]
      %v1475 = vld [vmem:[%s1 + $0x1bc] sm:$0xf]
      %v1489 = vunpack.c.l.b16 %v1447
      %v1490 = vunpack.c.l.b16 %v1448
      %v1491 = vunpack.c.l.b16 %v1449
      %v1492 = vunpack.c.l.b16 %v1450
      %v1493 = vunpack.c.l.b16 %v1451
      %v1494 = vunpack.c.l.b16 %v1452
      %v1495 = vunpack.c.l.b16 %v1453
      %v1496 = vunpack.c.l.b16 %v1454
      %v1497 = vunpack.c.l.b16 %v1455
      %v1498 = vunpack.c.l.b16 %v1456
      %v1499 = vunpack.c.l.b16 %v1457
      %v1500 = vunpack.c.l.b16 %v1458
      %v1501 = vunpack.c.l.b16 %v1459
      %v1502 = vpack.c.b16 %v1490, %v1489
      %v1503 = vpack.c.b16 %v1492, %v1491
      %v1504 = vpack.c.b16 %v1494, %v1493
      %v1505 = vpack.c.b16 %v1496, %v1495
      %v1506 = vpack.c.b16 %v1498, %v1497
      %v1507 = vpack.c.b16 %v1500, %v1499
      %v1508 = vpack.c.b16 %v1501, %v1501
      %v1509 = vrot.slane %v1502, 2
      %v1510 = vrot.slane %v1503, 2
      %v1511 = vsel %vm1277, %v1509, %v1510
      %v1512 = vrot.slane %v1504, 2
      %v1513 = vsel %vm1277, %v1510, %v1512
      %v1514 = vrot.slane %v1505, 2
      %v1515 = vsel %vm1277, %v1512, %v1514
      %v1516 = vrot.slane %v1506, 2
      %v1517 = vsel %vm1277, %v1514, %v1516
      %v1518 = vrot.slane %v1507, 2
      %v1519 = vsel %vm1277, %v1516, %v1518
      %v1520 = vrot.slane %v1508, 2
      %v1521 = vsel %vm1277, %v1518, %v1520
      %v1545 = vunpack.c.l.b16 %v1460
      %v1546 = vunpack.c.l.b16 %v1461
      %v1547 = vunpack.c.l.b16 %v1462
      %v1548 = vunpack.c.l.b16 %v1463
      %v1549 = vunpack.c.l.b16 %v1464
      %v1550 = vunpack.c.l.b16 %v1465
      %v1551 = vunpack.c.l.b16 %v1466
      %v1552 = vunpack.c.l.b16 %v1467
      %v1553 = vunpack.c.l.b16 %v1468
      %v1554 = vunpack.c.l.b16 %v1469
      %v1555 = vunpack.c.l.b16 %v1470
      %v1556 = vunpack.c.l.b16 %v1471
      %v1557 = vunpack.c.l.b16 %v1472
      %v1558 = vunpack.c.l.b16 %v1473
      %v1559 = vunpack.c.l.b16 %v1474
      %v1560 = vunpack.c.l.b16 %v1475
      %v1561 = vpack.c.b16 %v1546, %v1545
      %v1562 = vpack.c.b16 %v1548, %v1547
      %v1563 = vpack.c.b16 %v1550, %v1549
      %v1564 = vpack.c.b16 %v1552, %v1551
      %v1565 = vpack.c.b16 %v1554, %v1553
      %v1566 = vpack.c.b16 %v1556, %v1555
      %v1567 = vpack.c.b16 %v1558, %v1557
      %v1568 = vpack.c.b16 %v1560, %v1559
      %1577 = vmatprep.subr.bf16.mxu0 0
      %1578 = vmatpush1.bf16.msra.mxu0 %v1561
      %1579 = vmatprep.subr.bf16.mxu0 0
      %1580 = vmatpush1.bf16.msra.mxu0 %v1562
      %1581 = vmatprep.subr.bf16.mxu0 0
      %1582 = vmatpush1.bf16.msra.mxu0 %v1563
      %1583 = vmatprep.subr.bf16.mxu0 0
      %1584 = vmatpush1.bf16.msra.mxu0 %v1564
      %1585 = vmatprep.subr.bf16.mxu0 0
      %1586 = vmatpush1.bf16.msra.mxu0 %v1565
      %1587 = vmatprep.subr.bf16.mxu0 0
      %1588 = vmatpush1.bf16.msra.mxu0 %v1566
      %1589 = vmatprep.subr.bf16.mxu0 0
      %1590 = vmatpush1.bf16.msra.mxu0 %v1567
      %1591 = vmatprep.subr.bf16.mxu0 0
      %1592 = vmatpush1.bf16.msra.mxu0 %v1568
      %1593 = vmatprep.subr.bf16.mxu0 0
      %1594 = vmatpush1.bf16.msra.mxu0 0
      %1595 = vmatprep.subr.bf16.mxu0 0
      %1596 = vmatpush1.bf16.msra.mxu0 0
      %1597 = vmatprep.subr.bf16.mxu0 0
      %1598 = vmatpush1.bf16.msra.mxu0 0
      %1599 = vmatprep.subr.bf16.mxu0 0
      %1600 = vmatpush1.bf16.msra.mxu0 0
      %1601 = vmatprep.subr.bf16.mxu0 0
      %1602 = vmatpush1.bf16.msra.mxu0 0
      %1603 = vmatprep.subr.bf16.mxu0 0
      %1604 = vmatpush1.bf16.msra.mxu0 0
      %1605 = vmatprep.subr.bf16.mxu0 0
      %1606 = vmatpush1.bf16.msra.mxu0 0
      %1607 = vmatprep.subr.bf16.mxu0 0
      %1608 = vmatpush1.bf16.msra.mxu0 0
      %1609 = vmatprep.mubr.bf16.mxu0 0
      %1610 = vmatmul.mubr.bf16.gmra.mrb[0].mxu0 %v1511
      %v1611 = vpop.f32.mrb[0].mxu0
      %v1612 = vadd.f32 0.0, %v1611
      %v1613 = vpop.f32.mrb[0].mxu0
      %v1614 = vpop.f32.mrb[0].mxu0
      %v1615 = vadd.f32 0.0, %v1614
      %v1616 = vpop.f32.mrb[0].mxu0
      %1617 = vmatprep.mubr.bf16.mxu0 0
      %1618 = vmatmul.mubr.bf16.gmra.mrb[0].mxu0 %v1513
      %v1619 = vpop.f32.mrb[0].mxu0
      %v1620 = vadd.f32 0.0, %v1619
      %v1621 = vpop.f32.mrb[0].mxu0
      %v1622 = vpop.f32.mrb[0].mxu0
      %v1623 = vadd.f32 0.0, %v1622
      %v1624 = vpop.f32.mrb[0].mxu0
      %1625 = vmatprep.mubr.bf16.mxu0 0
      %1626 = vmatmul.mubr.bf16.gmra.mrb[0].mxu0 %v1515
      %v1627 = vpop.f32.mrb[0].mxu0
      %v1628 = vadd.f32 0.0, %v1627
      %v1629 = vpop.f32.mrb[0].mxu0
      %v1630 = vpop.f32.mrb[0].mxu0
      %v1631 = vadd.f32 0.0, %v1630
      %v1632 = vpop.f32.mrb[0].mxu0
      %1633 = vmatprep.mubr.bf16.mxu0 0
      %1634 = vmatmul.mubr.bf16.gmra.mrb[0].mxu0 %v1517
      %v1635 = vpop.f32.mrb[0].mxu0
      %v1636 = vadd.f32 0.0, %v1635
      %v1637 = vpop.f32.mrb[0].mxu0
      %v1638 = vpop.f32.mrb[0].mxu0
      %v1639 = vadd.f32 0.0, %v1638
      %v1640 = vpop.f32.mrb[0].mxu0
      %1641 = vmatprep.mubr.bf16.mxu0 0
      %1642 = vmatmul.mubr.bf16.gmra.mrb[0].mxu0 %v1519
      %v1643 = vpop.f32.mrb[0].mxu0
      %v1644 = vadd.f32 0.0, %v1643
      %v1645 = vpop.f32.mrb[0].mxu0
      %v1646 = vpop.f32.mrb[0].mxu0
      %v1647 = vadd.f32 0.0, %v1646
      %v1648 = vpop.f32.mrb[0].mxu0
      %1649 = vmatprep.mubr.bf16.mxu0 0
      %1650 = vmatmul.mubr.bf16.gmra.mrb[0].mxu0 %v1521
      %v1651 = vpop.f32.mrb[0].mxu0
      %v1652 = vadd.f32 0.0, %v1651
      %v1653 = vpop.f32.mrb[0].mxu0
      %v1654 = vpop.f32.mrb[0].mxu0
      %v1655 = vadd.f32 0.0, %v1654
      %v1656 = vpop.f32.mrb[0].mxu0
      %1657 = vmatprep.mubr.bf16.mxu0 0
      %1658 = vmatmul.mubr.bf16.gmra.mrb[0].mxu0 %v1520
      %v1659 = vpop.f32.mrb[0].mxu0
      %v1660 = vadd.f32 0.0, %v1659
      %v1661 = vpop.f32.mrb[0].mxu0
      %v1662 = vpop.f32.mrb[0].mxu0
      %v1663 = vpop.f32.mrb[0].mxu0
      %1664 = vdwg.mxu0
      %v1665 = vadd.f32 %v1434, %v1612
      %v1666 = vadd.f32 %v1435, %v1615
      %v1667 = vadd.f32 %v1436, %v1620
      %v1668 = vadd.f32 %v1437, %v1623
      %v1669 = vadd.f32 %v1438, %v1628
      %v1670 = vadd.f32 %v1439, %v1631
      %v1671 = vadd.f32 %v1440, %v1636
      %v1672 = vadd.f32 %v1441, %v1639
      %v1673 = vadd.f32 %v1442, %v1644
      %v1674 = vadd.f32 %v1443, %v1647
      %v1675 = vadd.f32 %v1444, %v1652
      %v1676 = vadd.f32 %v1445, %v1655
      %v1677 = vadd.f32 %v1446, %v1660
      %v1678 = vld [vmem:[%s165 + $0x8] sm:$0xc]
      %v1679 = vld [vmem:[%s165 + $0xc] sm:$0xf]
      %v1680 = vld [vmem:[%s165 + $0x10] sm:$0xf]
      %v1681 = vld [vmem:[%s165 + $0x14] sm:$0xf]
      %v1682 = vld [vmem:[%s165 + $0x18] sm:$0xf]
      %v1683 = vld [vmem:[%s165 + $0x1c] sm:$0xf]
      %v1684 = vld [vmem:[%s165 + $0x20] sm:$0xf]
      %v1685 = vld [vmem:[%s165 + $0x24] sm:$0xf]
      %v1686 = vld [vmem:[%s165 + $0x28] sm:$0xf]
      %v1687 = vld [vmem:[%s165 + $0x2c] sm:$0xf]
      %v1688 = vld [vmem:[%s165 + $0x30] sm:$0xf]
      %v1689 = vld [vmem:[%s165 + $0x34] sm:$0xf]
      %v1690 = vld [vmem:[%s165 + $0x38] sm:$0xf]
      %v1691 = vld [vmem:[%s165 + $0x3c] sm:$0x1]
      %v1692 = vld [vmem:[%s1 + $0x1c0] sm:$0xf]
      %v1693 = vld [vmem:[%s1 + $0x1c4] sm:$0xf]
      %v1694 = vld [vmem:[%s1 + $0x1c8] sm:$0xf]
      %v1695 = vld [vmem:[%s1 + $0x1cc] sm:$0xf]
      %v1696 = vld [vmem:[%s1 + $0x1d0] sm:$0xf]
      %v1697 = vld [vmem:[%s1 + $0x1d4] sm:$0xf]
      %v1698 = vld [vmem:[%s1 + $0x1d8] sm:$0xf]
      %v1699 = vld [vmem:[%s1 + $0x1dc] sm:$0xf]
      %v1700 = vld [vmem:[%s1 + $0x1e0] sm:$0xf]
      %v1701 = vld [vmem:[%s1 + $0x1e4] sm:$0xf]
      %v1702 = vld [vmem:[%s1 + $0x1e8] sm:$0xf]
      %v1703 = vld [vmem:[%s1 + $0x1ec] sm:$0xf]
      %v1704 = vld [vmem:[%s1 + $0x1f0] sm:$0xf]
      %v1705 = vld [vmem:[%s1 + $0x1f4] sm:$0xf]
      %v1706 = vld [vmem:[%s1 + $0x1f8] sm:$0xf]
      %v1707 = vld [vmem:[%s1 + $0x1fc] sm:$0xf]
      %v1722 = vunpack.c.l.b16 %v1678
      %v1723 = vunpack.c.l.b16 %v1679
      %v1724 = vunpack.c.l.b16 %v1680
      %v1725 = vunpack.c.l.b16 %v1681
      %v1726 = vunpack.c.l.b16 %v1682
      %v1727 = vunpack.c.l.b16 %v1683
      %v1728 = vunpack.c.l.b16 %v1684
      %v1729 = vunpack.c.l.b16 %v1685
      %v1730 = vunpack.c.l.b16 %v1686
      %v1731 = vunpack.c.l.b16 %v1687
      %v1732 = vunpack.c.l.b16 %v1688
      %v1733 = vunpack.c.l.b16 %v1689
      %v1734 = vunpack.c.l.b16 %v1690
      %v1735 = vunpack.c.l.b16 %v1691
      %v1736 = vpack.c.b16 %v1723, %v1722
      %v1737 = vpack.c.b16 %v1725, %v1724
      %v1738 = vpack.c.b16 %v1727, %v1726
      %v1739 = vpack.c.b16 %v1729, %v1728
      %v1740 = vpack.c.b16 %v1731, %v1730
      %v1741 = vpack.c.b16 %v1733, %v1732
      %v1742 = vpack.c.b16 %v1735, %v1734
      %vm1743 = vsmask.f32 5376
      %v1745 = vshrl.u32 %v1736, 16
      %v1747 = vrot.slane %v1745, 2
      %v1748 = vshll.u32 %v1736, 16
      %v1750 = vrot.slane %v1748, 3
      %v1751 = vor.u32 %v1747, %v1750
      %v1753 = vshrl.u32 %v1737, 16
      %v1755 = vrot.slane %v1753, 2
      %v1756 = vshll.u32 %v1737, 16
      %v1758 = vrot.slane %v1756, 3
      %v1759 = vor.u32 %v1755, %v1758
      %v1760 = vsel %vm1743, %v1751, %v1759
      %v1762 = vshrl.u32 %v1738, 16
      %v1764 = vrot.slane %v1762, 2
      %v1765 = vshll.u32 %v1738, 16
      %v1767 = vrot.slane %v1765, 3
      %v1768 = vor.u32 %v1764, %v1767
      %v1769 = vsel %vm1743, %v1759, %v1768
      %v1771 = vshrl.u32 %v1739, 16
      %v1773 = vrot.slane %v1771, 2
      %v1774 = vshll.u32 %v1739, 16
      %v1776 = vrot.slane %v1774, 3
      %v1777 = vor.u32 %v1773, %v1776
      %v1778 = vsel %vm1743, %v1768, %v1777
      %v1780 = vshrl.u32 %v1740, 16
      %v1782 = vrot.slane %v1780, 2
      %v1783 = vshll.u32 %v1740, 16
      %v1785 = vrot.slane %v1783, 3
      %v1786 = vor.u32 %v1782, %v1785
      %v1787 = vsel %vm1743, %v1777, %v1786
      %v1789 = vshrl.u32 %v1741, 16
      %v1791 = vrot.slane %v1789, 2
      %v1792 = vshll.u32 %v1741, 16
      %v1794 = vrot.slane %v1792, 3
      %v1795 = vor.u32 %v1791, %v1794
      %v1796 = vsel %vm1743, %v1786, %v1795
      %v1798 = vshrl.u32 %v1742, 16
      %v1800 = vrot.slane %v1798, 2
      %v1801 = vshll.u32 %v1742, 16
      %v1803 = vrot.slane %v1801, 3
      %v1804 = vor.u32 %v1800, %v1803
      %v1805 = vsel %vm1743, %v1795, %v1804
      %v1829 = vunpack.c.l.b16 %v1692
      %v1830 = vunpack.c.l.b16 %v1693
      %v1831 = vunpack.c.l.b16 %v1694
      %v1832 = vunpack.c.l.b16 %v1695
      %v1833 = vunpack.c.l.b16 %v1696
      %v1834 = vunpack.c.l.b16 %v1697
      %v1835 = vunpack.c.l.b16 %v1698
      %v1836 = vunpack.c.l.b16 %v1699
      %v1837 = vunpack.c.l.b16 %v1700
      %v1838 = vunpack.c.l.b16 %v1701
      %v1839 = vunpack.c.l.b16 %v1702
      %v1840 = vunpack.c.l.b16 %v1703
      %v1841 = vunpack.c.l.b16 %v1704
      %v1842 = vunpack.c.l.b16 %v1705
      %v1843 = vunpack.c.l.b16 %v1706
      %v1844 = vunpack.c.l.b16 %v1707
      %v1845 = vpack.c.b16 %v1830, %v1829
      %v1846 = vpack.c.b16 %v1832, %v1831
      %v1847 = vpack.c.b16 %v1834, %v1833
      %v1848 = vpack.c.b16 %v1836, %v1835
      %v1849 = vpack.c.b16 %v1838, %v1837
      %v1850 = vpack.c.b16 %v1840, %v1839
      %v1851 = vpack.c.b16 %v1842, %v1841
      %v1852 = vpack.c.b16 %v1844, %v1843
      %1861 = vmatprep.subr.bf16.mxu0 0
      %1862 = vmatpush1.bf16.msra.mxu0 %v1845
      %1863 = vmatprep.subr.bf16.mxu0 0
      %1864 = vmatpush1.bf16.msra.mxu0 %v1846
      %1865 = vmatprep.subr.bf16.mxu0 0
      %1866 = vmatpush1.bf16.msra.mxu0 %v1847
      %1867 = vmatprep.subr.bf16.mxu0 0
      %1868 = vmatpush1.bf16.msra.mxu0 %v1848
      %1869 = vmatprep.subr.bf16.mxu0 0
      %1870 = vmatpush1.bf16.msra.mxu0 %v1849
      %1871 = vmatprep.subr.bf16.mxu0 0
      %1872 = vmatpush1.bf16.msra.mxu0 %v1850
      %1873 = vmatprep.subr.bf16.mxu0 0
      %1874 = vmatpush1.bf16.msra.mxu0 %v1851
      %1875 = vmatprep.subr.bf16.mxu0 0
      %1876 = vmatpush1.bf16.msra.mxu0 %v1852
      %1877 = vmatprep.subr.bf16.mxu0 0
      %1878 = vmatpush1.bf16.msra.mxu0 0
      %1879 = vmatprep.subr.bf16.mxu0 0
      %1880 = vmatpush1.bf16.msra.mxu0 0
      %1881 = vmatprep.subr.bf16.mxu0 0
      %1882 = vmatpush1.bf16.msra.mxu0 0
      %1883 = vmatprep.subr.bf16.mxu0 0
      %1884 = vmatpush1.bf16.msra.mxu0 0
      %1885 = vmatprep.subr.bf16.mxu0 0
      %1886 = vmatpush1.bf16.msra.mxu0 0
      %1887 = vmatprep.subr.bf16.mxu0 0
      %1888 = vmatpush1.bf16.msra.mxu0 0
      %1889 = vmatprep.subr.bf16.mxu0 0
      %1890 = vmatpush1.bf16.msra.mxu0 0
      %1891 = vmatprep.subr.bf16.mxu0 0
      %1892 = vmatpush1.bf16.msra.mxu0 0
      %1893 = vmatprep.mubr.bf16.mxu0 0
      %1894 = vmatmul.mubr.bf16.gmra.mrb[0].mxu0 %v1760
      %v1895 = vpop.f32.mrb[0].mxu0
      %v1896 = vadd.f32 0.0, %v1895
      %v1897 = vpop.f32.mrb[0].mxu0
      %v1898 = vpop.f32.mrb[0].mxu0
      %v1899 = vadd.f32 0.0, %v1898
      %v1900 = vpop.f32.mrb[0].mxu0
      %1901 = vmatprep.mubr.bf16.mxu0 0
      %1902 = vmatmul.mubr.bf16.gmra.mrb[0].mxu0 %v1769
      %v1903 = vpop.f32.mrb[0].mxu0
      %v1904 = vadd.f32 0.0, %v1903
      %v1905 = vpop.f32.mrb[0].mxu0
      %v1906 = vpop.f32.mrb[0].mxu0
      %v1907 = vadd.f32 0.0, %v1906
      %v1908 = vpop.f32.mrb[0].mxu0
      %1909 = vmatprep.mubr.bf16.mxu0 0
      %1910 = vmatmul.mubr.bf16.gmra.mrb[0].mxu0 %v1778
      %v1911 = vpop.f32.mrb[0].mxu0
      %v1912 = vadd.f32 0.0, %v1911
      %v1913 = vpop.f32.mrb[0].mxu0
      %v1914 = vpop.f32.mrb[0].mxu0
      %v1915 = vadd.f32 0.0, %v1914
      %v1916 = vpop.f32.mrb[0].mxu0
      %1917 = vmatprep.mubr.bf16.mxu0 0
      %1918 = vmatmul.mubr.bf16.gmra.mrb[0].mxu0 %v1787
      %v1919 = vpop.f32.mrb[0].mxu0
      %v1920 = vadd.f32 0.0, %v1919
      %v1921 = vpop.f32.mrb[0].mxu0
      %v1922 = vpop.f32.mrb[0].mxu0
      %v1923 = vadd.f32 0.0, %v1922
      %v1924 = vpop.f32.mrb[0].mxu0
      %1925 = vmatprep.mubr.bf16.mxu0 0
      %1926 = vmatmul.mubr.bf16.gmra.mrb[0].mxu0 %v1796
      %v1927 = vpop.f32.mrb[0].mxu0
      %v1928 = vadd.f32 0.0, %v1927
      %v1929 = vpop.f32.mrb[0].mxu0
      %v1930 = vpop.f32.mrb[0].mxu0
      %v1931 = vadd.f32 0.0, %v1930
      %v1932 = vpop.f32.mrb[0].mxu0
      %1933 = vmatprep.mubr.bf16.mxu0 0
      %1934 = vmatmul.mubr.bf16.gmra.mrb[0].mxu0 %v1805
      %v1935 = vpop.f32.mrb[0].mxu0
      %v1936 = vadd.f32 0.0, %v1935
      %v1937 = vpop.f32.mrb[0].mxu0
      %v1938 = vpop.f32.mrb[0].mxu0
      %v1939 = vadd.f32 0.0, %v1938
      %v1940 = vpop.f32.mrb[0].mxu0
      %1941 = vmatprep.mubr.bf16.mxu0 0
      %1942 = vmatmul.mubr.bf16.gmra.mrb[0].mxu0 %v1804
      %v1943 = vpop.f32.mrb[0].mxu0
      %v1944 = vadd.f32 0.0, %v1943
      %v1945 = vpop.f32.mrb[0].mxu0
      %v1946 = vpop.f32.mrb[0].mxu0
      %v1947 = vpop.f32.mrb[0].mxu0
      %1948 = vdwg.mxu0
      %v1949 = vadd.f32 %v1665, %v1896
      %v1950 = vadd.f32 %v1666, %v1899
      %v1951 = vadd.f32 %v1667, %v1904
      %v1952 = vadd.f32 %v1668, %v1907
      %v1953 = vadd.f32 %v1669, %v1912
      %v1954 = vadd.f32 %v1670, %v1915
      %v1955 = vadd.f32 %v1671, %v1920
      %v1956 = vadd.f32 %v1672, %v1923
      %v1957 = vadd.f32 %v1673, %v1928
      %v1958 = vadd.f32 %v1674, %v1931
      %v1959 = vadd.f32 %v1675, %v1936
      %v1960 = vadd.f32 %v1676, %v1939
      %v1961 = vadd.f32 %v1677, %v1944
      %v1962 = vld [vmem:[%s165 + $0x8] sm:$0x8]
      %v1963 = vld [vmem:[%s1 + $0x200] sm:$0xf]
      %v1964 = vld [vmem:[%s1 + $0x204] sm:$0xf]
      %v1965 = vld [vmem:[%s1 + $0x208] sm:$0xf]
      %v1966 = vld [vmem:[%s1 + $0x20c] sm:$0xf]
      %v1967 = vld [vmem:[%s1 + $0x210] sm:$0xf]
      %v1968 = vld [vmem:[%s1 + $0x214] sm:$0xf]
      %v1969 = vld [vmem:[%s1 + $0x218] sm:$0xf]
      %v1970 = vld [vmem:[%s1 + $0x21c] sm:$0xf]
      %v1971 = vld [vmem:[%s1 + $0x220] sm:$0xf]
      %v1972 = vld [vmem:[%s1 + $0x224] sm:$0xf]
      %v1973 = vld [vmem:[%s1 + $0x228] sm:$0xf]
      %v1974 = vld [vmem:[%s1 + $0x22c] sm:$0xf]
      %v1975 = vld [vmem:[%s1 + $0x230] sm:$0xf]
      %v1976 = vld [vmem:[%s1 + $0x234] sm:$0xf]
      %v1977 = vld [vmem:[%s1 + $0x238] sm:$0xf]
      %v1978 = vld [vmem:[%s1 + $0x23c] sm:$0xf]
      %v1980 = vunpack.c.l.b16 %v1962
      %v1981 = vpack.c.b16 %v1723, %v1980
      %vm1982 = vcmask 1044480
      %v1983 = vrot.slane %v1981, 3
      %v1984 = vrot.slane %v1737, 3
      %v1985 = vsel %vm1982, %v1983, %v1984
      %v1986 = vrot.slane %v1738, 3
      %v1987 = vsel %vm1982, %v1984, %v1986
      %v1988 = vrot.slane %v1739, 3
      %v1989 = vsel %vm1982, %v1986, %v1988
      %v1990 = vrot.slane %v1740, 3
      %v1991 = vsel %vm1982, %v1988, %v1990
      %v1992 = vrot.slane %v1741, 3
      %v1993 = vsel %vm1982, %v1990, %v1992
      %v1994 = vrot.slane %v1742, 3
      %v1995 = vsel %vm1982, %v1992, %v1994
      %v2019 = vunpack.c.l.b16 %v1963
      %v2020 = vunpack.c.l.b16 %v1964
      %v2021 = vunpack.c.l.b16 %v1965
      %v2022 = vunpack.c.l.b16 %v1966
      %v2023 = vunpack.c.l.b16 %v1967
      %v2024 = vunpack.c.l.b16 %v1968
      %v2025 = vunpack.c.l.b16 %v1969
      %v2026 = vunpack.c.l.b16 %v1970
      %v2027 = vunpack.c.l.b16 %v1971
      %v2028 = vunpack.c.l.b16 %v1972
      %v2029 = vunpack.c.l.b16 %v1973
      %v2030 = vunpack.c.l.b16 %v1974
      %v2031 = vunpack.c.l.b16 %v1975
      %v2032 = vunpack.c.l.b16 %v1976
      %v2033 = vunpack.c.l.b16 %v1977
      %v2034 = vunpack.c.l.b16 %v1978
      %v2035 = vpack.c.b16 %v2020, %v2019
      %v2036 = vpack.c.b16 %v2022, %v2021
      %v2037 = vpack.c.b16 %v2024, %v2023
      %v2038 = vpack.c.b16 %v2026, %v2025
      %v2039 = vpack.c.b16 %v2028, %v2027
      %v2040 = vpack.c.b16 %v2030, %v2029
      %v2041 = vpack.c.b16 %v2032, %v2031
      %v2042 = vpack.c.b16 %v2034, %v2033
      %2051 = vmatprep.subr.bf16.mxu0 0
      %2052 = vmatpush1.bf16.msra.mxu0 %v2035
      %2053 = vmatprep.subr.bf16.mxu0 0
      %2054 = vmatpush1.bf16.msra.mxu0 %v2036
      %2055 = vmatprep.subr.bf16.mxu0 0
      %2056 = vmatpush1.bf16.msra.mxu0 %v2037
      %2057 = vmatprep.subr.bf16.mxu0 0
      %2058 = vmatpush1.bf16.msra.mxu0 %v2038
      %2059 = vmatprep.subr.bf16.mxu0 0
      %2060 = vmatpush1.bf16.msra.mxu0 %v2039
      %2061 = vmatprep.subr.bf16.mxu0 0
      %2062 = vmatpush1.bf16.msra.mxu0 %v2040
      %2063 = vmatprep.subr.bf16.mxu0 0
      %2064 = vmatpush1.bf16.msra.mxu0 %v2041
      %2065 = vmatprep.subr.bf16.mxu0 0
      %2066 = vmatpush1.bf16.msra.mxu0 %v2042
      %2067 = vmatprep.subr.bf16.mxu0 0
      %2068 = vmatpush1.bf16.msra.mxu0 0
      %2069 = vmatprep.subr.bf16.mxu0 0
      %2070 = vmatpush1.bf16.msra.mxu0 0
      %2071 = vmatprep.subr.bf16.mxu0 0
      %2072 = vmatpush1.bf16.msra.mxu0 0
      %2073 = vmatprep.subr.bf16.mxu0 0
      %2074 = vmatpush1.bf16.msra.mxu0 0
      %2075 = vmatprep.subr.bf16.mxu0 0
      %2076 = vmatpush1.bf16.msra.mxu0 0
      %2077 = vmatprep.subr.bf16.mxu0 0
      %2078 = vmatpush1.bf16.msra.mxu0 0
      %2079 = vmatprep.subr.bf16.mxu0 0
      %2080 = vmatpush1.bf16.msra.mxu0 0
      %2081 = vmatprep.subr.bf16.mxu0 0
      %2082 = vmatpush1.bf16.msra.mxu0 0
      %2083 = vmatprep.mubr.bf16.mxu0 0
      %2084 = vmatmul.mubr.bf16.gmra.mrb[0].mxu0 %v1985
      %v2085 = vpop.f32.mrb[0].mxu0
      %v2086 = vadd.f32 0.0, %v2085
      %v2087 = vpop.f32.mrb[0].mxu0
      %v2088 = vpop.f32.mrb[0].mxu0
      %v2089 = vadd.f32 0.0, %v2088
      %v2090 = vpop.f32.mrb[0].mxu0
      %2091 = vmatprep.mubr.bf16.mxu0 0
      %2092 = vmatmul.mubr.bf16.gmra.mrb[0].mxu0 %v1987
      %v2093 = vpop.f32.mrb[0].mxu0
      %v2094 = vadd.f32 0.0, %v2093
      %v2095 = vpop.f32.mrb[0].mxu0
      %v2096 = vpop.f32.mrb[0].mxu0
      %v2097 = vadd.f32 0.0, %v2096
      %v2098 = vpop.f32.mrb[0].mxu0
      %2099 = vmatprep.mubr.bf16.mxu0 0
      %2100 = vmatmul.mubr.bf16.gmra.mrb[0].mxu0 %v1989
      %v2101 = vpop.f32.mrb[0].mxu0
      %v2102 = vadd.f32 0.0, %v2101
      %v2103 = vpop.f32.mrb[0].mxu0
      %v2104 = vpop.f32.mrb[0].mxu0
      %v2105 = vadd.f32 0.0, %v2104
      %v2106 = vpop.f32.mrb[0].mxu0
      %2107 = vmatprep.mubr.bf16.mxu0 0
      %2108 = vmatmul.mubr.bf16.gmra.mrb[0].mxu0 %v1991
      %v2109 = vpop.f32.mrb[0].mxu0
      %v2110 = vadd.f32 0.0, %v2109
      %v2111 = vpop.f32.mrb[0].mxu0
      %v2112 = vpop.f32.mrb[0].mxu0
      %v2113 = vadd.f32 0.0, %v2112
      %v2114 = vpop.f32.mrb[0].mxu0
      %2115 = vmatprep.mubr.bf16.mxu0 0
      %2116 = vmatmul.mubr.bf16.gmra.mrb[0].mxu0 %v1993
      %v2117 = vpop.f32.mrb[0].mxu0
      %v2118 = vadd.f32 0.0, %v2117
      %v2119 = vpop.f32.mrb[0].mxu0
      %v2120 = vpop.f32.mrb[0].mxu0
      %v2121 = vadd.f32 0.0, %v2120
      %v2122 = vpop.f32.mrb[0].mxu0
      %2123 = vmatprep.mubr.bf16.mxu0 0
      %2124 = vmatmul.mubr.bf16.gmra.mrb[0].mxu0 %v1995
      %v2125 = vpop.f32.mrb[0].mxu0
      %v2126 = vadd.f32 0.0, %v2125
      %v2127 = vpop.f32.mrb[0].mxu0
      %v2128 = vpop.f32.mrb[0].mxu0
      %v2129 = vadd.f32 0.0, %v2128
      %v2130 = vpop.f32.mrb[0].mxu0
      %2131 = vmatprep.mubr.bf16.mxu0 0
      %2132 = vmatmul.mubr.bf16.gmra.mrb[0].mxu0 %v1994
      %v2133 = vpop.f32.mrb[0].mxu0
      %v2134 = vadd.f32 0.0, %v2133
      %v2135 = vpop.f32.mrb[0].mxu0
      %v2136 = vpop.f32.mrb[0].mxu0
      %v2137 = vpop.f32.mrb[0].mxu0
      %2138 = vdwg.mxu0
      %v2139 = vadd.f32 %v1949, %v2086
      %v2140 = vadd.f32 %v1950, %v2089
      %v2141 = vadd.f32 %v1951, %v2094
      %v2142 = vadd.f32 %v1952, %v2097
      %v2143 = vadd.f32 %v1953, %v2102
      %v2144 = vadd.f32 %v1954, %v2105
      %v2145 = vadd.f32 %v1955, %v2110
      %v2146 = vadd.f32 %v1956, %v2113
      %v2147 = vadd.f32 %v1957, %v2118
      %v2148 = vadd.f32 %v1958, %v2121
      %v2149 = vadd.f32 %v1959, %v2126
      %v2150 = vadd.f32 %v1960, %v2129
      %v2151 = vadd.f32 %v1961, %v2134
      %v2153 = vlaneseq
      %v2154 = vshrl.u32 %v2153, 7
      %v2155 = vsub.s32 0, %v2154
      %v2156 = vrot.slane %v172, %v2155
      %v2158 = vadd.f32 %v2139, %v2156
      %v2159 = vadd.f32 %v2140, %v2156
      %v2160 = vadd.f32 %v2141, %v2156
      %v2161 = vadd.f32 %v2142, %v2156
      %v2162 = vadd.f32 %v2143, %v2156
      %v2163 = vadd.f32 %v2144, %v2156
      %v2164 = vadd.f32 %v2145, %v2156
      %v2165 = vadd.f32 %v2146, %v2156
      %v2166 = vadd.f32 %v2147, %v2156
      %v2167 = vadd.f32 %v2148, %v2156
      %v2168 = vadd.f32 %v2149, %v2156
      %v2169 = vadd.f32 %v2150, %v2156
      %v2170 = vadd.f32 %v2151, %v2156
      %v2171 = vmax.f32 %v2158, 0.0
      %v2172 = vmax.f32 %v2159, 0.0
      %v2173 = vmax.f32 %v2160, 0.0
      %v2174 = vmax.f32 %v2161, 0.0
      %v2175 = vmax.f32 %v2162, 0.0
      %v2176 = vmax.f32 %v2163, 0.0
      %v2177 = vmax.f32 %v2164, 0.0
      %v2178 = vmax.f32 %v2165, 0.0
      %v2179 = vmax.f32 %v2166, 0.0
      %v2180 = vmax.f32 %v2167, 0.0
      %v2181 = vmax.f32 %v2168, 0.0
      %v2182 = vmax.f32 %v2169, 0.0
      %v2183 = vmax.f32 %v2170, 0.0
      %v2184 = vpack.c.bf16 %v2172, %v2171
      %v2185 = vpack.c.bf16 %v2174, %v2173
      %v2186 = vpack.c.bf16 %v2176, %v2175
      %v2187 = vpack.c.bf16 %v2178, %v2177
      %v2188 = vpack.c.bf16 %v2180, %v2179
      %v2189 = vpack.c.bf16 %v2182, %v2181
      %v2190 = vpack.c.bf16 %v2183, %v2183
      %v2198 = vunpack.c.l.b16 %v2184
      %v2199 = vunpack.c.h.b16 %v2184
      %v2200 = vunpack.c.l.b16 %v2185
      %v2201 = vunpack.c.h.b16 %v2185
      %v2202 = vunpack.c.l.b16 %v2186
      %v2203 = vunpack.c.h.b16 %v2186
      %v2204 = vunpack.c.l.b16 %v2187
      %v2205 = vunpack.c.h.b16 %v2187
      %v2206 = vunpack.c.l.b16 %v2188
      %v2207 = vunpack.c.h.b16 %v2188
      %v2208 = vunpack.c.l.b16 %v2189
      %v2209 = vunpack.c.h.b16 %v2189
      %v2210 = vunpack.c.l.b16 %v2190
      %v2211 = vpack.c.b16 %v2198, %v2198
      %v2212 = vpack.c.b16 %v2199, %v2199
      %v2213 = vpack.c.b16 %v2200, %v2200
      %v2214 = vpack.c.b16 %v2201, %v2201
      %v2215 = vpack.c.b16 %v2202, %v2202
      %v2216 = vpack.c.b16 %v2203, %v2203
      %v2217 = vpack.c.b16 %v2204, %v2204
      %v2218 = vpack.c.b16 %v2205, %v2205
      %v2219 = vpack.c.b16 %v2206, %v2206
      %v2220 = vpack.c.b16 %v2207, %v2207
      %v2221 = vpack.c.b16 %v2208, %v2208
      %v2222 = vpack.c.b16 %v2209, %v2209
      %v2223 = vpack.c.b16 %v2210, %v2210
      %2237 = vst [vmem:[%s170] sm:$0xf] %v2211
      %2238 = vst [vmem:[%s170 + $0x4] sm:$0xf] %v2212
      %2239 = vst [vmem:[%s170 + $0x8] sm:$0xf] %v2213
      %2240 = vst [vmem:[%s170 + $0xc] sm:$0xf] %v2214
      %2241 = vst [vmem:[%s170 + $0x10] sm:$0xf] %v2215
      %2242 = vst [vmem:[%s170 + $0x14] sm:$0xf] %v2216
      %2243 = vst [vmem:[%s170 + $0x18] sm:$0xf] %v2217
      %2244 = vst [vmem:[%s170 + $0x1c] sm:$0xf] %v2218
      %2245 = vst [vmem:[%s170 + $0x20] sm:$0xf] %v2219
      %2246 = vst [vmem:[%s170 + $0x24] sm:$0xf] %v2220
      %2247 = vst [vmem:[%s170 + $0x28] sm:$0xf] %v2221
      %2248 = vst [vmem:[%s170 + $0x2c] sm:$0xf] %v2222
      %2249 = vst [vmem:[%s170 + $0x30] sm:$0x3] %v2223
      %p2250 = scmp.lt.s32.totalorder %s14, 1
      %s2251 = scalar_select %p2250, %s14, 1
      %s2252 = smul.addr %s2251, 13
      %s2253 = smul.addr %s2252, 4
      %s2254 = scalar_lea.vmem %s3, %s2253
      // Predicated region
      $region33: #{handwriting_feature_extractor.5} parent=31 // pred_check
        %p2255 = pneg %p100
      $region34: #{handwriting_feature_extractor.5} parent=31 // pred_check_branch
        %2257 = sbr.rel (%p2255) target = $region36
      $region35: #{handwriting_feature_extractor.5} parent=31 // pred_region
        _
      $region36: #{handwriting_feature_extractor.5} parent=31 // pred_fallthru
        _
    $region32: #{handwriting_feature_extractor.5} parent=5 // pred_fallthru
      _
    %p2258 = scmp.le.s32.totalorder 2, %s9
    // Predicated region
    $region37: #{handwriting_feature_extractor.5} parent=5 // pred_check
      %p2259 = pneg %p2258
    $region38: #{handwriting_feature_extractor.5} parent=5 // pred_check_branch
      %2261 = sbr.rel (%p2259) target = $region40
    $region39: #{handwriting_feature_extractor.5} parent=5 // pred_region
      %s2262 = ssub.s32 %s9, 2
      // Predicated region
      $region41: #{handwriting_feature_extractor.5} parent=39 // pred_check
        %p2263 = pneg %p106
      $region42: #{handwriting_feature_extractor.5} parent=39 // pred_check_branch
        %2265 = sbr.rel (%p2263) target = $region44
      $region43: #{handwriting_feature_extractor.5} parent=39 // pred_region
        %p2266 = scmp.lt.s32.totalorder %s15, 1
        %s2267 = scalar_select %p2266, %s15, 1
        %s2268 = smul.addr %s2267, 13
        %s2269 = smul.addr %s2268, 4
        %s2270 = scalar_lea.vmem %s3, %s2269
      $region44: #{handwriting_feature_extractor.5} parent=39 // pred_fallthru
        _
    $region40: #{handwriting_feature_extractor.5} parent=5 // pred_fallthru
      _
  $region6: #{handwriting_feature_extractor.5} parent=0 // loop_footer
    %s13 = sadd.s32 1, %s9
  $region7: #{handwriting_feature_extractor.5} parent=0 // loop_footer_branch
    %8 = sbr.rel target = $region3
  $region8: #{handwriting_feature_extractor.5} parent=0 // loop_exit
    _

// kernel: handwriting_feature_extractor.6
$region0: #{handwriting_feature_extractor.6}
  #allocation0 [shape = 'u32[]', space=smem, size = 0x4, offset = 0x4, fixed_abs, tag = 'smem constant byte address 0x4 - core index']
  #allocation1 [shape = 'u32[144,128]{1,0:T(1,128)}', space=vmem, size = 0x12000, scoped, tag = 'internal scratch']
  %s0 = inlined_call_operand.vmem [shape: bf16[2,50,128], index: 0, kind: input, shape index: {}]
  %s1 = inlined_call_operand.vmem [shape: bf16[1152,128], index: 1, kind: input, shape index: {}]
  %s2 = inlined_call_operand.vmem [shape: f32[1,128], index: 2, kind: input, shape index: {}]
  %s3 = inlined_call_operand.vmem [shape: bf16[2,36,128], index: 3, kind: output, shape index: {}]
  %s4 = sld [smem:[#allocation0]]
  $region45: #{handwriting_feature_extractor.6} parent=0
    _
  %s6 = ssub.s32 1, %s4
  %s7 = scalar_select 0, %s6, %s4
  loop: start=0, step=1, limit=4
  $region2: #{handwriting_feature_extractor.6} parent=0 // loop_pre_header
    _
  $region3: #{handwriting_feature_extractor.6} parent=0 // loop_header
    %s9 = sphi 0, %s13
    %p10 = scmp.ge.s32.totalorder %s9, 4
    %s19 = sphi 0, %s21
    %s22 = sphi 0, %s19
    %s23 = sphi 0, %s22
    %s39 = sphi 0, %s23
    %s43 = sphi 0, %s43
    %s45 = sphi 0, %s43
    %s46 = sphi 0, %s45
    %s60 = sphi 0, %s46
    %s64 = sphi 0, %s64
    %s66 = sphi 0, %s64
    %s67 = sphi 0, %s66
    %s81 = sphi 0, %s67
    %s87 = sphi 0, %s89
    %s90 = sphi 0, %s87
    %s91 = sphi 0, %s90
    %s107 = sphi 0, %s91
  $region4: #{handwriting_feature_extractor.6} parent=0 // loop_header_branch
    %12 = sbr.rel (%p10) target = $region8
  $region5: #{handwriting_feature_extractor.6} parent=0 // loop_body
    %s14 = ssub.s32 %s9, 1
    %s15 = ssub.s32 %s9, 2
    %s16 = sadd.s32 %s9, 1
    %s17 = ssub.s32 %s9, %s16
    %p18 = scmp.eq.s32.totalorder %s17, 0
    %s20 = sadd.s32 %s19, 1
    %s21 = scalar_select %p18, %s19, %s20
    %p24 = pneg %p18
    %p25 = scmp.eq.s32.totalorder %s9, 1
    %p26 = por %p24, %p25
    %p27 = scmp.ne.s32.totalorder %s19, %s22
    %p28 = scmp.eq.s32.totalorder %s9, 0
    %p29 = por %p27, %p28
    %p30 = scmp.ne.s32.totalorder %s19, %s22
    %p31 = scmp.eq.s32.totalorder %s14, 1
    %p32 = por %p30, %p31
    %p33 = scmp.ne.s32.totalorder %s22, %s23
    %p34 = scmp.eq.s32.totalorder %s14, 0
    %p35 = por %p33, %p34
    %p36 = scmp.ne.s32.totalorder %s22, %s23
    %p37 = scmp.eq.s32.totalorder %s15, 1
    %p38 = por %p36, %p37
    %p40 = scmp.ne.s32.totalorder %s23, %s39
    %p41 = scmp.eq.s32.totalorder %s15, 0
    %p42 = por %p40, %p41
    %s44 = sadd.s32 %s43, 1
    %p47 = scmp.eq.s32.totalorder %s9, 1
    %p48 = scmp.ne.s32.totalorder %s43, %s45
    %p49 = scmp.eq.s32.totalorder %s9, 0
    %p50 = por %p48, %p49
    %p51 = scmp.ne.s32.totalorder %s43, %s45
    %p52 = scmp.eq.s32.totalorder %s14, 1
    %p53 = por %p51, %p52
    %p54 = scmp.ne.s32.totalorder %s45, %s46
    %p55 = scmp.eq.s32.totalorder %s14, 0
    %p56 = por %p54, %p55
    %p57 = scmp.ne.s32.totalorder %s45, %s46
    %p58 = scmp.eq.s32.totalorder %s15, 1
    %p59 = por %p57, %p58
    %p61 = scmp.ne.s32.totalorder %s46, %s60
    %p62 = scmp.eq.s32.totalorder %s15, 0
    %p63 = por %p61, %p62
    %s65 = sadd.s32 %s64, 1
    %p68 = scmp.eq.s32.totalorder %s9, 1
    %p69 = scmp.ne.s32.totalorder %s64, %s66
    %p70 = scmp.eq.s32.totalorder %s9, 0
    %p71 = por %p69, %p70
    %p72 = scmp.ne.s32.totalorder %s64, %s66
    %p73 = scmp.eq.s32.totalorder %s14, 1
    %p74 = por %p72, %p73
    %p75 = scmp.ne.s32.totalorder %s66, %s67
    %p76 = scmp.eq.s32.totalorder %s14, 0
    %p77 = por %p75, %p76
    %p78 = scmp.ne.s32.totalorder %s66, %s67
    %p79 = scmp.eq.s32.totalorder %s15, 1
    %p80 = por %p78, %p79
    %p82 = scmp.ne.s32.totalorder %s67, %s81
    %p83 = scmp.eq.s32.totalorder %s15, 0
    %p84 = por %p82, %p83
    %s85 = ssub.s32 %s9, %s16
    %p86 = scmp.eq.s32.totalorder %s85, 0
    %s88 = sadd.s32 %s87, 1
    %s89 = scalar_select %p86, %s87, %s88
    %p92 = pneg %p86
    %p93 = scmp.eq.s32.totalorder %s9, 1
    %p94 = por %p92, %p93
    %p95 = scmp.ne.s32.totalorder %s87, %s90
    %p96 = scmp.eq.s32.totalorder %s9, 0
    %p97 = por %p95, %p96
    %p98 = scmp.ne.s32.totalorder %s87, %s90
    %p99 = scmp.eq.s32.totalorder %s14, 1
    %p100 = por %p98, %p99
    %p101 = scmp.ne.s32.totalorder %s90, %s91
    %p102 = scmp.eq.s32.totalorder %s14, 0
    %p103 = por %p101, %p102
    %p104 = scmp.ne.s32.totalorder %s90, %s91
    %p105 = scmp.eq.s32.totalorder %s15, 1
    %p106 = por %p104, %p105
    %p108 = scmp.ne.s32.totalorder %s91, %s107
    %p109 = scmp.eq.s32.totalorder %s15, 0
    %p110 = por %p108, %p109
    %p111 = scmp.le.s32.totalorder 1, %s9
    %p112 = scmp.lt.s32.totalorder %s9, 3
    %p113 = pnand %p111, %p112
    %p114 = pneg %p113
    // Predicated region
    $region9: #{handwriting_feature_extractor.6} parent=5 // pred_check
      _
    $region10: #{handwriting_feature_extractor.6} parent=5 // pred_check_branch
      %116 = sbr.rel (%p113) target = $region12
    $region11: #{handwriting_feature_extractor.6} parent=5 // pred_region
      %s117 = ssub.s32 %s9, 1
      // Predicated region
      $region13: #{handwriting_feature_extractor.6} parent=11 // pred_check
        %p118 = pneg %p56
      $region14: #{handwriting_feature_extractor.6} parent=11 // pred_check_branch
        %120 = sbr.rel (%p118) target = $region16
      $region15: #{handwriting_feature_extractor.6} parent=11 // pred_region
        _
      $region16: #{handwriting_feature_extractor.6} parent=11 // pred_fallthru
        _
      // Predicated region
      $region17: #{handwriting_feature_extractor.6} parent=11 // pred_check
        %p121 = pneg %p77
      $region18: #{handwriting_feature_extractor.6} parent=11 // pred_check_branch
        %123 = sbr.rel (%p121) target = $region20
      $region19: #{handwriting_feature_extractor.6} parent=11 // pred_region
        _
      $region20: #{handwriting_feature_extractor.6} parent=11 // pred_fallthru
        _
    $region12: #{handwriting_feature_extractor.6} parent=5 // pred_fallthru
      _
    %p124 = scmp.lt.s32.totalorder %s9, 2
    // Predicated region
    $region21: #{handwriting_feature_extractor.6} parent=5 // pred_check
      %p125 = pneg %p124
    $region22: #{handwriting_feature_extractor.6} parent=5 // pred_check_branch
      %127 = sbr.rel (%p125) target = $region24
    $region23: #{handwriting_feature_extractor.6} parent=5 // pred_region
      // Predicated region
      $region25: #{handwriting_feature_extractor.6} parent=23 // pred_check
        %p128 = pneg %p29
      $region26: #{handwriting_feature_extractor.6} parent=23 // pred_check_branch
        %130 = sbr.rel (%p128) target = $region28
      $region27: #{handwriting_feature_extractor.6} parent=23 // pred_region
        %p131 = scmp.lt.s32.totalorder %s9, 1
        %s132 = scalar_select %p131, %s9, 1
        %s133 = smul.addr %s132, 7
        %s134 = smul.addr %s133, 4
        %s135 = scalar_lea.vmem %s0, %s134
      $region28: #{handwriting_feature_extractor.6} parent=23 // pred_fallthru
        _
    $region24: #{handwriting_feature_extractor.6} parent=5 // pred_fallthru
      _
    %p136 = scmp.le.s32.totalorder 1, %s9
    %p137 = scmp.lt.s32.totalorder %s9, 3
    %p138 = pnand %p136, %p137
    %p139 = pneg %p138
    // Predicated region
    $region29: #{handwriting_feature_extractor.6} parent=5 // pred_check
      _
    $region30: #{handwriting_feature_extractor.6} parent=5 // pred_check_branch
      %141 = sbr.rel (%p138) target = $region32
    $region31: #{handwriting_feature_extractor.6} parent=5 // pred_region
      %s142 = ssub.s32 %s9, 1
      %p143 = scmp.lt.s32.totalorder %s14, 1
      %s144 = scalar_select %p143, %s14, 1
      %s145 = smul.addr %s144, 7
      %s146 = smul.addr %s145, 4
      %s147 = scalar_lea.vmem %s0, %s146
      %p148 = pneg %p35
      %p149 = pneg %p32
      %p150 = pneg %p56
      %p151 = pneg %p53
      %p152 = pneg %p77
      %p153 = pneg %p74
      %p154 = pneg %p103
      %p155 = pneg %p100
      %p156 = scmp.lt.s32.totalorder %s14, 1
      %s157 = scalar_select %p156, %s14, 1
      %s158 = smul.addr %s157, 5
      %s159 = smul.addr %s158, 4
      %s160 = scalar_lea.vmem %s3, %s159
      %p161 = scmp.lt.s32.totalorder %s14, 1
      %s162 = scalar_select %p161, %s14, 1
      %s163 = smul.addr %s162, 7
      %s164 = smul.addr %s163, 4
      %s165 = scalar_lea.vmem %s0, %s164
      %p166 = scmp.lt.s32.totalorder %s14, 1
      %s167 = scalar_select %p166, %s14, 1
      %s168 = smul.addr %s167, 5
      %s169 = smul.addr %s168, 4
      %s170 = scalar_lea.vmem %s3, %s169
      %v172 = vld [vmem:[%s2] sm:$0x1]
      %v173 = vld [vmem:[%s165] sm:$0xf]
      %v174 = vld [vmem:[%s165 + $0x4] sm:$0xf]
      %v175 = vld [vmem:[%s165 + $0x8] sm:$0xf]
      %v176 = vld [vmem:[%s165 + $0xc] sm:$0xf]
      %v177 = vld [vmem:[%s165 + $0x10] sm:$0x3]
      %v178 = vld [vmem:[%s1] sm:$0xf]
      %v179 = vld [vmem:[%s1 + $0x4] sm:$0xf]
      %v180 = vld [vmem:[%s1 + $0x8] sm:$0xf]
      %v181 = vld [vmem:[%s1 + $0xc] sm:$0xf]
      %v182 = vld [vmem:[%s1 + $0x10] sm:$0xf]
      %v183 = vld [vmem:[%s1 + $0x14] sm:$0xf]
      %v184 = vld [vmem:[%s1 + $0x18] sm:$0xf]
      %v185 = vld [vmem:[%s1 + $0x1c] sm:$0xf]
      %v186 = vld [vmem:[%s1 + $0x20] sm:$0xf]
      %v187 = vld [vmem:[%s1 + $0x24] sm:$0xf]
      %v188 = vld [vmem:[%s1 + $0x28] sm:$0xf]
      %v189 = vld [vmem:[%s1 + $0x2c] sm:$0xf]
      %v190 = vld [vmem:[%s1 + $0x30] sm:$0xf]
      %v191 = vld [vmem:[%s1 + $0x34] sm:$0xf]
      %v192 = vld [vmem:[%s1 + $0x38] sm:$0xf]
      %v193 = vld [vmem:[%s1 + $0x3c] sm:$0xf]
      %v194 = vld [vmem:[%s165 + $0x10] sm:$0x7]
      %v195 = vld [vmem:[%s1 + $0x40] sm:$0xf]
      %v196 = vld [vmem:[%s1 + $0x44] sm:$0xf]
      %v197 = vld [vmem:[%s1 + $0x48] sm:$0xf]
      %v198 = vld [vmem:[%s1 + $0x4c] sm:$0xf]
      %v199 = vld [vmem:[%s1 + $0x50] sm:$0xf]
      %v200 = vld [vmem:[%s1 + $0x54] sm:$0xf]
      %v201 = vld [vmem:[%s1 + $0x58] sm:$0xf]
      %v202 = vld [vmem:[%s1 + $0x5c] sm:$0xf]
      %v203 = vld [vmem:[%s1 + $0x60] sm:$0xf]
      %v204 = vld [vmem:[%s1 + $0x64] sm:$0xf]
      %v205 = vld [vmem:[%s1 + $0x68] sm:$0xf]
      %v206 = vld [vmem:[%s1 + $0x6c] sm:$0xf]
      %v207 = vld [vmem:[%s1 + $0x70] sm:$0xf]
      %v208 = vld [vmem:[%s1 + $0x74] sm:$0xf]
      %v209 = vld [vmem:[%s1 + $0x78] sm:$0xf]
      %v210 = vld [vmem:[%s1 + $0x7c] sm:$0xf]
      %v216 = vunpack.c.l.b16 %v173
      %v217 = vunpack.c.l.b16 %v174
      %v218 = vunpack.c.l.b16 %v175
      %v219 = vunpack.c.l.b16 %v176
      %v220 = vunpack.c.l.b16 %v194
      %v221 = vpack.c.b16 %v217, %v216
      %v222 = vpack.c.b16 %v219, %v218
      %v223 = vpack.c.b16 %v220, %v220
      %vm224 = vsmask.f32 7424
      %v226 = vshrl.u32 %v221, 16
      %v228 = vshll.u32 %v221, 16
      %v230 = vrot.slane %v228, 1
      %v231 = vor.u32 %v226, %v230
      %v233 = vshll.u32 %v222, 16
      %v235 = vrot.slane %v233, 1
      %v236 = vsel %vm224, %v231, %v235
      %v237 = vshrl.u32 %v222, 16
      %v239 = vor.u32 %v237, %v235
      %v241 = vshll.u32 %v223, 16
      %v243 = vrot.slane %v241, 1
      %v244 = vsel %vm224, %v239, %v243
      %v245 = vshrl.u32 %v223, 16
      %v247 = vor.u32 %v245, %v243
      %v267 = vunpack.c.l.b16 %v195
      %v268 = vunpack.c.l.b16 %v196
      %v269 = vunpack.c.l.b16 %v197
      %v270 = vunpack.c.l.b16 %v198
      %v271 = vunpack.c.l.b16 %v199
      %v272 = vunpack.c.l.b16 %v200
      %v273 = vunpack.c.l.b16 %v201
      %v274 = vunpack.c.l.b16 %v202
      %v275 = vunpack.c.l.b16 %v203
      %v276 = vunpack.c.l.b16 %v204
      %v277 = vunpack.c.l.b16 %v205
      %v278 = vunpack.c.l.b16 %v206
      %v279 = vunpack.c.l.b16 %v207
      %v280 = vunpack.c.l.b16 %v208
      %v281 = vunpack.c.l.b16 %v209
      %v282 = vunpack.c.l.b16 %v210
      %v283 = vpack.c.b16 %v268, %v267
      %v284 = vpack.c.b16 %v270, %v269
      %v285 = vpack.c.b16 %v272, %v271
      %v286 = vpack.c.b16 %v274, %v273
      %v287 = vpack.c.b16 %v276, %v275
      %v288 = vpack.c.b16 %v278, %v277
      %v289 = vpack.c.b16 %v280, %v279
      %v290 = vpack.c.b16 %v282, %v281
      %299 = vmatprep.subr.bf16.mxu0 0
      %300 = vmatpush1.bf16.msra.mxu0 %v283
      %301 = vmatprep.subr.bf16.mxu0 0
      %302 = vmatpush1.bf16.msra.mxu0 %v284
      %303 = vmatprep.subr.bf16.mxu0 0
      %304 = vmatpush1.bf16.msra.mxu0 %v285
      %305 = vmatprep.subr.bf16.mxu0 0
      %306 = vmatpush1.bf16.msra.mxu0 %v286
      %307 = vmatprep.subr.bf16.mxu0 0
      %308 = vmatpush1.bf16.msra.mxu0 %v287
      %309 = vmatprep.subr.bf16.mxu0 0
      %310 = vmatpush1.bf16.msra.mxu0 %v288
      %311 = vmatprep.subr.bf16.mxu0 0
      %312 = vmatpush1.bf16.msra.mxu0 %v289
      %313 = vmatprep.subr.bf16.mxu0 0
      %314 = vmatpush1.bf16.msra.mxu0 %v290
      %315 = vmatprep.subr.bf16.mxu0 0
      %316 = vmatpush1.bf16.msra.mxu0 0
      %317 = vmatprep.subr.bf16.mxu0 0
      %318 = vmatpush1.bf16.msra.mxu0 0
      %319 = vmatprep.subr.bf16.mxu0 0
      %320 = vmatpush1.bf16.msra.mxu0 0
      %321 = vmatprep.subr.bf16.mxu0 0
      %322 = vmatpush1.bf16.msra.mxu0 0
      %323 = vmatprep.subr.bf16.mxu0 0
      %324 = vmatpush1.bf16.msra.mxu0 0
      %325 = vmatprep.subr.bf16.mxu0 0
      %326 = vmatpush1.bf16.msra.mxu0 0
      %327 = vmatprep.subr.bf16.mxu0 0
      %328 = vmatpush1.bf16.msra.mxu0 0
      %329 = vmatprep.subr.bf16.mxu0 0
      %330 = vmatpush1.bf16.msra.mxu0 0
      %331 = vmatprep.mubr.bf16.mxu0 0
      %332 = vmatmul.mubr.bf16.gmra.mrb[0].mxu0 %v236
      %v333 = vpop.f32.mrb[0].mxu0
      %v334 = vadd.f32 0.0, %v333
      %v335 = vpop.f32.mrb[0].mxu0
      %v336 = vpop.f32.mrb[0].mxu0
      %v337 = vadd.f32 0.0, %v336
      %v338 = vpop.f32.mrb[0].mxu0
      %339 = vmatprep.mubr.bf16.mxu0 0
      %340 = vmatmul.mubr.bf16.gmra.mrb[0].mxu0 %v244
      %v341 = vpop.f32.mrb[0].mxu0
      %v342 = vadd.f32 0.0, %v341
      %v343 = vpop.f32.mrb[0].mxu0
      %v344 = vpop.f32.mrb[0].mxu0
      %v345 = vadd.f32 0.0, %v344
      %v346 = vpop.f32.mrb[0].mxu0
      %347 = vmatprep.mubr.bf16.mxu0 0
      %348 = vmatmul.mubr.bf16.gmra.mrb[0].mxu0 %v247
      %v349 = vpop.f32.mrb[0].mxu0
      %v350 = vadd.f32 0.0, %v349
      %v351 = vpop.f32.mrb[0].mxu0
      %v352 = vpop.f32.mrb[0].mxu0
      %v353 = vpop.f32.mrb[0].mxu0
      %354 = vdwg.mxu0
      %v356 = vunpack.c.l.b16 %v177
      %v357 = vpack.c.b16 %v356, %v356
      %v377 = vunpack.c.l.b16 %v178
      %v378 = vunpack.c.l.b16 %v179
      %v379 = vunpack.c.l.b16 %v180
      %v380 = vunpack.c.l.b16 %v181
      %v381 = vunpack.c.l.b16 %v182
      %v382 = vunpack.c.l.b16 %v183
      %v383 = vunpack.c.l.b16 %v184
      %v384 = vunpack.c.l.b16 %v185
      %v385 = vunpack.c.l.b16 %v186
      %v386 = vunpack.c.l.b16 %v187
      %v387 = vunpack.c.l.b16 %v188
      %v388 = vunpack.c.l.b16 %v189
      %v389 = vunpack.c.l.b16 %v190
      %v390 = vunpack.c.l.b16 %v191
      %v391 = vunpack.c.l.b16 %v192
      %v392 = vunpack.c.l.b16 %v193
      %v393 = vpack.c.b16 %v378, %v377
      %v394 = vpack.c.b16 %v380, %v379
      %v395 = vpack.c.b16 %v382, %v381
      %v396 = vpack.c.b16 %v384, %v383
      %v397 = vpack.c.b16 %v386, %v385
      %v398 = vpack.c.b16 %v388, %v387
      %v399 = vpack.c.b16 %v390, %v389
      %v400 = vpack.c.b16 %v392, %v391
      %409 = vmatprep.subr.bf16.mxu0 0
      %410 = vmatpush1.bf16.msra.mxu0 %v393
      %411 = vmatprep.subr.bf16.mxu0 0
      %412 = vmatpush1.bf16.msra.mxu0 %v394
      %413 = vmatprep.subr.bf16.mxu0 0
      %414 = vmatpush1.bf16.msra.mxu0 %v395
      %415 = vmatprep.subr.bf16.mxu0 0
      %416 = vmatpush1.bf16.msra.mxu0 %v396
      %417 = vmatprep.subr.bf16.mxu0 0
      %418 = vmatpush1.bf16.msra.mxu0 %v397
      %419 = vmatprep.subr.bf16.mxu0 0
      %420 = vmatpush1.bf16.msra.mxu0 %v398
      %421 = vmatprep.subr.bf16.mxu0 0
      %422 = vmatpush1.bf16.msra.mxu0 %v399
      %423 = vmatprep.subr.bf16.mxu0 0
      %424 = vmatpush1.bf16.msra.mxu0 %v400
      %425 = vmatprep.subr.bf16.mxu0 0
      %426 = vmatpush1.bf16.msra.mxu0 0
      %427 = vmatprep.subr.bf16.mxu0 0
      %428 = vmatpush1.bf16.msra.mxu0 0
      %429 = vmatprep.subr.bf16.mxu0 0
      %430 = vmatpush1.bf16.msra.mxu0 0
      %431 = vmatprep.subr.bf16.mxu0 0
      %432 = vmatpush1.bf16.msra.mxu0 0
      %433 = vmatprep.subr.bf16.mxu0 0
      %434 = vmatpush1.bf16.msra.mxu0 0
      %435 = vmatprep.subr.bf16.mxu0 0
      %436 = vmatpush1.bf16.msra.mxu0 0
      %437 = vmatprep.subr.bf16.mxu0 0
      %438 = vmatpush1.bf16.msra.mxu0 0
      %439 = vmatprep.subr.bf16.mxu0 0
      %440 = vmatpush1.bf16.msra.mxu0 0
      %441 = vmatprep.mubr.bf16.mxu0 0
      %442 = vmatmul.mubr.bf16.gmra.mrb[0].mxu0 %v221
      %v443 = vpop.f32.mrb[0].mxu0
      %v444 = vadd.f32 %v334, %v443
      %v445 = vpop.f32.mrb[0].mxu0
      %v446 = vpop.f32.mrb[0].mxu0
      %v447 = vadd.f32 %v337, %v446
      %v448 = vpop.f32.mrb[0].mxu0
      %449 = vmatprep.mubr.bf16.mxu0 0
      %450 = vmatmul.mubr.bf16.gmra.mrb[0].mxu0 %v222
      %v451 = vpop.f32.mrb[0].mxu0
      %v452 = vadd.f32 %v342, %v451
      %v453 = vpop.f32.mrb[0].mxu0
      %v454 = vpop.f32.mrb[0].mxu0
      %v455 = vadd.f32 %v345, %v454
      %v456 = vpop.f32.mrb[0].mxu0
      %457 = vmatprep.mubr.bf16.mxu0 0
      %458 = vmatmul.mubr.bf16.gmra.mrb[0].mxu0 %v357
      %v459 = vpop.f32.mrb[0].mxu0
      %v460 = vadd.f32 %v350, %v459
      %v461 = vpop.f32.mrb[0].mxu0
      %v462 = vpop.f32.mrb[0].mxu0
      %v463 = vpop.f32.mrb[0].mxu0
      %464 = vdwg.mxu0
      %v465 = vld [vmem:[%s165] sm:$0xe]
      %v466 = vld [vmem:[%s1 + $0x80] sm:$0xf]
      %v467 = vld [vmem:[%s1 + $0x84] sm:$0xf]
      %v468 = vld [vmem:[%s1 + $0x88] sm:$0xf]
      %v469 = vld [vmem:[%s1 + $0x8c] sm:$0xf]
      %v470 = vld [vmem:[%s1 + $0x90] sm:$0xf]
      %v471 = vld [vmem:[%s1 + $0x94] sm:$0xf]
      %v472 = vld [vmem:[%s1 + $0x98] sm:$0xf]
      %v473 = vld [vmem:[%s1 + $0x9c] sm:$0xf]
      %v474 = vld [vmem:[%s1 + $0xa0] sm:$0xf]
      %v475 = vld [vmem:[%s1 + $0xa4] sm:$0xf]
      %v476 = vld [vmem:[%s1 + $0xa8] sm:$0xf]
      %v477 = vld [vmem:[%s1 + $0xac] sm:$0xf]
      %v478 = vld [vmem:[%s1 + $0xb0] sm:$0xf]
      %v479 = vld [vmem:[%s1 + $0xb4] sm:$0xf]
      %v480 = vld [vmem:[%s1 + $0xb8] sm:$0xf]
      %v481 = vld [vmem:[%s1 + $0xbc] sm:$0xf]
      %v483 = vunpack.c.l.b16 %v465
      %v484 = vpack.c.b16 %v217, %v483
      %vm485 = vcmask 1046528
      %v486 = vrot.slane %v484, 1
      %v487 = vrot.slane %v222, 1
      %v488 = vsel %vm485, %v486, %v487
      %v489 = vrot.slane %v223, 1
      %v490 = vsel %vm485, %v487, %v489
      %v510 = vunpack.c.l.b16 %v466
      %v511 = vunpack.c.l.b16 %v467
      %v512 = vunpack.c.l.b16 %v468
      %v513 = vunpack.c.l.b16 %v469
      %v514 = vunpack.c.l.b16 %v470
      %v515 = vunpack.c.l.b16 %v471
      %v516 = vunpack.c.l.b16 %v472
      %v517 = vunpack.c.l.b16 %v473
      %v518 = vunpack.c.l.b16 %v474
      %v519 = vunpack.c.l.b16 %v475
      %v520 = vunpack.c.l.b16 %v476
      %v521 = vunpack.c.l.b16 %v477
      %v522 = vunpack.c.l.b16 %v478
      %v523 = vunpack.c.l.b16 %v479
      %v524 = vunpack.c.l.b16 %v480
      %v525 = vunpack.c.l.b16 %v481
      %v526 = vpack.c.b16 %v511, %v510
      %v527 = vpack.c.b16 %v513, %v512
      %v528 = vpack.c.b16 %v515, %v514
      %v529 = vpack.c.b16 %v517, %v516
      %v530 = vpack.c.b16 %v519, %v518
      %v531 = vpack.c.b16 %v521, %v520
      %v532 = vpack.c.b16 %v523, %v522
      %v533 = vpack.c.b16 %v525, %v524
      %542 = vmatprep.subr.bf16.mxu0 0
      %543 = vmatpush1.bf16.msra.mxu0 %v526
      %544 = vmatprep.subr.bf16.mxu0 0
      %545 = vmatpush1.bf16.msra.mxu0 %v527
      %546 = vmatprep.subr.bf16.mxu0 0
      %547 = vmatpush1.bf16.msra.mxu0 %v528
      %548 = vmatprep.subr.bf16.mxu0 0
      %549 = vmatpush1.bf16.msra.mxu0 %v529
      %550 = vmatprep.subr.bf16.mxu0 0
      %551 = vmatpush1.bf16.msra.mxu0 %v530
      %552 = vmatprep.subr.bf16.mxu0 0
      %553 = vmatpush1.bf16.msra.mxu0 %v531
      %554 = vmatprep.subr.bf16.mxu0 0
      %555 = vmatpush1.bf16.msra.mxu0 %v532
      %556 = vmatprep.subr.bf16.mxu0 0
      %557 = vmatpush1.bf16.msra.mxu0 %v533
      %558 = vmatprep.subr.bf16.mxu0 0
      %559 = vmatpush1.bf16.msra.mxu0 0
      %560 = vmatprep.subr.bf16.mxu0 0
      %561 = vmatpush1.bf16.msra.mxu0 0
      %562 = vmatprep.subr.bf16.mxu0 0
      %563 = vmatpush1.bf16.msra.mxu0 0
      %564 = vmatprep.subr.bf16.mxu0 0
      %565 = vmatpush1.bf16.msra.mxu0 0
      %566 = vmatprep.subr.bf16.mxu0 0
      %567 = vmatpush1.bf16.msra.mxu0 0
      %568 = vmatprep.subr.bf16.mxu0 0
      %569 = vmatpush1.bf16.msra.mxu0 0
      %570 = vmatprep.subr.bf16.mxu0 0
      %571 = vmatpush1.bf16.msra.mxu0 0
      %572 = vmatprep.subr.bf16.mxu0 0
      %573 = vmatpush1.bf16.msra.mxu0 0
      %574 = vmatprep.mubr.bf16.mxu0 0
      %575 = vmatmul.mubr.bf16.gmra.mrb[0].mxu0 %v488
      %v576 = vpop.f32.mrb[0].mxu0
      %v577 = vadd.f32 0.0, %v576
      %v578 = vpop.f32.mrb[0].mxu0
      %v579 = vpop.f32.mrb[0].mxu0
      %v580 = vadd.f32 0.0, %v579
      %v581 = vpop.f32.mrb[0].mxu0
      %582 = vmatprep.mubr.bf16.mxu0 0
      %583 = vmatmul.mubr.bf16.gmra.mrb[0].mxu0 %v490
      %v584 = vpop.f32.mrb[0].mxu0
      %v585 = vadd.f32 0.0, %v584
      %v586 = vpop.f32.mrb[0].mxu0
      %v587 = vpop.f32.mrb[0].mxu0
      %v588 = vadd.f32 0.0, %v587
      %v589 = vpop.f32.mrb[0].mxu0
      %590 = vmatprep.mubr.bf16.mxu0 0
      %591 = vmatmul.mubr.bf16.gmra.mrb[0].mxu0 %v489
      %v592 = vpop.f32.mrb[0].mxu0
      %v593 = vadd.f32 0.0, %v592
      %v594 = vpop.f32.mrb[0].mxu0
      %v595 = vpop.f32.mrb[0].mxu0
      %v596 = vpop.f32.mrb[0].mxu0
      %597 = vdwg.mxu0
      %v598 = vadd.f32 %v444, %v577
      %v599 = vadd.f32 %v447, %v580
      %v600 = vadd.f32 %v452, %v585
      %v601 = vadd.f32 %v455, %v588
      %v602 = vadd.f32 %v460, %v593
      %v603 = vld [vmem:[%s165] sm:$0x8]
      %v604 = vld [vmem:[%s165 + $0x4] sm:$0xf]
      %v605 = vld [vmem:[%s165 + $0x8] sm:$0xf]
      %v606 = vld [vmem:[%s165 + $0xc] sm:$0xf]
      %v607 = vld [vmem:[%s165 + $0x10] sm:$0xf]
      %v608 = vld [vmem:[%s165 + $0x14] sm:$0x1]
      %v609 = vld [vmem:[%s1 + $0xc0] sm:$0xf]
      %v610 = vld [vmem:[%s1 + $0xc4] sm:$0xf]
      %v611 = vld [vmem:[%s1 + $0xc8] sm:$0xf]
      %v612 = vld [vmem:[%s1 + $0xcc] sm:$0xf]
      %v613 = vld [vmem:[%s1 + $0xd0] sm:$0xf]
      %v614 = vld [vmem:[%s1 + $0xd4] sm:$0xf]
      %v615 = vld [vmem:[%s1 + $0xd8] sm:$0xf]
      %v616 = vld [vmem:[%s1 + $0xdc] sm:$0xf]
      %v617 = vld [vmem:[%s1 + $0xe0] sm:$0xf]
      %v618 = vld [vmem:[%s1 + $0xe4] sm:$0xf]
      %v619 = vld [vmem:[%s1 + $0xe8] sm:$0xf]
      %v620 = vld [vmem:[%s1 + $0xec] sm:$0xf]
      %v621 = vld [vmem:[%s1 + $0xf0] sm:$0xf]
      %v622 = vld [vmem:[%s1 + $0xf4] sm:$0xf]
      %v623 = vld [vmem:[%s1 + $0xf8] sm:$0xf]
      %v624 = vld [vmem:[%s1 + $0xfc] sm:$0xf]
      %v631 = vunpack.c.l.b16 %v603
      %v632 = vunpack.c.l.b16 %v604
      %v633 = vunpack.c.l.b16 %v605
      %v634 = vunpack.c.l.b16 %v606
      %v635 = vunpack.c.l.b16 %v607
      %v636 = vunpack.c.l.b16 %v608
      %v637 = vpack.c.b16 %v632, %v631
      %v638 = vpack.c.b16 %v634, %v633
      %v639 = vpack.c.b16 %v636, %v635
      %vm640 = vcmask 1044480
      %v641 = vrot.slane %v637, 3
      %v642 = vrot.slane %v638, 3
      %v643 = vsel %vm640, %v641, %v642
      %v644 = vrot.slane %v639, 3
      %v645 = vsel %vm640, %v642, %v644
      %v665 = vunpack.c.l.b16 %v609
      %v666 = vunpack.c.l.b16 %v610
      %v667 = vunpack.c.l.b16 %v611
      %v668 = vunpack.c.l.b16 %v612
      %v669 = vunpack.c.l.b16 %v613
      %v670 = vunpack.c.l.b16 %v614
      %v671 = vunpack.c.l.b16 %v615
      %v672 = vunpack.c.l.b16 %v616
      %v673 = vunpack.c.l.b16 %v617
      %v674 = vunpack.c.l.b16 %v618
      %v675 = vunpack.c.l.b16 %v619
      %v676 = vunpack.c.l.b16 %v620
      %v677 = vunpack.c.l.b16 %v621
      %v678 = vunpack.c.l.b16 %v622
      %v679 = vunpack.c.l.b16 %v623
      %v680 = vunpack.c.l.b16 %v624
      %v681 = vpack.c.b16 %v666, %v665
      %v682 = vpack.c.b16 %v668, %v667
      %v683 = vpack.c.b16 %v670, %v669
      %v684 = vpack.c.b16 %v672, %v671
      %v685 = vpack.c.b16 %v674, %v673
      %v686 = vpack.c.b16 %v676, %v675
      %v687 = vpack.c.b16 %v678, %v677
      %v688 = vpack.c.b16 %v680, %v679
      %697 = vmatprep.subr.bf16.mxu0 0
      %698 = vmatpush1.bf16.msra.mxu0 %v681
      %699 = vmatprep.subr.bf16.mxu0 0
      %700 = vmatpush1.bf16.msra.mxu0 %v682
      %701 = vmatprep.subr.bf16.mxu0 0
      %702 = vmatpush1.bf16.msra.mxu0 %v683
      %703 = vmatprep.subr.bf16.mxu0 0
      %704 = vmatpush1.bf16.msra.mxu0 %v684
      %705 = vmatprep.subr.bf16.mxu0 0
      %706 = vmatpush1.bf16.msra.mxu0 %v685
      %707 = vmatprep.subr.bf16.mxu0 0
      %708 = vmatpush1.bf16.msra.mxu0 %v686
      %709 = vmatprep.subr.bf16.mxu0 0
      %710 = vmatpush1.bf16.msra.mxu0 %v687
      %711 = vmatprep.subr.bf16.mxu0 0
      %712 = vmatpush1.bf16.msra.mxu0 %v688
      %713 = vmatprep.subr.bf16.mxu0 0
      %714 = vmatpush1.bf16.msra.mxu0 0
      %715 = vmatprep.subr.bf16.mxu0 0
      %716 = vmatpush1.bf16.msra.mxu0 0
      %717 = vmatprep.subr.bf16.mxu0 0
      %718 = vmatpush1.bf16.msra.mxu0 0
      %719 = vmatprep.subr.bf16.mxu0 0
      %720 = vmatpush1.bf16.msra.mxu0 0
      %721 = vmatprep.subr.bf16.mxu0 0
      %722 = vmatpush1.bf16.msra.mxu0 0
      %723 = vmatprep.subr.bf16.mxu0 0
      %724 = vmatpush1.bf16.msra.mxu0 0
      %725 = vmatprep.subr.bf16.mxu0 0
      %726 = vmatpush1.bf16.msra.mxu0 0
      %727 = vmatprep.subr.bf16.mxu0 0
      %728 = vmatpush1.bf16.msra.mxu0 0
      %729 = vmatprep.mubr.bf16.mxu0 0
      %730 = vmatmul.mubr.bf16.gmra.mrb[0].mxu0 %v643
      %v731 = vpop.f32.mrb[0].mxu0
      %v732 = vadd.f32 0.0, %v731
      %v733 = vpop.f32.mrb[0].mxu0
      %v734 = vpop.f32.mrb[0].mxu0
      %v735 = vadd.f32 0.0, %v734
      %v736 = vpop.f32.mrb[0].mxu0
      %737 = vmatprep.mubr.bf16.mxu0 0
      %738 = vmatmul.mubr.bf16.gmra.mrb[0].mxu0 %v645
      %v739 = vpop.f32.mrb[0].mxu0
      %v740 = vadd.f32 0.0, %v739
      %v741 = vpop.f32.mrb[0].mxu0
      %v742 = vpop.f32.mrb[0].mxu0
      %v743 = vadd.f32 0.0, %v742
      %v744 = vpop.f32.mrb[0].mxu0
      %745 = vmatprep.mubr.bf16.mxu0 0
      %746 = vmatmul.mubr.bf16.gmra.mrb[0].mxu0 %v644
      %v747 = vpop.f32.mrb[0].mxu0
      %v748 = vadd.f32 0.0, %v747
      %v749 = vpop.f32.mrb[0].mxu0
      %v750 = vpop.f32.mrb[0].mxu0
      %v751 = vpop.f32.mrb[0].mxu0
      %752 = vdwg.mxu0
      %v753 = vadd.f32 %v598, %v732
      %v754 = vadd.f32 %v599, %v735
      %v755 = vadd.f32 %v600, %v740
      %v756 = vadd.f32 %v601, %v743
      %v757 = vadd.f32 %v602, %v748
      %v758 = vld [vmem:[%s165 + $0x14] sm:$0x3]
      %v759 = vld [vmem:[%s1 + $0x100] sm:$0xf]
      %v760 = vld [vmem:[%s1 + $0x104] sm:$0xf]
      %v761 = vld [vmem:[%s1 + $0x108] sm:$0xf]
      %v762 = vld [vmem:[%s1 + $0x10c] sm:$0xf]
      %v763 = vld [vmem:[%s1 + $0x110] sm:$0xf]
      %v764 = vld [vmem:[%s1 + $0x114] sm:$0xf]
      %v765 = vld [vmem:[%s1 + $0x118] sm:$0xf]
      %v766 = vld [vmem:[%s1 + $0x11c] sm:$0xf]
      %v767 = vld [vmem:[%s1 + $0x120] sm:$0xf]
      %v768 = vld [vmem:[%s1 + $0x124] sm:$0xf]
      %v769 = vld [vmem:[%s1 + $0x128] sm:$0xf]
      %v770 = vld [vmem:[%s1 + $0x12c] sm:$0xf]
      %v771 = vld [vmem:[%s1 + $0x130] sm:$0xf]
      %v772 = vld [vmem:[%s1 + $0x134] sm:$0xf]
      %v773 = vld [vmem:[%s1 + $0x138] sm:$0xf]
      %v774 = vld [vmem:[%s1 + $0x13c] sm:$0xf]
      %v776 = vunpack.c.l.b16 %v758
      %v777 = vpack.c.b16 %v776, %v635
      %vm778 = vsmask.f32 4352
      %v780 = vshrl.u32 %v637, 16
      %v782 = vrot.slane %v780, 3
      %v783 = vshll.u32 %v637, 16
      %v785 = vrot.slane %v783, 4
      %v786 = vor.u32 %v782, %v785
      %v788 = vshrl.u32 %v638, 16
      %v790 = vrot.slane %v788, 3
      %v791 = vshll.u32 %v638, 16
      %v793 = vrot.slane %v791, 4
      %v794 = vor.u32 %v790, %v793
      %v795 = vsel %vm778, %v786, %v794
      %v797 = vshrl.u32 %v777, 16
      %v799 = vrot.slane %v797, 3
      %v800 = vshll.u32 %v777, 16
      %v802 = vrot.slane %v800, 4
      %v803 = vor.u32 %v799, %v802
      %v804 = vsel %vm778, %v794, %v803
      %v824 = vunpack.c.l.b16 %v759
      %v825 = vunpack.c.l.b16 %v760
      %v826 = vunpack.c.l.b16 %v761
      %v827 = vunpack.c.l.b16 %v762
      %v828 = vunpack.c.l.b16 %v763
      %v829 = vunpack.c.l.b16 %v764
      %v830 = vunpack.c.l.b16 %v765
      %v831 = vunpack.c.l.b16 %v766
      %v832 = vunpack.c.l.b16 %v767
      %v833 = vunpack.c.l.b16 %v768
      %v834 = vunpack.c.l.b16 %v769
      %v835 = vunpack.c.l.b16 %v770
      %v836 = vunpack.c.l.b16 %v771
      %v837 = vunpack.c.l.b16 %v772
      %v838 = vunpack.c.l.b16 %v773
      %v839 = vunpack.c.l.b16 %v774
      %v840 = vpack.c.b16 %v825, %v824
      %v841 = vpack.c.b16 %v827, %v826
      %v842 = vpack.c.b16 %v829, %v828
      %v843 = vpack.c.b16 %v831, %v830
      %v844 = vpack.c.b16 %v833, %v832
      %v845 = vpack.c.b16 %v835, %v834
      %v846 = vpack.c.b16 %v837, %v836
      %v847 = vpack.c.b16 %v839, %v838
      %856 = vmatprep.subr.bf16.mxu0 0
      %857 = vmatpush1.bf16.msra.mxu0 %v840
      %858 = vmatprep.subr.bf16.mxu0 0
      %859 = vmatpush1.bf16.msra.mxu0 %v841
      %860 = vmatprep.subr.bf16.mxu0 0
      %861 = vmatpush1.bf16.msra.mxu0 %v842
      %862 = vmatprep.subr.bf16.mxu0 0
      %863 = vmatpush1.bf16.msra.mxu0 %v843
      %864 = vmatprep.subr.bf16.mxu0 0
      %865 = vmatpush1.bf16.msra.mxu0 %v844
      %866 = vmatprep.subr.bf16.mxu0 0
      %867 = vmatpush1.bf16.msra.mxu0 %v845
      %868 = vmatprep.subr.bf16.mxu0 0
      %869 = vmatpush1.bf16.msra.mxu0 %v846
      %870 = vmatprep.subr.bf16.mxu0 0
      %871 = vmatpush1.bf16.msra.mxu0 %v847
      %872 = vmatprep.subr.bf16.mxu0 0
      %873 = vmatpush1.bf16.msra.mxu0 0
      %874 = vmatprep.subr.bf16.mxu0 0
      %875 = vmatpush1.bf16.msra.mxu0 0
      %876 = vmatprep.subr.bf16.mxu0 0
      %877 = vmatpush1.bf16.msra.mxu0 0
      %878 = vmatprep.subr.bf16.mxu0 0
      %879 = vmatpush1.bf16.msra.mxu0 0
      %880 = vmatprep.subr.bf16.mxu0 0
      %881 = vmatpush1.bf16.msra.mxu0 0
      %882 = vmatprep.subr.bf16.mxu0 0
      %883 = vmatpush1.bf16.msra.mxu0 0
      %884 = vmatprep.subr.bf16.mxu0 0
      %885 = vmatpush1.bf16.msra.mxu0 0
      %886 = vmatprep.subr.bf16.mxu0 0
      %887 = vmatpush1.bf16.msra.mxu0 0
      %888 = vmatprep.mubr.bf16.mxu0 0
      %889 = vmatmul.mubr.bf16.gmra.mrb[0].mxu0 %v795
      %v890 = vpop.f32.mrb[0].mxu0
      %v891 = vadd.f32 0.0, %v890
      %v892 = vpop.f32.mrb[0].mxu0
      %v893 = vpop.f32.mrb[0].mxu0
      %v894 = vadd.f32 0.0, %v893
      %v895 = vpop.f32.mrb[0].mxu0
      %896 = vmatprep.mubr.bf16.mxu0 0
      %897 = vmatmul.mubr.bf16.gmra.mrb[0].mxu0 %v804
      %v898 = vpop.f32.mrb[0].mxu0
      %v899 = vadd.f32 0.0, %v898
      %v900 = vpop.f32.mrb[0].mxu0
      %v901 = vpop.f32.mrb[0].mxu0
      %v902 = vadd.f32 0.0, %v901
      %v903 = vpop.f32.mrb[0].mxu0
      %904 = vmatprep.mubr.bf16.mxu0 0
      %905 = vmatmul.mubr.bf16.gmra.mrb[0].mxu0 %v803
      %v906 = vpop.f32.mrb[0].mxu0
      %v907 = vadd.f32 0.0, %v906
      %v908 = vpop.f32.mrb[0].mxu0
      %v909 = vpop.f32.mrb[0].mxu0
      %v910 = vpop.f32.mrb[0].mxu0
      %911 = vdwg.mxu0
      %v912 = vadd.f32 %v753, %v891
      %v913 = vadd.f32 %v754, %v894
      %v914 = vadd.f32 %v755, %v899
      %v915 = vadd.f32 %v756, %v902
      %v916 = vadd.f32 %v757, %v907
      %v917 = vld [vmem:[%s1 + $0x140] sm:$0xf]
      %v918 = vld [vmem:[%s1 + $0x144] sm:$0xf]
      %v919 = vld [vmem:[%s1 + $0x148] sm:$0xf]
      %v920 = vld [vmem:[%s1 + $0x14c] sm:$0xf]
      %v921 = vld [vmem:[%s1 + $0x150] sm:$0xf]
      %v922 = vld [vmem:[%s1 + $0x154] sm:$0xf]
      %v923 = vld [vmem:[%s1 + $0x158] sm:$0xf]
      %v924 = vld [vmem:[%s1 + $0x15c] sm:$0xf]
      %v925 = vld [vmem:[%s1 + $0x160] sm:$0xf]
      %v926 = vld [vmem:[%s1 + $0x164] sm:$0xf]
      %v927 = vld [vmem:[%s1 + $0x168] sm:$0xf]
      %v928 = vld [vmem:[%s1 + $0x16c] sm:$0xf]
      %v929 = vld [vmem:[%s1 + $0x170] sm:$0xf]
      %v930 = vld [vmem:[%s1 + $0x174] sm:$0xf]
      %v931 = vld [vmem:[%s1 + $0x178] sm:$0xf]
      %v932 = vld [vmem:[%s1 + $0x17c] sm:$0xf]
      %v933 = vpack.c.b16 %v633, %v632
      %v934 = vpack.c.b16 %v635, %v634
      %v935 = vpack.c.b16 %v776, %v776
      %v955 = vunpack.c.l.b16 %v917
      %v956 = vunpack.c.l.b16 %v918
      %v957 = vunpack.c.l.b16 %v919
      %v958 = vunpack.c.l.b16 %v920
      %v959 = vunpack.c.l.b16 %v921
      %v960 = vunpack.c.l.b16 %v922
      %v961 = vunpack.c.l.b16 %v923
      %v962 = vunpack.c.l.b16 %v924
      %v963 = vunpack.c.l.b16 %v925
      %v964 = vunpack.c.l.b16 %v926
      %v965 = vunpack.c.l.b16 %v927
      %v966 = vunpack.c.l.b16 %v928
      %v967 = vunpack.c.l.b16 %v929
      %v968 = vunpack.c.l.b16 %v930
      %v969 = vunpack.c.l.b16 %v931
      %v970 = vunpack.c.l.b16 %v932
      %v971 = vpack.c.b16 %v956, %v955
      %v972 = vpack.c.b16 %v958, %v957
      %v973 = vpack.c.b16 %v960, %v959
      %v974 = vpack.c.b16 %v962, %v961
      %v975 = vpack.c.b16 %v964, %v963
      %v976 = vpack.c.b16 %v966, %v965
      %v977 = vpack.c.b16 %v968, %v967
      %v978 = vpack.c.b16 %v970, %v969
      %987 = vmatprep.subr.bf16.mxu0 0
      %988 = vmatpush1.bf16.msra.mxu0 %v971
      %989 = vmatprep.subr.bf16.mxu0 0
      %990 = vmatpush1.bf16.msra.mxu0 %v972
      %991 = vmatprep.subr.bf16.mxu0 0
      %992 = vmatpush1.bf16.msra.mxu0 %v973
      %993 = vmatprep.subr.bf16.mxu0 0
      %994 = vmatpush1.bf16.msra.mxu0 %v974
      %995 = vmatprep.subr.bf16.mxu0 0
      %996 = vmatpush1.bf16.msra.mxu0 %v975
      %997 = vmatprep.subr.bf16.mxu0 0
      %998 = vmatpush1.bf16.msra.mxu0 %v976
      %999 = vmatprep.subr.bf16.mxu0 0
      %1000 = vmatpush1.bf16.msra.mxu0 %v977
      %1001 = vmatprep.subr.bf16.mxu0 0
      %1002 = vmatpush1.bf16.msra.mxu0 %v978
      %1003 = vmatprep.subr.bf16.mxu0 0
      %1004 = vmatpush1.bf16.msra.mxu0 0
      %1005 = vmatprep.subr.bf16.mxu0 0
      %1006 = vmatpush1.bf16.msra.mxu0 0
      %1007 = vmatprep.subr.bf16.mxu0 0
      %1008 = vmatpush1.bf16.msra.mxu0 0
      %1009 = vmatprep.subr.bf16.mxu0 0
      %1010 = vmatpush1.bf16.msra.mxu0 0
      %1011 = vmatprep.subr.bf16.mxu0 0
      %1012 = vmatpush1.bf16.msra.mxu0 0
      %1013 = vmatprep.subr.bf16.mxu0 0
      %1014 = vmatpush1.bf16.msra.mxu0 0
      %1015 = vmatprep.subr.bf16.mxu0 0
      %1016 = vmatpush1.bf16.msra.mxu0 0
      %1017 = vmatprep.subr.bf16.mxu0 0
      %1018 = vmatpush1.bf16.msra.mxu0 0
      %1019 = vmatprep.mubr.bf16.mxu0 0
      %1020 = vmatmul.mubr.bf16.gmra.mrb[0].mxu0 %v933
      %v1021 = vpop.f32.mrb[0].mxu0
      %v1022 = vadd.f32 0.0, %v1021
      %v1023 = vpop.f32.mrb[0].mxu0
      %v1024 = vpop.f32.mrb[0].mxu0
      %v1025 = vadd.f32 0.0, %v1024
      %v1026 = vpop.f32.mrb[0].mxu0
      %1027 = vmatprep.mubr.bf16.mxu0 0
      %1028 = vmatmul.mubr.bf16.gmra.mrb[0].mxu0 %v934
      %v1029 = vpop.f32.mrb[0].mxu0
      %v1030 = vadd.f32 0.0, %v1029
      %v1031 = vpop.f32.mrb[0].mxu0
      %v1032 = vpop.f32.mrb[0].mxu0
      %v1033 = vadd.f32 0.0, %v1032
      %v1034 = vpop.f32.mrb[0].mxu0
      %1035 = vmatprep.mubr.bf16.mxu0 0
      %1036 = vmatmul.mubr.bf16.gmra.mrb[0].mxu0 %v935
      %v1037 = vpop.f32.mrb[0].mxu0
      %v1038 = vadd.f32 0.0, %v1037
      %v1039 = vpop.f32.mrb[0].mxu0
      %v1040 = vpop.f32.mrb[0].mxu0
      %v1041 = vpop.f32.mrb[0].mxu0
      %1042 = vdwg.mxu0
      %v1043 = vadd.f32 %v912, %v1022
      %v1044 = vadd.f32 %v913, %v1025
      %v1045 = vadd.f32 %v914, %v1030
      %v1046 = vadd.f32 %v915, %v1033
      %v1047 = vadd.f32 %v916, %v1038
      %v1048 = vld [vmem:[%s165 + $0x4] sm:$0xc]
      %v1049 = vld [vmem:[%s165 + $0x14] sm:$0xf]
      %v1050 = vld [vmem:[%s1 + $0x180] sm:$0xf]
      %v1051 = vld [vmem:[%s1 + $0x184] sm:$0xf]
      %v1052 = vld [vmem:[%s1 + $0x188] sm:$0xf]
      %v1053 = vld [vmem:[%s1 + $0x18c] sm:$0xf]
      %v1054 = vld [vmem:[%s1 + $0x190] sm:$0xf]
      %v1055 = vld [vmem:[%s1 + $0x194] sm:$0xf]
      %v1056 = vld [vmem:[%s1 + $0x198] sm:$0xf]
      %v1057 = vld [vmem:[%s1 + $0x19c] sm:$0xf]
      %v1058 = vld [vmem:[%s1 + $0x1a0] sm:$0xf]
      %v1059 = vld [vmem:[%s1 + $0x1a4] sm:$0xf]
      %v1060 = vld [vmem:[%s1 + $0x1a8] sm:$0xf]
      %v1061 = vld [vmem:[%s1 + $0x1ac] sm:$0xf]
      %v1062 = vld [vmem:[%s1 + $0x1b0] sm:$0xf]
      %v1063 = vld [vmem:[%s1 + $0x1b4] sm:$0xf]
      %v1064 = vld [vmem:[%s1 + $0x1b8] sm:$0xf]
      %v1065 = vld [vmem:[%s1 + $0x1bc] sm:$0xf]
      %v1068 = vunpack.c.l.b16 %v1048
      %v1069 = vunpack.c.l.b16 %v1049
      %v1070 = vpack.c.b16 %v633, %v1068
      %v1071 = vpack.c.b16 %v1069, %v1069
      %vm1072 = vcmask 1045504
      %v1073 = vrot.slane %v1070, 2
      %v1074 = vrot.slane %v934, 2
      %v1075 = vsel %vm1072, %v1073, %v1074
      %v1076 = vrot.slane %v1071, 2
      %v1077 = vsel %vm1072, %v1074, %v1076
      %v1097 = vunpack.c.l.b16 %v1050
      %v1098 = vunpack.c.l.b16 %v1051
      %v1099 = vunpack.c.l.b16 %v1052
      %v1100 = vunpack.c.l.b16 %v1053
      %v1101 = vunpack.c.l.b16 %v1054
      %v1102 = vunpack.c.l.b16 %v1055
      %v1103 = vunpack.c.l.b16 %v1056
      %v1104 = vunpack.c.l.b16 %v1057
      %v1105 = vunpack.c.l.b16 %v1058
      %v1106 = vunpack.c.l.b16 %v1059
      %v1107 = vunpack.c.l.b16 %v1060
      %v1108 = vunpack.c.l.b16 %v1061
      %v1109 = vunpack.c.l.b16 %v1062
      %v1110 = vunpack.c.l.b16 %v1063
      %v1111 = vunpack.c.l.b16 %v1064
      %v1112 = vunpack.c.l.b16 %v1065
      %v1113 = vpack.c.b16 %v1098, %v1097
      %v1114 = vpack.c.b16 %v1100, %v1099
      %v1115 = vpack.c.b16 %v1102, %v1101
      %v1116 = vpack.c.b16 %v1104, %v1103
      %v1117 = vpack.c.b16 %v1106, %v1105
      %v1118 = vpack.c.b16 %v1108, %v1107
      %v1119 = vpack.c.b16 %v1110, %v1109
      %v1120 = vpack.c.b16 %v1112, %v1111
      %1129 = vmatprep.subr.bf16.mxu0 0
      %1130 = vmatpush1.bf16.msra.mxu0 %v1113
      %1131 = vmatprep.subr.bf16.mxu0 0
      %1132 = vmatpush1.bf16.msra.mxu0 %v1114
      %1133 = vmatprep.subr.bf16.mxu0 0
      %1134 = vmatpush1.bf16.msra.mxu0 %v1115
      %1135 = vmatprep.subr.bf16.mxu0 0
      %1136 = vmatpush1.bf16.msra.mxu0 %v1116
      %1137 = vmatprep.subr.bf16.mxu0 0
      %1138 = vmatpush1.bf16.msra.mxu0 %v1117
      %1139 = vmatprep.subr.bf16.mxu0 0
      %1140 = vmatpush1.bf16.msra.mxu0 %v1118
      %1141 = vmatprep.subr.bf16.mxu0 0
      %1142 = vmatpush1.bf16.msra.mxu0 %v1119
      %1143 = vmatprep.subr.bf16.mxu0 0
      %1144 = vmatpush1.bf16.msra.mxu0 %v1120
      %1145 = vmatprep.subr.bf16.mxu0 0
      %1146 = vmatpush1.bf16.msra.mxu0 0
      %1147 = vmatprep.subr.bf16.mxu0 0
      %1148 = vmatpush1.bf16.msra.mxu0 0
      %1149 = vmatprep.subr.bf16.mxu0 0
      %1150 = vmatpush1.bf16.msra.mxu0 0
      %1151 = vmatprep.subr.bf16.mxu0 0
      %1152 = vmatpush1.bf16.msra.mxu0 0
      %1153 = vmatprep.subr.bf16.mxu0 0
      %1154 = vmatpush1.bf16.msra.mxu0 0
      %1155 = vmatprep.subr.bf16.mxu0 0
      %1156 = vmatpush1.bf16.msra.mxu0 0
      %1157 = vmatprep.subr.bf16.mxu0 0
      %1158 = vmatpush1.bf16.msra.mxu0 0
      %1159 = vmatprep.subr.bf16.mxu0 0
      %1160 = vmatpush1.bf16.msra.mxu0 0
      %1161 = vmatprep.mubr.bf16.mxu0 0
      %1162 = vmatmul.mubr.bf16.gmra.mrb[0].mxu0 %v1075
      %v1163 = vpop.f32.mrb[0].mxu0
      %v1164 = vadd.f32 0.0, %v1163
      %v1165 = vpop.f32.mrb[0].mxu0
      %v1166 = vpop.f32.mrb[0].mxu0
      %v1167 = vadd.f32 0.0, %v1166
      %v1168 = vpop.f32.mrb[0].mxu0
      %1169 = vmatprep.mubr.bf16.mxu0 0
      %1170 = vmatmul.mubr.bf16.gmra.mrb[0].mxu0 %v1077
      %v1171 = vpop.f32.mrb[0].mxu0
      %v1172 = vadd.f32 0.0, %v1171
      %v1173 = vpop.f32.mrb[0].mxu0
      %v1174 = vpop.f32.mrb[0].mxu0
      %v1175 = vadd.f32 0.0, %v1174
      %v1176 = vpop.f32.mrb[0].mxu0
      %1177 = vmatprep.mubr.bf16.mxu0 0
      %1178 = vmatmul.mubr.bf16.gmra.mrb[0].mxu0 %v1076
      %v1179 = vpop.f32.mrb[0].mxu0
      %v1180 = vadd.f32 0.0, %v1179
      %v1181 = vpop.f32.mrb[0].mxu0
      %v1182 = vpop.f32.mrb[0].mxu0
      %v1183 = vpop.f32.mrb[0].mxu0
      %1184 = vdwg.mxu0
      %v1185 = vadd.f32 %v1043, %v1164
      %v1186 = vadd.f32 %v1044, %v1167
      %v1187 = vadd.f32 %v1045, %v1172
      %v1188 = vadd.f32 %v1046, %v1175
      %v1189 = vadd.f32 %v1047, %v1180
      %v1190 = vld [vmem:[%s165 + $0x4] sm:$0xc]
      %v1191 = vld [vmem:[%s165 + $0x8] sm:$0xf]
      %v1192 = vld [vmem:[%s165 + $0xc] sm:$0xf]
      %v1193 = vld [vmem:[%s165 + $0x10] sm:$0xf]
      %v1194 = vld [vmem:[%s165 + $0x14] sm:$0xf]
      %v1195 = vld [vmem:[%s165 + $0x18] sm:$0x1]
      %v1196 = vld [vmem:[%s1 + $0x1c0] sm:$0xf]
      %v1197 = vld [vmem:[%s1 + $0x1c4] sm:$0xf]
      %v1198 = vld [vmem:[%s1 + $0x1c8] sm:$0xf]
      %v1199 = vld [vmem:[%s1 + $0x1cc] sm:$0xf]
      %v1200 = vld [vmem:[%s1 + $0x1d0] sm:$0xf]
      %v1201 = vld [vmem:[%s1 + $0x1d4] sm:$0xf]
      %v1202 = vld [vmem:[%s1 + $0x1d8] sm:$0xf]
      %v1203 = vld [vmem:[%s1 + $0x1dc] sm:$0xf]
      %v1204 = vld [vmem:[%s1 + $0x1e0] sm:$0xf]
      %v1205 = vld [vmem:[%s1 + $0x1e4] sm:$0xf]
      %v1206 = vld [vmem:[%s1 + $0x1e8] sm:$0xf]
      %v1207 = vld [vmem:[%s1 + $0x1ec] sm:$0xf]
      %v1208 = vld [vmem:[%s1 + $0x1f0] sm:$0xf]
      %v1209 = vld [vmem:[%s1 + $0x1f4] sm:$0xf]
      %v1210 = vld [vmem:[%s1 + $0x1f8] sm:$0xf]
      %v1211 = vld [vmem:[%s1 + $0x1fc] sm:$0xf]
      %v1218 = vunpack.c.l.b16 %v1190
      %v1219 = vunpack.c.l.b16 %v1191
      %v1220 = vunpack.c.l.b16 %v1192
      %v1221 = vunpack.c.l.b16 %v1193
      %v1222 = vunpack.c.l.b16 %v1194
      %v1223 = vunpack.c.l.b16 %v1195
      %v1224 = vpack.c.b16 %v1219, %v1218
      %v1225 = vpack.c.b16 %v1221, %v1220
      %v1226 = vpack.c.b16 %v1223, %v1222
      %vm1227 = vsmask.f32 5376
      %v1229 = vshrl.u32 %v1224, 16
      %v1231 = vrot.slane %v1229, 2
      %v1232 = vshll.u32 %v1224, 16
      %v1234 = vrot.slane %v1232, 3
      %v1235 = vor.u32 %v1231, %v1234
      %v1237 = vshrl.u32 %v1225, 16
      %v1239 = vrot.slane %v1237, 2
      %v1240 = vshll.u32 %v1225, 16
      %v1242 = vrot.slane %v1240, 3
      %v1243 = vor.u32 %v1239, %v1242
      %v1244 = vsel %vm1227, %v1235, %v1243
      %v1246 = vshrl.u32 %v1226, 16
      %v1248 = vrot.slane %v1246, 2
      %v1249 = vshll.u32 %v1226, 16
      %v1251 = vrot.slane %v1249, 3
      %v1252 = vor.u32 %v1248, %v1251
      %v1253 = vsel %vm1227, %v1243, %v1252
      %v1273 = vunpack.c.l.b16 %v1196
      %v1274 = vunpack.c.l.b16 %v1197
      %v1275 = vunpack.c.l.b16 %v1198
      %v1276 = vunpack.c.l.b16 %v1199
      %v1277 = vunpack.c.l.b16 %v1200
      %v1278 = vunpack.c.l.b16 %v1201
      %v1279 = vunpack.c.l.b16 %v1202
      %v1280 = vunpack.c.l.b16 %v1203
      %v1281 = vunpack.c.l.b16 %v1204
      %v1282 = vunpack.c.l.b16 %v1205
      %v1283 = vunpack.c.l.b16 %v1206
      %v1284 = vunpack.c.l.b16 %v1207
      %v1285 = vunpack.c.l.b16 %v1208
      %v1286 = vunpack.c.l.b16 %v1209
      %v1287 = vunpack.c.l.b16 %v1210
      %v1288 = vunpack.c.l.b16 %v1211
      %v1289 = vpack.c.b16 %v1274, %v1273
      %v1290 = vpack.c.b16 %v1276, %v1275
      %v1291 = vpack.c.b16 %v1278, %v1277
      %v1292 = vpack.c.b16 %v1280, %v1279
      %v1293 = vpack.c.b16 %v1282, %v1281
      %v1294 = vpack.c.b16 %v1284, %v1283
      %v1295 = vpack.c.b16 %v1286, %v1285
      %v1296 = vpack.c.b16 %v1288, %v1287
      %1305 = vmatprep.subr.bf16.mxu0 0
      %1306 = vmatpush1.bf16.msra.mxu0 %v1289
      %1307 = vmatprep.subr.bf16.mxu0 0
      %1308 = vmatpush1.bf16.msra.mxu0 %v1290
      %1309 = vmatprep.subr.bf16.mxu0 0
      %1310 = vmatpush1.bf16.msra.mxu0 %v1291
      %1311 = vmatprep.subr.bf16.mxu0 0
      %1312 = vmatpush1.bf16.msra.mxu0 %v1292
      %1313 = vmatprep.subr.bf16.mxu0 0
      %1314 = vmatpush1.bf16.msra.mxu0 %v1293
      %1315 = vmatprep.subr.bf16.mxu0 0
      %1316 = vmatpush1.bf16.msra.mxu0 %v1294
      %1317 = vmatprep.subr.bf16.mxu0 0
      %1318 = vmatpush1.bf16.msra.mxu0 %v1295
      %1319 = vmatprep.subr.bf16.mxu0 0
      %1320 = vmatpush1.bf16.msra.mxu0 %v1296
      %1321 = vmatprep.subr.bf16.mxu0 0
      %1322 = vmatpush1.bf16.msra.mxu0 0
      %1323 = vmatprep.subr.bf16.mxu0 0
      %1324 = vmatpush1.bf16.msra.mxu0 0
      %1325 = vmatprep.subr.bf16.mxu0 0
      %1326 = vmatpush1.bf16.msra.mxu0 0
      %1327 = vmatprep.subr.bf16.mxu0 0
      %1328 = vmatpush1.bf16.msra.mxu0 0
      %1329 = vmatprep.subr.bf16.mxu0 0
      %1330 = vmatpush1.bf16.msra.mxu0 0
      %1331 = vmatprep.subr.bf16.mxu0 0
      %1332 = vmatpush1.bf16.msra.mxu0 0
      %1333 = vmatprep.subr.bf16.mxu0 0
      %1334 = vmatpush1.bf16.msra.mxu0 0
      %1335 = vmatprep.subr.bf16.mxu0 0
      %1336 = vmatpush1.bf16.msra.mxu0 0
      %1337 = vmatprep.mubr.bf16.mxu0 0
      %1338 = vmatmul.mubr.bf16.gmra.mrb[0].mxu0 %v1244
      %v1339 = vpop.f32.mrb[0].mxu0
      %v1340 = vadd.f32 0.0, %v1339
      %v1341 = vpop.f32.mrb[0].mxu0
      %v1342 = vpop.f32.mrb[0].mxu0
      %v1343 = vadd.f32 0.0, %v1342
      %v1344 = vpop.f32.mrb[0].mxu0
      %1345 = vmatprep.mubr.bf16.mxu0 0
      %1346 = vmatmul.mubr.bf16.gmra.mrb[0].mxu0 %v1253
      %v1347 = vpop.f32.mrb[0].mxu0
      %v1348 = vadd.f32 0.0, %v1347
      %v1349 = vpop.f32.mrb[0].mxu0
      %v1350 = vpop.f32.mrb[0].mxu0
      %v1351 = vadd.f32 0.0, %v1350
      %v1352 = vpop.f32.mrb[0].mxu0
      %1353 = vmatprep.mubr.bf16.mxu0 0
      %1354 = vmatmul.mubr.bf16.gmra.mrb[0].mxu0 %v1252
      %v1355 = vpop.f32.mrb[0].mxu0
      %v1356 = vadd.f32 0.0, %v1355
      %v1357 = vpop.f32.mrb[0].mxu0
      %v1358 = vpop.f32.mrb[0].mxu0
      %v1359 = vpop.f32.mrb[0].mxu0
      %1360 = vdwg.mxu0
      %v1361 = vadd.f32 %v1185, %v1340
      %v1362 = vadd.f32 %v1186, %v1343
      %v1363 = vadd.f32 %v1187, %v1348
      %v1364 = vadd.f32 %v1188, %v1351
      %v1365 = vadd.f32 %v1189, %v1356
      %v1366 = vld [vmem:[%s165 + $0x4] sm:$0x8]
      %v1367 = vld [vmem:[%s1 + $0x200] sm:$0xf]
      %v1368 = vld [vmem:[%s1 + $0x204] sm:$0xf]
      %v1369 = vld [vmem:[%s1 + $0x208] sm:$0xf]
      %v1370 = vld [vmem:[%s1 + $0x20c] sm:$0xf]
      %v1371 = vld [vmem:[%s1 + $0x210] sm:$0xf]
      %v1372 = vld [vmem:[%s1 + $0x214] sm:$0xf]
      %v1373 = vld [vmem:[%s1 + $0x218] sm:$0xf]
      %v1374 = vld [vmem:[%s1 + $0x21c] sm:$0xf]
      %v1375 = vld [vmem:[%s1 + $0x220] sm:$0xf]
      %v1376 = vld [vmem:[%s1 + $0x224] sm:$0xf]
      %v1377 = vld [vmem:[%s1 + $0x228] sm:$0xf]
      %v1378 = vld [vmem:[%s1 + $0x22c] sm:$0xf]
      %v1379 = vld [vmem:[%s1 + $0x230] sm:$0xf]
      %v1380 = vld [vmem:[%s1 + $0x234] sm:$0xf]
      %v1381 = vld [vmem:[%s1 + $0x238] sm:$0xf]
      %v1382 = vld [vmem:[%s1 + $0x23c] sm:$0xf]
      %v1384 = vunpack.c.l.b16 %v1366
      %v1385 = vpack.c.b16 %v1219, %v1384
      %v1386 = vrot.slane %v1385, 3
      %v1387 = vrot.slane %v1225, 3
      %v1388 = vsel %vm640, %v1386, %v1387
      %v1389 = vrot.slane %v1226, 3
      %v1390 = vsel %vm640, %v1387, %v1389
      %v1410 = vunpack.c.l.b16 %v1367
      %v1411 = vunpack.c.l.b16 %v1368
      %v1412 = vunpack.c.l.b16 %v1369
      %v1413 = vunpack.c.l.b16 %v1370
      %v1414 = vunpack.c.l.b16 %v1371
      %v1415 = vunpack.c.l.b16 %v1372
      %v1416 = vunpack.c.l.b16 %v1373
      %v1417 = vunpack.c.l.b16 %v1374
      %v1418 = vunpack.c.l.b16 %v1375
      %v1419 = vunpack.c.l.b16 %v1376
      %v1420 = vunpack.c.l.b16 %v1377
      %v1421 = vunpack.c.l.b16 %v1378
      %v1422 = vunpack.c.l.b16 %v1379
      %v1423 = vunpack.c.l.b16 %v1380
      %v1424 = vunpack.c.l.b16 %v1381
      %v1425 = vunpack.c.l.b16 %v1382
      %v1426 = vpack.c.b16 %v1411, %v1410
      %v1427 = vpack.c.b16 %v1413, %v1412
      %v1428 = vpack.c.b16 %v1415, %v1414
      %v1429 = vpack.c.b16 %v1417, %v1416
      %v1430 = vpack.c.b16 %v1419, %v1418
      %v1431 = vpack.c.b16 %v1421, %v1420
      %v1432 = vpack.c.b16 %v1423, %v1422
      %v1433 = vpack.c.b16 %v1425, %v1424
      %1442 = vmatprep.subr.bf16.mxu0 0
      %1443 = vmatpush1.bf16.msra.mxu0 %v1426
      %1444 = vmatprep.subr.bf16.mxu0 0
      %1445 = vmatpush1.bf16.msra.mxu0 %v1427
      %1446 = vmatprep.subr.bf16.mxu0 0
      %1447 = vmatpush1.bf16.msra.mxu0 %v1428
      %1448 = vmatprep.subr.bf16.mxu0 0
      %1449 = vmatpush1.bf16.msra.mxu0 %v1429
      %1450 = vmatprep.subr.bf16.mxu0 0
      %1451 = vmatpush1.bf16.msra.mxu0 %v1430
      %1452 = vmatprep.subr.bf16.mxu0 0
      %1453 = vmatpush1.bf16.msra.mxu0 %v1431
      %1454 = vmatprep.subr.bf16.mxu0 0
      %1455 = vmatpush1.bf16.msra.mxu0 %v1432
      %1456 = vmatprep.subr.bf16.mxu0 0
      %1457 = vmatpush1.bf16.msra.mxu0 %v1433
      %1458 = vmatprep.subr.bf16.mxu0 0
      %1459 = vmatpush1.bf16.msra.mxu0 0
      %1460 = vmatprep.subr.bf16.mxu0 0
      %1461 = vmatpush1.bf16.msra.mxu0 0
      %1462 = vmatprep.subr.bf16.mxu0 0
      %1463 = vmatpush1.bf16.msra.mxu0 0
      %1464 = vmatprep.subr.bf16.mxu0 0
      %1465 = vmatpush1.bf16.msra.mxu0 0
      %1466 = vmatprep.subr.bf16.mxu0 0
      %1467 = vmatpush1.bf16.msra.mxu0 0
      %1468 = vmatprep.subr.bf16.mxu0 0
      %1469 = vmatpush1.bf16.msra.mxu0 0
      %1470 = vmatprep.subr.bf16.mxu0 0
      %1471 = vmatpush1.bf16.msra.mxu0 0
      %1472 = vmatprep.subr.bf16.mxu0 0
      %1473 = vmatpush1.bf16.msra.mxu0 0
      %1474 = vmatprep.mubr.bf16.mxu0 0
      %1475 = vmatmul.mubr.bf16.gmra.mrb[0].mxu0 %v1388
      %v1476 = vpop.f32.mrb[0].mxu0
      %v1477 = vadd.f32 0.0, %v1476
      %v1478 = vpop.f32.mrb[0].mxu0
      %v1479 = vpop.f32.mrb[0].mxu0
      %v1480 = vadd.f32 0.0, %v1479
      %v1481 = vpop.f32.mrb[0].mxu0
      %1482 = vmatprep.mubr.bf16.mxu0 0
      %1483 = vmatmul.mubr.bf16.gmra.mrb[0].mxu0 %v1390
      %v1484 = vpop.f32.mrb[0].mxu0
      %v1485 = vadd.f32 0.0, %v1484
      %v1486 = vpop.f32.mrb[0].mxu0
      %v1487 = vpop.f32.mrb[0].mxu0
      %v1488 = vadd.f32 0.0, %v1487
      %v1489 = vpop.f32.mrb[0].mxu0
      %1490 = vmatprep.mubr.bf16.mxu0 0
      %1491 = vmatmul.mubr.bf16.gmra.mrb[0].mxu0 %v1389
      %v1492 = vpop.f32.mrb[0].mxu0
      %v1493 = vadd.f32 0.0, %v1492
      %v1494 = vpop.f32.mrb[0].mxu0
      %v1495 = vpop.f32.mrb[0].mxu0
      %v1496 = vpop.f32.mrb[0].mxu0
      %1497 = vdwg.mxu0
      %v1498 = vadd.f32 %v1361, %v1477
      %v1499 = vadd.f32 %v1362, %v1480
      %v1500 = vadd.f32 %v1363, %v1485
      %v1501 = vadd.f32 %v1364, %v1488
      %v1502 = vadd.f32 %v1365, %v1493
      %v1504 = vlaneseq
      %v1505 = vshrl.u32 %v1504, 7
      %v1506 = vsub.s32 0, %v1505
      %v1507 = vrot.slane %v172, %v1506
      %v1509 = vadd.f32 %v1498, %v1507
      %v1510 = vadd.f32 %v1499, %v1507
      %v1511 = vadd.f32 %v1500, %v1507
      %v1512 = vadd.f32 %v1501, %v1507
      %v1513 = vadd.f32 %v1502, %v1507
      %v1514 = vmax.f32 %v1509, 0.0
      %v1515 = vmax.f32 %v1510, 0.0
      %v1516 = vmax.f32 %v1511, 0.0
      %v1517 = vmax.f32 %v1512, 0.0
      %v1518 = vmax.f32 %v1513, 0.0
      %v1519 = vpack.c.bf16 %v1515, %v1514
      %v1520 = vpack.c.bf16 %v1517, %v1516
      %v1521 = vpack.c.bf16 %v1518, %v1518
      %v1525 = vunpack.c.l.b16 %v1519
      %v1526 = vunpack.c.h.b16 %v1519
      %v1527 = vunpack.c.l.b16 %v1520
      %v1528 = vunpack.c.h.b16 %v1520
      %v1529 = vunpack.c.l.b16 %v1521
      %v1530 = vpack.c.b16 %v1525, %v1525
      %v1531 = vpack.c.b16 %v1526, %v1526
      %v1532 = vpack.c.b16 %v1527, %v1527
      %v1533 = vpack.c.b16 %v1528, %v1528
      %v1534 = vpack.c.b16 %v1529, %v1529
      %1540 = vst [vmem:[%s170] sm:$0xf] %v1530
      %1541 = vst [vmem:[%s170 + $0x4] sm:$0xf] %v1531
      %1542 = vst [vmem:[%s170 + $0x8] sm:$0xf] %v1532
      %1543 = vst [vmem:[%s170 + $0xc] sm:$0xf] %v1533
      %1544 = vst [vmem:[%s170 + $0x10] sm:$0x3] %v1534
      %p1545 = scmp.lt.s32.totalorder %s14, 1
      %s1546 = scalar_select %p1545, %s14, 1
      %s1547 = smul.addr %s1546, 5
      %s1548 = smul.addr %s1547, 4
      %s1549 = scalar_lea.vmem %s3, %s1548
      // Predicated region
      $region33: #{handwriting_feature_extractor.6} parent=31 // pred_check
        %p1550 = pneg %p100
      $region34: #{handwriting_feature_extractor.6} parent=31 // pred_check_branch
        %1552 = sbr.rel (%p1550) target = $region36
      $region35: #{handwriting_feature_extractor.6} parent=31 // pred_region
        _
      $region36: #{handwriting_feature_extractor.6} parent=31 // pred_fallthru
        _
    $region32: #{handwriting_feature_extractor.6} parent=5 // pred_fallthru
      _
    %p1553 = scmp.le.s32.totalorder 2, %s9
    // Predicated region
    $region37: #{handwriting_feature_extractor.6} parent=5 // pred_check
      %p1554 = pneg %p1553
    $region38: #{handwriting_feature_extractor.6} parent=5 // pred_check_branch
      %1556 = sbr.rel (%p1554) target = $region40
    $region39: #{handwriting_feature_extractor.6} parent=5 // pred_region
      %s1557 = ssub.s32 %s9, 2
      // Predicated region
      $region41: #{handwriting_feature_extractor.6} parent=39 // pred_check
        %p1558 = pneg %p106
      $region42: #{handwriting_feature_extractor.6} parent=39 // pred_check_branch
        %1560 = sbr.rel (%p1558) target = $region44
      $region43: #{handwriting_feature_extractor.6} parent=39 // pred_region
        %p1561 = scmp.lt.s32.totalorder %s15, 1
        %s1562 = scalar_select %p1561, %s15, 1
        %s1563 = smul.addr %s1562, 5
        %s1564 = smul.addr %s1563, 4
        %s1565 = scalar_lea.vmem %s3, %s1564
      $region44: #{handwriting_feature_extractor.6} parent=39 // pred_fallthru
        _
    $region40: #{handwriting_feature_extractor.6} parent=5 // pred_fallthru
      _
  $region6: #{handwriting_feature_extractor.6} parent=0 // loop_footer
    %s13 = sadd.s32 1, %s9
  $region7: #{handwriting_feature_extractor.6} parent=0 // loop_footer_branch
    %8 = sbr.rel target = $region3
  $region8: #{handwriting_feature_extractor.6} parent=0 // loop_exit
    _

// kernel: handwriting_feature_extractor.4
$region0: #{handwriting_feature_extractor.4}
  #allocation0 [shape = 'u32[]', space=smem, size = 0x4, offset = 0x4, fixed_abs, tag = 'smem constant byte address 0x4 - core index']
  #allocation1 [shape = 'u32[144,128]{1,0:T(1,128)}', space=vmem, size = 0x12000, scoped, tag = 'internal scratch']
  %s0 = inlined_call_operand.vmem [shape: bf16[2,362,1], index: 0, kind: input, shape index: {}]
  %s1 = inlined_call_operand.vmem [shape: bf16[9,128], index: 1, kind: input, shape index: {}]
  %s2 = inlined_call_operand.vmem [shape: f32[1,128], index: 2, kind: input, shape index: {}]
  %s3 = inlined_call_operand.vmem [shape: bf16[2,324,128], index: 3, kind: output, shape index: {}]
  %s4 = sld [smem:[#allocation0]]
  $region45: #{handwriting_feature_extractor.4} parent=0
    _
  %s6 = ssub.s32 1, %s4
  %s7 = scalar_select 0, %s6, %s4
  loop: start=0, step=1, limit=4
  $region2: #{handwriting_feature_extractor.4} parent=0 // loop_pre_header
    _
  $region3: #{handwriting_feature_extractor.4} parent=0 // loop_header
    %s9 = sphi 0, %s13
    %p10 = scmp.ge.s32.totalorder %s9, 4
    %s19 = sphi 0, %s21
    %s22 = sphi 0, %s19
    %s23 = sphi 0, %s22
    %s39 = sphi 0, %s23
    %s43 = sphi 0, %s43
    %s45 = sphi 0, %s43
    %s46 = sphi 0, %s45
    %s60 = sphi 0, %s46
    %s64 = sphi 0, %s64
    %s66 = sphi 0, %s64
    %s67 = sphi 0, %s66
    %s81 = sphi 0, %s67
    %s87 = sphi 0, %s89
    %s90 = sphi 0, %s87
    %s91 = sphi 0, %s90
    %s107 = sphi 0, %s91
  $region4: #{handwriting_feature_extractor.4} parent=0 // loop_header_branch
    %12 = sbr.rel (%p10) target = $region8
  $region5: #{handwriting_feature_extractor.4} parent=0 // loop_body
    %s14 = ssub.s32 %s9, 1
    %s15 = ssub.s32 %s9, 2
    %s16 = sadd.s32 %s9, 1
    %s17 = ssub.s32 %s9, %s16
    %p18 = scmp.eq.s32.totalorder %s17, 0
    %s20 = sadd.s32 %s19, 1
    %s21 = scalar_select %p18, %s19, %s20
    %p24 = pneg %p18
    %p25 = scmp.eq.s32.totalorder %s9, 1
    %p26 = por %p24, %p25
    %p27 = scmp.ne.s32.totalorder %s19, %s22
    %p28 = scmp.eq.s32.totalorder %s9, 0
    %p29 = por %p27, %p28
    %p30 = scmp.ne.s32.totalorder %s19, %s22
    %p31 = scmp.eq.s32.totalorder %s14, 1
    %p32 = por %p30, %p31
    %p33 = scmp.ne.s32.totalorder %s22, %s23
    %p34 = scmp.eq.s32.totalorder %s14, 0
    %p35 = por %p33, %p34
    %p36 = scmp.ne.s32.totalorder %s22, %s23
    %p37 = scmp.eq.s32.totalorder %s15, 1
    %p38 = por %p36, %p37
    %p40 = scmp.ne.s32.totalorder %s23, %s39
    %p41 = scmp.eq.s32.totalorder %s15, 0
    %p42 = por %p40, %p41
    %s44 = sadd.s32 %s43, 1
    %p47 = scmp.eq.s32.totalorder %s9, 1
    %p48 = scmp.ne.s32.totalorder %s43, %s45
    %p49 = scmp.eq.s32.totalorder %s9, 0
    %p50 = por %p48, %p49
    %p51 = scmp.ne.s32.totalorder %s43, %s45
    %p52 = scmp.eq.s32.totalorder %s14, 1
    %p53 = por %p51, %p52
    %p54 = scmp.ne.s32.totalorder %s45, %s46
    %p55 = scmp.eq.s32.totalorder %s14, 0
    %p56 = por %p54, %p55
    %p57 = scmp.ne.s32.totalorder %s45, %s46
    %p58 = scmp.eq.s32.totalorder %s15, 1
    %p59 = por %p57, %p58
    %p61 = scmp.ne.s32.totalorder %s46, %s60
    %p62 = scmp.eq.s32.totalorder %s15, 0
    %p63 = por %p61, %p62
    %s65 = sadd.s32 %s64, 1
    %p68 = scmp.eq.s32.totalorder %s9, 1
    %p69 = scmp.ne.s32.totalorder %s64, %s66
    %p70 = scmp.eq.s32.totalorder %s9, 0
    %p71 = por %p69, %p70
    %p72 = scmp.ne.s32.totalorder %s64, %s66
    %p73 = scmp.eq.s32.totalorder %s14, 1
    %p74 = por %p72, %p73
    %p75 = scmp.ne.s32.totalorder %s66, %s67
    %p76 = scmp.eq.s32.totalorder %s14, 0
    %p77 = por %p75, %p76
    %p78 = scmp.ne.s32.totalorder %s66, %s67
    %p79 = scmp.eq.s32.totalorder %s15, 1
    %p80 = por %p78, %p79
    %p82 = scmp.ne.s32.totalorder %s67, %s81
    %p83 = scmp.eq.s32.totalorder %s15, 0
    %p84 = por %p82, %p83
    %s85 = ssub.s32 %s9, %s16
    %p86 = scmp.eq.s32.totalorder %s85, 0
    %s88 = sadd.s32 %s87, 1
    %s89 = scalar_select %p86, %s87, %s88
    %p92 = pneg %p86
    %p93 = scmp.eq.s32.totalorder %s9, 1
    %p94 = por %p92, %p93
    %p95 = scmp.ne.s32.totalorder %s87, %s90
    %p96 = scmp.eq.s32.totalorder %s9, 0
    %p97 = por %p95, %p96
    %p98 = scmp.ne.s32.totalorder %s87, %s90
    %p99 = scmp.eq.s32.totalorder %s14, 1
    %p100 = por %p98, %p99
    %p101 = scmp.ne.s32.totalorder %s90, %s91
    %p102 = scmp.eq.s32.totalorder %s14, 0
    %p103 = por %p101, %p102
    %p104 = scmp.ne.s32.totalorder %s90, %s91
    %p105 = scmp.eq.s32.totalorder %s15, 1
    %p106 = por %p104, %p105
    %p108 = scmp.ne.s32.totalorder %s91, %s107
    %p109 = scmp.eq.s32.totalorder %s15, 0
    %p110 = por %p108, %p109
    %p111 = scmp.le.s32.totalorder 1, %s9
    %p112 = scmp.lt.s32.totalorder %s9, 3
    %p113 = pnand %p111, %p112
    %p114 = pneg %p113
    // Predicated region
    $region9: #{handwriting_feature_extractor.4} parent=5 // pred_check
      _
    $region10: #{handwriting_feature_extractor.4} parent=5 // pred_check_branch
      %116 = sbr.rel (%p113) target = $region12
    $region11: #{handwriting_feature_extractor.4} parent=5 // pred_region
      %s117 = ssub.s32 %s9, 1
      // Predicated region
      $region13: #{handwriting_feature_extractor.4} parent=11 // pred_check
        %p118 = pneg %p56
      $region14: #{handwriting_feature_extractor.4} parent=11 // pred_check_branch
        %120 = sbr.rel (%p118) target = $region16
      $region15: #{handwriting_feature_extractor.4} parent=11 // pred_region
        _
      $region16: #{handwriting_feature_extractor.4} parent=11 // pred_fallthru
        _
      // Predicated region
      $region17: #{handwriting_feature_extractor.4} parent=11 // pred_check
        %p121 = pneg %p77
      $region18: #{handwriting_feature_extractor.4} parent=11 // pred_check_branch
        %123 = sbr.rel (%p121) target = $region20
      $region19: #{handwriting_feature_extractor.4} parent=11 // pred_region
        _
      $region20: #{handwriting_feature_extractor.4} parent=11 // pred_fallthru
        _
    $region12: #{handwriting_feature_extractor.4} parent=5 // pred_fallthru
      _
    %p124 = scmp.lt.s32.totalorder %s9, 2
    // Predicated region
    $region21: #{handwriting_feature_extractor.4} parent=5 // pred_check
      %p125 = pneg %p124
    $region22: #{handwriting_feature_extractor.4} parent=5 // pred_check_branch
      %127 = sbr.rel (%p125) target = $region24
    $region23: #{handwriting_feature_extractor.4} parent=5 // pred_region
      // Predicated region
      $region25: #{handwriting_feature_extractor.4} parent=23 // pred_check
        %p128 = pneg %p29
      $region26: #{handwriting_feature_extractor.4} parent=23 // pred_check_branch
        %130 = sbr.rel (%p128) target = $region28
      $region27: #{handwriting_feature_extractor.4} parent=23 // pred_region
        %p131 = scmp.lt.s32.totalorder %s9, 1
        %s132 = scalar_select %p131, %s9, 1
        %s133 = smul.addr %s132, 46
        %s134 = smul.addr %s133, 4
        %s135 = scalar_lea.vmem %s0, %s134
      $region28: #{handwriting_feature_extractor.4} parent=23 // pred_fallthru
        _
    $region24: #{handwriting_feature_extractor.4} parent=5 // pred_fallthru
      _
    %p136 = scmp.le.s32.totalorder 1, %s9
    %p137 = scmp.lt.s32.totalorder %s9, 3
    %p138 = pnand %p136, %p137
    %p139 = pneg %p138
    // Predicated region
    $region29: #{handwriting_feature_extractor.4} parent=5 // pred_check
      _
    $region30: #{handwriting_feature_extractor.4} parent=5 // pred_check_branch
      %141 = sbr.rel (%p138) target = $region32
    $region31: #{handwriting_feature_extractor.4} parent=5 // pred_region
      %s142 = ssub.s32 %s9, 1
      %p143 = scmp.lt.s32.totalorder %s14, 1
      %s144 = scalar_select %p143, %s14, 1
      %s145 = smul.addr %s144, 46
      %s146 = smul.addr %s145, 4
      %s147 = scalar_lea.vmem %s0, %s146
      %p148 = pneg %p35
      %p149 = pneg %p32
      %p150 = pneg %p56
      %p151 = pneg %p53
      %p152 = pneg %p77
      %p153 = pneg %p74
      %p154 = pneg %p103
      %p155 = pneg %p100
      %p156 = scmp.lt.s32.totalorder %s14, 1
      %s157 = scalar_select %p156, %s14, 1
      %s158 = smul.addr %s157, 41
      %s159 = smul.addr %s158, 4
      %s160 = scalar_lea.vmem %s3, %s159
      %p161 = scmp.lt.s32.totalorder %s14, 1
      %s162 = scalar_select %p161, %s14, 1
      %s163 = smul.addr %s162, 46
      %s164 = smul.addr %s163, 4
      %s165 = scalar_lea.vmem %s0, %s164
      %p166 = scmp.lt.s32.totalorder %s14, 1
      %s167 = scalar_select %p166, %s14, 1
      %s168 = smul.addr %s167, 41
      %s169 = smul.addr %s168, 4
      %s170 = scalar_lea.vmem %s3, %s169
      %v171 = vld [vmem:[%s2] sm:$0x1]
      %v172 = vld [vmem:[%s165] sm:$0xf]
      %v173 = vld [vmem:[%s165 + $0x4] sm:$0xf]
      %v174 = vld [vmem:[%s165 + $0x8] sm:$0xf]
      %v175 = vld [vmem:[%s165 + $0xc] sm:$0xf]
      %v176 = vld [vmem:[%s165 + $0x10] sm:$0xf]
      %v177 = vld [vmem:[%s165 + $0x14] sm:$0xf]
      %v178 = vld [vmem:[%s165 + $0x18] sm:$0xf]
      %v179 = vld [vmem:[%s165 + $0x1c] sm:$0xf]
      %v180 = vld [vmem:[%s165 + $0x20] sm:$0xf]
      %v181 = vld [vmem:[%s165 + $0x24] sm:$0xf]
      %v182 = vld [vmem:[%s165 + $0x28] sm:$0xf]
      %v183 = vld [vmem:[%s165 + $0x2c] sm:$0xf]
      %v184 = vld [vmem:[%s165 + $0x30] sm:$0xf]
      %v185 = vld [vmem:[%s165 + $0x34] sm:$0xf]
      %v186 = vld [vmem:[%s165 + $0x38] sm:$0xf]
      %v187 = vld [vmem:[%s165 + $0x3c] sm:$0xf]
      %v188 = vld [vmem:[%s1] sm:$0x1]
      %v189 = vunpack.c.l.bf16 %v172
      %v190 = vunpack.c.l.bf16 %v173
      %v191 = vunpack.c.l.bf16 %v174
      %v192 = vunpack.c.l.bf16 %v175
      %v193 = vunpack.c.l.bf16 %v176
      %v194 = vunpack.c.l.bf16 %v177
      %v195 = vunpack.c.l.bf16 %v178
      %v196 = vunpack.c.l.bf16 %v179
      %v197 = vunpack.c.l.bf16 %v180
      %v198 = vunpack.c.l.bf16 %v181
      %v199 = vunpack.c.l.bf16 %v182
      %v200 = vunpack.c.l.bf16 %v183
      %v201 = vunpack.c.l.bf16 %v184
      %v202 = vunpack.c.l.bf16 %v185
      %v203 = vunpack.c.l.bf16 %v186
      %v204 = vunpack.c.l.bf16 %v187
      %v205 = vunpack.c.l.bf16 %v188
      %207 = vset.pattern.permute.xlu0 0
      %208 = vperm.xlu0 %207, %v189
      %v209 = vpop.permute.xlu0 %208
      %212 = vset.pattern.permute.xlu0 0
      %213 = vperm.xlu0 %212, %v190
      %v214 = vpop.permute.xlu0 %213
      %217 = vset.pattern.permute.xlu0 0
      %218 = vperm.xlu0 %217, %v191
      %v219 = vpop.permute.xlu0 %218
      %222 = vset.pattern.permute.xlu0 0
      %223 = vperm.xlu0 %222, %v192
      %v224 = vpop.permute.xlu0 %223
      %227 = vset.pattern.permute.xlu0 0
      %228 = vperm.xlu0 %227, %v193
      %v229 = vpop.permute.xlu0 %228
      %232 = vset.pattern.permute.xlu0 0
      %233 = vperm.xlu0 %232, %v194
      %v234 = vpop.permute.xlu0 %233
      %237 = vset.pattern.permute.xlu0 0
      %238 = vperm.xlu0 %237, %v195
      %v239 = vpop.permute.xlu0 %238
      %242 = vset.pattern.permute.xlu0 0
      %243 = vperm.xlu0 %242, %v196
      %v244 = vpop.permute.xlu0 %243
      %247 = vset.pattern.permute.xlu0 0
      %248 = vperm.xlu0 %247, %v197
      %v249 = vpop.permute.xlu0 %248
      %252 = vset.pattern.permute.xlu0 0
      %253 = vperm.xlu0 %252, %v198
      %v254 = vpop.permute.xlu0 %253
      %257 = vset.pattern.permute.xlu0 0
      %258 = vperm.xlu0 %257, %v199
      %v259 = vpop.permute.xlu0 %258
      %262 = vset.pattern.permute.xlu0 0
      %263 = vperm.xlu0 %262, %v200
      %v264 = vpop.permute.xlu0 %263
      %267 = vset.pattern.permute.xlu0 0
      %268 = vperm.xlu0 %267, %v201
      %v269 = vpop.permute.xlu0 %268
      %272 = vset.pattern.permute.xlu0 0
      %273 = vperm.xlu0 %272, %v202
      %v274 = vpop.permute.xlu0 %273
      %277 = vset.pattern.permute.xlu0 0
      %278 = vperm.xlu0 %277, %v203
      %v279 = vpop.permute.xlu0 %278
      %282 = vset.pattern.permute.xlu0 0
      %283 = vperm.xlu0 %282, %v204
      %v284 = vpop.permute.xlu0 %283
      %v286 = vlaneseq
      %v287 = vshrl.u32 %v286, 7
      %v288 = vsub.s32 0, %v287
      %v289 = vrot.slane %v205, %v288
      %v290 = vmul.f32 %v209, %v289
      %v291 = vmul.f32 %v214, %v289
      %v292 = vmul.f32 %v219, %v289
      %v293 = vmul.f32 %v224, %v289
      %v294 = vmul.f32 %v229, %v289
      %v295 = vmul.f32 %v234, %v289
      %v296 = vmul.f32 %v239, %v289
      %v297 = vmul.f32 %v244, %v289
      %v298 = vmul.f32 %v249, %v289
      %v299 = vmul.f32 %v254, %v289
      %v300 = vmul.f32 %v259, %v289
      %v301 = vmul.f32 %v264, %v289
      %v302 = vmul.f32 %v269, %v289
      %v303 = vmul.f32 %v274, %v289
      %v304 = vmul.f32 %v279, %v289
      %v305 = vmul.f32 %v284, %v289
      %v306 = vld [vmem:[%s165] sm:$0xf]
      %v307 = vld [vmem:[%s165 + $0x4] sm:$0xf]
      %v308 = vld [vmem:[%s165 + $0x8] sm:$0xf]
      %v309 = vld [vmem:[%s165 + $0xc] sm:$0xf]
      %v310 = vld [vmem:[%s165 + $0x10] sm:$0xf]
      %v311 = vld [vmem:[%s165 + $0x14] sm:$0xf]
      %v312 = vld [vmem:[%s165 + $0x18] sm:$0xf]
      %v313 = vld [vmem:[%s165 + $0x1c] sm:$0xf]
      %v314 = vld [vmem:[%s165 + $0x20] sm:$0xf]
      %v315 = vld [vmem:[%s165 + $0x24] sm:$0xf]
      %v316 = vld [vmem:[%s165 + $0x28] sm:$0xf]
      %v317 = vld [vmem:[%s165 + $0x2c] sm:$0xf]
      %v318 = vld [vmem:[%s165 + $0x30] sm:$0xf]
      %v319 = vld [vmem:[%s165 + $0x34] sm:$0xf]
      %v320 = vld [vmem:[%s165 + $0x38] sm:$0xf]
      %v321 = vld [vmem:[%s165 + $0x3c] sm:$0xf]
      %v322 = vld [vmem:[%s165 + $0x40] sm:$0x1]
      %v323 = vunpack.c.l.bf16 %v306
      %v324 = vunpack.c.l.bf16 %v307
      %v325 = vunpack.c.l.bf16 %v308
      %v326 = vunpack.c.l.bf16 %v309
      %v327 = vunpack.c.l.bf16 %v310
      %v328 = vunpack.c.l.bf16 %v311
      %v329 = vunpack.c.l.bf16 %v312
      %v330 = vunpack.c.l.bf16 %v313
      %v331 = vunpack.c.l.bf16 %v314
      %v332 = vunpack.c.l.bf16 %v315
      %v333 = vunpack.c.l.bf16 %v316
      %v334 = vunpack.c.l.bf16 %v317
      %v335 = vunpack.c.l.bf16 %v318
      %v336 = vunpack.c.l.bf16 %v319
      %v337 = vunpack.c.l.bf16 %v320
      %v338 = vunpack.c.l.bf16 %v321
      %v339 = vunpack.c.l.bf16 %v322
      %341 = vset.pattern.permute.xlu0 0
      %342 = vperm.xlu0 %341, %v323
      %v343 = vpop.permute.xlu0 %342
      %346 = vset.pattern.permute.xlu0 0
      %347 = vperm.xlu0 %346, %v324
      %v348 = vpop.permute.xlu0 %347
      %351 = vset.pattern.permute.xlu0 0
      %352 = vperm.xlu0 %351, %v325
      %v353 = vpop.permute.xlu0 %352
      %356 = vset.pattern.permute.xlu0 0
      %357 = vperm.xlu0 %356, %v326
      %v358 = vpop.permute.xlu0 %357
      %361 = vset.pattern.permute.xlu0 0
      %362 = vperm.xlu0 %361, %v327
      %v363 = vpop.permute.xlu0 %362
      %366 = vset.pattern.permute.xlu0 0
      %367 = vperm.xlu0 %366, %v328
      %v368 = vpop.permute.xlu0 %367
      %371 = vset.pattern.permute.xlu0 0
      %372 = vperm.xlu0 %371, %v329
      %v373 = vpop.permute.xlu0 %372
      %376 = vset.pattern.permute.xlu0 0
      %377 = vperm.xlu0 %376, %v330
      %v378 = vpop.permute.xlu0 %377
      %381 = vset.pattern.permute.xlu0 0
      %382 = vperm.xlu0 %381, %v331
      %v383 = vpop.permute.xlu0 %382
      %386 = vset.pattern.permute.xlu0 0
      %387 = vperm.xlu0 %386, %v332
      %v388 = vpop.permute.xlu0 %387
      %391 = vset.pattern.permute.xlu0 0
      %392 = vperm.xlu0 %391, %v333
      %v393 = vpop.permute.xlu0 %392
      %396 = vset.pattern.permute.xlu0 0
      %397 = vperm.xlu0 %396, %v334
      %v398 = vpop.permute.xlu0 %397
      %401 = vset.pattern.permute.xlu0 0
      %402 = vperm.xlu0 %401, %v335
      %v403 = vpop.permute.xlu0 %402
      %406 = vset.pattern.permute.xlu0 0
      %407 = vperm.xlu0 %406, %v336
      %v408 = vpop.permute.xlu0 %407
      %411 = vset.pattern.permute.xlu0 0
      %412 = vperm.xlu0 %411, %v337
      %v413 = vpop.permute.xlu0 %412
      %416 = vset.pattern.permute.xlu0 0
      %417 = vperm.xlu0 %416, %v338
      %v418 = vpop.permute.xlu0 %417
      %421 = vset.pattern.permute.xlu0 0
      %422 = vperm.xlu0 %421, %v339
      %v423 = vpop.permute.xlu0 %422
      %v425 = vlaneseq
      %v426 = vshrl.u32 %v425, 7
      %v427 = vsub.s32 1, %v426
      %v428 = vrot.slane %v205, %v427
      %v429 = vmul.f32 %v343, %v428
      %v430 = vmul.f32 %v348, %v428
      %v431 = vmul.f32 %v353, %v428
      %v432 = vmul.f32 %v358, %v428
      %v433 = vmul.f32 %v363, %v428
      %v434 = vmul.f32 %v368, %v428
      %v435 = vmul.f32 %v373, %v428
      %v436 = vmul.f32 %v378, %v428
      %v437 = vmul.f32 %v383, %v428
      %v438 = vmul.f32 %v388, %v428
      %v439 = vmul.f32 %v393, %v428
      %v440 = vmul.f32 %v398, %v428
      %v441 = vmul.f32 %v403, %v428
      %v442 = vmul.f32 %v408, %v428
      %v443 = vmul.f32 %v413, %v428
      %v444 = vmul.f32 %v418, %v428
      %v445 = vmul.f32 %v423, %v428
      %vm463 = vcmask 1046528
      %v464 = vrot.slane %v429, 1
      %v465 = vrot.slane %v430, 1
      %v466 = vsel %vm463, %v464, %v465
      %v467 = vrot.slane %v431, 1
      %v468 = vsel %vm463, %v465, %v467
      %v469 = vrot.slane %v432, 1
      %v470 = vsel %vm463, %v467, %v469
      %v471 = vrot.slane %v433, 1
      %v472 = vsel %vm463, %v469, %v471
      %v473 = vrot.slane %v434, 1
      %v474 = vsel %vm463, %v471, %v473
      %v475 = vrot.slane %v435, 1
      %v476 = vsel %vm463, %v473, %v475
      %v477 = vrot.slane %v436, 1
      %v478 = vsel %vm463, %v475, %v477
      %v479 = vrot.slane %v437, 1
      %v480 = vsel %vm463, %v477, %v479
      %v481 = vrot.slane %v438, 1
      %v482 = vsel %vm463, %v479, %v481
      %v483 = vrot.slane %v439, 1
      %v484 = vsel %vm463, %v481, %v483
      %v485 = vrot.slane %v440, 1
      %v486 = vsel %vm463, %v483, %v485
      %v487 = vrot.slane %v441, 1
      %v488 = vsel %vm463, %v485, %v487
      %v489 = vrot.slane %v442, 1
      %v490 = vsel %vm463, %v487, %v489
      %v491 = vrot.slane %v443, 1
      %v492 = vsel %vm463, %v489, %v491
      %v493 = vrot.slane %v444, 1
      %v494 = vsel %vm463, %v491, %v493
      %v495 = vrot.slane %v445, 1
      %v496 = vsel %vm463, %v493, %v495
      %v513 = vadd.f32 %v290, %v466
      %v514 = vadd.f32 %v291, %v468
      %v515 = vadd.f32 %v292, %v470
      %v516 = vadd.f32 %v293, %v472
      %v517 = vadd.f32 %v294, %v474
      %v518 = vadd.f32 %v295, %v476
      %v519 = vadd.f32 %v296, %v478
      %v520 = vadd.f32 %v297, %v480
      %v521 = vadd.f32 %v298, %v482
      %v522 = vadd.f32 %v299, %v484
      %v523 = vadd.f32 %v300, %v486
      %v524 = vadd.f32 %v301, %v488
      %v525 = vadd.f32 %v302, %v490
      %v526 = vadd.f32 %v303, %v492
      %v527 = vadd.f32 %v304, %v494
      %v528 = vadd.f32 %v305, %v496
      %v529 = vld [vmem:[%s165] sm:$0xe]
      %v530 = vld [vmem:[%s1] sm:$0x2]
      %v531 = vunpack.c.l.bf16 %v529
      %v532 = vunpack.c.l.bf16 %v530
      %534 = vset.pattern.permute.xlu0 0
      %535 = vperm.xlu0 %534, %v531
      %v536 = vpop.permute.xlu0 %535
      %v538 = vlaneseq
      %v539 = vshrl.u32 %v538, 7
      %v540 = vsub.s32 2, %v539
      %v541 = vrot.slane %v532, %v540
      %v542 = vmul.f32 %v536, %v541
      %v543 = vmul.f32 %v348, %v541
      %v544 = vmul.f32 %v353, %v541
      %v545 = vmul.f32 %v358, %v541
      %v546 = vmul.f32 %v363, %v541
      %v547 = vmul.f32 %v368, %v541
      %v548 = vmul.f32 %v373, %v541
      %v549 = vmul.f32 %v378, %v541
      %v550 = vmul.f32 %v383, %v541
      %v551 = vmul.f32 %v388, %v541
      %v552 = vmul.f32 %v393, %v541
      %v553 = vmul.f32 %v398, %v541
      %v554 = vmul.f32 %v403, %v541
      %v555 = vmul.f32 %v408, %v541
      %v556 = vmul.f32 %v413, %v541
      %v557 = vmul.f32 %v418, %v541
      %v558 = vmul.f32 %v423, %v541
      %vm576 = vcmask 1045504
      %v577 = vrot.slane %v542, 2
      %v578 = vrot.slane %v543, 2
      %v579 = vsel %vm576, %v577, %v578
      %v580 = vrot.slane %v544, 2
      %v581 = vsel %vm576, %v578, %v580
      %v582 = vrot.slane %v545, 2
      %v583 = vsel %vm576, %v580, %v582
      %v584 = vrot.slane %v546, 2
      %v585 = vsel %vm576, %v582, %v584
      %v586 = vrot.slane %v547, 2
      %v587 = vsel %vm576, %v584, %v586
      %v588 = vrot.slane %v548, 2
      %v589 = vsel %vm576, %v586, %v588
      %v590 = vrot.slane %v549, 2
      %v591 = vsel %vm576, %v588, %v590
      %v592 = vrot.slane %v550, 2
      %v593 = vsel %vm576, %v590, %v592
      %v594 = vrot.slane %v551, 2
      %v595 = vsel %vm576, %v592, %v594
      %v596 = vrot.slane %v552, 2
      %v597 = vsel %vm576, %v594, %v596
      %v598 = vrot.slane %v553, 2
      %v599 = vsel %vm576, %v596, %v598
      %v600 = vrot.slane %v554, 2
      %v601 = vsel %vm576, %v598, %v600
      %v602 = vrot.slane %v555, 2
      %v603 = vsel %vm576, %v600, %v602
      %v604 = vrot.slane %v556, 2
      %v605 = vsel %vm576, %v602, %v604
      %v606 = vrot.slane %v557, 2
      %v607 = vsel %vm576, %v604, %v606
      %v608 = vrot.slane %v558, 2
      %v609 = vsel %vm576, %v606, %v608
      %v626 = vadd.f32 %v513, %v579
      %v627 = vadd.f32 %v514, %v581
      %v628 = vadd.f32 %v515, %v583
      %v629 = vadd.f32 %v516, %v585
      %v630 = vadd.f32 %v517, %v587
      %v631 = vadd.f32 %v518, %v589
      %v632 = vadd.f32 %v519, %v591
      %v633 = vadd.f32 %v520, %v593
      %v634 = vadd.f32 %v521, %v595
      %v635 = vadd.f32 %v522, %v597
      %v636 = vadd.f32 %v523, %v599
      %v637 = vadd.f32 %v524, %v601
      %v638 = vadd.f32 %v525, %v603
      %v639 = vadd.f32 %v526, %v605
      %v640 = vadd.f32 %v527, %v607
      %v641 = vadd.f32 %v528, %v609
      %v642 = vld [vmem:[%s165 + $0x8] sm:$0xe]
      %v643 = vld [vmem:[%s165 + $0xc] sm:$0xf]
      %v644 = vld [vmem:[%s165 + $0x10] sm:$0xf]
      %v645 = vld [vmem:[%s165 + $0x14] sm:$0xf]
      %v646 = vld [vmem:[%s165 + $0x18] sm:$0xf]
      %v647 = vld [vmem:[%s165 + $0x1c] sm:$0xf]
      %v648 = vld [vmem:[%s165 + $0x20] sm:$0xf]
      %v649 = vld [vmem:[%s165 + $0x24] sm:$0xf]
      %v650 = vld [vmem:[%s165 + $0x28] sm:$0xf]
      %v651 = vld [vmem:[%s165 + $0x2c] sm:$0xf]
      %v652 = vld [vmem:[%s165 + $0x30] sm:$0xf]
      %v653 = vld [vmem:[%s165 + $0x34] sm:$0xf]
      %v654 = vld [vmem:[%s165 + $0x38] sm:$0xf]
      %v655 = vld [vmem:[%s165 + $0x3c] sm:$0xf]
      %v656 = vld [vmem:[%s165 + $0x40] sm:$0xf]
      %v657 = vld [vmem:[%s165 + $0x44] sm:$0xf]
      %v658 = vld [vmem:[%s165 + $0x48] sm:$0x1]
      %v659 = vunpack.c.l.bf16 %v642
      %v660 = vunpack.c.l.bf16 %v643
      %v661 = vunpack.c.l.bf16 %v644
      %v662 = vunpack.c.l.bf16 %v645
      %v663 = vunpack.c.l.bf16 %v646
      %v664 = vunpack.c.l.bf16 %v647
      %v665 = vunpack.c.l.bf16 %v648
      %v666 = vunpack.c.l.bf16 %v649
      %v667 = vunpack.c.l.bf16 %v650
      %v668 = vunpack.c.l.bf16 %v651
      %v669 = vunpack.c.l.bf16 %v652
      %v670 = vunpack.c.l.bf16 %v653
      %v671 = vunpack.c.l.bf16 %v654
      %v672 = vunpack.c.l.bf16 %v655
      %v673 = vunpack.c.l.bf16 %v656
      %v674 = vunpack.c.l.bf16 %v657
      %v675 = vunpack.c.l.bf16 %v658
      %677 = vset.pattern.permute.xlu0 0
      %678 = vperm.xlu0 %677, %v659
      %v679 = vpop.permute.xlu0 %678
      %682 = vset.pattern.permute.xlu0 0
      %683 = vperm.xlu0 %682, %v660
      %v684 = vpop.permute.xlu0 %683
      %687 = vset.pattern.permute.xlu0 0
      %688 = vperm.xlu0 %687, %v661
      %v689 = vpop.permute.xlu0 %688
      %692 = vset.pattern.permute.xlu0 0
      %693 = vperm.xlu0 %692, %v662
      %v694 = vpop.permute.xlu0 %693
      %697 = vset.pattern.permute.xlu0 0
      %698 = vperm.xlu0 %697, %v663
      %v699 = vpop.permute.xlu0 %698
      %702 = vset.pattern.permute.xlu0 0
      %703 = vperm.xlu0 %702, %v664
      %v704 = vpop.permute.xlu0 %703
      %707 = vset.pattern.permute.xlu0 0
      %708 = vperm.xlu0 %707, %v665
      %v709 = vpop.permute.xlu0 %708
      %712 = vset.pattern.permute.xlu0 0
      %713 = vperm.xlu0 %712, %v666
      %v714 = vpop.permute.xlu0 %713
      %717 = vset.pattern.permute.xlu0 0
      %718 = vperm.xlu0 %717, %v667
      %v719 = vpop.permute.xlu0 %718
      %722 = vset.pattern.permute.xlu0 0
      %723 = vperm.xlu0 %722, %v668
      %v724 = vpop.permute.xlu0 %723
      %727 = vset.pattern.permute.xlu0 0
      %728 = vperm.xlu0 %727, %v669
      %v729 = vpop.permute.xlu0 %728
      %732 = vset.pattern.permute.xlu0 0
      %733 = vperm.xlu0 %732, %v670
      %v734 = vpop.permute.xlu0 %733
      %737 = vset.pattern.permute.xlu0 0
      %738 = vperm.xlu0 %737, %v671
      %v739 = vpop.permute.xlu0 %738
      %742 = vset.pattern.permute.xlu0 0
      %743 = vperm.xlu0 %742, %v672
      %v744 = vpop.permute.xlu0 %743
      %747 = vset.pattern.permute.xlu0 0
      %748 = vperm.xlu0 %747, %v673
      %v749 = vpop.permute.xlu0 %748
      %752 = vset.pattern.permute.xlu0 0
      %753 = vperm.xlu0 %752, %v674
      %v754 = vpop.permute.xlu0 %753
      %757 = vset.pattern.permute.xlu0 0
      %758 = vperm.xlu0 %757, %v675
      %v759 = vpop.permute.xlu0 %758
      %v761 = vlaneseq
      %v762 = vshrl.u32 %v761, 7
      %v763 = vsub.s32 3, %v762
      %v764 = vrot.slane %v532, %v763
      %v765 = vmul.f32 %v679, %v764
      %v766 = vmul.f32 %v684, %v764
      %v767 = vmul.f32 %v689, %v764
      %v768 = vmul.f32 %v694, %v764
      %v769 = vmul.f32 %v699, %v764
      %v770 = vmul.f32 %v704, %v764
      %v771 = vmul.f32 %v709, %v764
      %v772 = vmul.f32 %v714, %v764
      %v773 = vmul.f32 %v719, %v764
      %v774 = vmul.f32 %v724, %v764
      %v775 = vmul.f32 %v729, %v764
      %v776 = vmul.f32 %v734, %v764
      %v777 = vmul.f32 %v739, %v764
      %v778 = vmul.f32 %v744, %v764
      %v779 = vmul.f32 %v749, %v764
      %v780 = vmul.f32 %v754, %v764
      %v781 = vmul.f32 %v759, %v764
      %v799 = vrot.slane %v765, 2
      %v800 = vrot.slane %v766, 2
      %v801 = vsel %vm576, %v799, %v800
      %v802 = vrot.slane %v767, 2
      %v803 = vsel %vm576, %v800, %v802
      %v804 = vrot.slane %v768, 2
      %v805 = vsel %vm576, %v802, %v804
      %v806 = vrot.slane %v769, 2
      %v807 = vsel %vm576, %v804, %v806
      %v808 = vrot.slane %v770, 2
      %v809 = vsel %vm576, %v806, %v808
      %v810 = vrot.slane %v771, 2
      %v811 = vsel %vm576, %v808, %v810
      %v812 = vrot.slane %v772, 2
      %v813 = vsel %vm576, %v810, %v812
      %v814 = vrot.slane %v773, 2
      %v815 = vsel %vm576, %v812, %v814
      %v816 = vrot.slane %v774, 2
      %v817 = vsel %vm576, %v814, %v816
      %v818 = vrot.slane %v775, 2
      %v819 = vsel %vm576, %v816, %v818
      %v820 = vrot.slane %v776, 2
      %v821 = vsel %vm576, %v818, %v820
      %v822 = vrot.slane %v777, 2
      %v823 = vsel %vm576, %v820, %v822
      %v824 = vrot.slane %v778, 2
      %v825 = vsel %vm576, %v822, %v824
      %v826 = vrot.slane %v779, 2
      %v827 = vsel %vm576, %v824, %v826
      %v828 = vrot.slane %v780, 2
      %v829 = vsel %vm576, %v826, %v828
      %v830 = vrot.slane %v781, 2
      %v831 = vsel %vm576, %v828, %v830
      %v848 = vadd.f32 %v626, %v801
      %v849 = vadd.f32 %v627, %v803
      %v850 = vadd.f32 %v628, %v805
      %v851 = vadd.f32 %v629, %v807
      %v852 = vadd.f32 %v630, %v809
      %v853 = vadd.f32 %v631, %v811
      %v854 = vadd.f32 %v632, %v813
      %v855 = vadd.f32 %v633, %v815
      %v856 = vadd.f32 %v634, %v817
      %v857 = vadd.f32 %v635, %v819
      %v858 = vadd.f32 %v636, %v821
      %v859 = vadd.f32 %v637, %v823
      %v860 = vadd.f32 %v638, %v825
      %v861 = vadd.f32 %v639, %v827
      %v862 = vadd.f32 %v640, %v829
      %v863 = vadd.f32 %v641, %v831
      %v864 = vld [vmem:[%s165 + $0x48] sm:$0x3]
      %v865 = vld [vmem:[%s1] sm:$0x4]
      %v866 = vunpack.c.l.bf16 %v864
      %v867 = vunpack.c.l.bf16 %v865
      %869 = vset.pattern.permute.xlu0 0
      %870 = vperm.xlu0 %869, %v866
      %v871 = vpop.permute.xlu0 %870
      %v873 = vlaneseq
      %v874 = vshrl.u32 %v873, 7
      %v875 = vsub.s32 4, %v874
      %v876 = vrot.slane %v867, %v875
      %v877 = vmul.f32 %v679, %v876
      %v878 = vmul.f32 %v684, %v876
      %v879 = vmul.f32 %v689, %v876
      %v880 = vmul.f32 %v694, %v876
      %v881 = vmul.f32 %v699, %v876
      %v882 = vmul.f32 %v704, %v876
      %v883 = vmul.f32 %v709, %v876
      %v884 = vmul.f32 %v714, %v876
      %v885 = vmul.f32 %v719, %v876
      %v886 = vmul.f32 %v724, %v876
      %v887 = vmul.f32 %v729, %v876
      %v888 = vmul.f32 %v734, %v876
      %v889 = vmul.f32 %v739, %v876
      %v890 = vmul.f32 %v744, %v876
      %v891 = vmul.f32 %v749, %v876
      %v892 = vmul.f32 %v754, %v876
      %v893 = vmul.f32 %v871, %v876
      %vm911 = vcmask 1044480
      %v912 = vrot.slane %v877, 3
      %v913 = vrot.slane %v878, 3
      %v914 = vsel %vm911, %v912, %v913
      %v915 = vrot.slane %v879, 3
      %v916 = vsel %vm911, %v913, %v915
      %v917 = vrot.slane %v880, 3
      %v918 = vsel %vm911, %v915, %v917
      %v919 = vrot.slane %v881, 3
      %v920 = vsel %vm911, %v917, %v919
      %v921 = vrot.slane %v882, 3
      %v922 = vsel %vm911, %v919, %v921
      %v923 = vrot.slane %v883, 3
      %v924 = vsel %vm911, %v921, %v923
      %v925 = vrot.slane %v884, 3
      %v926 = vsel %vm911, %v923, %v925
      %v927 = vrot.slane %v885, 3
      %v928 = vsel %vm911, %v925, %v927
      %v929 = vrot.slane %v886, 3
      %v930 = vsel %vm911, %v927, %v929
      %v931 = vrot.slane %v887, 3
      %v932 = vsel %vm911, %v929, %v931
      %v933 = vrot.slane %v888, 3
      %v934 = vsel %vm911, %v931, %v933
      %v935 = vrot.slane %v889, 3
      %v936 = vsel %vm911, %v933, %v935
      %v937 = vrot.slane %v890, 3
      %v938 = vsel %vm911, %v935, %v937
      %v939 = vrot.slane %v891, 3
      %v940 = vsel %vm911, %v937, %v939
      %v941 = vrot.slane %v892, 3
      %v942 = vsel %vm911, %v939, %v941
      %v943 = vrot.slane %v893, 3
      %v944 = vsel %vm911, %v941, %v943
      %v961 = vadd.f32 %v848, %v914
      %v962 = vadd.f32 %v849, %v916
      %v963 = vadd.f32 %v850, %v918
      %v964 = vadd.f32 %v851, %v920
      %v965 = vadd.f32 %v852, %v922
      %v966 = vadd.f32 %v853, %v924
      %v967 = vadd.f32 %v854, %v926
      %v968 = vadd.f32 %v855, %v928
      %v969 = vadd.f32 %v856, %v930
      %v970 = vadd.f32 %v857, %v932
      %v971 = vadd.f32 %v858, %v934
      %v972 = vadd.f32 %v859, %v936
      %v973 = vadd.f32 %v860, %v938
      %v974 = vadd.f32 %v861, %v940
      %v975 = vadd.f32 %v862, %v942
      %v976 = vadd.f32 %v863, %v944
      %v977 = vld [vmem:[%s165 + $0x8] sm:$0xc]
      %v978 = vunpack.c.l.bf16 %v977
      %980 = vset.pattern.permute.xlu0 0
      %981 = vperm.xlu0 %980, %v978
      %v982 = vpop.permute.xlu0 %981
      %v984 = vlaneseq
      %v985 = vshrl.u32 %v984, 7
      %v986 = vsub.s32 5, %v985
      %v987 = vrot.slane %v867, %v986
      %v988 = vmul.f32 %v982, %v987
      %v989 = vmul.f32 %v684, %v987
      %v990 = vmul.f32 %v689, %v987
      %v991 = vmul.f32 %v694, %v987
      %v992 = vmul.f32 %v699, %v987
      %v993 = vmul.f32 %v704, %v987
      %v994 = vmul.f32 %v709, %v987
      %v995 = vmul.f32 %v714, %v987
      %v996 = vmul.f32 %v719, %v987
      %v997 = vmul.f32 %v724, %v987
      %v998 = vmul.f32 %v729, %v987
      %v999 = vmul.f32 %v734, %v987
      %v1000 = vmul.f32 %v739, %v987
      %v1001 = vmul.f32 %v744, %v987
      %v1002 = vmul.f32 %v749, %v987
      %v1003 = vmul.f32 %v754, %v987
      %v1004 = vmul.f32 %v871, %v987
      %vm1022 = vcmask 1043456
      %v1023 = vrot.slane %v988, 4
      %v1024 = vrot.slane %v989, 4
      %v1025 = vsel %vm1022, %v1023, %v1024
      %v1026 = vrot.slane %v990, 4
      %v1027 = vsel %vm1022, %v1024, %v1026
      %v1028 = vrot.slane %v991, 4
      %v1029 = vsel %vm1022, %v1026, %v1028
      %v1030 = vrot.slane %v992, 4
      %v1031 = vsel %vm1022, %v1028, %v1030
      %v1032 = vrot.slane %v993, 4
      %v1033 = vsel %vm1022, %v1030, %v1032
      %v1034 = vrot.slane %v994, 4
      %v1035 = vsel %vm1022, %v1032, %v1034
      %v1036 = vrot.slane %v995, 4
      %v1037 = vsel %vm1022, %v1034, %v1036
      %v1038 = vrot.slane %v996, 4
      %v1039 = vsel %vm1022, %v1036, %v1038
      %v1040 = vrot.slane %v997, 4
      %v1041 = vsel %vm1022, %v1038, %v1040
      %v1042 = vrot.slane %v998, 4
      %v1043 = vsel %vm1022, %v1040, %v1042
      %v1044 = vrot.slane %v999, 4
      %v1045 = vsel %vm1022, %v1042, %v1044
      %v1046 = vrot.slane %v1000, 4
      %v1047 = vsel %vm1022, %v1044, %v1046
      %v1048 = vrot.slane %v1001, 4
      %v1049 = vsel %vm1022, %v1046, %v1048
      %v1050 = vrot.slane %v1002, 4
      %v1051 = vsel %vm1022, %v1048, %v1050
      %v1052 = vrot.slane %v1003, 4
      %v1053 = vsel %vm1022, %v1050, %v1052
      %v1054 = vrot.slane %v1004, 4
      %v1055 = vsel %vm1022, %v1052, %v1054
      %v1072 = vadd.f32 %v961, %v1025
      %v1073 = vadd.f32 %v962, %v1027
      %v1074 = vadd.f32 %v963, %v1029
      %v1075 = vadd.f32 %v964, %v1031
      %v1076 = vadd.f32 %v965, %v1033
      %v1077 = vadd.f32 %v966, %v1035
      %v1078 = vadd.f32 %v967, %v1037
      %v1079 = vadd.f32 %v968, %v1039
      %v1080 = vadd.f32 %v969, %v1041
      %v1081 = vadd.f32 %v970, %v1043
      %v1082 = vadd.f32 %v971, %v1045
      %v1083 = vadd.f32 %v972, %v1047
      %v1084 = vadd.f32 %v973, %v1049
      %v1085 = vadd.f32 %v974, %v1051
      %v1086 = vadd.f32 %v975, %v1053
      %v1087 = vadd.f32 %v976, %v1055
      %v1088 = vld [vmem:[%s165 + $0x10] sm:$0xc]
      %v1089 = vld [vmem:[%s165 + $0x14] sm:$0xf]
      %v1090 = vld [vmem:[%s165 + $0x18] sm:$0xf]
      %v1091 = vld [vmem:[%s165 + $0x1c] sm:$0xf]
      %v1092 = vld [vmem:[%s165 + $0x20] sm:$0xf]
      %v1093 = vld [vmem:[%s165 + $0x24] sm:$0xf]
      %v1094 = vld [vmem:[%s165 + $0x28] sm:$0xf]
      %v1095 = vld [vmem:[%s165 + $0x2c] sm:$0xf]
      %v1096 = vld [vmem:[%s165 + $0x30] sm:$0xf]
      %v1097 = vld [vmem:[%s165 + $0x34] sm:$0xf]
      %v1098 = vld [vmem:[%s165 + $0x38] sm:$0xf]
      %v1099 = vld [vmem:[%s165 + $0x3c] sm:$0xf]
      %v1100 = vld [vmem:[%s165 + $0x40] sm:$0xf]
      %v1101 = vld [vmem:[%s165 + $0x44] sm:$0xf]
      %v1102 = vld [vmem:[%s165 + $0x48] sm:$0xf]
      %v1103 = vld [vmem:[%s165 + $0x4c] sm:$0xf]
      %v1104 = vld [vmem:[%s165 + $0x50] sm:$0x3]
      %v1105 = vld [vmem:[%s1] sm:$0x8]
      %v1106 = vunpack.c.l.bf16 %v1088
      %v1107 = vunpack.c.l.bf16 %v1089
      %v1108 = vunpack.c.l.bf16 %v1090
      %v1109 = vunpack.c.l.bf16 %v1091
      %v1110 = vunpack.c.l.bf16 %v1092
      %v1111 = vunpack.c.l.bf16 %v1093
      %v1112 = vunpack.c.l.bf16 %v1094
      %v1113 = vunpack.c.l.bf16 %v1095
      %v1114 = vunpack.c.l.bf16 %v1096
      %v1115 = vunpack.c.l.bf16 %v1097
      %v1116 = vunpack.c.l.bf16 %v1098
      %v1117 = vunpack.c.l.bf16 %v1099
      %v1118 = vunpack.c.l.bf16 %v1100
      %v1119 = vunpack.c.l.bf16 %v1101
      %v1120 = vunpack.c.l.bf16 %v1102
      %v1121 = vunpack.c.l.bf16 %v1103
      %v1122 = vunpack.c.l.bf16 %v1104
      %v1123 = vunpack.c.l.bf16 %v1105
      %1125 = vset.pattern.permute.xlu0 0
      %1126 = vperm.xlu0 %1125, %v1106
      %v1127 = vpop.permute.xlu0 %1126
      %1130 = vset.pattern.permute.xlu0 0
      %1131 = vperm.xlu0 %1130, %v1107
      %v1132 = vpop.permute.xlu0 %1131
      %1135 = vset.pattern.permute.xlu0 0
      %1136 = vperm.xlu0 %1135, %v1108
      %v1137 = vpop.permute.xlu0 %1136
      %1140 = vset.pattern.permute.xlu0 0
      %1141 = vperm.xlu0 %1140, %v1109
      %v1142 = vpop.permute.xlu0 %1141
      %1145 = vset.pattern.permute.xlu0 0
      %1146 = vperm.xlu0 %1145, %v1110
      %v1147 = vpop.permute.xlu0 %1146
      %1150 = vset.pattern.permute.xlu0 0
      %1151 = vperm.xlu0 %1150, %v1111
      %v1152 = vpop.permute.xlu0 %1151
      %1155 = vset.pattern.permute.xlu0 0
      %1156 = vperm.xlu0 %1155, %v1112
      %v1157 = vpop.permute.xlu0 %1156
      %1160 = vset.pattern.permute.xlu0 0
      %1161 = vperm.xlu0 %1160, %v1113
      %v1162 = vpop.permute.xlu0 %1161
      %1165 = vset.pattern.permute.xlu0 0
      %1166 = vperm.xlu0 %1165, %v1114
      %v1167 = vpop.permute.xlu0 %1166
      %1170 = vset.pattern.permute.xlu0 0
      %1171 = vperm.xlu0 %1170, %v1115
      %v1172 = vpop.permute.xlu0 %1171
      %1175 = vset.pattern.permute.xlu0 0
      %1176 = vperm.xlu0 %1175, %v1116
      %v1177 = vpop.permute.xlu0 %1176
      %1180 = vset.pattern.permute.xlu0 0
      %1181 = vperm.xlu0 %1180, %v1117
      %v1182 = vpop.permute.xlu0 %1181
      %1185 = vset.pattern.permute.xlu0 0
      %1186 = vperm.xlu0 %1185, %v1118
      %v1187 = vpop.permute.xlu0 %1186
      %1190 = vset.pattern.permute.xlu0 0
      %1191 = vperm.xlu0 %1190, %v1119
      %v1192 = vpop.permute.xlu0 %1191
      %1195 = vset.pattern.permute.xlu0 0
      %1196 = vperm.xlu0 %1195, %v1120
      %v1197 = vpop.permute.xlu0 %1196
      %1200 = vset.pattern.permute.xlu0 0
      %1201 = vperm.xlu0 %1200, %v1121
      %v1202 = vpop.permute.xlu0 %1201
      %1205 = vset.pattern.permute.xlu0 0
      %1206 = vperm.xlu0 %1205, %v1122
      %v1207 = vpop.permute.xlu0 %1206
      %v1209 = vlaneseq
      %v1210 = vshrl.u32 %v1209, 7
      %v1211 = vsub.s32 6, %v1210
      %v1212 = vrot.slane %v1123, %v1211
      %v1213 = vmul.f32 %v1127, %v1212
      %v1214 = vmul.f32 %v1132, %v1212
      %v1215 = vmul.f32 %v1137, %v1212
      %v1216 = vmul.f32 %v1142, %v1212
      %v1217 = vmul.f32 %v1147, %v1212
      %v1218 = vmul.f32 %v1152, %v1212
      %v1219 = vmul.f32 %v1157, %v1212
      %v1220 = vmul.f32 %v1162, %v1212
      %v1221 = vmul.f32 %v1167, %v1212
      %v1222 = vmul.f32 %v1172, %v1212
      %v1223 = vmul.f32 %v1177, %v1212
      %v1224 = vmul.f32 %v1182, %v1212
      %v1225 = vmul.f32 %v1187, %v1212
      %v1226 = vmul.f32 %v1192, %v1212
      %v1227 = vmul.f32 %v1197, %v1212
      %v1228 = vmul.f32 %v1202, %v1212
      %v1229 = vmul.f32 %v1207, %v1212
      %v1247 = vrot.slane %v1213, 4
      %v1248 = vrot.slane %v1214, 4
      %v1249 = vsel %vm1022, %v1247, %v1248
      %v1250 = vrot.slane %v1215, 4
      %v1251 = vsel %vm1022, %v1248, %v1250
      %v1252 = vrot.slane %v1216, 4
      %v1253 = vsel %vm1022, %v1250, %v1252
      %v1254 = vrot.slane %v1217, 4
      %v1255 = vsel %vm1022, %v1252, %v1254
      %v1256 = vrot.slane %v1218, 4
      %v1257 = vsel %vm1022, %v1254, %v1256
      %v1258 = vrot.slane %v1219, 4
      %v1259 = vsel %vm1022, %v1256, %v1258
      %v1260 = vrot.slane %v1220, 4
      %v1261 = vsel %vm1022, %v1258, %v1260
      %v1262 = vrot.slane %v1221, 4
      %v1263 = vsel %vm1022, %v1260, %v1262
      %v1264 = vrot.slane %v1222, 4
      %v1265 = vsel %vm1022, %v1262, %v1264
      %v1266 = vrot.slane %v1223, 4
      %v1267 = vsel %vm1022, %v1264, %v1266
      %v1268 = vrot.slane %v1224, 4
      %v1269 = vsel %vm1022, %v1266, %v1268
      %v1270 = vrot.slane %v1225, 4
      %v1271 = vsel %vm1022, %v1268, %v1270
      %v1272 = vrot.slane %v1226, 4
      %v1273 = vsel %vm1022, %v1270, %v1272
      %v1274 = vrot.slane %v1227, 4
      %v1275 = vsel %vm1022, %v1272, %v1274
      %v1276 = vrot.slane %v1228, 4
      %v1277 = vsel %vm1022, %v1274, %v1276
      %v1278 = vrot.slane %v1229, 4
      %v1279 = vsel %vm1022, %v1276, %v1278
      %v1296 = vadd.f32 %v1072, %v1249
      %v1297 = vadd.f32 %v1073, %v1251
      %v1298 = vadd.f32 %v1074, %v1253
      %v1299 = vadd.f32 %v1075, %v1255
      %v1300 = vadd.f32 %v1076, %v1257
      %v1301 = vadd.f32 %v1077, %v1259
      %v1302 = vadd.f32 %v1078, %v1261
      %v1303 = vadd.f32 %v1079, %v1263
      %v1304 = vadd.f32 %v1080, %v1265
      %v1305 = vadd.f32 %v1081, %v1267
      %v1306 = vadd.f32 %v1082, %v1269
      %v1307 = vadd.f32 %v1083, %v1271
      %v1308 = vadd.f32 %v1084, %v1273
      %v1309 = vadd.f32 %v1085, %v1275
      %v1310 = vadd.f32 %v1086, %v1277
      %v1311 = vadd.f32 %v1087, %v1279
      %v1312 = vld [vmem:[%s165 + $0x50] sm:$0x7]
      %v1313 = vunpack.c.l.bf16 %v1312
      %1315 = vset.pattern.permute.xlu0 0
      %1316 = vperm.xlu0 %1315, %v1313
      %v1317 = vpop.permute.xlu0 %1316
      %v1319 = vlaneseq
      %v1320 = vshrl.u32 %v1319, 7
      %v1321 = vsub.s32 7, %v1320
      %v1322 = vrot.slane %v1123, %v1321
      %v1323 = vmul.f32 %v1127, %v1322
      %v1324 = vmul.f32 %v1132, %v1322
      %v1325 = vmul.f32 %v1137, %v1322
      %v1326 = vmul.f32 %v1142, %v1322
      %v1327 = vmul.f32 %v1147, %v1322
      %v1328 = vmul.f32 %v1152, %v1322
      %v1329 = vmul.f32 %v1157, %v1322
      %v1330 = vmul.f32 %v1162, %v1322
      %v1331 = vmul.f32 %v1167, %v1322
      %v1332 = vmul.f32 %v1172, %v1322
      %v1333 = vmul.f32 %v1177, %v1322
      %v1334 = vmul.f32 %v1182, %v1322
      %v1335 = vmul.f32 %v1187, %v1322
      %v1336 = vmul.f32 %v1192, %v1322
      %v1337 = vmul.f32 %v1197, %v1322
      %v1338 = vmul.f32 %v1202, %v1322
      %v1339 = vmul.f32 %v1317, %v1322
      %vm1357 = vcmask 1042432
      %v1358 = vrot.slane %v1323, 5
      %v1359 = vrot.slane %v1324, 5
      %v1360 = vsel %vm1357, %v1358, %v1359
      %v1361 = vrot.slane %v1325, 5
      %v1362 = vsel %vm1357, %v1359, %v1361
      %v1363 = vrot.slane %v1326, 5
      %v1364 = vsel %vm1357, %v1361, %v1363
      %v1365 = vrot.slane %v1327, 5
      %v1366 = vsel %vm1357, %v1363, %v1365
      %v1367 = vrot.slane %v1328, 5
      %v1368 = vsel %vm1357, %v1365, %v1367
      %v1369 = vrot.slane %v1329, 5
      %v1370 = vsel %vm1357, %v1367, %v1369
      %v1371 = vrot.slane %v1330, 5
      %v1372 = vsel %vm1357, %v1369, %v1371
      %v1373 = vrot.slane %v1331, 5
      %v1374 = vsel %vm1357, %v1371, %v1373
      %v1375 = vrot.slane %v1332, 5
      %v1376 = vsel %vm1357, %v1373, %v1375
      %v1377 = vrot.slane %v1333, 5
      %v1378 = vsel %vm1357, %v1375, %v1377
      %v1379 = vrot.slane %v1334, 5
      %v1380 = vsel %vm1357, %v1377, %v1379
      %v1381 = vrot.slane %v1335, 5
      %v1382 = vsel %vm1357, %v1379, %v1381
      %v1383 = vrot.slane %v1336, 5
      %v1384 = vsel %vm1357, %v1381, %v1383
      %v1385 = vrot.slane %v1337, 5
      %v1386 = vsel %vm1357, %v1383, %v1385
      %v1387 = vrot.slane %v1338, 5
      %v1388 = vsel %vm1357, %v1385, %v1387
      %v1389 = vrot.slane %v1339, 5
      %v1390 = vsel %vm1357, %v1387, %v1389
      %v1407 = vadd.f32 %v1296, %v1360
      %v1408 = vadd.f32 %v1297, %v1362
      %v1409 = vadd.f32 %v1298, %v1364
      %v1410 = vadd.f32 %v1299, %v1366
      %v1411 = vadd.f32 %v1300, %v1368
      %v1412 = vadd.f32 %v1301, %v1370
      %v1413 = vadd.f32 %v1302, %v1372
      %v1414 = vadd.f32 %v1303, %v1374
      %v1415 = vadd.f32 %v1304, %v1376
      %v1416 = vadd.f32 %v1305, %v1378
      %v1417 = vadd.f32 %v1306, %v1380
      %v1418 = vadd.f32 %v1307, %v1382
      %v1419 = vadd.f32 %v1308, %v1384
      %v1420 = vadd.f32 %v1309, %v1386
      %v1421 = vadd.f32 %v1310, %v1388
      %v1422 = vadd.f32 %v1311, %v1390
      %v1423 = vld [vmem:[%s165 + $0x10] sm:$0x8]
      %v1424 = vld [vmem:[%s1 + $0x4] sm:$0x1]
      %v1425 = vunpack.c.l.bf16 %v1423
      %v1426 = vunpack.c.l.bf16 %v1424
      %1428 = vset.pattern.permute.xlu0 0
      %1429 = vperm.xlu0 %1428, %v1425
      %v1430 = vpop.permute.xlu0 %1429
      %v1432 = vlaneseq
      %v1433 = vshrl.u32 %v1432, 7
      %v1434 = vsub.s32 0, %v1433
      %v1435 = vrot.slane %v1426, %v1434
      %v1436 = vmul.f32 %v1430, %v1435
      %v1437 = vmul.f32 %v1132, %v1435
      %v1438 = vmul.f32 %v1137, %v1435
      %v1439 = vmul.f32 %v1142, %v1435
      %v1440 = vmul.f32 %v1147, %v1435
      %v1441 = vmul.f32 %v1152, %v1435
      %v1442 = vmul.f32 %v1157, %v1435
      %v1443 = vmul.f32 %v1162, %v1435
      %v1444 = vmul.f32 %v1167, %v1435
      %v1445 = vmul.f32 %v1172, %v1435
      %v1446 = vmul.f32 %v1177, %v1435
      %v1447 = vmul.f32 %v1182, %v1435
      %v1448 = vmul.f32 %v1187, %v1435
      %v1449 = vmul.f32 %v1192, %v1435
      %v1450 = vmul.f32 %v1197, %v1435
      %v1451 = vmul.f32 %v1202, %v1435
      %v1452 = vmul.f32 %v1317, %v1435
      %vm1470 = vcmask 1041408
      %v1471 = vrot.slane %v1436, 6
      %v1472 = vrot.slane %v1437, 6
      %v1473 = vsel %vm1470, %v1471, %v1472
      %v1474 = vrot.slane %v1438, 6
      %v1475 = vsel %vm1470, %v1472, %v1474
      %v1476 = vrot.slane %v1439, 6
      %v1477 = vsel %vm1470, %v1474, %v1476
      %v1478 = vrot.slane %v1440, 6
      %v1479 = vsel %vm1470, %v1476, %v1478
      %v1480 = vrot.slane %v1441, 6
      %v1481 = vsel %vm1470, %v1478, %v1480
      %v1482 = vrot.slane %v1442, 6
      %v1483 = vsel %vm1470, %v1480, %v1482
      %v1484 = vrot.slane %v1443, 6
      %v1485 = vsel %vm1470, %v1482, %v1484
      %v1486 = vrot.slane %v1444, 6
      %v1487 = vsel %vm1470, %v1484, %v1486
      %v1488 = vrot.slane %v1445, 6
      %v1489 = vsel %vm1470, %v1486, %v1488
      %v1490 = vrot.slane %v1446, 6
      %v1491 = vsel %vm1470, %v1488, %v1490
      %v1492 = vrot.slane %v1447, 6
      %v1493 = vsel %vm1470, %v1490, %v1492
      %v1494 = vrot.slane %v1448, 6
      %v1495 = vsel %vm1470, %v1492, %v1494
      %v1496 = vrot.slane %v1449, 6
      %v1497 = vsel %vm1470, %v1494, %v1496
      %v1498 = vrot.slane %v1450, 6
      %v1499 = vsel %vm1470, %v1496, %v1498
      %v1500 = vrot.slane %v1451, 6
      %v1501 = vsel %vm1470, %v1498, %v1500
      %v1502 = vrot.slane %v1452, 6
      %v1503 = vsel %vm1470, %v1500, %v1502
      %v1520 = vadd.f32 %v1407, %v1473
      %v1521 = vadd.f32 %v1408, %v1475
      %v1522 = vadd.f32 %v1409, %v1477
      %v1523 = vadd.f32 %v1410, %v1479
      %v1524 = vadd.f32 %v1411, %v1481
      %v1525 = vadd.f32 %v1412, %v1483
      %v1526 = vadd.f32 %v1413, %v1485
      %v1527 = vadd.f32 %v1414, %v1487
      %v1528 = vadd.f32 %v1415, %v1489
      %v1529 = vadd.f32 %v1416, %v1491
      %v1530 = vadd.f32 %v1417, %v1493
      %v1531 = vadd.f32 %v1418, %v1495
      %v1532 = vadd.f32 %v1419, %v1497
      %v1533 = vadd.f32 %v1420, %v1499
      %v1534 = vadd.f32 %v1421, %v1501
      %v1535 = vadd.f32 %v1422, %v1503
      %v1537 = vlaneseq
      %v1538 = vshrl.u32 %v1537, 7
      %v1539 = vsub.s32 0, %v1538
      %v1540 = vrot.slane %v171, %v1539
      %v1542 = vadd.f32 %v1520, %v1540
      %v1543 = vadd.f32 %v1521, %v1540
      %v1544 = vadd.f32 %v1522, %v1540
      %v1545 = vadd.f32 %v1523, %v1540
      %v1546 = vadd.f32 %v1524, %v1540
      %v1547 = vadd.f32 %v1525, %v1540
      %v1548 = vadd.f32 %v1526, %v1540
      %v1549 = vadd.f32 %v1527, %v1540
      %v1550 = vadd.f32 %v1528, %v1540
      %v1551 = vadd.f32 %v1529, %v1540
      %v1552 = vadd.f32 %v1530, %v1540
      %v1553 = vadd.f32 %v1531, %v1540
      %v1554 = vadd.f32 %v1532, %v1540
      %v1555 = vadd.f32 %v1533, %v1540
      %v1556 = vadd.f32 %v1534, %v1540
      %v1557 = vadd.f32 %v1535, %v1540
      %v1558 = vmax.f32 %v1542, 0.0
      %v1559 = vmax.f32 %v1543, 0.0
      %v1560 = vmax.f32 %v1544, 0.0
      %v1561 = vmax.f32 %v1545, 0.0
      %v1562 = vmax.f32 %v1546, 0.0
      %v1563 = vmax.f32 %v1547, 0.0
      %v1564 = vmax.f32 %v1548, 0.0
      %v1565 = vmax.f32 %v1549, 0.0
      %v1566 = vmax.f32 %v1550, 0.0
      %v1567 = vmax.f32 %v1551, 0.0
      %v1568 = vmax.f32 %v1552, 0.0
      %v1569 = vmax.f32 %v1553, 0.0
      %v1570 = vmax.f32 %v1554, 0.0
      %v1571 = vmax.f32 %v1555, 0.0
      %v1572 = vmax.f32 %v1556, 0.0
      %v1573 = vmax.f32 %v1557, 0.0
      %v1574 = vpack.c.bf16 %v1559, %v1558
      %v1575 = vpack.c.bf16 %v1561, %v1560
      %v1576 = vpack.c.bf16 %v1563, %v1562
      %v1577 = vpack.c.bf16 %v1565, %v1564
      %v1578 = vpack.c.bf16 %v1567, %v1566
      %v1579 = vpack.c.bf16 %v1569, %v1568
      %v1580 = vpack.c.bf16 %v1571, %v1570
      %v1581 = vpack.c.bf16 %v1573, %v1572
      %v1590 = vunpack.c.l.b16 %v1574
      %v1591 = vunpack.c.h.b16 %v1574
      %v1592 = vunpack.c.l.b16 %v1575
      %v1593 = vunpack.c.h.b16 %v1575
      %v1594 = vunpack.c.l.b16 %v1576
      %v1595 = vunpack.c.h.b16 %v1576
      %v1596 = vunpack.c.l.b16 %v1577
      %v1597 = vunpack.c.h.b16 %v1577
      %v1598 = vunpack.c.l.b16 %v1578
      %v1599 = vunpack.c.h.b16 %v1578
      %v1600 = vunpack.c.l.b16 %v1579
      %v1601 = vunpack.c.h.b16 %v1579
      %v1602 = vunpack.c.l.b16 %v1580
      %v1603 = vunpack.c.h.b16 %v1580
      %v1604 = vunpack.c.l.b16 %v1581
      %v1605 = vunpack.c.h.b16 %v1581
      %v1606 = vpack.c.b16 %v1590, %v1590
      %v1607 = vpack.c.b16 %v1591, %v1591
      %v1608 = vpack.c.b16 %v1592, %v1592
      %v1609 = vpack.c.b16 %v1593, %v1593
      %v1610 = vpack.c.b16 %v1594, %v1594
      %v1611 = vpack.c.b16 %v1595, %v1595
      %v1612 = vpack.c.b16 %v1596, %v1596
      %v1613 = vpack.c.b16 %v1597, %v1597
      %v1614 = vpack.c.b16 %v1598, %v1598
      %v1615 = vpack.c.b16 %v1599, %v1599
      %v1616 = vpack.c.b16 %v1600, %v1600
      %v1617 = vpack.c.b16 %v1601, %v1601
      %v1618 = vpack.c.b16 %v1602, %v1602
      %v1619 = vpack.c.b16 %v1603, %v1603
      %v1620 = vpack.c.b16 %v1604, %v1604
      %v1621 = vpack.c.b16 %v1605, %v1605
      %1638 = vst [vmem:[%s170] sm:$0xf] %v1606
      %1639 = vst [vmem:[%s170 + $0x4] sm:$0xf] %v1607
      %1640 = vst [vmem:[%s170 + $0x8] sm:$0xf] %v1608
      %1641 = vst [vmem:[%s170 + $0xc] sm:$0xf] %v1609
      %1642 = vst [vmem:[%s170 + $0x10] sm:$0xf] %v1610
      %1643 = vst [vmem:[%s170 + $0x14] sm:$0xf] %v1611
      %1644 = vst [vmem:[%s170 + $0x18] sm:$0xf] %v1612
      %1645 = vst [vmem:[%s170 + $0x1c] sm:$0xf] %v1613
      %1646 = vst [vmem:[%s170 + $0x20] sm:$0xf] %v1614
      %1647 = vst [vmem:[%s170 + $0x24] sm:$0xf] %v1615
      %1648 = vst [vmem:[%s170 + $0x28] sm:$0xf] %v1616
      %1649 = vst [vmem:[%s170 + $0x2c] sm:$0xf] %v1617
      %1650 = vst [vmem:[%s170 + $0x30] sm:$0xf] %v1618
      %1651 = vst [vmem:[%s170 + $0x34] sm:$0xf] %v1619
      %1652 = vst [vmem:[%s170 + $0x38] sm:$0xf] %v1620
      %1653 = vst [vmem:[%s170 + $0x3c] sm:$0xf] %v1621
      %v1654 = vld [vmem:[%s165 + $0x40] sm:$0xf]
      %v1655 = vld [vmem:[%s165 + $0x44] sm:$0xf]
      %v1656 = vld [vmem:[%s165 + $0x48] sm:$0xf]
      %v1657 = vld [vmem:[%s165 + $0x4c] sm:$0xf]
      %v1658 = vld [vmem:[%s165 + $0x50] sm:$0xf]
      %v1659 = vld [vmem:[%s165 + $0x54] sm:$0xf]
      %v1660 = vld [vmem:[%s165 + $0x58] sm:$0xf]
      %v1661 = vld [vmem:[%s165 + $0x5c] sm:$0xf]
      %v1662 = vld [vmem:[%s165 + $0x60] sm:$0xf]
      %v1663 = vld [vmem:[%s165 + $0x64] sm:$0xf]
      %v1664 = vld [vmem:[%s165 + $0x68] sm:$0xf]
      %v1665 = vld [vmem:[%s165 + $0x6c] sm:$0xf]
      %v1666 = vld [vmem:[%s165 + $0x70] sm:$0xf]
      %v1667 = vld [vmem:[%s165 + $0x74] sm:$0xf]
      %v1668 = vld [vmem:[%s165 + $0x78] sm:$0xf]
      %v1669 = vld [vmem:[%s165 + $0x7c] sm:$0xf]
      %v1670 = vld [vmem:[%s1] sm:$0x1]
      %v1671 = vunpack.c.l.bf16 %v1654
      %v1672 = vunpack.c.l.bf16 %v1655
      %v1673 = vunpack.c.l.bf16 %v1656
      %v1674 = vunpack.c.l.bf16 %v1657
      %v1675 = vunpack.c.l.bf16 %v1658
      %v1676 = vunpack.c.l.bf16 %v1659
      %v1677 = vunpack.c.l.bf16 %v1660
      %v1678 = vunpack.c.l.bf16 %v1661
      %v1679 = vunpack.c.l.bf16 %v1662
      %v1680 = vunpack.c.l.bf16 %v1663
      %v1681 = vunpack.c.l.bf16 %v1664
      %v1682 = vunpack.c.l.bf16 %v1665
      %v1683 = vunpack.c.l.bf16 %v1666
      %v1684 = vunpack.c.l.bf16 %v1667
      %v1685 = vunpack.c.l.bf16 %v1668
      %v1686 = vunpack.c.l.bf16 %v1669
      %v1687 = vunpack.c.l.bf16 %v1670
      %1689 = vset.pattern.permute.xlu0 0
      %1690 = vperm.xlu0 %1689, %v1671
      %v1691 = vpop.permute.xlu0 %1690
      %1694 = vset.pattern.permute.xlu0 0
      %1695 = vperm.xlu0 %1694, %v1672
      %v1696 = vpop.permute.xlu0 %1695
      %1699 = vset.pattern.permute.xlu0 0
      %1700 = vperm.xlu0 %1699, %v1673
      %v1701 = vpop.permute.xlu0 %1700
      %1704 = vset.pattern.permute.xlu0 0
      %1705 = vperm.xlu0 %1704, %v1674
      %v1706 = vpop.permute.xlu0 %1705
      %1709 = vset.pattern.permute.xlu0 0
      %1710 = vperm.xlu0 %1709, %v1675
      %v1711 = vpop.permute.xlu0 %1710
      %1714 = vset.pattern.permute.xlu0 0
      %1715 = vperm.xlu0 %1714, %v1676
      %v1716 = vpop.permute.xlu0 %1715
      %1719 = vset.pattern.permute.xlu0 0
      %1720 = vperm.xlu0 %1719, %v1677
      %v1721 = vpop.permute.xlu0 %1720
      %1724 = vset.pattern.permute.xlu0 0
      %1725 = vperm.xlu0 %1724, %v1678
      %v1726 = vpop.permute.xlu0 %1725
      %1729 = vset.pattern.permute.xlu0 0
      %1730 = vperm.xlu0 %1729, %v1679
      %v1731 = vpop.permute.xlu0 %1730
      %1734 = vset.pattern.permute.xlu0 0
      %1735 = vperm.xlu0 %1734, %v1680
      %v1736 = vpop.permute.xlu0 %1735
      %1739 = vset.pattern.permute.xlu0 0
      %1740 = vperm.xlu0 %1739, %v1681
      %v1741 = vpop.permute.xlu0 %1740
      %1744 = vset.pattern.permute.xlu0 0
      %1745 = vperm.xlu0 %1744, %v1682
      %v1746 = vpop.permute.xlu0 %1745
      %1749 = vset.pattern.permute.xlu0 0
      %1750 = vperm.xlu0 %1749, %v1683
      %v1751 = vpop.permute.xlu0 %1750
      %1754 = vset.pattern.permute.xlu0 0
      %1755 = vperm.xlu0 %1754, %v1684
      %v1756 = vpop.permute.xlu0 %1755
      %1759 = vset.pattern.permute.xlu0 0
      %1760 = vperm.xlu0 %1759, %v1685
      %v1761 = vpop.permute.xlu0 %1760
      %1764 = vset.pattern.permute.xlu0 0
      %1765 = vperm.xlu0 %1764, %v1686
      %v1766 = vpop.permute.xlu0 %1765
      %v1768 = vlaneseq
      %v1769 = vshrl.u32 %v1768, 7
      %v1770 = vsub.s32 0, %v1769
      %v1771 = vrot.slane %v1687, %v1770
      %v1772 = vmul.f32 %v1691, %v1771
      %v1773 = vmul.f32 %v1696, %v1771
      %v1774 = vmul.f32 %v1701, %v1771
      %v1775 = vmul.f32 %v1706, %v1771
      %v1776 = vmul.f32 %v1711, %v1771
      %v1777 = vmul.f32 %v1716, %v1771
      %v1778 = vmul.f32 %v1721, %v1771
      %v1779 = vmul.f32 %v1726, %v1771
      %v1780 = vmul.f32 %v1731, %v1771
      %v1781 = vmul.f32 %v1736, %v1771
      %v1782 = vmul.f32 %v1741, %v1771
      %v1783 = vmul.f32 %v1746, %v1771
      %v1784 = vmul.f32 %v1751, %v1771
      %v1785 = vmul.f32 %v1756, %v1771
      %v1786 = vmul.f32 %v1761, %v1771
      %v1787 = vmul.f32 %v1766, %v1771
      %v1788 = vld [vmem:[%s165 + $0x40] sm:$0xf]
      %v1789 = vld [vmem:[%s165 + $0x44] sm:$0xf]
      %v1790 = vld [vmem:[%s165 + $0x48] sm:$0xf]
      %v1791 = vld [vmem:[%s165 + $0x4c] sm:$0xf]
      %v1792 = vld [vmem:[%s165 + $0x50] sm:$0xf]
      %v1793 = vld [vmem:[%s165 + $0x54] sm:$0xf]
      %v1794 = vld [vmem:[%s165 + $0x58] sm:$0xf]
      %v1795 = vld [vmem:[%s165 + $0x5c] sm:$0xf]
      %v1796 = vld [vmem:[%s165 + $0x60] sm:$0xf]
      %v1797 = vld [vmem:[%s165 + $0x64] sm:$0xf]
      %v1798 = vld [vmem:[%s165 + $0x68] sm:$0xf]
      %v1799 = vld [vmem:[%s165 + $0x6c] sm:$0xf]
      %v1800 = vld [vmem:[%s165 + $0x70] sm:$0xf]
      %v1801 = vld [vmem:[%s165 + $0x74] sm:$0xf]
      %v1802 = vld [vmem:[%s165 + $0x78] sm:$0xf]
      %v1803 = vld [vmem:[%s165 + $0x7c] sm:$0xf]
      %v1804 = vld [vmem:[%s165 + $0x80] sm:$0x1]
      %v1805 = vunpack.c.l.bf16 %v1788
      %v1806 = vunpack.c.l.bf16 %v1789
      %v1807 = vunpack.c.l.bf16 %v1790
      %v1808 = vunpack.c.l.bf16 %v1791
      %v1809 = vunpack.c.l.bf16 %v1792
      %v1810 = vunpack.c.l.bf16 %v1793
      %v1811 = vunpack.c.l.bf16 %v1794
      %v1812 = vunpack.c.l.bf16 %v1795
      %v1813 = vunpack.c.l.bf16 %v1796
      %v1814 = vunpack.c.l.bf16 %v1797
      %v1815 = vunpack.c.l.bf16 %v1798
      %v1816 = vunpack.c.l.bf16 %v1799
      %v1817 = vunpack.c.l.bf16 %v1800
      %v1818 = vunpack.c.l.bf16 %v1801
      %v1819 = vunpack.c.l.bf16 %v1802
      %v1820 = vunpack.c.l.bf16 %v1803
      %v1821 = vunpack.c.l.bf16 %v1804
      %1823 = vset.pattern.permute.xlu0 0
      %1824 = vperm.xlu0 %1823, %v1805
      %v1825 = vpop.permute.xlu0 %1824
      %1828 = vset.pattern.permute.xlu0 0
      %1829 = vperm.xlu0 %1828, %v1806
      %v1830 = vpop.permute.xlu0 %1829
      %1833 = vset.pattern.permute.xlu0 0
      %1834 = vperm.xlu0 %1833, %v1807
      %v1835 = vpop.permute.xlu0 %1834
      %1838 = vset.pattern.permute.xlu0 0
      %1839 = vperm.xlu0 %1838, %v1808
      %v1840 = vpop.permute.xlu0 %1839
      %1843 = vset.pattern.permute.xlu0 0
      %1844 = vperm.xlu0 %1843, %v1809
      %v1845 = vpop.permute.xlu0 %1844
      %1848 = vset.pattern.permute.xlu0 0
      %1849 = vperm.xlu0 %1848, %v1810
      %v1850 = vpop.permute.xlu0 %1849
      %1853 = vset.pattern.permute.xlu0 0
      %1854 = vperm.xlu0 %1853, %v1811
      %v1855 = vpop.permute.xlu0 %1854
      %1858 = vset.pattern.permute.xlu0 0
      %1859 = vperm.xlu0 %1858, %v1812
      %v1860 = vpop.permute.xlu0 %1859
      %1863 = vset.pattern.permute.xlu0 0
      %1864 = vperm.xlu0 %1863, %v1813
      %v1865 = vpop.permute.xlu0 %1864
      %1868 = vset.pattern.permute.xlu0 0
      %1869 = vperm.xlu0 %1868, %v1814
      %v1870 = vpop.permute.xlu0 %1869
      %1873 = vset.pattern.permute.xlu0 0
      %1874 = vperm.xlu0 %1873, %v1815
      %v1875 = vpop.permute.xlu0 %1874
      %1878 = vset.pattern.permute.xlu0 0
      %1879 = vperm.xlu0 %1878, %v1816
      %v1880 = vpop.permute.xlu0 %1879
      %1883 = vset.pattern.permute.xlu0 0
      %1884 = vperm.xlu0 %1883, %v1817
      %v1885 = vpop.permute.xlu0 %1884
      %1888 = vset.pattern.permute.xlu0 0
      %1889 = vperm.xlu0 %1888, %v1818
      %v1890 = vpop.permute.xlu0 %1889
      %1893 = vset.pattern.permute.xlu0 0
      %1894 = vperm.xlu0 %1893, %v1819
      %v1895 = vpop.permute.xlu0 %1894
      %1898 = vset.pattern.permute.xlu0 0
      %1899 = vperm.xlu0 %1898, %v1820
      %v1900 = vpop.permute.xlu0 %1899
      %1903 = vset.pattern.permute.xlu0 0
      %1904 = vperm.xlu0 %1903, %v1821
      %v1905 = vpop.permute.xlu0 %1904
      %v1907 = vlaneseq
      %v1908 = vshrl.u32 %v1907, 7
      %v1909 = vsub.s32 1, %v1908
      %v1910 = vrot.slane %v1687, %v1909
      %v1911 = vmul.f32 %v1825, %v1910
      %v1912 = vmul.f32 %v1830, %v1910
      %v1913 = vmul.f32 %v1835, %v1910
      %v1914 = vmul.f32 %v1840, %v1910
      %v1915 = vmul.f32 %v1845, %v1910
      %v1916 = vmul.f32 %v1850, %v1910
      %v1917 = vmul.f32 %v1855, %v1910
      %v1918 = vmul.f32 %v1860, %v1910
      %v1919 = vmul.f32 %v1865, %v1910
      %v1920 = vmul.f32 %v1870, %v1910
      %v1921 = vmul.f32 %v1875, %v1910
      %v1922 = vmul.f32 %v1880, %v1910
      %v1923 = vmul.f32 %v1885, %v1910
      %v1924 = vmul.f32 %v1890, %v1910
      %v1925 = vmul.f32 %v1895, %v1910
      %v1926 = vmul.f32 %v1900, %v1910
      %v1927 = vmul.f32 %v1905, %v1910
      %v1945 = vrot.slane %v1911, 1
      %v1946 = vrot.slane %v1912, 1
      %v1947 = vsel %vm463, %v1945, %v1946
      %v1948 = vrot.slane %v1913, 1
      %v1949 = vsel %vm463, %v1946, %v1948
      %v1950 = vrot.slane %v1914, 1
      %v1951 = vsel %vm463, %v1948, %v1950
      %v1952 = vrot.slane %v1915, 1
      %v1953 = vsel %vm463, %v1950, %v1952
      %v1954 = vrot.slane %v1916, 1
      %v1955 = vsel %vm463, %v1952, %v1954
      %v1956 = vrot.slane %v1917, 1
      %v1957 = vsel %vm463, %v1954, %v1956
      %v1958 = vrot.slane %v1918, 1
      %v1959 = vsel %vm463, %v1956, %v1958
      %v1960 = vrot.slane %v1919, 1
      %v1961 = vsel %vm463, %v1958, %v1960
      %v1962 = vrot.slane %v1920, 1
      %v1963 = vsel %vm463, %v1960, %v1962
      %v1964 = vrot.slane %v1921, 1
      %v1965 = vsel %vm463, %v1962, %v1964
      %v1966 = vrot.slane %v1922, 1
      %v1967 = vsel %vm463, %v1964, %v1966
      %v1968 = vrot.slane %v1923, 1
      %v1969 = vsel %vm463, %v1966, %v1968
      %v1970 = vrot.slane %v1924, 1
      %v1971 = vsel %vm463, %v1968, %v1970
      %v1972 = vrot.slane %v1925, 1
      %v1973 = vsel %vm463, %v1970, %v1972
      %v1974 = vrot.slane %v1926, 1
      %v1975 = vsel %vm463, %v1972, %v1974
      %v1976 = vrot.slane %v1927, 1
      %v1977 = vsel %vm463, %v1974, %v1976
      %v1994 = vadd.f32 %v1772, %v1947
      %v1995 = vadd.f32 %v1773, %v1949
      %v1996 = vadd.f32 %v1774, %v1951
      %v1997 = vadd.f32 %v1775, %v1953
      %v1998 = vadd.f32 %v1776, %v1955
      %v1999 = vadd.f32 %v1777, %v1957
      %v2000 = vadd.f32 %v1778, %v1959
      %v2001 = vadd.f32 %v1779, %v1961
      %v2002 = vadd.f32 %v1780, %v1963
      %v2003 = vadd.f32 %v1781, %v1965
      %v2004 = vadd.f32 %v1782, %v1967
      %v2005 = vadd.f32 %v1783, %v1969
      %v2006 = vadd.f32 %v1784, %v1971
      %v2007 = vadd.f32 %v1785, %v1973
      %v2008 = vadd.f32 %v1786, %v1975
      %v2009 = vadd.f32 %v1787, %v1977
      %v2010 = vld [vmem:[%s165 + $0x40] sm:$0xe]
      %v2011 = vld [vmem:[%s1] sm:$0x2]
      %v2012 = vunpack.c.l.bf16 %v2010
      %v2013 = vunpack.c.l.bf16 %v2011
      %2015 = vset.pattern.permute.xlu0 0
      %2016 = vperm.xlu0 %2015, %v2012
      %v2017 = vpop.permute.xlu0 %2016
      %v2019 = vlaneseq
      %v2020 = vshrl.u32 %v2019, 7
      %v2021 = vsub.s32 2, %v2020
      %v2022 = vrot.slane %v2013, %v2021
      %v2023 = vmul.f32 %v2017, %v2022
      %v2024 = vmul.f32 %v1830, %v2022
      %v2025 = vmul.f32 %v1835, %v2022
      %v2026 = vmul.f32 %v1840, %v2022
      %v2027 = vmul.f32 %v1845, %v2022
      %v2028 = vmul.f32 %v1850, %v2022
      %v2029 = vmul.f32 %v1855, %v2022
      %v2030 = vmul.f32 %v1860, %v2022
      %v2031 = vmul.f32 %v1865, %v2022
      %v2032 = vmul.f32 %v1870, %v2022
      %v2033 = vmul.f32 %v1875, %v2022
      %v2034 = vmul.f32 %v1880, %v2022
      %v2035 = vmul.f32 %v1885, %v2022
      %v2036 = vmul.f32 %v1890, %v2022
      %v2037 = vmul.f32 %v1895, %v2022
      %v2038 = vmul.f32 %v1900, %v2022
      %v2039 = vmul.f32 %v1905, %v2022
      %v2057 = vrot.slane %v2023, 2
      %v2058 = vrot.slane %v2024, 2
      %v2059 = vsel %vm576, %v2057, %v2058
      %v2060 = vrot.slane %v2025, 2
      %v2061 = vsel %vm576, %v2058, %v2060
      %v2062 = vrot.slane %v2026, 2
      %v2063 = vsel %vm576, %v2060, %v2062
      %v2064 = vrot.slane %v2027, 2
      %v2065 = vsel %vm576, %v2062, %v2064
      %v2066 = vrot.slane %v2028, 2
      %v2067 = vsel %vm576, %v2064, %v2066
      %v2068 = vrot.slane %v2029, 2
      %v2069 = vsel %vm576, %v2066, %v2068
      %v2070 = vrot.slane %v2030, 2
      %v2071 = vsel %vm576, %v2068, %v2070
      %v2072 = vrot.slane %v2031, 2
      %v2073 = vsel %vm576, %v2070, %v2072
      %v2074 = vrot.slane %v2032, 2
      %v2075 = vsel %vm576, %v2072, %v2074
      %v2076 = vrot.slane %v2033, 2
      %v2077 = vsel %vm576, %v2074, %v2076
      %v2078 = vrot.slane %v2034, 2
      %v2079 = vsel %vm576, %v2076, %v2078
      %v2080 = vrot.slane %v2035, 2
      %v2081 = vsel %vm576, %v2078, %v2080
      %v2082 = vrot.slane %v2036, 2
      %v2083 = vsel %vm576, %v2080, %v2082
      %v2084 = vrot.slane %v2037, 2
      %v2085 = vsel %vm576, %v2082, %v2084
      %v2086 = vrot.slane %v2038, 2
      %v2087 = vsel %vm576, %v2084, %v2086
      %v2088 = vrot.slane %v2039, 2
      %v2089 = vsel %vm576, %v2086, %v2088
      %v2106 = vadd.f32 %v1994, %v2059
      %v2107 = vadd.f32 %v1995, %v2061
      %v2108 = vadd.f32 %v1996, %v2063
      %v2109 = vadd.f32 %v1997, %v2065
      %v2110 = vadd.f32 %v1998, %v2067
      %v2111 = vadd.f32 %v1999, %v2069
      %v2112 = vadd.f32 %v2000, %v2071
      %v2113 = vadd.f32 %v2001, %v2073
      %v2114 = vadd.f32 %v2002, %v2075
      %v2115 = vadd.f32 %v2003, %v2077
      %v2116 = vadd.f32 %v2004, %v2079
      %v2117 = vadd.f32 %v2005, %v2081
      %v2118 = vadd.f32 %v2006, %v2083
      %v2119 = vadd.f32 %v2007, %v2085
      %v2120 = vadd.f32 %v2008, %v2087
      %v2121 = vadd.f32 %v2009, %v2089
      %v2122 = vld [vmem:[%s165 + $0x48] sm:$0xe]
      %v2123 = vld [vmem:[%s165 + $0x4c] sm:$0xf]
      %v2124 = vld [vmem:[%s165 + $0x50] sm:$0xf]
      %v2125 = vld [vmem:[%s165 + $0x54] sm:$0xf]
      %v2126 = vld [vmem:[%s165 + $0x58] sm:$0xf]
      %v2127 = vld [vmem:[%s165 + $0x5c] sm:$0xf]
      %v2128 = vld [vmem:[%s165 + $0x60] sm:$0xf]
      %v2129 = vld [vmem:[%s165 + $0x64] sm:$0xf]
      %v2130 = vld [vmem:[%s165 + $0x68] sm:$0xf]
      %v2131 = vld [vmem:[%s165 + $0x6c] sm:$0xf]
      %v2132 = vld [vmem:[%s165 + $0x70] sm:$0xf]
      %v2133 = vld [vmem:[%s165 + $0x74] sm:$0xf]
      %v2134 = vld [vmem:[%s165 + $0x78] sm:$0xf]
      %v2135 = vld [vmem:[%s165 + $0x7c] sm:$0xf]
      %v2136 = vld [vmem:[%s165 + $0x80] sm:$0xf]
      %v2137 = vld [vmem:[%s165 + $0x84] sm:$0xf]
      %v2138 = vld [vmem:[%s165 + $0x88] sm:$0x1]
      %v2139 = vunpack.c.l.bf16 %v2122
      %v2140 = vunpack.c.l.bf16 %v2123
      %v2141 = vunpack.c.l.bf16 %v2124
      %v2142 = vunpack.c.l.bf16 %v2125
      %v2143 = vunpack.c.l.bf16 %v2126
      %v2144 = vunpack.c.l.bf16 %v2127
      %v2145 = vunpack.c.l.bf16 %v2128
      %v2146 = vunpack.c.l.bf16 %v2129
      %v2147 = vunpack.c.l.bf16 %v2130
      %v2148 = vunpack.c.l.bf16 %v2131
      %v2149 = vunpack.c.l.bf16 %v2132
      %v2150 = vunpack.c.l.bf16 %v2133
      %v2151 = vunpack.c.l.bf16 %v2134
      %v2152 = vunpack.c.l.bf16 %v2135
      %v2153 = vunpack.c.l.bf16 %v2136
      %v2154 = vunpack.c.l.bf16 %v2137
      %v2155 = vunpack.c.l.bf16 %v2138
      %2157 = vset.pattern.permute.xlu0 0
      %2158 = vperm.xlu0 %2157, %v2139
      %v2159 = vpop.permute.xlu0 %2158
      %2162 = vset.pattern.permute.xlu0 0
      %2163 = vperm.xlu0 %2162, %v2140
      %v2164 = vpop.permute.xlu0 %2163
      %2167 = vset.pattern.permute.xlu0 0
      %2168 = vperm.xlu0 %2167, %v2141
      %v2169 = vpop.permute.xlu0 %2168
      %2172 = vset.pattern.permute.xlu0 0
      %2173 = vperm.xlu0 %2172, %v2142
      %v2174 = vpop.permute.xlu0 %2173
      %2177 = vset.pattern.permute.xlu0 0
      %2178 = vperm.xlu0 %2177, %v2143
      %v2179 = vpop.permute.xlu0 %2178
      %2182 = vset.pattern.permute.xlu0 0
      %2183 = vperm.xlu0 %2182, %v2144
      %v2184 = vpop.permute.xlu0 %2183
      %2187 = vset.pattern.permute.xlu0 0
      %2188 = vperm.xlu0 %2187, %v2145
      %v2189 = vpop.permute.xlu0 %2188
      %2192 = vset.pattern.permute.xlu0 0
      %2193 = vperm.xlu0 %2192, %v2146
      %v2194 = vpop.permute.xlu0 %2193
      %2197 = vset.pattern.permute.xlu0 0
      %2198 = vperm.xlu0 %2197, %v2147
      %v2199 = vpop.permute.xlu0 %2198
      %2202 = vset.pattern.permute.xlu0 0
      %2203 = vperm.xlu0 %2202, %v2148
      %v2204 = vpop.permute.xlu0 %2203
      %2207 = vset.pattern.permute.xlu0 0
      %2208 = vperm.xlu0 %2207, %v2149
      %v2209 = vpop.permute.xlu0 %2208
      %2212 = vset.pattern.permute.xlu0 0
      %2213 = vperm.xlu0 %2212, %v2150
      %v2214 = vpop.permute.xlu0 %2213
      %2217 = vset.pattern.permute.xlu0 0
      %2218 = vperm.xlu0 %2217, %v2151
      %v2219 = vpop.permute.xlu0 %2218
      %2222 = vset.pattern.permute.xlu0 0
      %2223 = vperm.xlu0 %2222, %v2152
      %v2224 = vpop.permute.xlu0 %2223
      %2227 = vset.pattern.permute.xlu0 0
      %2228 = vperm.xlu0 %2227, %v2153
      %v2229 = vpop.permute.xlu0 %2228
      %2232 = vset.pattern.permute.xlu0 0
      %2233 = vperm.xlu0 %2232, %v2154
      %v2234 = vpop.permute.xlu0 %2233
      %2237 = vset.pattern.permute.xlu0 0
      %2238 = vperm.xlu0 %2237, %v2155
      %v2239 = vpop.permute.xlu0 %2238
      %v2241 = vlaneseq
      %v2242 = vshrl.u32 %v2241, 7
      %v2243 = vsub.s32 3, %v2242
      %v2244 = vrot.slane %v2013, %v2243
      %v2245 = vmul.f32 %v2159, %v2244
      %v2246 = vmul.f32 %v2164, %v2244
      %v2247 = vmul.f32 %v2169, %v2244
      %v2248 = vmul.f32 %v2174, %v2244
      %v2249 = vmul.f32 %v2179, %v2244
      %v2250 = vmul.f32 %v2184, %v2244
      %v2251 = vmul.f32 %v2189, %v2244
      %v2252 = vmul.f32 %v2194, %v2244
      %v2253 = vmul.f32 %v2199, %v2244
      %v2254 = vmul.f32 %v2204, %v2244
      %v2255 = vmul.f32 %v2209, %v2244
      %v2256 = vmul.f32 %v2214, %v2244
      %v2257 = vmul.f32 %v2219, %v2244
      %v2258 = vmul.f32 %v2224, %v2244
      %v2259 = vmul.f32 %v2229, %v2244
      %v2260 = vmul.f32 %v2234, %v2244
      %v2261 = vmul.f32 %v2239, %v2244
      %v2279 = vrot.slane %v2245, 2
      %v2280 = vrot.slane %v2246, 2
      %v2281 = vsel %vm576, %v2279, %v2280
      %v2282 = vrot.slane %v2247, 2
      %v2283 = vsel %vm576, %v2280, %v2282
      %v2284 = vrot.slane %v2248, 2
      %v2285 = vsel %vm576, %v2282, %v2284
      %v2286 = vrot.slane %v2249, 2
      %v2287 = vsel %vm576, %v2284, %v2286
      %v2288 = vrot.slane %v2250, 2
      %v2289 = vsel %vm576, %v2286, %v2288
      %v2290 = vrot.slane %v2251, 2
      %v2291 = vsel %vm576, %v2288, %v2290
      %v2292 = vrot.slane %v2252, 2
      %v2293 = vsel %vm576, %v2290, %v2292
      %v2294 = vrot.slane %v2253, 2
      %v2295 = vsel %vm576, %v2292, %v2294
      %v2296 = vrot.slane %v2254, 2
      %v2297 = vsel %vm576, %v2294, %v2296
      %v2298 = vrot.slane %v2255, 2
      %v2299 = vsel %vm576, %v2296, %v2298
      %v2300 = vrot.slane %v2256, 2
      %v2301 = vsel %vm576, %v2298, %v2300
      %v2302 = vrot.slane %v2257, 2
      %v2303 = vsel %vm576, %v2300, %v2302
      %v2304 = vrot.slane %v2258, 2
      %v2305 = vsel %vm576, %v2302, %v2304
      %v2306 = vrot.slane %v2259, 2
      %v2307 = vsel %vm576, %v2304, %v2306
      %v2308 = vrot.slane %v2260, 2
      %v2309 = vsel %vm576, %v2306, %v2308
      %v2310 = vrot.slane %v2261, 2
      %v2311 = vsel %vm576, %v2308, %v2310
      %v2328 = vadd.f32 %v2106, %v2281
      %v2329 = vadd.f32 %v2107, %v2283
      %v2330 = vadd.f32 %v2108, %v2285
      %v2331 = vadd.f32 %v2109, %v2287
      %v2332 = vadd.f32 %v2110, %v2289
      %v2333 = vadd.f32 %v2111, %v2291
      %v2334 = vadd.f32 %v2112, %v2293
      %v2335 = vadd.f32 %v2113, %v2295
      %v2336 = vadd.f32 %v2114, %v2297
      %v2337 = vadd.f32 %v2115, %v2299
      %v2338 = vadd.f32 %v2116, %v2301
      %v2339 = vadd.f32 %v2117, %v2303
      %v2340 = vadd.f32 %v2118, %v2305
      %v2341 = vadd.f32 %v2119, %v2307
      %v2342 = vadd.f32 %v2120, %v2309
      %v2343 = vadd.f32 %v2121, %v2311
      %v2344 = vld [vmem:[%s165 + $0x88] sm:$0x3]
      %v2345 = vld [vmem:[%s1] sm:$0x4]
      %v2346 = vunpack.c.l.bf16 %v2344
      %v2347 = vunpack.c.l.bf16 %v2345
      %2349 = vset.pattern.permute.xlu0 0
      %2350 = vperm.xlu0 %2349, %v2346
      %v2351 = vpop.permute.xlu0 %2350
      %v2353 = vlaneseq
      %v2354 = vshrl.u32 %v2353, 7
      %v2355 = vsub.s32 4, %v2354
      %v2356 = vrot.slane %v2347, %v2355
      %v2357 = vmul.f32 %v2159, %v2356
      %v2358 = vmul.f32 %v2164, %v2356
      %v2359 = vmul.f32 %v2169, %v2356
      %v2360 = vmul.f32 %v2174, %v2356
      %v2361 = vmul.f32 %v2179, %v2356
      %v2362 = vmul.f32 %v2184, %v2356
      %v2363 = vmul.f32 %v2189, %v2356
      %v2364 = vmul.f32 %v2194, %v2356
      %v2365 = vmul.f32 %v2199, %v2356
      %v2366 = vmul.f32 %v2204, %v2356
      %v2367 = vmul.f32 %v2209, %v2356
      %v2368 = vmul.f32 %v2214, %v2356
      %v2369 = vmul.f32 %v2219, %v2356
      %v2370 = vmul.f32 %v2224, %v2356
      %v2371 = vmul.f32 %v2229, %v2356
      %v2372 = vmul.f32 %v2234, %v2356
      %v2373 = vmul.f32 %v2351, %v2356
      %v2391 = vrot.slane %v2357, 3
      %v2392 = vrot.slane %v2358, 3
      %v2393 = vsel %vm911, %v2391, %v2392
      %v2394 = vrot.slane %v2359, 3
      %v2395 = vsel %vm911, %v2392, %v2394
      %v2396 = vrot.slane %v2360, 3
      %v2397 = vsel %vm911, %v2394, %v2396
      %v2398 = vrot.slane %v2361, 3
      %v2399 = vsel %vm911, %v2396, %v2398
      %v2400 = vrot.slane %v2362, 3
      %v2401 = vsel %vm911, %v2398, %v2400
      %v2402 = vrot.slane %v2363, 3
      %v2403 = vsel %vm911, %v2400, %v2402
      %v2404 = vrot.slane %v2364, 3
      %v2405 = vsel %vm911, %v2402, %v2404
      %v2406 = vrot.slane %v2365, 3
      %v2407 = vsel %vm911, %v2404, %v2406
      %v2408 = vrot.slane %v2366, 3
      %v2409 = vsel %vm911, %v2406, %v2408
      %v2410 = vrot.slane %v2367, 3
      %v2411 = vsel %vm911, %v2408, %v2410
      %v2412 = vrot.slane %v2368, 3
      %v2413 = vsel %vm911, %v2410, %v2412
      %v2414 = vrot.slane %v2369, 3
      %v2415 = vsel %vm911, %v2412, %v2414
      %v2416 = vrot.slane %v2370, 3
      %v2417 = vsel %vm911, %v2414, %v2416
      %v2418 = vrot.slane %v2371, 3
      %v2419 = vsel %vm911, %v2416, %v2418
      %v2420 = vrot.slane %v2372, 3
      %v2421 = vsel %vm911, %v2418, %v2420
      %v2422 = vrot.slane %v2373, 3
      %v2423 = vsel %vm911, %v2420, %v2422
      %v2440 = vadd.f32 %v2328, %v2393
      %v2441 = vadd.f32 %v2329, %v2395
      %v2442 = vadd.f32 %v2330, %v2397
      %v2443 = vadd.f32 %v2331, %v2399
      %v2444 = vadd.f32 %v2332, %v2401
      %v2445 = vadd.f32 %v2333, %v2403
      %v2446 = vadd.f32 %v2334, %v2405
      %v2447 = vadd.f32 %v2335, %v2407
      %v2448 = vadd.f32 %v2336, %v2409
      %v2449 = vadd.f32 %v2337, %v2411
      %v2450 = vadd.f32 %v2338, %v2413
      %v2451 = vadd.f32 %v2339, %v2415
      %v2452 = vadd.f32 %v2340, %v2417
      %v2453 = vadd.f32 %v2341, %v2419
      %v2454 = vadd.f32 %v2342, %v2421
      %v2455 = vadd.f32 %v2343, %v2423
      %v2456 = vld [vmem:[%s165 + $0x48] sm:$0xc]
      %v2457 = vunpack.c.l.bf16 %v2456
      %2459 = vset.pattern.permute.xlu0 0
      %2460 = vperm.xlu0 %2459, %v2457
      %v2461 = vpop.permute.xlu0 %2460
      %v2463 = vlaneseq
      %v2464 = vshrl.u32 %v2463, 7
      %v2465 = vsub.s32 5, %v2464
      %v2466 = vrot.slane %v2347, %v2465
      %v2467 = vmul.f32 %v2461, %v2466
      %v2468 = vmul.f32 %v2164, %v2466
      %v2469 = vmul.f32 %v2169, %v2466
      %v2470 = vmul.f32 %v2174, %v2466
      %v2471 = vmul.f32 %v2179, %v2466
      %v2472 = vmul.f32 %v2184, %v2466
      %v2473 = vmul.f32 %v2189, %v2466
      %v2474 = vmul.f32 %v2194, %v2466
      %v2475 = vmul.f32 %v2199, %v2466
      %v2476 = vmul.f32 %v2204, %v2466
      %v2477 = vmul.f32 %v2209, %v2466
      %v2478 = vmul.f32 %v2214, %v2466
      %v2479 = vmul.f32 %v2219, %v2466
      %v2480 = vmul.f32 %v2224, %v2466
      %v2481 = vmul.f32 %v2229, %v2466
      %v2482 = vmul.f32 %v2234, %v2466
      %v2483 = vmul.f32 %v2351, %v2466
      %v2501 = vrot.slane %v2467, 4
      %v2502 = vrot.slane %v2468, 4
      %v2503 = vsel %vm1022, %v2501, %v2502
      %v2504 = vrot.slane %v2469, 4
      %v2505 = vsel %vm1022, %v2502, %v2504
      %v2506 = vrot.slane %v2470, 4
      %v2507 = vsel %vm1022, %v2504, %v2506
      %v2508 = vrot.slane %v2471, 4
      %v2509 = vsel %vm1022, %v2506, %v2508
      %v2510 = vrot.slane %v2472, 4
      %v2511 = vsel %vm1022, %v2508, %v2510
      %v2512 = vrot.slane %v2473, 4
      %v2513 = vsel %vm1022, %v2510, %v2512
      %v2514 = vrot.slane %v2474, 4
      %v2515 = vsel %vm1022, %v2512, %v2514
      %v2516 = vrot.slane %v2475, 4
      %v2517 = vsel %vm1022, %v2514, %v2516
      %v2518 = vrot.slane %v2476, 4
      %v2519 = vsel %vm1022, %v2516, %v2518
      %v2520 = vrot.slane %v2477, 4
      %v2521 = vsel %vm1022, %v2518, %v2520
      %v2522 = vrot.slane %v2478, 4
      %v2523 = vsel %vm1022, %v2520, %v2522
      %v2524 = vrot.slane %v2479, 4
      %v2525 = vsel %vm1022, %v2522, %v2524
      %v2526 = vrot.slane %v2480, 4
      %v2527 = vsel %vm1022, %v2524, %v2526
      %v2528 = vrot.slane %v2481, 4
      %v2529 = vsel %vm1022, %v2526, %v2528
      %v2530 = vrot.slane %v2482, 4
      %v2531 = vsel %vm1022, %v2528, %v2530
      %v2532 = vrot.slane %v2483, 4
      %v2533 = vsel %vm1022, %v2530, %v2532
      %v2550 = vadd.f32 %v2440, %v2503
      %v2551 = vadd.f32 %v2441, %v2505
      %v2552 = vadd.f32 %v2442, %v2507
      %v2553 = vadd.f32 %v2443, %v2509
      %v2554 = vadd.f32 %v2444, %v2511
      %v2555 = vadd.f32 %v2445, %v2513
      %v2556 = vadd.f32 %v2446, %v2515
      %v2557 = vadd.f32 %v2447, %v2517
      %v2558 = vadd.f32 %v2448, %v2519
      %v2559 = vadd.f32 %v2449, %v2521
      %v2560 = vadd.f32 %v2450, %v2523
      %v2561 = vadd.f32 %v2451, %v2525
      %v2562 = vadd.f32 %v2452, %v2527
      %v2563 = vadd.f32 %v2453, %v2529
      %v2564 = vadd.f32 %v2454, %v2531
      %v2565 = vadd.f32 %v2455, %v2533
      %v2566 = vld [vmem:[%s165 + $0x50] sm:$0xc]
      %v2567 = vld [vmem:[%s165 + $0x54] sm:$0xf]
      %v2568 = vld [vmem:[%s165 + $0x58] sm:$0xf]
      %v2569 = vld [vmem:[%s165 + $0x5c] sm:$0xf]
      %v2570 = vld [vmem:[%s165 + $0x60] sm:$0xf]
      %v2571 = vld [vmem:[%s165 + $0x64] sm:$0xf]
      %v2572 = vld [vmem:[%s165 + $0x68] sm:$0xf]
      %v2573 = vld [vmem:[%s165 + $0x6c] sm:$0xf]
      %v2574 = vld [vmem:[%s165 + $0x70] sm:$0xf]
      %v2575 = vld [vmem:[%s165 + $0x74] sm:$0xf]
      %v2576 = vld [vmem:[%s165 + $0x78] sm:$0xf]
      %v2577 = vld [vmem:[%s165 + $0x7c] sm:$0xf]
      %v2578 = vld [vmem:[%s165 + $0x80] sm:$0xf]
      %v2579 = vld [vmem:[%s165 + $0x84] sm:$0xf]
      %v2580 = vld [vmem:[%s165 + $0x88] sm:$0xf]
      %v2581 = vld [vmem:[%s165 + $0x8c] sm:$0xf]
      %v2582 = vld [vmem:[%s165 + $0x90] sm:$0x3]
      %v2583 = vld [vmem:[%s1] sm:$0x8]
      %v2584 = vunpack.c.l.bf16 %v2566
      %v2585 = vunpack.c.l.bf16 %v2567
      %v2586 = vunpack.c.l.bf16 %v2568
      %v2587 = vunpack.c.l.bf16 %v2569
      %v2588 = vunpack.c.l.bf16 %v2570
      %v2589 = vunpack.c.l.bf16 %v2571
      %v2590 = vunpack.c.l.bf16 %v2572
      %v2591 = vunpack.c.l.bf16 %v2573
      %v2592 = vunpack.c.l.bf16 %v2574
      %v2593 = vunpack.c.l.bf16 %v2575
      %v2594 = vunpack.c.l.bf16 %v2576
      %v2595 = vunpack.c.l.bf16 %v2577
      %v2596 = vunpack.c.l.bf16 %v2578
      %v2597 = vunpack.c.l.bf16 %v2579
      %v2598 = vunpack.c.l.bf16 %v2580
      %v2599 = vunpack.c.l.bf16 %v2581
      %v2600 = vunpack.c.l.bf16 %v2582
      %v2601 = vunpack.c.l.bf16 %v2583
      %2603 = vset.pattern.permute.xlu0 0
      %2604 = vperm.xlu0 %2603, %v2584
      %v2605 = vpop.permute.xlu0 %2604
      %2608 = vset.pattern.permute.xlu0 0
      %2609 = vperm.xlu0 %2608, %v2585
      %v2610 = vpop.permute.xlu0 %2609
      %2613 = vset.pattern.permute.xlu0 0
      %2614 = vperm.xlu0 %2613, %v2586
      %v2615 = vpop.permute.xlu0 %2614
      %2618 = vset.pattern.permute.xlu0 0
      %2619 = vperm.xlu0 %2618, %v2587
      %v2620 = vpop.permute.xlu0 %2619
      %2623 = vset.pattern.permute.xlu0 0
      %2624 = vperm.xlu0 %2623, %v2588
      %v2625 = vpop.permute.xlu0 %2624
      %2628 = vset.pattern.permute.xlu0 0
      %2629 = vperm.xlu0 %2628, %v2589
      %v2630 = vpop.permute.xlu0 %2629
      %2633 = vset.pattern.permute.xlu0 0
      %2634 = vperm.xlu0 %2633, %v2590
      %v2635 = vpop.permute.xlu0 %2634
      %2638 = vset.pattern.permute.xlu0 0
      %2639 = vperm.xlu0 %2638, %v2591
      %v2640 = vpop.permute.xlu0 %2639
      %2643 = vset.pattern.permute.xlu0 0
      %2644 = vperm.xlu0 %2643, %v2592
      %v2645 = vpop.permute.xlu0 %2644
      %2648 = vset.pattern.permute.xlu0 0
      %2649 = vperm.xlu0 %2648, %v2593
      %v2650 = vpop.permute.xlu0 %2649
      %2653 = vset.pattern.permute.xlu0 0
      %2654 = vperm.xlu0 %2653, %v2594
      %v2655 = vpop.permute.xlu0 %2654
      %2658 = vset.pattern.permute.xlu0 0
      %2659 = vperm.xlu0 %2658, %v2595
      %v2660 = vpop.permute.xlu0 %2659
      %2663 = vset.pattern.permute.xlu0 0
      %2664 = vperm.xlu0 %2663, %v2596
      %v2665 = vpop.permute.xlu0 %2664
      %2668 = vset.pattern.permute.xlu0 0
      %2669 = vperm.xlu0 %2668, %v2597
      %v2670 = vpop.permute.xlu0 %2669
      %2673 = vset.pattern.permute.xlu0 0
      %2674 = vperm.xlu0 %2673, %v2598
      %v2675 = vpop.permute.xlu0 %2674
      %2678 = vset.pattern.permute.xlu0 0
      %2679 = vperm.xlu0 %2678, %v2599
      %v2680 = vpop.permute.xlu0 %2679
      %2683 = vset.pattern.permute.xlu0 0
      %2684 = vperm.xlu0 %2683, %v2600
      %v2685 = vpop.permute.xlu0 %2684
      %v2687 = vlaneseq
      %v2688 = vshrl.u32 %v2687, 7
      %v2689 = vsub.s32 6, %v2688
      %v2690 = vrot.slane %v2601, %v2689
      %v2691 = vmul.f32 %v2605, %v2690
      %v2692 = vmul.f32 %v2610, %v2690
      %v2693 = vmul.f32 %v2615, %v2690
      %v2694 = vmul.f32 %v2620, %v2690
      %v2695 = vmul.f32 %v2625, %v2690
      %v2696 = vmul.f32 %v2630, %v2690
      %v2697 = vmul.f32 %v2635, %v2690
      %v2698 = vmul.f32 %v2640, %v2690
      %v2699 = vmul.f32 %v2645, %v2690
      %v2700 = vmul.f32 %v2650, %v2690
      %v2701 = vmul.f32 %v2655, %v2690
      %v2702 = vmul.f32 %v2660, %v2690
      %v2703 = vmul.f32 %v2665, %v2690
      %v2704 = vmul.f32 %v2670, %v2690
      %v2705 = vmul.f32 %v2675, %v2690
      %v2706 = vmul.f32 %v2680, %v2690
      %v2707 = vmul.f32 %v2685, %v2690
      %v2725 = vrot.slane %v2691, 4
      %v2726 = vrot.slane %v2692, 4
      %v2727 = vsel %vm1022, %v2725, %v2726
      %v2728 = vrot.slane %v2693, 4
      %v2729 = vsel %vm1022, %v2726, %v2728
      %v2730 = vrot.slane %v2694, 4
      %v2731 = vsel %vm1022, %v2728, %v2730
      %v2732 = vrot.slane %v2695, 4
      %v2733 = vsel %vm1022, %v2730, %v2732
      %v2734 = vrot.slane %v2696, 4
      %v2735 = vsel %vm1022, %v2732, %v2734
      %v2736 = vrot.slane %v2697, 4
      %v2737 = vsel %vm1022, %v2734, %v2736
      %v2738 = vrot.slane %v2698, 4
      %v2739 = vsel %vm1022, %v2736, %v2738
      %v2740 = vrot.slane %v2699, 4
      %v2741 = vsel %vm1022, %v2738, %v2740
      %v2742 = vrot.slane %v2700, 4
      %v2743 = vsel %vm1022, %v2740, %v2742
      %v2744 = vrot.slane %v2701, 4
      %v2745 = vsel %vm1022, %v2742, %v2744
      %v2746 = vrot.slane %v2702, 4
      %v2747 = vsel %vm1022, %v2744, %v2746
      %v2748 = vrot.slane %v2703, 4
      %v2749 = vsel %vm1022, %v2746, %v2748
      %v2750 = vrot.slane %v2704, 4
      %v2751 = vsel %vm1022, %v2748, %v2750
      %v2752 = vrot.slane %v2705, 4
      %v2753 = vsel %vm1022, %v2750, %v2752
      %v2754 = vrot.slane %v2706, 4
      %v2755 = vsel %vm1022, %v2752, %v2754
      %v2756 = vrot.slane %v2707, 4
      %v2757 = vsel %vm1022, %v2754, %v2756
      %v2774 = vadd.f32 %v2550, %v2727
      %v2775 = vadd.f32 %v2551, %v2729
      %v2776 = vadd.f32 %v2552, %v2731
      %v2777 = vadd.f32 %v2553, %v2733
      %v2778 = vadd.f32 %v2554, %v2735
      %v2779 = vadd.f32 %v2555, %v2737
      %v2780 = vadd.f32 %v2556, %v2739
      %v2781 = vadd.f32 %v2557, %v2741
      %v2782 = vadd.f32 %v2558, %v2743
      %v2783 = vadd.f32 %v2559, %v2745
      %v2784 = vadd.f32 %v2560, %v2747
      %v2785 = vadd.f32 %v2561, %v2749
      %v2786 = vadd.f32 %v2562, %v2751
      %v2787 = vadd.f32 %v2563, %v2753
      %v2788 = vadd.f32 %v2564, %v2755
      %v2789 = vadd.f32 %v2565, %v2757
      %v2790 = vld [vmem:[%s165 + $0x90] sm:$0x7]
      %v2791 = vunpack.c.l.bf16 %v2790
      %2793 = vset.pattern.permute.xlu0 0
      %2794 = vperm.xlu0 %2793, %v2791
      %v2795 = vpop.permute.xlu0 %2794
      %v2797 = vlaneseq
      %v2798 = vshrl.u32 %v2797, 7
      %v2799 = vsub.s32 7, %v2798
      %v2800 = vrot.slane %v2601, %v2799
      %v2801 = vmul.f32 %v2605, %v2800
      %v2802 = vmul.f32 %v2610, %v2800
      %v2803 = vmul.f32 %v2615, %v2800
      %v2804 = vmul.f32 %v2620, %v2800
      %v2805 = vmul.f32 %v2625, %v2800
      %v2806 = vmul.f32 %v2630, %v2800
      %v2807 = vmul.f32 %v2635, %v2800
      %v2808 = vmul.f32 %v2640, %v2800
      %v2809 = vmul.f32 %v2645, %v2800
      %v2810 = vmul.f32 %v2650, %v2800
      %v2811 = vmul.f32 %v2655, %v2800
      %v2812 = vmul.f32 %v2660, %v2800
      %v2813 = vmul.f32 %v2665, %v2800
      %v2814 = vmul.f32 %v2670, %v2800
      %v2815 = vmul.f32 %v2675, %v2800
      %v2816 = vmul.f32 %v2680, %v2800
      %v2817 = vmul.f32 %v2795, %v2800
      %v2835 = vrot.slane %v2801, 5
      %v2836 = vrot.slane %v2802, 5
      %v2837 = vsel %vm1357, %v2835, %v2836
      %v2838 = vrot.slane %v2803, 5
      %v2839 = vsel %vm1357, %v2836, %v2838
      %v2840 = vrot.slane %v2804, 5
      %v2841 = vsel %vm1357, %v2838, %v2840
      %v2842 = vrot.slane %v2805, 5
      %v2843 = vsel %vm1357, %v2840, %v2842
      %v2844 = vrot.slane %v2806, 5
      %v2845 = vsel %vm1357, %v2842, %v2844
      %v2846 = vrot.slane %v2807, 5
      %v2847 = vsel %vm1357, %v2844, %v2846
      %v2848 = vrot.slane %v2808, 5
      %v2849 = vsel %vm1357, %v2846, %v2848
      %v2850 = vrot.slane %v2809, 5
      %v2851 = vsel %vm1357, %v2848, %v2850
      %v2852 = vrot.slane %v2810, 5
      %v2853 = vsel %vm1357, %v2850, %v2852
      %v2854 = vrot.slane %v2811, 5
      %v2855 = vsel %vm1357, %v2852, %v2854
      %v2856 = vrot.slane %v2812, 5
      %v2857 = vsel %vm1357, %v2854, %v2856
      %v2858 = vrot.slane %v2813, 5
      %v2859 = vsel %vm1357, %v2856, %v2858
      %v2860 = vrot.slane %v2814, 5
      %v2861 = vsel %vm1357, %v2858, %v2860
      %v2862 = vrot.slane %v2815, 5
      %v2863 = vsel %vm1357, %v2860, %v2862
      %v2864 = vrot.slane %v2816, 5
      %v2865 = vsel %vm1357, %v2862, %v2864
      %v2866 = vrot.slane %v2817, 5
      %v2867 = vsel %vm1357, %v2864, %v2866
      %v2884 = vadd.f32 %v2774, %v2837
      %v2885 = vadd.f32 %v2775, %v2839
      %v2886 = vadd.f32 %v2776, %v2841
      %v2887 = vadd.f32 %v2777, %v2843
      %v2888 = vadd.f32 %v2778, %v2845
      %v2889 = vadd.f32 %v2779, %v2847
      %v2890 = vadd.f32 %v2780, %v2849
      %v2891 = vadd.f32 %v2781, %v2851
      %v2892 = vadd.f32 %v2782, %v2853
      %v2893 = vadd.f32 %v2783, %v2855
      %v2894 = vadd.f32 %v2784, %v2857
      %v2895 = vadd.f32 %v2785, %v2859
      %v2896 = vadd.f32 %v2786, %v2861
      %v2897 = vadd.f32 %v2787, %v2863
      %v2898 = vadd.f32 %v2788, %v2865
      %v2899 = vadd.f32 %v2789, %v2867
      %v2900 = vld [vmem:[%s165 + $0x50] sm:$0x8]
      %v2901 = vld [vmem:[%s1 + $0x4] sm:$0x1]
      %v2902 = vunpack.c.l.bf16 %v2900
      %v2903 = vunpack.c.l.bf16 %v2901
      %2905 = vset.pattern.permute.xlu0 0
      %2906 = vperm.xlu0 %2905, %v2902
      %v2907 = vpop.permute.xlu0 %2906
      %v2909 = vlaneseq
      %v2910 = vshrl.u32 %v2909, 7
      %v2911 = vsub.s32 0, %v2910
      %v2912 = vrot.slane %v2903, %v2911
      %v2913 = vmul.f32 %v2907, %v2912
      %v2914 = vmul.f32 %v2610, %v2912
      %v2915 = vmul.f32 %v2615, %v2912
      %v2916 = vmul.f32 %v2620, %v2912
      %v2917 = vmul.f32 %v2625, %v2912
      %v2918 = vmul.f32 %v2630, %v2912
      %v2919 = vmul.f32 %v2635, %v2912
      %v2920 = vmul.f32 %v2640, %v2912
      %v2921 = vmul.f32 %v2645, %v2912
      %v2922 = vmul.f32 %v2650, %v2912
      %v2923 = vmul.f32 %v2655, %v2912
      %v2924 = vmul.f32 %v2660, %v2912
      %v2925 = vmul.f32 %v2665, %v2912
      %v2926 = vmul.f32 %v2670, %v2912
      %v2927 = vmul.f32 %v2675, %v2912
      %v2928 = vmul.f32 %v2680, %v2912
      %v2929 = vmul.f32 %v2795, %v2912
      %v2947 = vrot.slane %v2913, 6
      %v2948 = vrot.slane %v2914, 6
      %v2949 = vsel %vm1470, %v2947, %v2948
      %v2950 = vrot.slane %v2915, 6
      %v2951 = vsel %vm1470, %v2948, %v2950
      %v2952 = vrot.slane %v2916, 6
      %v2953 = vsel %vm1470, %v2950, %v2952
      %v2954 = vrot.slane %v2917, 6
      %v2955 = vsel %vm1470, %v2952, %v2954
      %v2956 = vrot.slane %v2918, 6
      %v2957 = vsel %vm1470, %v2954, %v2956
      %v2958 = vrot.slane %v2919, 6
      %v2959 = vsel %vm1470, %v2956, %v2958
      %v2960 = vrot.slane %v2920, 6
      %v2961 = vsel %vm1470, %v2958, %v2960
      %v2962 = vrot.slane %v2921, 6
      %v2963 = vsel %vm1470, %v2960, %v2962
      %v2964 = vrot.slane %v2922, 6
      %v2965 = vsel %vm1470, %v2962, %v2964
      %v2966 = vrot.slane %v2923, 6
      %v2967 = vsel %vm1470, %v2964, %v2966
      %v2968 = vrot.slane %v2924, 6
      %v2969 = vsel %vm1470, %v2966, %v2968
      %v2970 = vrot.slane %v2925, 6
      %v2971 = vsel %vm1470, %v2968, %v2970
      %v2972 = vrot.slane %v2926, 6
      %v2973 = vsel %vm1470, %v2970, %v2972
      %v2974 = vrot.slane %v2927, 6
      %v2975 = vsel %vm1470, %v2972, %v2974
      %v2976 = vrot.slane %v2928, 6
      %v2977 = vsel %vm1470, %v2974, %v2976
      %v2978 = vrot.slane %v2929, 6
      %v2979 = vsel %vm1470, %v2976, %v2978
      %v2996 = vadd.f32 %v2884, %v2949
      %v2997 = vadd.f32 %v2885, %v2951
      %v2998 = vadd.f32 %v2886, %v2953
      %v2999 = vadd.f32 %v2887, %v2955
      %v3000 = vadd.f32 %v2888, %v2957
      %v3001 = vadd.f32 %v2889, %v2959
      %v3002 = vadd.f32 %v2890, %v2961
      %v3003 = vadd.f32 %v2891, %v2963
      %v3004 = vadd.f32 %v2892, %v2965
      %v3005 = vadd.f32 %v2893, %v2967
      %v3006 = vadd.f32 %v2894, %v2969
      %v3007 = vadd.f32 %v2895, %v2971
      %v3008 = vadd.f32 %v2896, %v2973
      %v3009 = vadd.f32 %v2897, %v2975
      %v3010 = vadd.f32 %v2898, %v2977
      %v3011 = vadd.f32 %v2899, %v2979
      %v3012 = vadd.f32 %v2996, %v1540
      %v3013 = vadd.f32 %v2997, %v1540
      %v3014 = vadd.f32 %v2998, %v1540
      %v3015 = vadd.f32 %v2999, %v1540
      %v3016 = vadd.f32 %v3000, %v1540
      %v3017 = vadd.f32 %v3001, %v1540
      %v3018 = vadd.f32 %v3002, %v1540
      %v3019 = vadd.f32 %v3003, %v1540
      %v3020 = vadd.f32 %v3004, %v1540
      %v3021 = vadd.f32 %v3005, %v1540
      %v3022 = vadd.f32 %v3006, %v1540
      %v3023 = vadd.f32 %v3007, %v1540
      %v3024 = vadd.f32 %v3008, %v1540
      %v3025 = vadd.f32 %v3009, %v1540
      %v3026 = vadd.f32 %v3010, %v1540
      %v3027 = vadd.f32 %v3011, %v1540
      %v3028 = vmax.f32 %v3012, 0.0
      %v3029 = vmax.f32 %v3013, 0.0
      %v3030 = vmax.f32 %v3014, 0.0
      %v3031 = vmax.f32 %v3015, 0.0
      %v3032 = vmax.f32 %v3016, 0.0
      %v3033 = vmax.f32 %v3017, 0.0
      %v3034 = vmax.f32 %v3018, 0.0
      %v3035 = vmax.f32 %v3019, 0.0
      %v3036 = vmax.f32 %v3020, 0.0
      %v3037 = vmax.f32 %v3021, 0.0
      %v3038 = vmax.f32 %v3022, 0.0
      %v3039 = vmax.f32 %v3023, 0.0
      %v3040 = vmax.f32 %v3024, 0.0
      %v3041 = vmax.f32 %v3025, 0.0
      %v3042 = vmax.f32 %v3026, 0.0
      %v3043 = vmax.f32 %v3027, 0.0
      %v3044 = vpack.c.bf16 %v3029, %v3028
      %v3045 = vpack.c.bf16 %v3031, %v3030
      %v3046 = vpack.c.bf16 %v3033, %v3032
      %v3047 = vpack.c.bf16 %v3035, %v3034
      %v3048 = vpack.c.bf16 %v3037, %v3036
      %v3049 = vpack.c.bf16 %v3039, %v3038
      %v3050 = vpack.c.bf16 %v3041, %v3040
      %v3051 = vpack.c.bf16 %v3043, %v3042
      %v3060 = vunpack.c.l.b16 %v3044
      %v3061 = vunpack.c.h.b16 %v3044
      %v3062 = vunpack.c.l.b16 %v3045
      %v3063 = vunpack.c.h.b16 %v3045
      %v3064 = vunpack.c.l.b16 %v3046
      %v3065 = vunpack.c.h.b16 %v3046
      %v3066 = vunpack.c.l.b16 %v3047
      %v3067 = vunpack.c.h.b16 %v3047
      %v3068 = vunpack.c.l.b16 %v3048
      %v3069 = vunpack.c.h.b16 %v3048
      %v3070 = vunpack.c.l.b16 %v3049
      %v3071 = vunpack.c.h.b16 %v3049
      %v3072 = vunpack.c.l.b16 %v3050
      %v3073 = vunpack.c.h.b16 %v3050
      %v3074 = vunpack.c.l.b16 %v3051
      %v3075 = vunpack.c.h.b16 %v3051
      %v3076 = vpack.c.b16 %v3060, %v3060
      %v3077 = vpack.c.b16 %v3061, %v3061
      %v3078 = vpack.c.b16 %v3062, %v3062
      %v3079 = vpack.c.b16 %v3063, %v3063
      %v3080 = vpack.c.b16 %v3064, %v3064
      %v3081 = vpack.c.b16 %v3065, %v3065
      %v3082 = vpack.c.b16 %v3066, %v3066
      %v3083 = vpack.c.b16 %v3067, %v3067
      %v3084 = vpack.c.b16 %v3068, %v3068
      %v3085 = vpack.c.b16 %v3069, %v3069
      %v3086 = vpack.c.b16 %v3070, %v3070
      %v3087 = vpack.c.b16 %v3071, %v3071
      %v3088 = vpack.c.b16 %v3072, %v3072
      %v3089 = vpack.c.b16 %v3073, %v3073
      %v3090 = vpack.c.b16 %v3074, %v3074
      %v3091 = vpack.c.b16 %v3075, %v3075
      %3108 = vst [vmem:[%s170 + $0x40] sm:$0xf] %v3076
      %3109 = vst [vmem:[%s170 + $0x44] sm:$0xf] %v3077
      %3110 = vst [vmem:[%s170 + $0x48] sm:$0xf] %v3078
      %3111 = vst [vmem:[%s170 + $0x4c] sm:$0xf] %v3079
      %3112 = vst [vmem:[%s170 + $0x50] sm:$0xf] %v3080
      %3113 = vst [vmem:[%s170 + $0x54] sm:$0xf] %v3081
      %3114 = vst [vmem:[%s170 + $0x58] sm:$0xf] %v3082
      %3115 = vst [vmem:[%s170 + $0x5c] sm:$0xf] %v3083
      %3116 = vst [vmem:[%s170 + $0x60] sm:$0xf] %v3084
      %3117 = vst [vmem:[%s170 + $0x64] sm:$0xf] %v3085
      %3118 = vst [vmem:[%s170 + $0x68] sm:$0xf] %v3086
      %3119 = vst [vmem:[%s170 + $0x6c] sm:$0xf] %v3087
      %3120 = vst [vmem:[%s170 + $0x70] sm:$0xf] %v3088
      %3121 = vst [vmem:[%s170 + $0x74] sm:$0xf] %v3089
      %3122 = vst [vmem:[%s170 + $0x78] sm:$0xf] %v3090
      %3123 = vst [vmem:[%s170 + $0x7c] sm:$0xf] %v3091
      %v3124 = vld [vmem:[%s165 + $0x80] sm:$0xf]
      %v3125 = vld [vmem:[%s165 + $0x84] sm:$0xf]
      %v3126 = vld [vmem:[%s165 + $0x88] sm:$0xf]
      %v3127 = vld [vmem:[%s165 + $0x8c] sm:$0xf]
      %v3128 = vld [vmem:[%s165 + $0x90] sm:$0xf]
      %v3129 = vld [vmem:[%s165 + $0x94] sm:$0xf]
      %v3130 = vld [vmem:[%s165 + $0x98] sm:$0xf]
      %v3131 = vld [vmem:[%s165 + $0x9c] sm:$0xf]
      %v3132 = vld [vmem:[%s165 + $0xa0] sm:$0x3]
      %v3133 = vld [vmem:[%s1] sm:$0x1]
      %v3134 = vunpack.c.l.bf16 %v3124
      %v3135 = vunpack.c.l.bf16 %v3125
      %v3136 = vunpack.c.l.bf16 %v3126
      %v3137 = vunpack.c.l.bf16 %v3127
      %v3138 = vunpack.c.l.bf16 %v3128
      %v3139 = vunpack.c.l.bf16 %v3129
      %v3140 = vunpack.c.l.bf16 %v3130
      %v3141 = vunpack.c.l.bf16 %v3131
      %v3142 = vunpack.c.l.bf16 %v3132
      %v3143 = vunpack.c.l.bf16 %v3133
      %3145 = vset.pattern.permute.xlu0 0
      %3146 = vperm.xlu0 %3145, %v3134
      %v3147 = vpop.permute.xlu0 %3146
      %3150 = vset.pattern.permute.xlu0 0
      %3151 = vperm.xlu0 %3150, %v3135
      %v3152 = vpop.permute.xlu0 %3151
      %3155 = vset.pattern.permute.xlu0 0
      %3156 = vperm.xlu0 %3155, %v3136
      %v3157 = vpop.permute.xlu0 %3156
      %3160 = vset.pattern.permute.xlu0 0
      %3161 = vperm.xlu0 %3160, %v3137
      %v3162 = vpop.permute.xlu0 %3161
      %3165 = vset.pattern.permute.xlu0 0
      %3166 = vperm.xlu0 %3165, %v3138
      %v3167 = vpop.permute.xlu0 %3166
      %3170 = vset.pattern.permute.xlu0 0
      %3171 = vperm.xlu0 %3170, %v3139
      %v3172 = vpop.permute.xlu0 %3171
      %3175 = vset.pattern.permute.xlu0 0
      %3176 = vperm.xlu0 %3175, %v3140
      %v3177 = vpop.permute.xlu0 %3176
      %3180 = vset.pattern.permute.xlu0 0
      %3181 = vperm.xlu0 %3180, %v3141
      %v3182 = vpop.permute.xlu0 %3181
      %3185 = vset.pattern.permute.xlu0 0
      %3186 = vperm.xlu0 %3185, %v3142
      %v3187 = vpop.permute.xlu0 %3186
      %v3189 = vlaneseq
      %v3190 = vshrl.u32 %v3189, 7
      %v3191 = vsub.s32 0, %v3190
      %v3192 = vrot.slane %v3143, %v3191
      %v3193 = vmul.f32 %v3147, %v3192
      %v3194 = vmul.f32 %v3152, %v3192
      %v3195 = vmul.f32 %v3157, %v3192
      %v3196 = vmul.f32 %v3162, %v3192
      %v3197 = vmul.f32 %v3167, %v3192
      %v3198 = vmul.f32 %v3172, %v3192
      %v3199 = vmul.f32 %v3177, %v3192
      %v3200 = vmul.f32 %v3182, %v3192
      %v3201 = vmul.f32 %v3187, %v3192
      %v3202 = vld [vmem:[%s165 + $0xa0] sm:$0x7]
      %v3203 = vunpack.c.l.bf16 %v3202
      %3205 = vset.pattern.permute.xlu0 0
      %3206 = vperm.xlu0 %3205, %v3203
      %v3207 = vpop.permute.xlu0 %3206
      %v3209 = vlaneseq
      %v3210 = vshrl.u32 %v3209, 7
      %v3211 = vsub.s32 1, %v3210
      %v3212 = vrot.slane %v3143, %v3211
      %v3213 = vmul.f32 %v3147, %v3212
      %v3214 = vmul.f32 %v3152, %v3212
      %v3215 = vmul.f32 %v3157, %v3212
      %v3216 = vmul.f32 %v3162, %v3212
      %v3217 = vmul.f32 %v3167, %v3212
      %v3218 = vmul.f32 %v3172, %v3212
      %v3219 = vmul.f32 %v3177, %v3212
      %v3220 = vmul.f32 %v3182, %v3212
      %v3221 = vmul.f32 %v3207, %v3212
      %v3231 = vrot.slane %v3213, 1
      %v3232 = vrot.slane %v3214, 1
      %v3233 = vsel %vm463, %v3231, %v3232
      %v3234 = vrot.slane %v3215, 1
      %v3235 = vsel %vm463, %v3232, %v3234
      %v3236 = vrot.slane %v3216, 1
      %v3237 = vsel %vm463, %v3234, %v3236
      %v3238 = vrot.slane %v3217, 1
      %v3239 = vsel %vm463, %v3236, %v3238
      %v3240 = vrot.slane %v3218, 1
      %v3241 = vsel %vm463, %v3238, %v3240
      %v3242 = vrot.slane %v3219, 1
      %v3243 = vsel %vm463, %v3240, %v3242
      %v3244 = vrot.slane %v3220, 1
      %v3245 = vsel %vm463, %v3242, %v3244
      %v3246 = vrot.slane %v3221, 1
      %v3247 = vsel %vm463, %v3244, %v3246
      %v3257 = vadd.f32 %v3193, %v3233
      %v3258 = vadd.f32 %v3194, %v3235
      %v3259 = vadd.f32 %v3195, %v3237
      %v3260 = vadd.f32 %v3196, %v3239
      %v3261 = vadd.f32 %v3197, %v3241
      %v3262 = vadd.f32 %v3198, %v3243
      %v3263 = vadd.f32 %v3199, %v3245
      %v3264 = vadd.f32 %v3200, %v3247
      %v3265 = vadd.f32 %v3201, %v3246
      %v3266 = vld [vmem:[%s165 + $0x80] sm:$0xe]
      %v3267 = vld [vmem:[%s1] sm:$0x2]
      %v3268 = vunpack.c.l.bf16 %v3266
      %v3269 = vunpack.c.l.bf16 %v3267
      %3271 = vset.pattern.permute.xlu0 0
      %3272 = vperm.xlu0 %3271, %v3268
      %v3273 = vpop.permute.xlu0 %3272
      %v3275 = vlaneseq
      %v3276 = vshrl.u32 %v3275, 7
      %v3277 = vsub.s32 2, %v3276
      %v3278 = vrot.slane %v3269, %v3277
      %v3279 = vmul.f32 %v3273, %v3278
      %v3280 = vmul.f32 %v3152, %v3278
      %v3281 = vmul.f32 %v3157, %v3278
      %v3282 = vmul.f32 %v3162, %v3278
      %v3283 = vmul.f32 %v3167, %v3278
      %v3284 = vmul.f32 %v3172, %v3278
      %v3285 = vmul.f32 %v3177, %v3278
      %v3286 = vmul.f32 %v3182, %v3278
      %v3287 = vmul.f32 %v3207, %v3278
      %v3297 = vrot.slane %v3279, 2
      %v3298 = vrot.slane %v3280, 2
      %v3299 = vsel %vm576, %v3297, %v3298
      %v3300 = vrot.slane %v3281, 2
      %v3301 = vsel %vm576, %v3298, %v3300
      %v3302 = vrot.slane %v3282, 2
      %v3303 = vsel %vm576, %v3300, %v3302
      %v3304 = vrot.slane %v3283, 2
      %v3305 = vsel %vm576, %v3302, %v3304
      %v3306 = vrot.slane %v3284, 2
      %v3307 = vsel %vm576, %v3304, %v3306
      %v3308 = vrot.slane %v3285, 2
      %v3309 = vsel %vm576, %v3306, %v3308
      %v3310 = vrot.slane %v3286, 2
      %v3311 = vsel %vm576, %v3308, %v3310
      %v3312 = vrot.slane %v3287, 2
      %v3313 = vsel %vm576, %v3310, %v3312
      %v3323 = vadd.f32 %v3257, %v3299
      %v3324 = vadd.f32 %v3258, %v3301
      %v3325 = vadd.f32 %v3259, %v3303
      %v3326 = vadd.f32 %v3260, %v3305
      %v3327 = vadd.f32 %v3261, %v3307
      %v3328 = vadd.f32 %v3262, %v3309
      %v3329 = vadd.f32 %v3263, %v3311
      %v3330 = vadd.f32 %v3264, %v3313
      %v3331 = vadd.f32 %v3265, %v3312
      %v3332 = vld [vmem:[%s165 + $0x88] sm:$0xe]
      %v3333 = vld [vmem:[%s165 + $0x8c] sm:$0xf]
      %v3334 = vld [vmem:[%s165 + $0x90] sm:$0xf]
      %v3335 = vld [vmem:[%s165 + $0x94] sm:$0xf]
      %v3336 = vld [vmem:[%s165 + $0x98] sm:$0xf]
      %v3337 = vld [vmem:[%s165 + $0x9c] sm:$0xf]
      %v3338 = vld [vmem:[%s165 + $0xa0] sm:$0xf]
      %v3339 = vld [vmem:[%s165 + $0xa4] sm:$0xf]
      %v3340 = vld [vmem:[%s165 + $0xa8] sm:$0x7]
      %v3341 = vunpack.c.l.bf16 %v3332
      %v3342 = vunpack.c.l.bf16 %v3333
      %v3343 = vunpack.c.l.bf16 %v3334
      %v3344 = vunpack.c.l.bf16 %v3335
      %v3345 = vunpack.c.l.bf16 %v3336
      %v3346 = vunpack.c.l.bf16 %v3337
      %v3347 = vunpack.c.l.bf16 %v3338
      %v3348 = vunpack.c.l.bf16 %v3339
      %v3349 = vunpack.c.l.bf16 %v3340
      %3351 = vset.pattern.permute.xlu0 0
      %3352 = vperm.xlu0 %3351, %v3341
      %v3353 = vpop.permute.xlu0 %3352
      %3356 = vset.pattern.permute.xlu0 0
      %3357 = vperm.xlu0 %3356, %v3342
      %v3358 = vpop.permute.xlu0 %3357
      %3361 = vset.pattern.permute.xlu0 0
      %3362 = vperm.xlu0 %3361, %v3343
      %v3363 = vpop.permute.xlu0 %3362
      %3366 = vset.pattern.permute.xlu0 0
      %3367 = vperm.xlu0 %3366, %v3344
      %v3368 = vpop.permute.xlu0 %3367
      %3371 = vset.pattern.permute.xlu0 0
      %3372 = vperm.xlu0 %3371, %v3345
      %v3373 = vpop.permute.xlu0 %3372
      %3376 = vset.pattern.permute.xlu0 0
      %3377 = vperm.xlu0 %3376, %v3346
      %v3378 = vpop.permute.xlu0 %3377
      %3381 = vset.pattern.permute.xlu0 0
      %3382 = vperm.xlu0 %3381, %v3347
      %v3383 = vpop.permute.xlu0 %3382
      %3386 = vset.pattern.permute.xlu0 0
      %3387 = vperm.xlu0 %3386, %v3348
      %v3388 = vpop.permute.xlu0 %3387
      %3391 = vset.pattern.permute.xlu0 0
      %3392 = vperm.xlu0 %3391, %v3349
      %v3393 = vpop.permute.xlu0 %3392
      %v3395 = vlaneseq
      %v3396 = vshrl.u32 %v3395, 7
      %v3397 = vsub.s32 3, %v3396
      %v3398 = vrot.slane %v3269, %v3397
      %v3399 = vmul.f32 %v3353, %v3398
      %v3400 = vmul.f32 %v3358, %v3398
      %v3401 = vmul.f32 %v3363, %v3398
      %v3402 = vmul.f32 %v3368, %v3398
      %v3403 = vmul.f32 %v3373, %v3398
      %v3404 = vmul.f32 %v3378, %v3398
      %v3405 = vmul.f32 %v3383, %v3398
      %v3406 = vmul.f32 %v3388, %v3398
      %v3407 = vmul.f32 %v3393, %v3398
      %v3417 = vrot.slane %v3399, 2
      %v3418 = vrot.slane %v3400, 2
      %v3419 = vsel %vm576, %v3417, %v3418
      %v3420 = vrot.slane %v3401, 2
      %v3421 = vsel %vm576, %v3418, %v3420
      %v3422 = vrot.slane %v3402, 2
      %v3423 = vsel %vm576, %v3420, %v3422
      %v3424 = vrot.slane %v3403, 2
      %v3425 = vsel %vm576, %v3422, %v3424
      %v3426 = vrot.slane %v3404, 2
      %v3427 = vsel %vm576, %v3424, %v3426
      %v3428 = vrot.slane %v3405, 2
      %v3429 = vsel %vm576, %v3426, %v3428
      %v3430 = vrot.slane %v3406, 2
      %v3431 = vsel %vm576, %v3428, %v3430
      %v3432 = vrot.slane %v3407, 2
      %v3433 = vsel %vm576, %v3430, %v3432
      %v3443 = vadd.f32 %v3323, %v3419
      %v3444 = vadd.f32 %v3324, %v3421
      %v3445 = vadd.f32 %v3325, %v3423
      %v3446 = vadd.f32 %v3326, %v3425
      %v3447 = vadd.f32 %v3327, %v3427
      %v3448 = vadd.f32 %v3328, %v3429
      %v3449 = vadd.f32 %v3329, %v3431
      %v3450 = vadd.f32 %v3330, %v3433
      %v3451 = vadd.f32 %v3331, %v3432
      %v3452 = vld [vmem:[%s165 + $0xa8] sm:$0xf]
      %v3453 = vld [vmem:[%s1] sm:$0x4]
      %v3454 = vunpack.c.l.bf16 %v3452
      %v3455 = vunpack.c.l.bf16 %v3453
      %3457 = vset.pattern.permute.xlu0 0
      %3458 = vperm.xlu0 %3457, %v3454
      %v3459 = vpop.permute.xlu0 %3458
      %v3461 = vlaneseq
      %v3462 = vshrl.u32 %v3461, 7
      %v3463 = vsub.s32 4, %v3462
      %v3464 = vrot.slane %v3455, %v3463
      %v3465 = vmul.f32 %v3353, %v3464
      %v3466 = vmul.f32 %v3358, %v3464
      %v3467 = vmul.f32 %v3363, %v3464
      %v3468 = vmul.f32 %v3368, %v3464
      %v3469 = vmul.f32 %v3373, %v3464
      %v3470 = vmul.f32 %v3378, %v3464
      %v3471 = vmul.f32 %v3383, %v3464
      %v3472 = vmul.f32 %v3388, %v3464
      %v3473 = vmul.f32 %v3459, %v3464
      %v3483 = vrot.slane %v3465, 3
      %v3484 = vrot.slane %v3466, 3
      %v3485 = vsel %vm911, %v3483, %v3484
      %v3486 = vrot.slane %v3467, 3
      %v3487 = vsel %vm911, %v3484, %v3486
      %v3488 = vrot.slane %v3468, 3
      %v3489 = vsel %vm911, %v3486, %v3488
      %v3490 = vrot.slane %v3469, 3
      %v3491 = vsel %vm911, %v3488, %v3490
      %v3492 = vrot.slane %v3470, 3
      %v3493 = vsel %vm911, %v3490, %v3492
      %v3494 = vrot.slane %v3471, 3
      %v3495 = vsel %vm911, %v3492, %v3494
      %v3496 = vrot.slane %v3472, 3
      %v3497 = vsel %vm911, %v3494, %v3496
      %v3498 = vrot.slane %v3473, 3
      %v3499 = vsel %vm911, %v3496, %v3498
      %v3509 = vadd.f32 %v3443, %v3485
      %v3510 = vadd.f32 %v3444, %v3487
      %v3511 = vadd.f32 %v3445, %v3489
      %v3512 = vadd.f32 %v3446, %v3491
      %v3513 = vadd.f32 %v3447, %v3493
      %v3514 = vadd.f32 %v3448, %v3495
      %v3515 = vadd.f32 %v3449, %v3497
      %v3516 = vadd.f32 %v3450, %v3499
      %v3517 = vadd.f32 %v3451, %v3498
      %v3518 = vld [vmem:[%s165 + $0x88] sm:$0xc]
      %v3519 = vunpack.c.l.bf16 %v3518
      %3521 = vset.pattern.permute.xlu0 0
      %3522 = vperm.xlu0 %3521, %v3519
      %v3523 = vpop.permute.xlu0 %3522
      %v3525 = vlaneseq
      %v3526 = vshrl.u32 %v3525, 7
      %v3527 = vsub.s32 5, %v3526
      %v3528 = vrot.slane %v3455, %v3527
      %v3529 = vmul.f32 %v3523, %v3528
      %v3530 = vmul.f32 %v3358, %v3528
      %v3531 = vmul.f32 %v3363, %v3528
      %v3532 = vmul.f32 %v3368, %v3528
      %v3533 = vmul.f32 %v3373, %v3528
      %v3534 = vmul.f32 %v3378, %v3528
      %v3535 = vmul.f32 %v3383, %v3528
      %v3536 = vmul.f32 %v3388, %v3528
      %v3537 = vmul.f32 %v3459, %v3528
      %v3547 = vrot.slane %v3529, 4
      %v3548 = vrot.slane %v3530, 4
      %v3549 = vsel %vm1022, %v3547, %v3548
      %v3550 = vrot.slane %v3531, 4
      %v3551 = vsel %vm1022, %v3548, %v3550
      %v3552 = vrot.slane %v3532, 4
      %v3553 = vsel %vm1022, %v3550, %v3552
      %v3554 = vrot.slane %v3533, 4
      %v3555 = vsel %vm1022, %v3552, %v3554
      %v3556 = vrot.slane %v3534, 4
      %v3557 = vsel %vm1022, %v3554, %v3556
      %v3558 = vrot.slane %v3535, 4
      %v3559 = vsel %vm1022, %v3556, %v3558
      %v3560 = vrot.slane %v3536, 4
      %v3561 = vsel %vm1022, %v3558, %v3560
      %v3562 = vrot.slane %v3537, 4
      %v3563 = vsel %vm1022, %v3560, %v3562
      %v3573 = vadd.f32 %v3509, %v3549
      %v3574 = vadd.f32 %v3510, %v3551
      %v3575 = vadd.f32 %v3511, %v3553
      %v3576 = vadd.f32 %v3512, %v3555
      %v3577 = vadd.f32 %v3513, %v3557
      %v3578 = vadd.f32 %v3514, %v3559
      %v3579 = vadd.f32 %v3515, %v3561
      %v3580 = vadd.f32 %v3516, %v3563
      %v3581 = vadd.f32 %v3517, %v3562
      %v3582 = vld [vmem:[%s165 + $0x90] sm:$0xc]
      %v3583 = vld [vmem:[%s165 + $0x94] sm:$0xf]
      %v3584 = vld [vmem:[%s165 + $0x98] sm:$0xf]
      %v3585 = vld [vmem:[%s165 + $0x9c] sm:$0xf]
      %v3586 = vld [vmem:[%s165 + $0xa0] sm:$0xf]
      %v3587 = vld [vmem:[%s165 + $0xa4] sm:$0xf]
      %v3588 = vld [vmem:[%s165 + $0xa8] sm:$0xf]
      %v3589 = vld [vmem:[%s165 + $0xac] sm:$0xf]
      %v3590 = vld [vmem:[%s165 + $0xb0] sm:$0xf]
      %v3591 = vld [vmem:[%s1] sm:$0x8]
      %v3592 = vunpack.c.l.bf16 %v3582
      %v3593 = vunpack.c.l.bf16 %v3583
      %v3594 = vunpack.c.l.bf16 %v3584
      %v3595 = vunpack.c.l.bf16 %v3585
      %v3596 = vunpack.c.l.bf16 %v3586
      %v3597 = vunpack.c.l.bf16 %v3587
      %v3598 = vunpack.c.l.bf16 %v3588
      %v3599 = vunpack.c.l.bf16 %v3589
      %v3600 = vunpack.c.l.bf16 %v3590
      %v3601 = vunpack.c.l.bf16 %v3591
      %3603 = vset.pattern.permute.xlu0 0
      %3604 = vperm.xlu0 %3603, %v3592
      %v3605 = vpop.permute.xlu0 %3604
      %3608 = vset.pattern.permute.xlu0 0
      %3609 = vperm.xlu0 %3608, %v3593
      %v3610 = vpop.permute.xlu0 %3609
      %3613 = vset.pattern.permute.xlu0 0
      %3614 = vperm.xlu0 %3613, %v3594
      %v3615 = vpop.permute.xlu0 %3614
      %3618 = vset.pattern.permute.xlu0 0
      %3619 = vperm.xlu0 %3618, %v3595
      %v3620 = vpop.permute.xlu0 %3619
      %3623 = vset.pattern.permute.xlu0 0
      %3624 = vperm.xlu0 %3623, %v3596
      %v3625 = vpop.permute.xlu0 %3624
      %3628 = vset.pattern.permute.xlu0 0
      %3629 = vperm.xlu0 %3628, %v3597
      %v3630 = vpop.permute.xlu0 %3629
      %3633 = vset.pattern.permute.xlu0 0
      %3634 = vperm.xlu0 %3633, %v3598
      %v3635 = vpop.permute.xlu0 %3634
      %3638 = vset.pattern.permute.xlu0 0
      %3639 = vperm.xlu0 %3638, %v3599
      %v3640 = vpop.permute.xlu0 %3639
      %3643 = vset.pattern.permute.xlu0 0
      %3644 = vperm.xlu0 %3643, %v3600
      %v3645 = vpop.permute.xlu0 %3644
      %v3647 = vlaneseq
      %v3648 = vshrl.u32 %v3647, 7
      %v3649 = vsub.s32 6, %v3648
      %v3650 = vrot.slane %v3601, %v3649
      %v3651 = vmul.f32 %v3605, %v3650
      %v3652 = vmul.f32 %v3610, %v3650
      %v3653 = vmul.f32 %v3615, %v3650
      %v3654 = vmul.f32 %v3620, %v3650
      %v3655 = vmul.f32 %v3625, %v3650
      %v3656 = vmul.f32 %v3630, %v3650
      %v3657 = vmul.f32 %v3635, %v3650
      %v3658 = vmul.f32 %v3640, %v3650
      %v3659 = vmul.f32 %v3645, %v3650
      %v3669 = vrot.slane %v3651, 4
      %v3670 = vrot.slane %v3652, 4
      %v3671 = vsel %vm1022, %v3669, %v3670
      %v3672 = vrot.slane %v3653, 4
      %v3673 = vsel %vm1022, %v3670, %v3672
      %v3674 = vrot.slane %v3654, 4
      %v3675 = vsel %vm1022, %v3672, %v3674
      %v3676 = vrot.slane %v3655, 4
      %v3677 = vsel %vm1022, %v3674, %v3676
      %v3678 = vrot.slane %v3656, 4
      %v3679 = vsel %vm1022, %v3676, %v3678
      %v3680 = vrot.slane %v3657, 4
      %v3681 = vsel %vm1022, %v3678, %v3680
      %v3682 = vrot.slane %v3658, 4
      %v3683 = vsel %vm1022, %v3680, %v3682
      %v3684 = vrot.slane %v3659, 4
      %v3685 = vsel %vm1022, %v3682, %v3684
      %v3695 = vadd.f32 %v3573, %v3671
      %v3696 = vadd.f32 %v3574, %v3673
      %v3697 = vadd.f32 %v3575, %v3675
      %v3698 = vadd.f32 %v3576, %v3677
      %v3699 = vadd.f32 %v3577, %v3679
      %v3700 = vadd.f32 %v3578, %v3681
      %v3701 = vadd.f32 %v3579, %v3683
      %v3702 = vadd.f32 %v3580, %v3685
      %v3703 = vadd.f32 %v3581, %v3684
      %v3704 = vld [vmem:[%s165 + $0x90] sm:$0xc]
      %v3705 = vld [vmem:[%s165 + $0x94] sm:$0xf]
      %v3706 = vld [vmem:[%s165 + $0x98] sm:$0xf]
      %v3707 = vld [vmem:[%s165 + $0x9c] sm:$0xf]
      %v3708 = vld [vmem:[%s165 + $0xa0] sm:$0xf]
      %v3709 = vld [vmem:[%s165 + $0xa4] sm:$0xf]
      %v3710 = vld [vmem:[%s165 + $0xa8] sm:$0xf]
      %v3711 = vld [vmem:[%s165 + $0xac] sm:$0xf]
      %v3712 = vld [vmem:[%s165 + $0xb0] sm:$0xf]
      %v3713 = vld [vmem:[%s165 + $0xb4] sm:$0x1]
      %v3714 = vunpack.c.l.bf16 %v3704
      %v3715 = vunpack.c.l.bf16 %v3705
      %v3716 = vunpack.c.l.bf16 %v3706
      %v3717 = vunpack.c.l.bf16 %v3707
      %v3718 = vunpack.c.l.bf16 %v3708
      %v3719 = vunpack.c.l.bf16 %v3709
      %v3720 = vunpack.c.l.bf16 %v3710
      %v3721 = vunpack.c.l.bf16 %v3711
      %v3722 = vunpack.c.l.bf16 %v3712
      %v3723 = vunpack.c.l.bf16 %v3713
      %3725 = vset.pattern.permute.xlu0 0
      %3726 = vperm.xlu0 %3725, %v3714
      %v3727 = vpop.permute.xlu0 %3726
      %3730 = vset.pattern.permute.xlu0 0
      %3731 = vperm.xlu0 %3730, %v3715
      %v3732 = vpop.permute.xlu0 %3731
      %3735 = vset.pattern.permute.xlu0 0
      %3736 = vperm.xlu0 %3735, %v3716
      %v3737 = vpop.permute.xlu0 %3736
      %3740 = vset.pattern.permute.xlu0 0
      %3741 = vperm.xlu0 %3740, %v3717
      %v3742 = vpop.permute.xlu0 %3741
      %3745 = vset.pattern.permute.xlu0 0
      %3746 = vperm.xlu0 %3745, %v3718
      %v3747 = vpop.permute.xlu0 %3746
      %3750 = vset.pattern.permute.xlu0 0
      %3751 = vperm.xlu0 %3750, %v3719
      %v3752 = vpop.permute.xlu0 %3751
      %3755 = vset.pattern.permute.xlu0 0
      %3756 = vperm.xlu0 %3755, %v3720
      %v3757 = vpop.permute.xlu0 %3756
      %3760 = vset.pattern.permute.xlu0 0
      %3761 = vperm.xlu0 %3760, %v3721
      %v3762 = vpop.permute.xlu0 %3761
      %3765 = vset.pattern.permute.xlu0 0
      %3766 = vperm.xlu0 %3765, %v3722
      %v3767 = vpop.permute.xlu0 %3766
      %3770 = vset.pattern.permute.xlu0 0
      %3771 = vperm.xlu0 %3770, %v3723
      %v3772 = vpop.permute.xlu0 %3771
      %v3774 = vlaneseq
      %v3775 = vshrl.u32 %v3774, 7
      %v3776 = vsub.s32 7, %v3775
      %v3777 = vrot.slane %v3601, %v3776
      %v3778 = vmul.f32 %v3727, %v3777
      %v3779 = vmul.f32 %v3732, %v3777
      %v3780 = vmul.f32 %v3737, %v3777
      %v3781 = vmul.f32 %v3742, %v3777
      %v3782 = vmul.f32 %v3747, %v3777
      %v3783 = vmul.f32 %v3752, %v3777
      %v3784 = vmul.f32 %v3757, %v3777
      %v3785 = vmul.f32 %v3762, %v3777
      %v3786 = vmul.f32 %v3767, %v3777
      %v3787 = vmul.f32 %v3772, %v3777
      %v3798 = vrot.slane %v3778, 5
      %v3799 = vrot.slane %v3779, 5
      %v3800 = vsel %vm1357, %v3798, %v3799
      %v3801 = vrot.slane %v3780, 5
      %v3802 = vsel %vm1357, %v3799, %v3801
      %v3803 = vrot.slane %v3781, 5
      %v3804 = vsel %vm1357, %v3801, %v3803
      %v3805 = vrot.slane %v3782, 5
      %v3806 = vsel %vm1357, %v3803, %v3805
      %v3807 = vrot.slane %v3783, 5
      %v3808 = vsel %vm1357, %v3805, %v3807
      %v3809 = vrot.slane %v3784, 5
      %v3810 = vsel %vm1357, %v3807, %v3809
      %v3811 = vrot.slane %v3785, 5
      %v3812 = vsel %vm1357, %v3809, %v3811
      %v3813 = vrot.slane %v3786, 5
      %v3814 = vsel %vm1357, %v3811, %v3813
      %v3815 = vrot.slane %v3787, 5
      %v3816 = vsel %vm1357, %v3813, %v3815
      %v3826 = vadd.f32 %v3695, %v3800
      %v3827 = vadd.f32 %v3696, %v3802
      %v3828 = vadd.f32 %v3697, %v3804
      %v3829 = vadd.f32 %v3698, %v3806
      %v3830 = vadd.f32 %v3699, %v3808
      %v3831 = vadd.f32 %v3700, %v3810
      %v3832 = vadd.f32 %v3701, %v3812
      %v3833 = vadd.f32 %v3702, %v3814
      %v3834 = vadd.f32 %v3703, %v3816
      %v3835 = vld [vmem:[%s165 + $0x90] sm:$0x8]
      %v3836 = vld [vmem:[%s1 + $0x4] sm:$0x1]
      %v3837 = vunpack.c.l.bf16 %v3835
      %v3838 = vunpack.c.l.bf16 %v3836
      %3840 = vset.pattern.permute.xlu0 0
      %3841 = vperm.xlu0 %3840, %v3837
      %v3842 = vpop.permute.xlu0 %3841
      %v3844 = vlaneseq
      %v3845 = vshrl.u32 %v3844, 7
      %v3846 = vsub.s32 0, %v3845
      %v3847 = vrot.slane %v3838, %v3846
      %v3848 = vmul.f32 %v3842, %v3847
      %v3849 = vmul.f32 %v3732, %v3847
      %v3850 = vmul.f32 %v3737, %v3847
      %v3851 = vmul.f32 %v3742, %v3847
      %v3852 = vmul.f32 %v3747, %v3847
      %v3853 = vmul.f32 %v3752, %v3847
      %v3854 = vmul.f32 %v3757, %v3847
      %v3855 = vmul.f32 %v3762, %v3847
      %v3856 = vmul.f32 %v3767, %v3847
      %v3857 = vmul.f32 %v3772, %v3847
      %v3868 = vrot.slane %v3848, 6
      %v3869 = vrot.slane %v3849, 6
      %v3870 = vsel %vm1470, %v3868, %v3869
      %v3871 = vrot.slane %v3850, 6
      %v3872 = vsel %vm1470, %v3869, %v3871
      %v3873 = vrot.slane %v3851, 6
      %v3874 = vsel %vm1470, %v3871, %v3873
      %v3875 = vrot.slane %v3852, 6
      %v3876 = vsel %vm1470, %v3873, %v3875
      %v3877 = vrot.slane %v3853, 6
      %v3878 = vsel %vm1470, %v3875, %v3877
      %v3879 = vrot.slane %v3854, 6
      %v3880 = vsel %vm1470, %v3877, %v3879
      %v3881 = vrot.slane %v3855, 6
      %v3882 = vsel %vm1470, %v3879, %v3881
      %v3883 = vrot.slane %v3856, 6
      %v3884 = vsel %vm1470, %v3881, %v3883
      %v3885 = vrot.slane %v3857, 6
      %v3886 = vsel %vm1470, %v3883, %v3885
      %v3896 = vadd.f32 %v3826, %v3870
      %v3897 = vadd.f32 %v3827, %v3872
      %v3898 = vadd.f32 %v3828, %v3874
      %v3899 = vadd.f32 %v3829, %v3876
      %v3900 = vadd.f32 %v3830, %v3878
      %v3901 = vadd.f32 %v3831, %v3880
      %v3902 = vadd.f32 %v3832, %v3882
      %v3903 = vadd.f32 %v3833, %v3884
      %v3904 = vadd.f32 %v3834, %v3886
      %v3905 = vadd.f32 %v3896, %v1540
      %v3906 = vadd.f32 %v3897, %v1540
      %v3907 = vadd.f32 %v3898, %v1540
      %v3908 = vadd.f32 %v3899, %v1540
      %v3909 = vadd.f32 %v3900, %v1540
      %v3910 = vadd.f32 %v3901, %v1540
      %v3911 = vadd.f32 %v3902, %v1540
      %v3912 = vadd.f32 %v3903, %v1540
      %v3913 = vadd.f32 %v3904, %v1540
      %v3914 = vmax.f32 %v3905, 0.0
      %v3915 = vmax.f32 %v3906, 0.0
      %v3916 = vmax.f32 %v3907, 0.0
      %v3917 = vmax.f32 %v3908, 0.0
      %v3918 = vmax.f32 %v3909, 0.0
      %v3919 = vmax.f32 %v3910, 0.0
      %v3920 = vmax.f32 %v3911, 0.0
      %v3921 = vmax.f32 %v3912, 0.0
      %v3922 = vmax.f32 %v3913, 0.0
      %v3923 = vpack.c.bf16 %v3915, %v3914
      %v3924 = vpack.c.bf16 %v3917, %v3916
      %v3925 = vpack.c.bf16 %v3919, %v3918
      %v3926 = vpack.c.bf16 %v3921, %v3920
      %v3927 = vpack.c.bf16 %v3922, %v3922
      %v3933 = vunpack.c.l.b16 %v3923
      %v3934 = vunpack.c.h.b16 %v3923
      %v3935 = vunpack.c.l.b16 %v3924
      %v3936 = vunpack.c.h.b16 %v3924
      %v3937 = vunpack.c.l.b16 %v3925
      %v3938 = vunpack.c.h.b16 %v3925
      %v3939 = vunpack.c.l.b16 %v3926
      %v3940 = vunpack.c.h.b16 %v3926
      %v3941 = vunpack.c.l.b16 %v3927
      %v3942 = vpack.c.b16 %v3933, %v3933
      %v3943 = vpack.c.b16 %v3934, %v3934
      %v3944 = vpack.c.b16 %v3935, %v3935
      %v3945 = vpack.c.b16 %v3936, %v3936
      %v3946 = vpack.c.b16 %v3937, %v3937
      %v3947 = vpack.c.b16 %v3938, %v3938
      %v3948 = vpack.c.b16 %v3939, %v3939
      %v3949 = vpack.c.b16 %v3940, %v3940
      %v3950 = vpack.c.b16 %v3941, %v3941
      %3960 = vst [vmem:[%s170 + $0x80] sm:$0xf] %v3942
      %3961 = vst [vmem:[%s170 + $0x84] sm:$0xf] %v3943
      %3962 = vst [vmem:[%s170 + $0x88] sm:$0xf] %v3944
      %3963 = vst [vmem:[%s170 + $0x8c] sm:$0xf] %v3945
      %3964 = vst [vmem:[%s170 + $0x90] sm:$0xf] %v3946
      %3965 = vst [vmem:[%s170 + $0x94] sm:$0xf] %v3947
      %3966 = vst [vmem:[%s170 + $0x98] sm:$0xf] %v3948
      %3967 = vst [vmem:[%s170 + $0x9c] sm:$0xf] %v3949
      %3968 = vst [vmem:[%s170 + $0xa0] sm:$0x3] %v3950
      %p3969 = scmp.lt.s32.totalorder %s14, 1
      %s3970 = scalar_select %p3969, %s14, 1
      %s3971 = smul.addr %s3970, 41
      %s3972 = smul.addr %s3971, 4
      %s3973 = scalar_lea.vmem %s3, %s3972
      // Predicated region
      $region33: #{handwriting_feature_extractor.4} parent=31 // pred_check
        %p3974 = pneg %p100
      $region34: #{handwriting_feature_extractor.4} parent=31 // pred_check_branch
        %3976 = sbr.rel (%p3974) target = $region36
      $region35: #{handwriting_feature_extractor.4} parent=31 // pred_region
        _
      $region36: #{handwriting_feature_extractor.4} parent=31 // pred_fallthru
        _
    $region32: #{handwriting_feature_extractor.4} parent=5 // pred_fallthru
      _
    %p3977 = scmp.le.s32.totalorder 2, %s9
    // Predicated region
    $region37: #{handwriting_feature_extractor.4} parent=5 // pred_check
      %p3978 = pneg %p3977
    $region38: #{handwriting_feature_extractor.4} parent=5 // pred_check_branch
      %3980 = sbr.rel (%p3978) target = $region40
    $region39: #{handwriting_feature_extractor.4} parent=5 // pred_region
      %s3981 = ssub.s32 %s9, 2
      // Predicated region
      $region41: #{handwriting_feature_extractor.4} parent=39 // pred_check
        %p3982 = pneg %p106
      $region42: #{handwriting_feature_extractor.4} parent=39 // pred_check_branch
        %3984 = sbr.rel (%p3982) target = $region44
      $region43: #{handwriting_feature_extractor.4} parent=39 // pred_region
        %p3985 = scmp.lt.s32.totalorder %s15, 1
        %s3986 = scalar_select %p3985, %s15, 1
        %s3987 = smul.addr %s3986, 41
        %s3988 = smul.addr %s3987, 4
        %s3989 = scalar_lea.vmem %s3, %s3988
      $region44: #{handwriting_feature_extractor.4} parent=39 // pred_fallthru
        _
    $region40: #{handwriting_feature_extractor.4} parent=5 // pred_fallthru
      _
  $region6: #{handwriting_feature_extractor.4} parent=0 // loop_footer
    %s13 = sadd.s32 1, %s9
  $region7: #{handwriting_feature_extractor.4} parent=0 // loop_footer_branch
    %8 = sbr.rel target = $region3
  $region8: #{handwriting_feature_extractor.4} parent=0 // loop_exit
    _

// kernel: handwriting_feature_extractor.7
$region0: #{handwriting_feature_extractor.7}
  #allocation0 [shape = 'u32[]', space=smem, size = 0x4, offset = 0x4, fixed_abs, tag = 'smem constant byte address 0x4 - core index']
  #allocation1 [shape = 'u32[144,128]{1,0:T(1,128)}', space=vmem, size = 0x12000, scoped, tag = 'internal scratch']
  %s0 = inlined_call_operand.vmem [shape: bf16[2,4,128], index: 0, kind: input, shape index: {}]
  %s1 = inlined_call_operand.vmem [shape: bf16[128,384], index: 1, kind: input, shape index: {}]
  %s2 = inlined_call_operand.vmem [shape: f32[1,384], index: 2, kind: input, shape index: {}]
  %s3 = inlined_call_operand.vmem [shape: bf16[128,128], index: 3, kind: input, shape index: {}]
  %s4 = inlined_call_operand.vmem [shape: f32[1,128], index: 4, kind: input, shape index: {}]
  %s5 = inlined_call_operand.vmem [shape: bf16[128,128], index: 5, kind: input, shape index: {}]
  %s6 = inlined_call_operand.vmem [shape: f32[1,128], index: 6, kind: input, shape index: {}]
  %s7 = inlined_call_operand.hbm [shape: f32[2,1,128], index: 7, kind: output, shape index: {}]
  %s8 = sld [smem:[#allocation0]]
  $region61: #{handwriting_feature_extractor.7} parent=0
    _
  %s10 = ssub.s32 1, %s8
  %s11 = scalar_select 0, %s10, %s8
  $region1: #{handwriting_feature_extractor.7} parent=0
    #allocation2 [shape = 'u8[1024]{0}', space=vmem, size = 0x400, scoped, tag = 'output window, operand 0']
    #allocation3 [shape = 's32[2]{0}', space=sflag, size = 0x8, scoped, tag = 'scoped memory for handwriting_feature_extractor.7']
    %12 = vsyncpa [#allocation3], 0
    %s13 = scalar_lea.sflag [#allocation3], 1
    %14 = vsyncpa %s13, 0
    loop: start=0, step=1, limit=4
    $region2: #{handwriting_feature_extractor.7} parent=1 // loop_pre_header
      _
    $region3: #{handwriting_feature_extractor.7} parent=1 // loop_header
      %s16 = sphi 0, %s20
      %p17 = scmp.ge.s32.totalorder %s16, 4
      %s26 = sphi 0, %s28
      %s29 = sphi 0, %s26
      %s30 = sphi 0, %s29
      %s46 = sphi 0, %s30
      %s50 = sphi 0, %s50
      %s52 = sphi 0, %s50
      %s53 = sphi 0, %s52
      %s67 = sphi 0, %s53
      %s71 = sphi 0, %s71
      %s73 = sphi 0, %s71
      %s74 = sphi 0, %s73
      %s88 = sphi 0, %s74
      %s92 = sphi 0, %s92
      %s94 = sphi 0, %s92
      %s95 = sphi 0, %s94
      %s109 = sphi 0, %s95
      %s113 = sphi 0, %s113
      %s115 = sphi 0, %s113
      %s116 = sphi 0, %s115
      %s130 = sphi 0, %s116
      %s134 = sphi 0, %s134
      %s136 = sphi 0, %s134
      %s137 = sphi 0, %s136
      %s151 = sphi 0, %s137
      %s155 = sphi 0, %s155
      %s157 = sphi 0, %s155
      %s158 = sphi 0, %s157
      %s172 = sphi 0, %s158
      %s178 = sphi 0, %s180
      %s181 = sphi 0, %s178
      %s182 = sphi 0, %s181
      %s198 = sphi 0, %s182
    $region4: #{handwriting_feature_extractor.7} parent=1 // loop_header_branch
      %19 = sbr.rel (%p17) target = $region8
    $region5: #{handwriting_feature_extractor.7} parent=1 // loop_body
      %s21 = ssub.s32 %s16, 1
      %s22 = ssub.s32 %s16, 2
      %s23 = sadd.s32 %s16, 1
      %s24 = ssub.s32 %s16, %s23
      %p25 = scmp.eq.s32.totalorder %s24, 0
      %s27 = sadd.s32 %s26, 1
      %s28 = scalar_select %p25, %s26, %s27
      %p31 = pneg %p25
      %p32 = scmp.eq.s32.totalorder %s16, 1
      %p33 = por %p31, %p32
      %p34 = scmp.ne.s32.totalorder %s26, %s29
      %p35 = scmp.eq.s32.totalorder %s16, 0
      %p36 = por %p34, %p35
      %p37 = scmp.ne.s32.totalorder %s26, %s29
      %p38 = scmp.eq.s32.totalorder %s21, 1
      %p39 = por %p37, %p38
      %p40 = scmp.ne.s32.totalorder %s29, %s30
      %p41 = scmp.eq.s32.totalorder %s21, 0
      %p42 = por %p40, %p41
      %p43 = scmp.ne.s32.totalorder %s29, %s30
      %p44 = scmp.eq.s32.totalorder %s22, 1
      %p45 = por %p43, %p44
      %p47 = scmp.ne.s32.totalorder %s30, %s46
      %p48 = scmp.eq.s32.totalorder %s22, 0
      %p49 = por %p47, %p48
      %s51 = sadd.s32 %s50, 1
      %p54 = scmp.eq.s32.totalorder %s16, 1
      %p55 = scmp.ne.s32.totalorder %s50, %s52
      %p56 = scmp.eq.s32.totalorder %s16, 0
      %p57 = por %p55, %p56
      %p58 = scmp.ne.s32.totalorder %s50, %s52
      %p59 = scmp.eq.s32.totalorder %s21, 1
      %p60 = por %p58, %p59
      %p61 = scmp.ne.s32.totalorder %s52, %s53
      %p62 = scmp.eq.s32.totalorder %s21, 0
      %p63 = por %p61, %p62
      %p64 = scmp.ne.s32.totalorder %s52, %s53
      %p65 = scmp.eq.s32.totalorder %s22, 1
      %p66 = por %p64, %p65
      %p68 = scmp.ne.s32.totalorder %s53, %s67
      %p69 = scmp.eq.s32.totalorder %s22, 0
      %p70 = por %p68, %p69
      %s72 = sadd.s32 %s71, 1
      %p75 = scmp.eq.s32.totalorder %s16, 1
      %p76 = scmp.ne.s32.totalorder %s71, %s73
      %p77 = scmp.eq.s32.totalorder %s16, 0
      %p78 = por %p76, %p77
      %p79 = scmp.ne.s32.totalorder %s71, %s73
      %p80 = scmp.eq.s32.totalorder %s21, 1
      %p81 = por %p79, %p80
      %p82 = scmp.ne.s32.totalorder %s73, %s74
      %p83 = scmp.eq.s32.totalorder %s21, 0
      %p84 = por %p82, %p83
      %p85 = scmp.ne.s32.totalorder %s73, %s74
      %p86 = scmp.eq.s32.totalorder %s22, 1
      %p87 = por %p85, %p86
      %p89 = scmp.ne.s32.totalorder %s74, %s88
      %p90 = scmp.eq.s32.totalorder %s22, 0
      %p91 = por %p89, %p90
      %s93 = sadd.s32 %s92, 1
      %p96 = scmp.eq.s32.totalorder %s16, 1
      %p97 = scmp.ne.s32.totalorder %s92, %s94
      %p98 = scmp.eq.s32.totalorder %s16, 0
      %p99 = por %p97, %p98
      %p100 = scmp.ne.s32.totalorder %s92, %s94
      %p101 = scmp.eq.s32.totalorder %s21, 1
      %p102 = por %p100, %p101
      %p103 = scmp.ne.s32.totalorder %s94, %s95
      %p104 = scmp.eq.s32.totalorder %s21, 0
      %p105 = por %p103, %p104
      %p106 = scmp.ne.s32.totalorder %s94, %s95
      %p107 = scmp.eq.s32.totalorder %s22, 1
      %p108 = por %p106, %p107
      %p110 = scmp.ne.s32.totalorder %s95, %s109
      %p111 = scmp.eq.s32.totalorder %s22, 0
      %p112 = por %p110, %p111
      %s114 = sadd.s32 %s113, 1
      %p117 = scmp.eq.s32.totalorder %s16, 1
      %p118 = scmp.ne.s32.totalorder %s113, %s115
      %p119 = scmp.eq.s32.totalorder %s16, 0
      %p120 = por %p118, %p119
      %p121 = scmp.ne.s32.totalorder %s113, %s115
      %p122 = scmp.eq.s32.totalorder %s21, 1
      %p123 = por %p121, %p122
      %p124 = scmp.ne.s32.totalorder %s115, %s116
      %p125 = scmp.eq.s32.totalorder %s21, 0
      %p126 = por %p124, %p125
      %p127 = scmp.ne.s32.totalorder %s115, %s116
      %p128 = scmp.eq.s32.totalorder %s22, 1
      %p129 = por %p127, %p128
      %p131 = scmp.ne.s32.totalorder %s116, %s130
      %p132 = scmp.eq.s32.totalorder %s22, 0
      %p133 = por %p131, %p132
      %s135 = sadd.s32 %s134, 1
      %p138 = scmp.eq.s32.totalorder %s16, 1
      %p139 = scmp.ne.s32.totalorder %s134, %s136
      %p140 = scmp.eq.s32.totalorder %s16, 0
      %p141 = por %p139, %p140
      %p142 = scmp.ne.s32.totalorder %s134, %s136
      %p143 = scmp.eq.s32.totalorder %s21, 1
      %p144 = por %p142, %p143
      %p145 = scmp.ne.s32.totalorder %s136, %s137
      %p146 = scmp.eq.s32.totalorder %s21, 0
      %p147 = por %p145, %p146
      %p148 = scmp.ne.s32.totalorder %s136, %s137
      %p149 = scmp.eq.s32.totalorder %s22, 1
      %p150 = por %p148, %p149
      %p152 = scmp.ne.s32.totalorder %s137, %s151
      %p153 = scmp.eq.s32.totalorder %s22, 0
      %p154 = por %p152, %p153
      %s156 = sadd.s32 %s155, 1
      %p159 = scmp.eq.s32.totalorder %s16, 1
      %p160 = scmp.ne.s32.totalorder %s155, %s157
      %p161 = scmp.eq.s32.totalorder %s16, 0
      %p162 = por %p160, %p161
      %p163 = scmp.ne.s32.totalorder %s155, %s157
      %p164 = scmp.eq.s32.totalorder %s21, 1
      %p165 = por %p163, %p164
      %p166 = scmp.ne.s32.totalorder %s157, %s158
      %p167 = scmp.eq.s32.totalorder %s21, 0
      %p168 = por %p166, %p167
      %p169 = scmp.ne.s32.totalorder %s157, %s158
      %p170 = scmp.eq.s32.totalorder %s22, 1
      %p171 = por %p169, %p170
      %p173 = scmp.ne.s32.totalorder %s158, %s172
      %p174 = scmp.eq.s32.totalorder %s22, 0
      %p175 = por %p173, %p174
      %s176 = ssub.s32 %s16, %s23
      %p177 = scmp.eq.s32.totalorder %s176, 0
      %s179 = sadd.s32 %s178, 1
      %s180 = scalar_select %p177, %s178, %s179
      %p183 = pneg %p177
      %p184 = scmp.eq.s32.totalorder %s16, 1
      %p185 = por %p183, %p184
      %p186 = scmp.ne.s32.totalorder %s178, %s181
      %p187 = scmp.eq.s32.totalorder %s16, 0
      %p188 = por %p186, %p187
      %p189 = scmp.ne.s32.totalorder %s178, %s181
      %p190 = scmp.eq.s32.totalorder %s21, 1
      %p191 = por %p189, %p190
      %p192 = scmp.ne.s32.totalorder %s181, %s182
      %p193 = scmp.eq.s32.totalorder %s21, 0
      %p194 = por %p192, %p193
      %p195 = scmp.ne.s32.totalorder %s181, %s182
      %p196 = scmp.eq.s32.totalorder %s22, 1
      %p197 = por %p195, %p196
      %p199 = scmp.ne.s32.totalorder %s182, %s198
      %p200 = scmp.eq.s32.totalorder %s22, 0
      %p201 = por %p199, %p200
      %p202 = scmp.le.s32.totalorder 1, %s16
      %p203 = scmp.lt.s32.totalorder %s16, 3
      %p204 = pnand %p202, %p203
      %p205 = pneg %p204
      // Predicated region
      $region9: #{handwriting_feature_extractor.7} parent=5 // pred_check
        _
      $region10: #{handwriting_feature_extractor.7} parent=5 // pred_check_branch
        %207 = sbr.rel (%p204) target = $region12
      $region11: #{handwriting_feature_extractor.7} parent=5 // pred_region
        %s208 = ssub.s32 %s16, 1
        // Predicated region
        $region13: #{handwriting_feature_extractor.7} parent=11 // pred_check
          %p209 = pneg %p63
        $region14: #{handwriting_feature_extractor.7} parent=11 // pred_check_branch
          %211 = sbr.rel (%p209) target = $region16
        $region15: #{handwriting_feature_extractor.7} parent=11 // pred_region
          _
        $region16: #{handwriting_feature_extractor.7} parent=11 // pred_fallthru
          _
        // Predicated region
        $region17: #{handwriting_feature_extractor.7} parent=11 // pred_check
          %p212 = pneg %p84
        $region18: #{handwriting_feature_extractor.7} parent=11 // pred_check_branch
          %214 = sbr.rel (%p212) target = $region20
        $region19: #{handwriting_feature_extractor.7} parent=11 // pred_region
          _
        $region20: #{handwriting_feature_extractor.7} parent=11 // pred_fallthru
          _
        // Predicated region
        $region21: #{handwriting_feature_extractor.7} parent=11 // pred_check
          %p215 = pneg %p105
        $region22: #{handwriting_feature_extractor.7} parent=11 // pred_check_branch
          %217 = sbr.rel (%p215) target = $region24
        $region23: #{handwriting_feature_extractor.7} parent=11 // pred_region
          _
        $region24: #{handwriting_feature_extractor.7} parent=11 // pred_fallthru
          _
        // Predicated region
        $region25: #{handwriting_feature_extractor.7} parent=11 // pred_check
          %p218 = pneg %p126
        $region26: #{handwriting_feature_extractor.7} parent=11 // pred_check_branch
          %220 = sbr.rel (%p218) target = $region28
        $region27: #{handwriting_feature_extractor.7} parent=11 // pred_region
          _
        $region28: #{handwriting_feature_extractor.7} parent=11 // pred_fallthru
          _
        // Predicated region
        $region29: #{handwriting_feature_extractor.7} parent=11 // pred_check
          %p221 = pneg %p147
        $region30: #{handwriting_feature_extractor.7} parent=11 // pred_check_branch
          %223 = sbr.rel (%p221) target = $region32
        $region31: #{handwriting_feature_extractor.7} parent=11 // pred_region
          _
        $region32: #{handwriting_feature_extractor.7} parent=11 // pred_fallthru
          _
        // Predicated region
        $region33: #{handwriting_feature_extractor.7} parent=11 // pred_check
          %p224 = pneg %p168
        $region34: #{handwriting_feature_extractor.7} parent=11 // pred_check_branch
          %226 = sbr.rel (%p224) target = $region36
        $region35: #{handwriting_feature_extractor.7} parent=11 // pred_region
          _
        $region36: #{handwriting_feature_extractor.7} parent=11 // pred_fallthru
          _
      $region12: #{handwriting_feature_extractor.7} parent=5 // pred_fallthru
        _
      %p227 = scmp.lt.s32.totalorder %s16, 2
      // Predicated region
      $region37: #{handwriting_feature_extractor.7} parent=5 // pred_check
        %p228 = pneg %p227
      $region38: #{handwriting_feature_extractor.7} parent=5 // pred_check_branch
        %230 = sbr.rel (%p228) target = $region40
      $region39: #{handwriting_feature_extractor.7} parent=5 // pred_region
        // Predicated region
        $region41: #{handwriting_feature_extractor.7} parent=39 // pred_check
          %p231 = pneg %p36
        $region42: #{handwriting_feature_extractor.7} parent=39 // pred_check_branch
          %233 = sbr.rel (%p231) target = $region44
        $region43: #{handwriting_feature_extractor.7} parent=39 // pred_region
          %p234 = scmp.lt.s32.totalorder %s16, 1
          %s235 = scalar_select %p234, %s16, 1
          %s236 = smul.addr %s235, 2
          %s237 = scalar_lea.vmem %s0, %s236
        $region44: #{handwriting_feature_extractor.7} parent=39 // pred_fallthru
          _
      $region40: #{handwriting_feature_extractor.7} parent=5 // pred_fallthru
        _
      %p238 = scmp.le.s32.totalorder 1, %s16
      %p239 = scmp.lt.s32.totalorder %s16, 3
      %p240 = pnand %p238, %p239
      %p241 = pneg %p240
      // Predicated region
      $region45: #{handwriting_feature_extractor.7} parent=5 // pred_check
        _
      $region46: #{handwriting_feature_extractor.7} parent=5 // pred_check_branch
        %243 = sbr.rel (%p240) target = $region48
      $region47: #{handwriting_feature_extractor.7} parent=5 // pred_region
        %s244 = ssub.s32 %s16, 1
        %p245 = scmp.lt.s32.totalorder %s21, 1
        %s246 = scalar_select %p245, %s21, 1
        %s247 = smul.addr %s246, 2
        %s248 = scalar_lea.vmem %s0, %s247
        %p249 = pneg %p42
        %p250 = pneg %p39
        %p251 = pneg %p63
        %p252 = pneg %p60
        %p253 = pneg %p84
        %p254 = pneg %p81
        %p255 = pneg %p105
        %p256 = pneg %p102
        %p257 = pneg %p126
        %p258 = pneg %p123
        %p259 = pneg %p147
        %p260 = pneg %p144
        %p261 = pneg %p168
        %p262 = pneg %p165
        %p263 = pneg %p194
        %p264 = pneg %p191
        %s265 = sand.u32 %s181, 1
        %s266 = scalar_lea.sflag [#allocation3], %s265
        %s267 = sand.u32 %s181, 1
        %s268 = scalar_lea.vmem [#allocation2], %s267
        %p269 = scmp.lt.s32.totalorder %s21, 1
        %s270 = scalar_select %p269, %s21, 1
        %s271 = smul.addr %s270, 2
        %s272 = scalar_lea.vmem %s0, %s271
        %v274 = vld [vmem:[%s272] sm:$0x3]
        %v275 = vld [vmem:[%s1] sm:$0xff]
        %v276 = vld [vmem:[%s1 + $0x8] sm:$0xf]
        %v277 = vld [vmem:[%s1 + $0xc] sm:$0xff]
        %v278 = vld [vmem:[%s1 + $0x14] sm:$0xf]
        %v279 = vld [vmem:[%s1 + $0x18] sm:$0xff]
        %v280 = vld [vmem:[%s1 + $0x20] sm:$0xf]
        %v281 = vld [vmem:[%s1 + $0x24] sm:$0xff]
        %v282 = vld [vmem:[%s1 + $0x2c] sm:$0xf]
        %v283 = vld [vmem:[%s1 + $0x30] sm:$0xff]
        %v284 = vld [vmem:[%s1 + $0x38] sm:$0xf]
        %v285 = vld [vmem:[%s1 + $0x3c] sm:$0xff]
        %v286 = vld [vmem:[%s1 + $0x44] sm:$0xf]
        %v287 = vld [vmem:[%s1 + $0x48] sm:$0xff]
        %v288 = vld [vmem:[%s1 + $0x50] sm:$0xf]
        %v289 = vld [vmem:[%s1 + $0x54] sm:$0xff]
        %v290 = vld [vmem:[%s1 + $0x5c] sm:$0xf]
        %v291 = vld [vmem:[%s1 + $0x60] sm:$0xff]
        %v292 = vld [vmem:[%s1 + $0x68] sm:$0xf]
        %v293 = vld [vmem:[%s1 + $0x6c] sm:$0xff]
        %v294 = vld [vmem:[%s1 + $0x74] sm:$0xf]
        %v295 = vld [vmem:[%s1 + $0x78] sm:$0xff]
        %v296 = vld [vmem:[%s1 + $0x80] sm:$0xf]
        %v297 = vld [vmem:[%s1 + $0x84] sm:$0xff]
        %v298 = vld [vmem:[%s1 + $0x8c] sm:$0xf]
        %v299 = vld [vmem:[%s1 + $0x90] sm:$0xff]
        %v300 = vld [vmem:[%s1 + $0x98] sm:$0xf]
        %v301 = vld [vmem:[%s1 + $0x9c] sm:$0xff]
        %v302 = vld [vmem:[%s1 + $0xa4] sm:$0xf]
        %v303 = vld [vmem:[%s1 + $0xa8] sm:$0xff]
        %v304 = vld [vmem:[%s1 + $0xb0] sm:$0xf]
        %v305 = vld [vmem:[%s1 + $0xb4] sm:$0xff]
        %v306 = vld [vmem:[%s1 + $0xbc] sm:$0xf]
        %v307 = vld [vmem:[%s2] sm:$0x7]
        %v309 = vlaneseq
        %v310 = vshrl.u32 %v309, 7
        %v311 = vsub.s32 0, %v310
        %v312 = vrot.slane %v307, %v311
        %v313 = vlaneseq
        %v314 = vshrl.u32 %v313, 7
        %v315 = vsub.s32 1, %v314
        %v316 = vrot.slane %v307, %v315
        %v317 = vlaneseq
        %v318 = vshrl.u32 %v317, 7
        %v319 = vsub.s32 2, %v318
        %v320 = vrot.slane %v307, %v319
        %v356 = vunpack.c.l.b16 %v275
        %v357 = vunpack.c.h.b16 %v275
        %v358 = vunpack.c.l.b16 %v276
        %v359 = vunpack.c.l.b16 %v277
        %v360 = vunpack.c.h.b16 %v277
        %v361 = vunpack.c.l.b16 %v278
        %v362 = vunpack.c.l.b16 %v279
        %v363 = vunpack.c.h.b16 %v279
        %v364 = vunpack.c.l.b16 %v280
        %v365 = vunpack.c.l.b16 %v281
        %v366 = vunpack.c.h.b16 %v281
        %v367 = vunpack.c.l.b16 %v282
        %v368 = vunpack.c.l.b16 %v283
        %v369 = vunpack.c.h.b16 %v283
        %v370 = vunpack.c.l.b16 %v284
        %v371 = vunpack.c.l.b16 %v285
        %v372 = vunpack.c.h.b16 %v285
        %v373 = vunpack.c.l.b16 %v286
        %v374 = vunpack.c.l.b16 %v287
        %v375 = vunpack.c.h.b16 %v287
        %v376 = vunpack.c.l.b16 %v288
        %v377 = vunpack.c.l.b16 %v289
        %v378 = vunpack.c.h.b16 %v289
        %v379 = vunpack.c.l.b16 %v290
        %v380 = vunpack.c.l.b16 %v291
        %v381 = vunpack.c.h.b16 %v291
        %v382 = vunpack.c.l.b16 %v292
        %v383 = vunpack.c.l.b16 %v293
        %v384 = vunpack.c.h.b16 %v293
        %v385 = vunpack.c.l.b16 %v294
        %v386 = vunpack.c.l.b16 %v295
        %v387 = vunpack.c.h.b16 %v295
        %v388 = vunpack.c.l.b16 %v296
        %v389 = vunpack.c.l.b16 %v297
        %v390 = vunpack.c.h.b16 %v297
        %v391 = vunpack.c.l.b16 %v298
        %v392 = vunpack.c.l.b16 %v299
        %v393 = vunpack.c.h.b16 %v299
        %v394 = vunpack.c.l.b16 %v300
        %v395 = vunpack.c.l.b16 %v301
        %v396 = vunpack.c.h.b16 %v301
        %v397 = vunpack.c.l.b16 %v302
        %v398 = vunpack.c.l.b16 %v303
        %v399 = vunpack.c.h.b16 %v303
        %v400 = vunpack.c.l.b16 %v304
        %v401 = vunpack.c.l.b16 %v305
        %v402 = vunpack.c.h.b16 %v305
        %v403 = vunpack.c.l.b16 %v306
        %v404 = vpack.c.b16 %v359, %v356
        %v405 = vpack.c.b16 %v360, %v357
        %v406 = vpack.c.b16 %v361, %v358
        %v407 = vpack.c.b16 %v365, %v362
        %v408 = vpack.c.b16 %v366, %v363
        %v409 = vpack.c.b16 %v367, %v364
        %v410 = vpack.c.b16 %v371, %v368
        %v411 = vpack.c.b16 %v372, %v369
        %v412 = vpack.c.b16 %v373, %v370
        %v413 = vpack.c.b16 %v377, %v374
        %v414 = vpack.c.b16 %v378, %v375
        %v415 = vpack.c.b16 %v379, %v376
        %v416 = vpack.c.b16 %v383, %v380
        %v417 = vpack.c.b16 %v384, %v381
        %v418 = vpack.c.b16 %v385, %v382
        %v419 = vpack.c.b16 %v389, %v386
        %v420 = vpack.c.b16 %v390, %v387
        %v421 = vpack.c.b16 %v391, %v388
        %v422 = vpack.c.b16 %v395, %v392
        %v423 = vpack.c.b16 %v396, %v393
        %v424 = vpack.c.b16 %v397, %v394
        %v425 = vpack.c.b16 %v401, %v398
        %v426 = vpack.c.b16 %v402, %v399
        %v427 = vpack.c.b16 %v403, %v400
        %452 = vmatprep.subr.bf16.mxu0 %v405
        %453 = vmatpush1.bf16.msra.mxu0 %v404
        %454 = vmatprep.subr.bf16.mxu0 %v408
        %455 = vmatpush1.bf16.msra.mxu0 %v407
        %456 = vmatprep.subr.bf16.mxu0 %v411
        %457 = vmatpush1.bf16.msra.mxu0 %v410
        %458 = vmatprep.subr.bf16.mxu0 %v414
        %459 = vmatpush1.bf16.msra.mxu0 %v413
        %460 = vmatprep.subr.bf16.mxu0 %v417
        %461 = vmatpush1.bf16.msra.mxu0 %v416
        %462 = vmatprep.subr.bf16.mxu0 %v420
        %463 = vmatpush1.bf16.msra.mxu0 %v419
        %464 = vmatprep.subr.bf16.mxu0 %v423
        %465 = vmatpush1.bf16.msra.mxu0 %v422
        %466 = vmatprep.subr.bf16.mxu0 %v426
        %467 = vmatpush1.bf16.msra.mxu0 %v425
        %468 = vmatprep.subr.bf16.mxu0 0
        %469 = vmatpush1.bf16.msra.mxu0 0
        %470 = vmatprep.subr.bf16.mxu0 0
        %471 = vmatpush1.bf16.msra.mxu0 0
        %472 = vmatprep.subr.bf16.mxu0 0
        %473 = vmatpush1.bf16.msra.mxu0 0
        %474 = vmatprep.subr.bf16.mxu0 0
        %475 = vmatpush1.bf16.msra.mxu0 0
        %476 = vmatprep.subr.bf16.mxu0 0
        %477 = vmatpush1.bf16.msra.mxu0 0
        %478 = vmatprep.subr.bf16.mxu0 0
        %479 = vmatpush1.bf16.msra.mxu0 0
        %480 = vmatprep.subr.bf16.mxu0 0
        %481 = vmatpush1.bf16.msra.mxu0 0
        %482 = vmatprep.subr.bf16.mxu0 0
        %483 = vmatpush1.bf16.msra.mxu0 0
        %484 = vmatprep.mubr.bf16.mxu0 0
        %485 = vmatmul.mubr.bf16.gmra.mrb[0].mxu0 %v274
        %v486 = vpop.f32.mrb[0].mxu0
        %v487 = vadd.f32 %v312, %v486
        %v488 = vpop.f32.mrb[0].mxu0
        %v489 = vadd.f32 %v316, %v488
        %v490 = vpop.f32.mrb[0].mxu0
        %v491 = vpop.f32.mrb[0].mxu0
        %492 = vdwg.mxu0
        %493 = vmatprep.subr.bf16.mxu0 0
        %494 = vmatpush1.bf16.msra.mxu0 %v406
        %495 = vmatprep.subr.bf16.mxu0 0
        %496 = vmatpush1.bf16.msra.mxu0 %v409
        %497 = vmatprep.subr.bf16.mxu0 0
        %498 = vmatpush1.bf16.msra.mxu0 %v412
        %499 = vmatprep.subr.bf16.mxu0 0
        %500 = vmatpush1.bf16.msra.mxu0 %v415
        %501 = vmatprep.subr.bf16.mxu0 0
        %502 = vmatpush1.bf16.msra.mxu0 %v418
        %503 = vmatprep.subr.bf16.mxu0 0
        %504 = vmatpush1.bf16.msra.mxu0 %v421
        %505 = vmatprep.subr.bf16.mxu0 0
        %506 = vmatpush1.bf16.msra.mxu0 %v424
        %507 = vmatprep.subr.bf16.mxu0 0
        %508 = vmatpush1.bf16.msra.mxu0 %v427
        %509 = vmatprep.subr.bf16.mxu0 0
        %510 = vmatpush1.bf16.msra.mxu0 0
        %511 = vmatprep.subr.bf16.mxu0 0
        %512 = vmatpush1.bf16.msra.mxu0 0
        %513 = vmatprep.subr.bf16.mxu0 0
        %514 = vmatpush1.bf16.msra.mxu0 0
        %515 = vmatprep.subr.bf16.mxu0 0
        %516 = vmatpush1.bf16.msra.mxu0 0
        %517 = vmatprep.subr.bf16.mxu0 0
        %518 = vmatpush1.bf16.msra.mxu0 0
        %519 = vmatprep.subr.bf16.mxu0 0
        %520 = vmatpush1.bf16.msra.mxu0 0
        %521 = vmatprep.subr.bf16.mxu0 0
        %522 = vmatpush1.bf16.msra.mxu0 0
        %523 = vmatprep.subr.bf16.mxu0 0
        %524 = vmatpush1.bf16.msra.mxu0 0
        %525 = vmatprep.mubr.bf16.mxu0 0
        %526 = vmatmul.mubr.bf16.gmra.mrb[0].mxu0 %v274
        %v527 = vpop.f32.mrb[0].mxu0
        %v528 = vadd.f32 %v320, %v527
        %v529 = vpop.f32.mrb[0].mxu0
        %v530 = vpop.f32.mrb[0].mxu0
        %v531 = vpop.f32.mrb[0].mxu0
        %532 = vdwg.mxu0
        %vm533 = vcmask 130048
        %v535 = vsel %vm533, %v487, 0
        %v538 = vsel %vm533, %v489, 0
        %540 = vmatprep.subr.mxu0 0.0
        %541 = vmatpush1.xpose.msra.mxu0 %v538
        %542 = vmatprep.subr.mxu0 0.0
        %543 = vmatpush1.xpose.msra.mxu0 0.0
        %544 = vmatprep.subr.mxu0 0.0
        %545 = vmatpush1.xpose.msra.mxu0 0.0
        %546 = vmatprep.subr.mxu0 0.0
        %547 = vmatpush1.xpose.msra.mxu0 0.0
        %548 = vmatprep.subr.mxu0 0.0
        %549 = vmatpush1.xpose.msra.mxu0 0.0
        %550 = vmatprep.subr.mxu0 0.0
        %551 = vmatpush1.xpose.msra.mxu0 0.0
        %552 = vmatprep.subr.mxu0 0.0
        %553 = vmatpush1.xpose.msra.mxu0 0.0
        %554 = vmatprep.subr.mxu0 0.0
        %555 = vmatpush1.xpose.msra.mxu0 0.0
        %556 = vmatprep.subr.mxu0 0.0
        %557 = vmatpush1.xpose.msra.mxu0 0.0
        %558 = vmatprep.subr.mxu0 0.0
        %559 = vmatpush1.xpose.msra.mxu0 0.0
        %560 = vmatprep.subr.mxu0 0.0
        %561 = vmatpush1.xpose.msra.mxu0 0.0
        %562 = vmatprep.subr.mxu0 0.0
        %563 = vmatpush1.xpose.msra.mxu0 0.0
        %564 = vmatprep.subr.mxu0 0.0
        %565 = vmatpush1.xpose.msra.mxu0 0.0
        %566 = vmatprep.subr.mxu0 0.0
        %567 = vmatpush1.xpose.msra.mxu0 0.0
        %568 = vmatprep.subr.mxu0 0.0
        %569 = vmatpush1.xpose.msra.mxu0 0.0
        %570 = vmatprep.subr.mxu0 0.0
        %571 = vmatpush1.xpose.msra.mxu0 0.0
        %572 = vmatprep.subr.mxu0 0.0
        %573 = vmatpush1.xpose.msra.mxu0 0.0
        %574 = vmatprep.subr.mxu0 0.0
        %575 = vmatpush1.xpose.msra.mxu0 0.0
        %576 = vmatprep.subr.mxu0 0.0
        %577 = vmatpush1.xpose.msra.mxu0 0.0
        %578 = vmatprep.subr.mxu0 0.0
        %579 = vmatpush1.xpose.msra.mxu0 0.0
        %580 = vmatprep.subr.mxu0 0.0
        %581 = vmatpush1.xpose.msra.mxu0 0.0
        %582 = vmatprep.subr.mxu0 0.0
        %583 = vmatpush1.xpose.msra.mxu0 0.0
        %584 = vmatprep.subr.mxu0 0.0
        %585 = vmatpush1.xpose.msra.mxu0 0.0
        %586 = vmatprep.subr.mxu0 0.0
        %587 = vmatpush1.xpose.msra.mxu0 0.0
        %588 = vmatprep.subr.mxu0 0.0
        %589 = vmatpush1.xpose.msra.mxu0 0.0
        %590 = vmatprep.subr.mxu0 0.0
        %591 = vmatpush1.xpose.msra.mxu0 0.0
        %592 = vmatprep.subr.mxu0 0.0
        %593 = vmatpush1.xpose.msra.mxu0 0.0
        %594 = vmatprep.subr.mxu0 0.0
        %595 = vmatpush1.xpose.msra.mxu0 0.0
        %596 = vmatprep.subr.mxu0 0.0
        %597 = vmatpush1.xpose.msra.mxu0 0.0
        %598 = vmatprep.subr.mxu0 0.0
        %599 = vmatpush1.xpose.msra.mxu0 0.0
        %600 = vmatprep.subr.mxu0 0.0
        %601 = vmatpush1.xpose.msra.mxu0 0.0
        %602 = vmatprep.subr.mxu0 0.0
        %603 = vmatpush1.xpose.msra.mxu0 0.0
        %604 = vmatprep.mubr.f32.mxu0 0.0
        %605 = vmatmul.mubr.f32.gmra.mrb[0].mxu0 %v535
        %v606 = vpop.f32.mrb[0].mxu0
        %v607 = vadd.f32 0.0, %v606
        %v608 = vpop.f32.mrb[0].mxu0
        %609 = vdwg.mxu0
        %vm610 = vcmask 27648
        %v611 = vsel %vm610, %v607, -inf
        %612 = vmax.xlane.f32.xlu0 %v611
        %v613 = vpop.xlane.xlu0 %612
        %v614 = vsub.f32 %v607, %v613
        %v615 = vmul.f32 %v614, 1.442695
        %v616 = vpow.pop %v615
        %v617 = vsel %vm610, %v616, 0.0
        %618 = vadd.xlane.f32.xlu0 %v617
        %v619 = vpop.xlane.xlu0 %618
        %v620 = vrcp.pop %v619
        %v621 = vmul.f32 %v616, %v620
        %vm622 = vcmask 31744
        %v624 = vsel %vm622, %v621, 0
        %vm626 = vcmask 1043456
        %v628 = vsel %vm626, %v528, 0
        %630 = vmatprep.subr.mxu0 0.0
        %631 = vmatpush1.msra.mxu0 %v628
        %632 = vmatprep.subr.mxu0 0.0
        %633 = vmatpush1.msra.mxu0 0.0
        %634 = vmatprep.subr.mxu0 0.0
        %635 = vmatpush1.msra.mxu0 0.0
        %636 = vmatprep.subr.mxu0 0.0
        %637 = vmatpush1.msra.mxu0 0.0
        %638 = vmatprep.subr.mxu0 0.0
        %639 = vmatpush1.msra.mxu0 0.0
        %640 = vmatprep.subr.mxu0 0.0
        %641 = vmatpush1.msra.mxu0 0.0
        %642 = vmatprep.subr.mxu0 0.0
        %643 = vmatpush1.msra.mxu0 0.0
        %644 = vmatprep.subr.mxu0 0.0
        %645 = vmatpush1.msra.mxu0 0.0
        %646 = vmatprep.subr.mxu0 0.0
        %647 = vmatpush1.msra.mxu0 0.0
        %648 = vmatprep.subr.mxu0 0.0
        %649 = vmatpush1.msra.mxu0 0.0
        %650 = vmatprep.subr.mxu0 0.0
        %651 = vmatpush1.msra.mxu0 0.0
        %652 = vmatprep.subr.mxu0 0.0
        %653 = vmatpush1.msra.mxu0 0.0
        %654 = vmatprep.subr.mxu0 0.0
        %655 = vmatpush1.msra.mxu0 0.0
        %656 = vmatprep.subr.mxu0 0.0
        %657 = vmatpush1.msra.mxu0 0.0
        %658 = vmatprep.subr.mxu0 0.0
        %659 = vmatpush1.msra.mxu0 0.0
        %660 = vmatprep.subr.mxu0 0.0
        %661 = vmatpush1.msra.mxu0 0.0
        %662 = vmatprep.subr.mxu0 0.0
        %663 = vmatpush1.msra.mxu0 0.0
        %664 = vmatprep.subr.mxu0 0.0
        %665 = vmatpush1.msra.mxu0 0.0
        %666 = vmatprep.subr.mxu0 0.0
        %667 = vmatpush1.msra.mxu0 0.0
        %668 = vmatprep.subr.mxu0 0.0
        %669 = vmatpush1.msra.mxu0 0.0
        %670 = vmatprep.subr.mxu0 0.0
        %671 = vmatpush1.msra.mxu0 0.0
        %672 = vmatprep.subr.mxu0 0.0
        %673 = vmatpush1.msra.mxu0 0.0
        %674 = vmatprep.subr.mxu0 0.0
        %675 = vmatpush1.msra.mxu0 0.0
        %676 = vmatprep.subr.mxu0 0.0
        %677 = vmatpush1.msra.mxu0 0.0
        %678 = vmatprep.subr.mxu0 0.0
        %679 = vmatpush1.msra.mxu0 0.0
        %680 = vmatprep.subr.mxu0 0.0
        %681 = vmatpush1.msra.mxu0 0.0
        %682 = vmatprep.subr.mxu0 0.0
        %683 = vmatpush1.msra.mxu0 0.0
        %684 = vmatprep.subr.mxu0 0.0
        %685 = vmatpush1.msra.mxu0 0.0
        %686 = vmatprep.subr.mxu0 0.0
        %687 = vmatpush1.msra.mxu0 0.0
        %688 = vmatprep.subr.mxu0 0.0
        %689 = vmatpush1.msra.mxu0 0.0
        %690 = vmatprep.subr.mxu0 0.0
        %691 = vmatpush1.msra.mxu0 0.0
        %692 = vmatprep.subr.mxu0 0.0
        %693 = vmatpush1.msra.mxu0 0.0
        %694 = vmatprep.mubr.f32.mxu0 0.0
        %695 = vmatmul.mubr.f32.gmra.mrb[0].mxu0 %v624
        %v696 = vpop.f32.mrb[0].mxu0
        %v697 = vadd.f32 0.0, %v696
        %v698 = vpop.f32.mrb[0].mxu0
        %699 = vdwg.mxu0
        %vm700 = vcmask 125952
        %v701 = vsel %vm700, %v697, 0.0
        %v702 = vrot.slane %v701, 4
        %v703 = vadd.f32 %v701, %v702
        %v704 = vrot.slane %v703, 2
        %v705 = vadd.f32 %v703, %v704
        %v706 = vrot.slane %v705, 1
        %v707 = vadd.f32 %v705, %v706
        %v708 = vrcp.pop 4.0
        %v709 = vmul.f32 %v707, %v708
        %v710 = vld [vmem:[%s3] sm:$0xf]
        %v711 = vld [vmem:[%s3 + $0x4] sm:$0xf]
        %712 = vrot.lane.b32.xlu0 %v487, 112
        %v713 = vpop.permute.xlu0 %712
        %714 = vrot.lane.b32.xlu0 %v489, 112
        %v715 = vpop.permute.xlu0 %714
        %v716 = vsel %vm533, %v713, 0
        %v718 = vsel %vm533, %v715, 0
        %720 = vmatprep.subr.mxu0 0.0
        %721 = vmatpush1.xpose.msra.mxu0 %v718
        %722 = vmatprep.subr.mxu0 0.0
        %723 = vmatpush1.xpose.msra.mxu0 0.0
        %724 = vmatprep.subr.mxu0 0.0
        %725 = vmatpush1.xpose.msra.mxu0 0.0
        %726 = vmatprep.subr.mxu0 0.0
        %727 = vmatpush1.xpose.msra.mxu0 0.0
        %728 = vmatprep.subr.mxu0 0.0
        %729 = vmatpush1.xpose.msra.mxu0 0.0
        %730 = vmatprep.subr.mxu0 0.0
        %731 = vmatpush1.xpose.msra.mxu0 0.0
        %732 = vmatprep.subr.mxu0 0.0
        %733 = vmatpush1.xpose.msra.mxu0 0.0
        %734 = vmatprep.subr.mxu0 0.0
        %735 = vmatpush1.xpose.msra.mxu0 0.0
        %736 = vmatprep.subr.mxu0 0.0
        %737 = vmatpush1.xpose.msra.mxu0 0.0
        %738 = vmatprep.subr.mxu0 0.0
        %739 = vmatpush1.xpose.msra.mxu0 0.0
        %740 = vmatprep.subr.mxu0 0.0
        %741 = vmatpush1.xpose.msra.mxu0 0.0
        %742 = vmatprep.subr.mxu0 0.0
        %743 = vmatpush1.xpose.msra.mxu0 0.0
        %744 = vmatprep.subr.mxu0 0.0
        %745 = vmatpush1.xpose.msra.mxu0 0.0
        %746 = vmatprep.subr.mxu0 0.0
        %747 = vmatpush1.xpose.msra.mxu0 0.0
        %748 = vmatprep.subr.mxu0 0.0
        %749 = vmatpush1.xpose.msra.mxu0 0.0
        %750 = vmatprep.subr.mxu0 0.0
        %751 = vmatpush1.xpose.msra.mxu0 0.0
        %752 = vmatprep.subr.mxu0 0.0
        %753 = vmatpush1.xpose.msra.mxu0 0.0
        %754 = vmatprep.subr.mxu0 0.0
        %755 = vmatpush1.xpose.msra.mxu0 0.0
        %756 = vmatprep.subr.mxu0 0.0
        %757 = vmatpush1.xpose.msra.mxu0 0.0
        %758 = vmatprep.subr.mxu0 0.0
        %759 = vmatpush1.xpose.msra.mxu0 0.0
        %760 = vmatprep.subr.mxu0 0.0
        %761 = vmatpush1.xpose.msra.mxu0 0.0
        %762 = vmatprep.subr.mxu0 0.0
        %763 = vmatpush1.xpose.msra.mxu0 0.0
        %764 = vmatprep.subr.mxu0 0.0
        %765 = vmatpush1.xpose.msra.mxu0 0.0
        %766 = vmatprep.subr.mxu0 0.0
        %767 = vmatpush1.xpose.msra.mxu0 0.0
        %768 = vmatprep.subr.mxu0 0.0
        %769 = vmatpush1.xpose.msra.mxu0 0.0
        %770 = vmatprep.subr.mxu0 0.0
        %771 = vmatpush1.xpose.msra.mxu0 0.0
        %772 = vmatprep.subr.mxu0 0.0
        %773 = vmatpush1.xpose.msra.mxu0 0.0
        %774 = vmatprep.subr.mxu0 0.0
        %775 = vmatpush1.xpose.msra.mxu0 0.0
        %776 = vmatprep.subr.mxu0 0.0
        %777 = vmatpush1.xpose.msra.mxu0 0.0
        %778 = vmatprep.subr.mxu0 0.0
        %779 = vmatpush1.xpose.msra.mxu0 0.0
        %780 = vmatprep.subr.mxu0 0.0
        %781 = vmatpush1.xpose.msra.mxu0 0.0
        %782 = vmatprep.subr.mxu0 0.0
        %783 = vmatpush1.xpose.msra.mxu0 0.0
        %784 = vmatprep.mubr.f32.mxu0 0.0
        %785 = vmatmul.mubr.f32.gmra.mrb[0].mxu0 %v716
        %v786 = vpop.f32.mrb[0].mxu0
        %v787 = vadd.f32 0.0, %v786
        %v788 = vpop.f32.mrb[0].mxu0
        %789 = vdwg.mxu0
        %v790 = vsel %vm610, %v787, -inf
        %791 = vmax.xlane.f32.xlu0 %v790
        %v792 = vpop.xlane.xlu0 %791
        %v793 = vsub.f32 %v787, %v792
        %v794 = vmul.f32 %v793, 1.442695
        %v795 = vpow.pop %v794
        %v796 = vsel %vm610, %v795, 0.0
        %797 = vadd.xlane.f32.xlu0 %v796
        %v798 = vpop.xlane.xlu0 %797
        %v799 = vrcp.pop %v798
        %v800 = vmul.f32 %v795, %v799
        %801 = vrot.lane.b32.xlu0 %v528, 112
        %v802 = vpop.permute.xlu0 %801
        %v804 = vsel %vm622, %v800, 0
        %v806 = vsel %vm626, %v802, 0
        %808 = vmatprep.subr.mxu0 0.0
        %809 = vmatpush1.msra.mxu0 %v806
        %810 = vmatprep.subr.mxu0 0.0
        %811 = vmatpush1.msra.mxu0 0.0
        %812 = vmatprep.subr.mxu0 0.0
        %813 = vmatpush1.msra.mxu0 0.0
        %814 = vmatprep.subr.mxu0 0.0
        %815 = vmatpush1.msra.mxu0 0.0
        %816 = vmatprep.subr.mxu0 0.0
        %817 = vmatpush1.msra.mxu0 0.0
        %818 = vmatprep.subr.mxu0 0.0
        %819 = vmatpush1.msra.mxu0 0.0
        %820 = vmatprep.subr.mxu0 0.0
        %821 = vmatpush1.msra.mxu0 0.0
        %822 = vmatprep.subr.mxu0 0.0
        %823 = vmatpush1.msra.mxu0 0.0
        %824 = vmatprep.subr.mxu0 0.0
        %825 = vmatpush1.msra.mxu0 0.0
        %826 = vmatprep.subr.mxu0 0.0
        %827 = vmatpush1.msra.mxu0 0.0
        %828 = vmatprep.subr.mxu0 0.0
        %829 = vmatpush1.msra.mxu0 0.0
        %830 = vmatprep.subr.mxu0 0.0
        %831 = vmatpush1.msra.mxu0 0.0
        %832 = vmatprep.subr.mxu0 0.0
        %833 = vmatpush1.msra.mxu0 0.0
        %834 = vmatprep.subr.mxu0 0.0
        %835 = vmatpush1.msra.mxu0 0.0
        %836 = vmatprep.subr.mxu0 0.0
        %837 = vmatpush1.msra.mxu0 0.0
        %838 = vmatprep.subr.mxu0 0.0
        %839 = vmatpush1.msra.mxu0 0.0
        %840 = vmatprep.subr.mxu0 0.0
        %841 = vmatpush1.msra.mxu0 0.0
        %842 = vmatprep.subr.mxu0 0.0
        %843 = vmatpush1.msra.mxu0 0.0
        %844 = vmatprep.subr.mxu0 0.0
        %845 = vmatpush1.msra.mxu0 0.0
        %846 = vmatprep.subr.mxu0 0.0
        %847 = vmatpush1.msra.mxu0 0.0
        %848 = vmatprep.subr.mxu0 0.0
        %849 = vmatpush1.msra.mxu0 0.0
        %850 = vmatprep.subr.mxu0 0.0
        %851 = vmatpush1.msra.mxu0 0.0
        %852 = vmatprep.subr.mxu0 0.0
        %853 = vmatpush1.msra.mxu0 0.0
        %854 = vmatprep.subr.mxu0 0.0
        %855 = vmatpush1.msra.mxu0 0.0
        %856 = vmatprep.subr.mxu0 0.0
        %857 = vmatpush1.msra.mxu0 0.0
        %858 = vmatprep.subr.mxu0 0.0
        %859 = vmatpush1.msra.mxu0 0.0
        %860 = vmatprep.subr.mxu0 0.0
        %861 = vmatpush1.msra.mxu0 0.0
        %862 = vmatprep.subr.mxu0 0.0
        %863 = vmatpush1.msra.mxu0 0.0
        %864 = vmatprep.subr.mxu0 0.0
        %865 = vmatpush1.msra.mxu0 0.0
        %866 = vmatprep.subr.mxu0 0.0
        %867 = vmatpush1.msra.mxu0 0.0
        %868 = vmatprep.subr.mxu0 0.0
        %869 = vmatpush1.msra.mxu0 0.0
        %870 = vmatprep.subr.mxu0 0.0
        %871 = vmatpush1.msra.mxu0 0.0
        %872 = vmatprep.mubr.f32.mxu0 0.0
        %873 = vmatmul.mubr.f32.gmra.mrb[0].mxu0 %v804
        %v874 = vpop.f32.mrb[0].mxu0
        %v875 = vadd.f32 0.0, %v874
        %v876 = vpop.f32.mrb[0].mxu0
        %877 = vdwg.mxu0
        %v878 = vsel %vm700, %v875, 0.0
        %v879 = vrot.slane %v878, 4
        %v880 = vadd.f32 %v878, %v879
        %v881 = vrot.slane %v880, 2
        %v882 = vadd.f32 %v880, %v881
        %v883 = vrot.slane %v882, 1
        %v884 = vadd.f32 %v882, %v883
        %v885 = vmul.f32 %v884, %v708
        %v886 = vld [vmem:[%s3 + $0x8] sm:$0xf]
        %v887 = vld [vmem:[%s3 + $0xc] sm:$0xf]
        %v890 = vunpack.c.l.b16 %v886
        %v891 = vunpack.c.l.b16 %v887
        %v892 = vpack.c.b16 %v891, %v890
        %v895 = vsel %vm533, %v885, 0
        %897 = vmatprep.subr.bf16.mxu0 0
        %898 = vmatpush1.bf16.msra.mxu0 %v892
        %899 = vmatprep.subr.bf16.mxu0 0
        %900 = vmatpush1.bf16.msra.mxu0 0
        %901 = vmatprep.subr.bf16.mxu0 0
        %902 = vmatpush1.bf16.msra.mxu0 0
        %903 = vmatprep.subr.bf16.mxu0 0
        %904 = vmatpush1.bf16.msra.mxu0 0
        %905 = vmatprep.subr.bf16.mxu0 0
        %906 = vmatpush1.bf16.msra.mxu0 0
        %907 = vmatprep.subr.bf16.mxu0 0
        %908 = vmatpush1.bf16.msra.mxu0 0
        %909 = vmatprep.subr.bf16.mxu0 0
        %910 = vmatpush1.bf16.msra.mxu0 0
        %911 = vmatprep.subr.bf16.mxu0 0
        %912 = vmatpush1.bf16.msra.mxu0 0
        %913 = vmatprep.subr.bf16.mxu0 0
        %914 = vmatpush1.bf16.msra.mxu0 0
        %915 = vmatprep.subr.bf16.mxu0 0
        %916 = vmatpush1.bf16.msra.mxu0 0
        %917 = vmatprep.subr.bf16.mxu0 0
        %918 = vmatpush1.bf16.msra.mxu0 0
        %919 = vmatprep.subr.bf16.mxu0 0
        %920 = vmatpush1.bf16.msra.mxu0 0
        %921 = vmatprep.subr.bf16.mxu0 0
        %922 = vmatpush1.bf16.msra.mxu0 0
        %923 = vmatprep.subr.bf16.mxu0 0
        %924 = vmatpush1.bf16.msra.mxu0 0
        %925 = vmatprep.subr.bf16.mxu0 0
        %926 = vmatpush1.bf16.msra.mxu0 0
        %927 = vmatprep.subr.bf16.mxu0 0
        %928 = vmatpush1.bf16.msra.mxu0 0
        %929 = vmatprep.mubr.f32.mxu0 0.0
        %930 = vmatmul.mubr.f32.gmra.mrb[0].mxu0 %v895
        %v931 = vpop.f32.mrb[0].mxu0
        %v932 = vadd.f32 0.0, %v931
        %v933 = vpop.f32.mrb[0].mxu0
        %934 = vdwg.mxu0
        %v937 = vunpack.c.l.b16 %v710
        %v938 = vunpack.c.l.b16 %v711
        %v939 = vpack.c.b16 %v938, %v937
        %v942 = vsel %vm533, %v709, 0
        %944 = vmatprep.subr.bf16.mxu0 0
        %945 = vmatpush1.bf16.msra.mxu0 %v939
        %946 = vmatprep.subr.bf16.mxu0 0
        %947 = vmatpush1.bf16.msra.mxu0 0
        %948 = vmatprep.subr.bf16.mxu0 0
        %949 = vmatpush1.bf16.msra.mxu0 0
        %950 = vmatprep.subr.bf16.mxu0 0
        %951 = vmatpush1.bf16.msra.mxu0 0
        %952 = vmatprep.subr.bf16.mxu0 0
        %953 = vmatpush1.bf16.msra.mxu0 0
        %954 = vmatprep.subr.bf16.mxu0 0
        %955 = vmatpush1.bf16.msra.mxu0 0
        %956 = vmatprep.subr.bf16.mxu0 0
        %957 = vmatpush1.bf16.msra.mxu0 0
        %958 = vmatprep.subr.bf16.mxu0 0
        %959 = vmatpush1.bf16.msra.mxu0 0
        %960 = vmatprep.subr.bf16.mxu0 0
        %961 = vmatpush1.bf16.msra.mxu0 0
        %962 = vmatprep.subr.bf16.mxu0 0
        %963 = vmatpush1.bf16.msra.mxu0 0
        %964 = vmatprep.subr.bf16.mxu0 0
        %965 = vmatpush1.bf16.msra.mxu0 0
        %966 = vmatprep.subr.bf16.mxu0 0
        %967 = vmatpush1.bf16.msra.mxu0 0
        %968 = vmatprep.subr.bf16.mxu0 0
        %969 = vmatpush1.bf16.msra.mxu0 0
        %970 = vmatprep.subr.bf16.mxu0 0
        %971 = vmatpush1.bf16.msra.mxu0 0
        %972 = vmatprep.subr.bf16.mxu0 0
        %973 = vmatpush1.bf16.msra.mxu0 0
        %974 = vmatprep.subr.bf16.mxu0 0
        %975 = vmatpush1.bf16.msra.mxu0 0
        %976 = vmatprep.mubr.f32.mxu0 0.0
        %977 = vmatmul.mubr.f32.gmra.mrb[0].mxu0 %v942
        %v978 = vpop.f32.mrb[0].mxu0
        %v979 = vadd.f32 %v932, %v978
        %v980 = vpop.f32.mrb[0].mxu0
        %981 = vdwg.mxu0
        %982 = vrot.lane.b32.xlu0 %v487, 96
        %v983 = vpop.permute.xlu0 %982
        %984 = vrot.lane.b32.xlu0 %v489, 96
        %v985 = vpop.permute.xlu0 %984
        %v986 = vsel %vm533, %v983, 0
        %v988 = vsel %vm533, %v985, 0
        %990 = vmatprep.subr.mxu0 0.0
        %991 = vmatpush1.xpose.msra.mxu0 %v988
        %992 = vmatprep.subr.mxu0 0.0
        %993 = vmatpush1.xpose.msra.mxu0 0.0
        %994 = vmatprep.subr.mxu0 0.0
        %995 = vmatpush1.xpose.msra.mxu0 0.0
        %996 = vmatprep.subr.mxu0 0.0
        %997 = vmatpush1.xpose.msra.mxu0 0.0
        %998 = vmatprep.subr.mxu0 0.0
        %999 = vmatpush1.xpose.msra.mxu0 0.0
        %1000 = vmatprep.subr.mxu0 0.0
        %1001 = vmatpush1.xpose.msra.mxu0 0.0
        %1002 = vmatprep.subr.mxu0 0.0
        %1003 = vmatpush1.xpose.msra.mxu0 0.0
        %1004 = vmatprep.subr.mxu0 0.0
        %1005 = vmatpush1.xpose.msra.mxu0 0.0
        %1006 = vmatprep.subr.mxu0 0.0
        %1007 = vmatpush1.xpose.msra.mxu0 0.0
        %1008 = vmatprep.subr.mxu0 0.0
        %1009 = vmatpush1.xpose.msra.mxu0 0.0
        %1010 = vmatprep.subr.mxu0 0.0
        %1011 = vmatpush1.xpose.msra.mxu0 0.0
        %1012 = vmatprep.subr.mxu0 0.0
        %1013 = vmatpush1.xpose.msra.mxu0 0.0
        %1014 = vmatprep.subr.mxu0 0.0
        %1015 = vmatpush1.xpose.msra.mxu0 0.0
        %1016 = vmatprep.subr.mxu0 0.0
        %1017 = vmatpush1.xpose.msra.mxu0 0.0
        %1018 = vmatprep.subr.mxu0 0.0
        %1019 = vmatpush1.xpose.msra.mxu0 0.0
        %1020 = vmatprep.subr.mxu0 0.0
        %1021 = vmatpush1.xpose.msra.mxu0 0.0
        %1022 = vmatprep.subr.mxu0 0.0
        %1023 = vmatpush1.xpose.msra.mxu0 0.0
        %1024 = vmatprep.subr.mxu0 0.0
        %1025 = vmatpush1.xpose.msra.mxu0 0.0
        %1026 = vmatprep.subr.mxu0 0.0
        %1027 = vmatpush1.xpose.msra.mxu0 0.0
        %1028 = vmatprep.subr.mxu0 0.0
        %1029 = vmatpush1.xpose.msra.mxu0 0.0
        %1030 = vmatprep.subr.mxu0 0.0
        %1031 = vmatpush1.xpose.msra.mxu0 0.0
        %1032 = vmatprep.subr.mxu0 0.0
        %1033 = vmatpush1.xpose.msra.mxu0 0.0
        %1034 = vmatprep.subr.mxu0 0.0
        %1035 = vmatpush1.xpose.msra.mxu0 0.0
        %1036 = vmatprep.subr.mxu0 0.0
        %1037 = vmatpush1.xpose.msra.mxu0 0.0
        %1038 = vmatprep.subr.mxu0 0.0
        %1039 = vmatpush1.xpose.msra.mxu0 0.0
        %1040 = vmatprep.subr.mxu0 0.0
        %1041 = vmatpush1.xpose.msra.mxu0 0.0
        %1042 = vmatprep.subr.mxu0 0.0
        %1043 = vmatpush1.xpose.msra.mxu0 0.0
        %1044 = vmatprep.subr.mxu0 0.0
        %1045 = vmatpush1.xpose.msra.mxu0 0.0
        %1046 = vmatprep.subr.mxu0 0.0
        %1047 = vmatpush1.xpose.msra.mxu0 0.0
        %1048 = vmatprep.subr.mxu0 0.0
        %1049 = vmatpush1.xpose.msra.mxu0 0.0
        %1050 = vmatprep.subr.mxu0 0.0
        %1051 = vmatpush1.xpose.msra.mxu0 0.0
        %1052 = vmatprep.subr.mxu0 0.0
        %1053 = vmatpush1.xpose.msra.mxu0 0.0
        %1054 = vmatprep.mubr.f32.mxu0 0.0
        %1055 = vmatmul.mubr.f32.gmra.mrb[0].mxu0 %v986
        %v1056 = vpop.f32.mrb[0].mxu0
        %v1057 = vadd.f32 0.0, %v1056
        %v1058 = vpop.f32.mrb[0].mxu0
        %1059 = vdwg.mxu0
        %v1060 = vsel %vm610, %v1057, -inf
        %1061 = vmax.xlane.f32.xlu0 %v1060
        %v1062 = vpop.xlane.xlu0 %1061
        %v1063 = vsub.f32 %v1057, %v1062
        %v1064 = vmul.f32 %v1063, 1.442695
        %v1065 = vpow.pop %v1064
        %v1066 = vsel %vm610, %v1065, 0.0
        %1067 = vadd.xlane.f32.xlu0 %v1066
        %v1068 = vpop.xlane.xlu0 %1067
        %v1069 = vrcp.pop %v1068
        %v1070 = vmul.f32 %v1065, %v1069
        %1071 = vrot.lane.b32.xlu0 %v528, 96
        %v1072 = vpop.permute.xlu0 %1071
        %v1074 = vsel %vm622, %v1070, 0
        %v1076 = vsel %vm626, %v1072, 0
        %1078 = vmatprep.subr.mxu0 0.0
        %1079 = vmatpush1.msra.mxu0 %v1076
        %1080 = vmatprep.subr.mxu0 0.0
        %1081 = vmatpush1.msra.mxu0 0.0
        %1082 = vmatprep.subr.mxu0 0.0
        %1083 = vmatpush1.msra.mxu0 0.0
        %1084 = vmatprep.subr.mxu0 0.0
        %1085 = vmatpush1.msra.mxu0 0.0
        %1086 = vmatprep.subr.mxu0 0.0
        %1087 = vmatpush1.msra.mxu0 0.0
        %1088 = vmatprep.subr.mxu0 0.0
        %1089 = vmatpush1.msra.mxu0 0.0
        %1090 = vmatprep.subr.mxu0 0.0
        %1091 = vmatpush1.msra.mxu0 0.0
        %1092 = vmatprep.subr.mxu0 0.0
        %1093 = vmatpush1.msra.mxu0 0.0
        %1094 = vmatprep.subr.mxu0 0.0
        %1095 = vmatpush1.msra.mxu0 0.0
        %1096 = vmatprep.subr.mxu0 0.0
        %1097 = vmatpush1.msra.mxu0 0.0
        %1098 = vmatprep.subr.mxu0 0.0
        %1099 = vmatpush1.msra.mxu0 0.0
        %1100 = vmatprep.subr.mxu0 0.0
        %1101 = vmatpush1.msra.mxu0 0.0
        %1102 = vmatprep.subr.mxu0 0.0
        %1103 = vmatpush1.msra.mxu0 0.0
        %1104 = vmatprep.subr.mxu0 0.0
        %1105 = vmatpush1.msra.mxu0 0.0
        %1106 = vmatprep.subr.mxu0 0.0
        %1107 = vmatpush1.msra.mxu0 0.0
        %1108 = vmatprep.subr.mxu0 0.0
        %1109 = vmatpush1.msra.mxu0 0.0
        %1110 = vmatprep.subr.mxu0 0.0
        %1111 = vmatpush1.msra.mxu0 0.0
        %1112 = vmatprep.subr.mxu0 0.0
        %1113 = vmatpush1.msra.mxu0 0.0
        %1114 = vmatprep.subr.mxu0 0.0
        %1115 = vmatpush1.msra.mxu0 0.0
        %1116 = vmatprep.subr.mxu0 0.0
        %1117 = vmatpush1.msra.mxu0 0.0
        %1118 = vmatprep.subr.mxu0 0.0
        %1119 = vmatpush1.msra.mxu0 0.0
        %1120 = vmatprep.subr.mxu0 0.0
        %1121 = vmatpush1.msra.mxu0 0.0
        %1122 = vmatprep.subr.mxu0 0.0
        %1123 = vmatpush1.msra.mxu0 0.0
        %1124 = vmatprep.subr.mxu0 0.0
        %1125 = vmatpush1.msra.mxu0 0.0
        %1126 = vmatprep.subr.mxu0 0.0
        %1127 = vmatpush1.msra.mxu0 0.0
        %1128 = vmatprep.subr.mxu0 0.0
        %1129 = vmatpush1.msra.mxu0 0.0
        %1130 = vmatprep.subr.mxu0 0.0
        %1131 = vmatpush1.msra.mxu0 0.0
        %1132 = vmatprep.subr.mxu0 0.0
        %1133 = vmatpush1.msra.mxu0 0.0
        %1134 = vmatprep.subr.mxu0 0.0
        %1135 = vmatpush1.msra.mxu0 0.0
        %1136 = vmatprep.subr.mxu0 0.0
        %1137 = vmatpush1.msra.mxu0 0.0
        %1138 = vmatprep.subr.mxu0 0.0
        %1139 = vmatpush1.msra.mxu0 0.0
        %1140 = vmatprep.subr.mxu0 0.0
        %1141 = vmatpush1.msra.mxu0 0.0
        %1142 = vmatprep.mubr.f32.mxu0 0.0
        %1143 = vmatmul.mubr.f32.gmra.mrb[0].mxu0 %v1074
        %v1144 = vpop.f32.mrb[0].mxu0
        %v1145 = vadd.f32 0.0, %v1144
        %v1146 = vpop.f32.mrb[0].mxu0
        %1147 = vdwg.mxu0
        %v1148 = vsel %vm700, %v1145, 0.0
        %v1149 = vrot.slane %v1148, 4
        %v1150 = vadd.f32 %v1148, %v1149
        %v1151 = vrot.slane %v1150, 2
        %v1152 = vadd.f32 %v1150, %v1151
        %v1153 = vrot.slane %v1152, 1
        %v1154 = vadd.f32 %v1152, %v1153
        %v1155 = vmul.f32 %v1154, %v708
        %v1156 = vld [vmem:[%s3 + $0x10] sm:$0xf]
        %v1157 = vld [vmem:[%s3 + $0x14] sm:$0xf]
        %v1160 = vunpack.c.l.b16 %v1156
        %v1161 = vunpack.c.l.b16 %v1157
        %v1162 = vpack.c.b16 %v1161, %v1160
        %v1165 = vsel %vm533, %v1155, 0
        %1167 = vmatprep.subr.bf16.mxu0 0
        %1168 = vmatpush1.bf16.msra.mxu0 %v1162
        %1169 = vmatprep.subr.bf16.mxu0 0
        %1170 = vmatpush1.bf16.msra.mxu0 0
        %1171 = vmatprep.subr.bf16.mxu0 0
        %1172 = vmatpush1.bf16.msra.mxu0 0
        %1173 = vmatprep.subr.bf16.mxu0 0
        %1174 = vmatpush1.bf16.msra.mxu0 0
        %1175 = vmatprep.subr.bf16.mxu0 0
        %1176 = vmatpush1.bf16.msra.mxu0 0
        %1177 = vmatprep.subr.bf16.mxu0 0
        %1178 = vmatpush1.bf16.msra.mxu0 0
        %1179 = vmatprep.subr.bf16.mxu0 0
        %1180 = vmatpush1.bf16.msra.mxu0 0
        %1181 = vmatprep.subr.bf16.mxu0 0
        %1182 = vmatpush1.bf16.msra.mxu0 0
        %1183 = vmatprep.subr.bf16.mxu0 0
        %1184 = vmatpush1.bf16.msra.mxu0 0
        %1185 = vmatprep.subr.bf16.mxu0 0
        %1186 = vmatpush1.bf16.msra.mxu0 0
        %1187 = vmatprep.subr.bf16.mxu0 0
        %1188 = vmatpush1.bf16.msra.mxu0 0
        %1189 = vmatprep.subr.bf16.mxu0 0
        %1190 = vmatpush1.bf16.msra.mxu0 0
        %1191 = vmatprep.subr.bf16.mxu0 0
        %1192 = vmatpush1.bf16.msra.mxu0 0
        %1193 = vmatprep.subr.bf16.mxu0 0
        %1194 = vmatpush1.bf16.msra.mxu0 0
        %1195 = vmatprep.subr.bf16.mxu0 0
        %1196 = vmatpush1.bf16.msra.mxu0 0
        %1197 = vmatprep.subr.bf16.mxu0 0
        %1198 = vmatpush1.bf16.msra.mxu0 0
        %1199 = vmatprep.mubr.f32.mxu0 0.0
        %1200 = vmatmul.mubr.f32.gmra.mrb[0].mxu0 %v1165
        %v1201 = vpop.f32.mrb[0].mxu0
        %v1202 = vadd.f32 0.0, %v1201
        %v1203 = vpop.f32.mrb[0].mxu0
        %1204 = vdwg.mxu0
        %v1205 = vadd.f32 %v979, %v1202
        %1206 = vrot.lane.b32.xlu0 %v487, 80
        %v1207 = vpop.permute.xlu0 %1206
        %1208 = vrot.lane.b32.xlu0 %v489, 80
        %v1209 = vpop.permute.xlu0 %1208
        %v1210 = vsel %vm533, %v1207, 0
        %v1212 = vsel %vm533, %v1209, 0
        %1214 = vmatprep.subr.mxu0 0.0
        %1215 = vmatpush1.xpose.msra.mxu0 %v1212
        %1216 = vmatprep.subr.mxu0 0.0
        %1217 = vmatpush1.xpose.msra.mxu0 0.0
        %1218 = vmatprep.subr.mxu0 0.0
        %1219 = vmatpush1.xpose.msra.mxu0 0.0
        %1220 = vmatprep.subr.mxu0 0.0
        %1221 = vmatpush1.xpose.msra.mxu0 0.0
        %1222 = vmatprep.subr.mxu0 0.0
        %1223 = vmatpush1.xpose.msra.mxu0 0.0
        %1224 = vmatprep.subr.mxu0 0.0
        %1225 = vmatpush1.xpose.msra.mxu0 0.0
        %1226 = vmatprep.subr.mxu0 0.0
        %1227 = vmatpush1.xpose.msra.mxu0 0.0
        %1228 = vmatprep.subr.mxu0 0.0
        %1229 = vmatpush1.xpose.msra.mxu0 0.0
        %1230 = vmatprep.subr.mxu0 0.0
        %1231 = vmatpush1.xpose.msra.mxu0 0.0
        %1232 = vmatprep.subr.mxu0 0.0
        %1233 = vmatpush1.xpose.msra.mxu0 0.0
        %1234 = vmatprep.subr.mxu0 0.0
        %1235 = vmatpush1.xpose.msra.mxu0 0.0
        %1236 = vmatprep.subr.mxu0 0.0
        %1237 = vmatpush1.xpose.msra.mxu0 0.0
        %1238 = vmatprep.subr.mxu0 0.0
        %1239 = vmatpush1.xpose.msra.mxu0 0.0
        %1240 = vmatprep.subr.mxu0 0.0
        %1241 = vmatpush1.xpose.msra.mxu0 0.0
        %1242 = vmatprep.subr.mxu0 0.0
        %1243 = vmatpush1.xpose.msra.mxu0 0.0
        %1244 = vmatprep.subr.mxu0 0.0
        %1245 = vmatpush1.xpose.msra.mxu0 0.0
        %1246 = vmatprep.subr.mxu0 0.0
        %1247 = vmatpush1.xpose.msra.mxu0 0.0
        %1248 = vmatprep.subr.mxu0 0.0
        %1249 = vmatpush1.xpose.msra.mxu0 0.0
        %1250 = vmatprep.subr.mxu0 0.0
        %1251 = vmatpush1.xpose.msra.mxu0 0.0
        %1252 = vmatprep.subr.mxu0 0.0
        %1253 = vmatpush1.xpose.msra.mxu0 0.0
        %1254 = vmatprep.subr.mxu0 0.0
        %1255 = vmatpush1.xpose.msra.mxu0 0.0
        %1256 = vmatprep.subr.mxu0 0.0
        %1257 = vmatpush1.xpose.msra.mxu0 0.0
        %1258 = vmatprep.subr.mxu0 0.0
        %1259 = vmatpush1.xpose.msra.mxu0 0.0
        %1260 = vmatprep.subr.mxu0 0.0
        %1261 = vmatpush1.xpose.msra.mxu0 0.0
        %1262 = vmatprep.subr.mxu0 0.0
        %1263 = vmatpush1.xpose.msra.mxu0 0.0
        %1264 = vmatprep.subr.mxu0 0.0
        %1265 = vmatpush1.xpose.msra.mxu0 0.0
        %1266 = vmatprep.subr.mxu0 0.0
        %1267 = vmatpush1.xpose.msra.mxu0 0.0
        %1268 = vmatprep.subr.mxu0 0.0
        %1269 = vmatpush1.xpose.msra.mxu0 0.0
        %1270 = vmatprep.subr.mxu0 0.0
        %1271 = vmatpush1.xpose.msra.mxu0 0.0
        %1272 = vmatprep.subr.mxu0 0.0
        %1273 = vmatpush1.xpose.msra.mxu0 0.0
        %1274 = vmatprep.subr.mxu0 0.0
        %1275 = vmatpush1.xpose.msra.mxu0 0.0
        %1276 = vmatprep.subr.mxu0 0.0
        %1277 = vmatpush1.xpose.msra.mxu0 0.0
        %1278 = vmatprep.mubr.f32.mxu0 0.0
        %1279 = vmatmul.mubr.f32.gmra.mrb[0].mxu0 %v1210
        %v1280 = vpop.f32.mrb[0].mxu0
        %v1281 = vadd.f32 0.0, %v1280
        %v1282 = vpop.f32.mrb[0].mxu0
        %1283 = vdwg.mxu0
        %v1284 = vsel %vm610, %v1281, -inf
        %1285 = vmax.xlane.f32.xlu0 %v1284
        %v1286 = vpop.xlane.xlu0 %1285
        %v1287 = vsub.f32 %v1281, %v1286
        %v1288 = vmul.f32 %v1287, 1.442695
        %v1289 = vpow.pop %v1288
        %v1290 = vsel %vm610, %v1289, 0.0
        %1291 = vadd.xlane.f32.xlu0 %v1290
        %v1292 = vpop.xlane.xlu0 %1291
        %v1293 = vrcp.pop %v1292
        %v1294 = vmul.f32 %v1289, %v1293
        %1295 = vrot.lane.b32.xlu0 %v528, 80
        %v1296 = vpop.permute.xlu0 %1295
        %v1298 = vsel %vm622, %v1294, 0
        %v1300 = vsel %vm626, %v1296, 0
        %1302 = vmatprep.subr.mxu0 0.0
        %1303 = vmatpush1.msra.mxu0 %v1300
        %1304 = vmatprep.subr.mxu0 0.0
        %1305 = vmatpush1.msra.mxu0 0.0
        %1306 = vmatprep.subr.mxu0 0.0
        %1307 = vmatpush1.msra.mxu0 0.0
        %1308 = vmatprep.subr.mxu0 0.0
        %1309 = vmatpush1.msra.mxu0 0.0
        %1310 = vmatprep.subr.mxu0 0.0
        %1311 = vmatpush1.msra.mxu0 0.0
        %1312 = vmatprep.subr.mxu0 0.0
        %1313 = vmatpush1.msra.mxu0 0.0
        %1314 = vmatprep.subr.mxu0 0.0
        %1315 = vmatpush1.msra.mxu0 0.0
        %1316 = vmatprep.subr.mxu0 0.0
        %1317 = vmatpush1.msra.mxu0 0.0
        %1318 = vmatprep.subr.mxu0 0.0
        %1319 = vmatpush1.msra.mxu0 0.0
        %1320 = vmatprep.subr.mxu0 0.0
        %1321 = vmatpush1.msra.mxu0 0.0
        %1322 = vmatprep.subr.mxu0 0.0
        %1323 = vmatpush1.msra.mxu0 0.0
        %1324 = vmatprep.subr.mxu0 0.0
        %1325 = vmatpush1.msra.mxu0 0.0
        %1326 = vmatprep.subr.mxu0 0.0
        %1327 = vmatpush1.msra.mxu0 0.0
        %1328 = vmatprep.subr.mxu0 0.0
        %1329 = vmatpush1.msra.mxu0 0.0
        %1330 = vmatprep.subr.mxu0 0.0
        %1331 = vmatpush1.msra.mxu0 0.0
        %1332 = vmatprep.subr.mxu0 0.0
        %1333 = vmatpush1.msra.mxu0 0.0
        %1334 = vmatprep.subr.mxu0 0.0
        %1335 = vmatpush1.msra.mxu0 0.0
        %1336 = vmatprep.subr.mxu0 0.0
        %1337 = vmatpush1.msra.mxu0 0.0
        %1338 = vmatprep.subr.mxu0 0.0
        %1339 = vmatpush1.msra.mxu0 0.0
        %1340 = vmatprep.subr.mxu0 0.0
        %1341 = vmatpush1.msra.mxu0 0.0
        %1342 = vmatprep.subr.mxu0 0.0
        %1343 = vmatpush1.msra.mxu0 0.0
        %1344 = vmatprep.subr.mxu0 0.0
        %1345 = vmatpush1.msra.mxu0 0.0
        %1346 = vmatprep.subr.mxu0 0.0
        %1347 = vmatpush1.msra.mxu0 0.0
        %1348 = vmatprep.subr.mxu0 0.0
        %1349 = vmatpush1.msra.mxu0 0.0
        %1350 = vmatprep.subr.mxu0 0.0
        %1351 = vmatpush1.msra.mxu0 0.0
        %1352 = vmatprep.subr.mxu0 0.0
        %1353 = vmatpush1.msra.mxu0 0.0
        %1354 = vmatprep.subr.mxu0 0.0
        %1355 = vmatpush1.msra.mxu0 0.0
        %1356 = vmatprep.subr.mxu0 0.0
        %1357 = vmatpush1.msra.mxu0 0.0
        %1358 = vmatprep.subr.mxu0 0.0
        %1359 = vmatpush1.msra.mxu0 0.0
        %1360 = vmatprep.subr.mxu0 0.0
        %1361 = vmatpush1.msra.mxu0 0.0
        %1362 = vmatprep.subr.mxu0 0.0
        %1363 = vmatpush1.msra.mxu0 0.0
        %1364 = vmatprep.subr.mxu0 0.0
        %1365 = vmatpush1.msra.mxu0 0.0
        %1366 = vmatprep.mubr.f32.mxu0 0.0
        %1367 = vmatmul.mubr.f32.gmra.mrb[0].mxu0 %v1298
        %v1368 = vpop.f32.mrb[0].mxu0
        %v1369 = vadd.f32 0.0, %v1368
        %v1370 = vpop.f32.mrb[0].mxu0
        %1371 = vdwg.mxu0
        %v1372 = vsel %vm700, %v1369, 0.0
        %v1373 = vrot.slane %v1372, 4
        %v1374 = vadd.f32 %v1372, %v1373
        %v1375 = vrot.slane %v1374, 2
        %v1376 = vadd.f32 %v1374, %v1375
        %v1377 = vrot.slane %v1376, 1
        %v1378 = vadd.f32 %v1376, %v1377
        %v1379 = vmul.f32 %v1378, %v708
        %v1380 = vld [vmem:[%s3 + $0x18] sm:$0xf]
        %v1381 = vld [vmem:[%s3 + $0x1c] sm:$0xf]
        %v1384 = vunpack.c.l.b16 %v1380
        %v1385 = vunpack.c.l.b16 %v1381
        %v1386 = vpack.c.b16 %v1385, %v1384
        %v1389 = vsel %vm533, %v1379, 0
        %1391 = vmatprep.subr.bf16.mxu0 0
        %1392 = vmatpush1.bf16.msra.mxu0 %v1386
        %1393 = vmatprep.subr.bf16.mxu0 0
        %1394 = vmatpush1.bf16.msra.mxu0 0
        %1395 = vmatprep.subr.bf16.mxu0 0
        %1396 = vmatpush1.bf16.msra.mxu0 0
        %1397 = vmatprep.subr.bf16.mxu0 0
        %1398 = vmatpush1.bf16.msra.mxu0 0
        %1399 = vmatprep.subr.bf16.mxu0 0
        %1400 = vmatpush1.bf16.msra.mxu0 0
        %1401 = vmatprep.subr.bf16.mxu0 0
        %1402 = vmatpush1.bf16.msra.mxu0 0
        %1403 = vmatprep.subr.bf16.mxu0 0
        %1404 = vmatpush1.bf16.msra.mxu0 0
        %1405 = vmatprep.subr.bf16.mxu0 0
        %1406 = vmatpush1.bf16.msra.mxu0 0
        %1407 = vmatprep.subr.bf16.mxu0 0
        %1408 = vmatpush1.bf16.msra.mxu0 0
        %1409 = vmatprep.subr.bf16.mxu0 0
        %1410 = vmatpush1.bf16.msra.mxu0 0
        %1411 = vmatprep.subr.bf16.mxu0 0
        %1412 = vmatpush1.bf16.msra.mxu0 0
        %1413 = vmatprep.subr.bf16.mxu0 0
        %1414 = vmatpush1.bf16.msra.mxu0 0
        %1415 = vmatprep.subr.bf16.mxu0 0
        %1416 = vmatpush1.bf16.msra.mxu0 0
        %1417 = vmatprep.subr.bf16.mxu0 0
        %1418 = vmatpush1.bf16.msra.mxu0 0
        %1419 = vmatprep.subr.bf16.mxu0 0
        %1420 = vmatpush1.bf16.msra.mxu0 0
        %1421 = vmatprep.subr.bf16.mxu0 0
        %1422 = vmatpush1.bf16.msra.mxu0 0
        %1423 = vmatprep.mubr.f32.mxu0 0.0
        %1424 = vmatmul.mubr.f32.gmra.mrb[0].mxu0 %v1389
        %v1425 = vpop.f32.mrb[0].mxu0
        %v1426 = vadd.f32 0.0, %v1425
        %v1427 = vpop.f32.mrb[0].mxu0
        %1428 = vdwg.mxu0
        %v1429 = vadd.f32 %v1205, %v1426
        %1430 = vrot.lane.b32.xlu0 %v487, 64
        %v1431 = vpop.permute.xlu0 %1430
        %1432 = vrot.lane.b32.xlu0 %v489, 64
        %v1433 = vpop.permute.xlu0 %1432
        %v1434 = vsel %vm533, %v1431, 0
        %v1436 = vsel %vm533, %v1433, 0
        %1438 = vmatprep.subr.mxu0 0.0
        %1439 = vmatpush1.xpose.msra.mxu0 %v1436
        %1440 = vmatprep.subr.mxu0 0.0
        %1441 = vmatpush1.xpose.msra.mxu0 0.0
        %1442 = vmatprep.subr.mxu0 0.0
        %1443 = vmatpush1.xpose.msra.mxu0 0.0
        %1444 = vmatprep.subr.mxu0 0.0
        %1445 = vmatpush1.xpose.msra.mxu0 0.0
        %1446 = vmatprep.subr.mxu0 0.0
        %1447 = vmatpush1.xpose.msra.mxu0 0.0
        %1448 = vmatprep.subr.mxu0 0.0
        %1449 = vmatpush1.xpose.msra.mxu0 0.0
        %1450 = vmatprep.subr.mxu0 0.0
        %1451 = vmatpush1.xpose.msra.mxu0 0.0
        %1452 = vmatprep.subr.mxu0 0.0
        %1453 = vmatpush1.xpose.msra.mxu0 0.0
        %1454 = vmatprep.subr.mxu0 0.0
        %1455 = vmatpush1.xpose.msra.mxu0 0.0
        %1456 = vmatprep.subr.mxu0 0.0
        %1457 = vmatpush1.xpose.msra.mxu0 0.0
        %1458 = vmatprep.subr.mxu0 0.0
        %1459 = vmatpush1.xpose.msra.mxu0 0.0
        %1460 = vmatprep.subr.mxu0 0.0
        %1461 = vmatpush1.xpose.msra.mxu0 0.0
        %1462 = vmatprep.subr.mxu0 0.0
        %1463 = vmatpush1.xpose.msra.mxu0 0.0
        %1464 = vmatprep.subr.mxu0 0.0
        %1465 = vmatpush1.xpose.msra.mxu0 0.0
        %1466 = vmatprep.subr.mxu0 0.0
        %1467 = vmatpush1.xpose.msra.mxu0 0.0
        %1468 = vmatprep.subr.mxu0 0.0
        %1469 = vmatpush1.xpose.msra.mxu0 0.0
        %1470 = vmatprep.subr.mxu0 0.0
        %1471 = vmatpush1.xpose.msra.mxu0 0.0
        %1472 = vmatprep.subr.mxu0 0.0
        %1473 = vmatpush1.xpose.msra.mxu0 0.0
        %1474 = vmatprep.subr.mxu0 0.0
        %1475 = vmatpush1.xpose.msra.mxu0 0.0
        %1476 = vmatprep.subr.mxu0 0.0
        %1477 = vmatpush1.xpose.msra.mxu0 0.0
        %1478 = vmatprep.subr.mxu0 0.0
        %1479 = vmatpush1.xpose.msra.mxu0 0.0
        %1480 = vmatprep.subr.mxu0 0.0
        %1481 = vmatpush1.xpose.msra.mxu0 0.0
        %1482 = vmatprep.subr.mxu0 0.0
        %1483 = vmatpush1.xpose.msra.mxu0 0.0
        %1484 = vmatprep.subr.mxu0 0.0
        %1485 = vmatpush1.xpose.msra.mxu0 0.0
        %1486 = vmatprep.subr.mxu0 0.0
        %1487 = vmatpush1.xpose.msra.mxu0 0.0
        %1488 = vmatprep.subr.mxu0 0.0
        %1489 = vmatpush1.xpose.msra.mxu0 0.0
        %1490 = vmatprep.subr.mxu0 0.0
        %1491 = vmatpush1.xpose.msra.mxu0 0.0
        %1492 = vmatprep.subr.mxu0 0.0
        %1493 = vmatpush1.xpose.msra.mxu0 0.0
        %1494 = vmatprep.subr.mxu0 0.0
        %1495 = vmatpush1.xpose.msra.mxu0 0.0
        %1496 = vmatprep.subr.mxu0 0.0
        %1497 = vmatpush1.xpose.msra.mxu0 0.0
        %1498 = vmatprep.subr.mxu0 0.0
        %1499 = vmatpush1.xpose.msra.mxu0 0.0
        %1500 = vmatprep.subr.mxu0 0.0
        %1501 = vmatpush1.xpose.msra.mxu0 0.0
        %1502 = vmatprep.mubr.f32.mxu0 0.0
        %1503 = vmatmul.mubr.f32.gmra.mrb[0].mxu0 %v1434
        %v1504 = vpop.f32.mrb[0].mxu0
        %v1505 = vadd.f32 0.0, %v1504
        %v1506 = vpop.f32.mrb[0].mxu0
        %1507 = vdwg.mxu0
        %v1508 = vsel %vm610, %v1505, -inf
        %1509 = vmax.xlane.f32.xlu0 %v1508
        %v1510 = vpop.xlane.xlu0 %1509
        %v1511 = vsub.f32 %v1505, %v1510
        %v1512 = vmul.f32 %v1511, 1.442695
        %v1513 = vpow.pop %v1512
        %v1514 = vsel %vm610, %v1513, 0.0
        %1515 = vadd.xlane.f32.xlu0 %v1514
        %v1516 = vpop.xlane.xlu0 %1515
        %v1517 = vrcp.pop %v1516
        %v1518 = vmul.f32 %v1513, %v1517
        %1519 = vrot.lane.b32.xlu0 %v528, 64
        %v1520 = vpop.permute.xlu0 %1519
        %v1522 = vsel %vm622, %v1518, 0
        %v1524 = vsel %vm626, %v1520, 0
        %1526 = vmatprep.subr.mxu0 0.0
        %1527 = vmatpush1.msra.mxu0 %v1524
        %1528 = vmatprep.subr.mxu0 0.0
        %1529 = vmatpush1.msra.mxu0 0.0
        %1530 = vmatprep.subr.mxu0 0.0
        %1531 = vmatpush1.msra.mxu0 0.0
        %1532 = vmatprep.subr.mxu0 0.0
        %1533 = vmatpush1.msra.mxu0 0.0
        %1534 = vmatprep.subr.mxu0 0.0
        %1535 = vmatpush1.msra.mxu0 0.0
        %1536 = vmatprep.subr.mxu0 0.0
        %1537 = vmatpush1.msra.mxu0 0.0
        %1538 = vmatprep.subr.mxu0 0.0
        %1539 = vmatpush1.msra.mxu0 0.0
        %1540 = vmatprep.subr.mxu0 0.0
        %1541 = vmatpush1.msra.mxu0 0.0
        %1542 = vmatprep.subr.mxu0 0.0
        %1543 = vmatpush1.msra.mxu0 0.0
        %1544 = vmatprep.subr.mxu0 0.0
        %1545 = vmatpush1.msra.mxu0 0.0
        %1546 = vmatprep.subr.mxu0 0.0
        %1547 = vmatpush1.msra.mxu0 0.0
        %1548 = vmatprep.subr.mxu0 0.0
        %1549 = vmatpush1.msra.mxu0 0.0
        %1550 = vmatprep.subr.mxu0 0.0
        %1551 = vmatpush1.msra.mxu0 0.0
        %1552 = vmatprep.subr.mxu0 0.0
        %1553 = vmatpush1.msra.mxu0 0.0
        %1554 = vmatprep.subr.mxu0 0.0
        %1555 = vmatpush1.msra.mxu0 0.0
        %1556 = vmatprep.subr.mxu0 0.0
        %1557 = vmatpush1.msra.mxu0 0.0
        %1558 = vmatprep.subr.mxu0 0.0
        %1559 = vmatpush1.msra.mxu0 0.0
        %1560 = vmatprep.subr.mxu0 0.0
        %1561 = vmatpush1.msra.mxu0 0.0
        %1562 = vmatprep.subr.mxu0 0.0
        %1563 = vmatpush1.msra.mxu0 0.0
        %1564 = vmatprep.subr.mxu0 0.0
        %1565 = vmatpush1.msra.mxu0 0.0
        %1566 = vmatprep.subr.mxu0 0.0
        %1567 = vmatpush1.msra.mxu0 0.0
        %1568 = vmatprep.subr.mxu0 0.0
        %1569 = vmatpush1.msra.mxu0 0.0
        %1570 = vmatprep.subr.mxu0 0.0
        %1571 = vmatpush1.msra.mxu0 0.0
        %1572 = vmatprep.subr.mxu0 0.0
        %1573 = vmatpush1.msra.mxu0 0.0
        %1574 = vmatprep.subr.mxu0 0.0
        %1575 = vmatpush1.msra.mxu0 0.0
        %1576 = vmatprep.subr.mxu0 0.0
        %1577 = vmatpush1.msra.mxu0 0.0
        %1578 = vmatprep.subr.mxu0 0.0
        %1579 = vmatpush1.msra.mxu0 0.0
        %1580 = vmatprep.subr.mxu0 0.0
        %1581 = vmatpush1.msra.mxu0 0.0
        %1582 = vmatprep.subr.mxu0 0.0
        %1583 = vmatpush1.msra.mxu0 0.0
        %1584 = vmatprep.subr.mxu0 0.0
        %1585 = vmatpush1.msra.mxu0 0.0
        %1586 = vmatprep.subr.mxu0 0.0
        %1587 = vmatpush1.msra.mxu0 0.0
        %1588 = vmatprep.subr.mxu0 0.0
        %1589 = vmatpush1.msra.mxu0 0.0
        %1590 = vmatprep.mubr.f32.mxu0 0.0
        %1591 = vmatmul.mubr.f32.gmra.mrb[0].mxu0 %v1522
        %v1592 = vpop.f32.mrb[0].mxu0
        %v1593 = vadd.f32 0.0, %v1592
        %v1594 = vpop.f32.mrb[0].mxu0
        %1595 = vdwg.mxu0
        %v1596 = vsel %vm700, %v1593, 0.0
        %v1597 = vrot.slane %v1596, 4
        %v1598 = vadd.f32 %v1596, %v1597
        %v1599 = vrot.slane %v1598, 2
        %v1600 = vadd.f32 %v1598, %v1599
        %v1601 = vrot.slane %v1600, 1
        %v1602 = vadd.f32 %v1600, %v1601
        %v1603 = vmul.f32 %v1602, %v708
        %v1604 = vld [vmem:[%s3 + $0x20] sm:$0xf]
        %v1605 = vld [vmem:[%s3 + $0x24] sm:$0xf]
        %v1608 = vunpack.c.l.b16 %v1604
        %v1609 = vunpack.c.l.b16 %v1605
        %v1610 = vpack.c.b16 %v1609, %v1608
        %v1613 = vsel %vm533, %v1603, 0
        %1615 = vmatprep.subr.bf16.mxu0 0
        %1616 = vmatpush1.bf16.msra.mxu0 %v1610
        %1617 = vmatprep.subr.bf16.mxu0 0
        %1618 = vmatpush1.bf16.msra.mxu0 0
        %1619 = vmatprep.subr.bf16.mxu0 0
        %1620 = vmatpush1.bf16.msra.mxu0 0
        %1621 = vmatprep.subr.bf16.mxu0 0
        %1622 = vmatpush1.bf16.msra.mxu0 0
        %1623 = vmatprep.subr.bf16.mxu0 0
        %1624 = vmatpush1.bf16.msra.mxu0 0
        %1625 = vmatprep.subr.bf16.mxu0 0
        %1626 = vmatpush1.bf16.msra.mxu0 0
        %1627 = vmatprep.subr.bf16.mxu0 0
        %1628 = vmatpush1.bf16.msra.mxu0 0
        %1629 = vmatprep.subr.bf16.mxu0 0
        %1630 = vmatpush1.bf16.msra.mxu0 0
        %1631 = vmatprep.subr.bf16.mxu0 0
        %1632 = vmatpush1.bf16.msra.mxu0 0
        %1633 = vmatprep.subr.bf16.mxu0 0
        %1634 = vmatpush1.bf16.msra.mxu0 0
        %1635 = vmatprep.subr.bf16.mxu0 0
        %1636 = vmatpush1.bf16.msra.mxu0 0
        %1637 = vmatprep.subr.bf16.mxu0 0
        %1638 = vmatpush1.bf16.msra.mxu0 0
        %1639 = vmatprep.subr.bf16.mxu0 0
        %1640 = vmatpush1.bf16.msra.mxu0 0
        %1641 = vmatprep.subr.bf16.mxu0 0
        %1642 = vmatpush1.bf16.msra.mxu0 0
        %1643 = vmatprep.subr.bf16.mxu0 0
        %1644 = vmatpush1.bf16.msra.mxu0 0
        %1645 = vmatprep.subr.bf16.mxu0 0
        %1646 = vmatpush1.bf16.msra.mxu0 0
        %1647 = vmatprep.mubr.f32.mxu0 0.0
        %1648 = vmatmul.mubr.f32.gmra.mrb[0].mxu0 %v1613
        %v1649 = vpop.f32.mrb[0].mxu0
        %v1650 = vadd.f32 0.0, %v1649
        %v1651 = vpop.f32.mrb[0].mxu0
        %1652 = vdwg.mxu0
        %v1653 = vadd.f32 %v1429, %v1650
        %1654 = vrot.lane.b32.xlu0 %v487, 48
        %v1655 = vpop.permute.xlu0 %1654
        %1656 = vrot.lane.b32.xlu0 %v489, 48
        %v1657 = vpop.permute.xlu0 %1656
        %v1658 = vsel %vm533, %v1655, 0
        %v1660 = vsel %vm533, %v1657, 0
        %1662 = vmatprep.subr.mxu0 0.0
        %1663 = vmatpush1.xpose.msra.mxu0 %v1660
        %1664 = vmatprep.subr.mxu0 0.0
        %1665 = vmatpush1.xpose.msra.mxu0 0.0
        %1666 = vmatprep.subr.mxu0 0.0
        %1667 = vmatpush1.xpose.msra.mxu0 0.0
        %1668 = vmatprep.subr.mxu0 0.0
        %1669 = vmatpush1.xpose.msra.mxu0 0.0
        %1670 = vmatprep.subr.mxu0 0.0
        %1671 = vmatpush1.xpose.msra.mxu0 0.0
        %1672 = vmatprep.subr.mxu0 0.0
        %1673 = vmatpush1.xpose.msra.mxu0 0.0
        %1674 = vmatprep.subr.mxu0 0.0
        %1675 = vmatpush1.xpose.msra.mxu0 0.0
        %1676 = vmatprep.subr.mxu0 0.0
        %1677 = vmatpush1.xpose.msra.mxu0 0.0
        %1678 = vmatprep.subr.mxu0 0.0
        %1679 = vmatpush1.xpose.msra.mxu0 0.0
        %1680 = vmatprep.subr.mxu0 0.0
        %1681 = vmatpush1.xpose.msra.mxu0 0.0
        %1682 = vmatprep.subr.mxu0 0.0
        %1683 = vmatpush1.xpose.msra.mxu0 0.0
        %1684 = vmatprep.subr.mxu0 0.0
        %1685 = vmatpush1.xpose.msra.mxu0 0.0
        %1686 = vmatprep.subr.mxu0 0.0
        %1687 = vmatpush1.xpose.msra.mxu0 0.0
        %1688 = vmatprep.subr.mxu0 0.0
        %1689 = vmatpush1.xpose.msra.mxu0 0.0
        %1690 = vmatprep.subr.mxu0 0.0
        %1691 = vmatpush1.xpose.msra.mxu0 0.0
        %1692 = vmatprep.subr.mxu0 0.0
        %1693 = vmatpush1.xpose.msra.mxu0 0.0
        %1694 = vmatprep.subr.mxu0 0.0
        %1695 = vmatpush1.xpose.msra.mxu0 0.0
        %1696 = vmatprep.subr.mxu0 0.0
        %1697 = vmatpush1.xpose.msra.mxu0 0.0
        %1698 = vmatprep.subr.mxu0 0.0
        %1699 = vmatpush1.xpose.msra.mxu0 0.0
        %1700 = vmatprep.subr.mxu0 0.0
        %1701 = vmatpush1.xpose.msra.mxu0 0.0
        %1702 = vmatprep.subr.mxu0 0.0
        %1703 = vmatpush1.xpose.msra.mxu0 0.0
        %1704 = vmatprep.subr.mxu0 0.0
        %1705 = vmatpush1.xpose.msra.mxu0 0.0
        %1706 = vmatprep.subr.mxu0 0.0
        %1707 = vmatpush1.xpose.msra.mxu0 0.0
        %1708 = vmatprep.subr.mxu0 0.0
        %1709 = vmatpush1.xpose.msra.mxu0 0.0
        %1710 = vmatprep.subr.mxu0 0.0
        %1711 = vmatpush1.xpose.msra.mxu0 0.0
        %1712 = vmatprep.subr.mxu0 0.0
        %1713 = vmatpush1.xpose.msra.mxu0 0.0
        %1714 = vmatprep.subr.mxu0 0.0
        %1715 = vmatpush1.xpose.msra.mxu0 0.0
        %1716 = vmatprep.subr.mxu0 0.0
        %1717 = vmatpush1.xpose.msra.mxu0 0.0
        %1718 = vmatprep.subr.mxu0 0.0
        %1719 = vmatpush1.xpose.msra.mxu0 0.0
        %1720 = vmatprep.subr.mxu0 0.0
        %1721 = vmatpush1.xpose.msra.mxu0 0.0
        %1722 = vmatprep.subr.mxu0 0.0
        %1723 = vmatpush1.xpose.msra.mxu0 0.0
        %1724 = vmatprep.subr.mxu0 0.0
        %1725 = vmatpush1.xpose.msra.mxu0 0.0
        %1726 = vmatprep.mubr.f32.mxu0 0.0
        %1727 = vmatmul.mubr.f32.gmra.mrb[0].mxu0 %v1658
        %v1728 = vpop.f32.mrb[0].mxu0
        %v1729 = vadd.f32 0.0, %v1728
        %v1730 = vpop.f32.mrb[0].mxu0
        %1731 = vdwg.mxu0
        %v1732 = vsel %vm610, %v1729, -inf
        %1733 = vmax.xlane.f32.xlu0 %v1732
        %v1734 = vpop.xlane.xlu0 %1733
        %v1735 = vsub.f32 %v1729, %v1734
        %v1736 = vmul.f32 %v1735, 1.442695
        %v1737 = vpow.pop %v1736
        %v1738 = vsel %vm610, %v1737, 0.0
        %1739 = vadd.xlane.f32.xlu0 %v1738
        %v1740 = vpop.xlane.xlu0 %1739
        %v1741 = vrcp.pop %v1740
        %v1742 = vmul.f32 %v1737, %v1741
        %1743 = vrot.lane.b32.xlu0 %v528, 48
        %v1744 = vpop.permute.xlu0 %1743
        %v1746 = vsel %vm622, %v1742, 0
        %v1748 = vsel %vm626, %v1744, 0
        %1750 = vmatprep.subr.mxu0 0.0
        %1751 = vmatpush1.msra.mxu0 %v1748
        %1752 = vmatprep.subr.mxu0 0.0
        %1753 = vmatpush1.msra.mxu0 0.0
        %1754 = vmatprep.subr.mxu0 0.0
        %1755 = vmatpush1.msra.mxu0 0.0
        %1756 = vmatprep.subr.mxu0 0.0
        %1757 = vmatpush1.msra.mxu0 0.0
        %1758 = vmatprep.subr.mxu0 0.0
        %1759 = vmatpush1.msra.mxu0 0.0
        %1760 = vmatprep.subr.mxu0 0.0
        %1761 = vmatpush1.msra.mxu0 0.0
        %1762 = vmatprep.subr.mxu0 0.0
        %1763 = vmatpush1.msra.mxu0 0.0
        %1764 = vmatprep.subr.mxu0 0.0
        %1765 = vmatpush1.msra.mxu0 0.0
        %1766 = vmatprep.subr.mxu0 0.0
        %1767 = vmatpush1.msra.mxu0 0.0
        %1768 = vmatprep.subr.mxu0 0.0
        %1769 = vmatpush1.msra.mxu0 0.0
        %1770 = vmatprep.subr.mxu0 0.0
        %1771 = vmatpush1.msra.mxu0 0.0
        %1772 = vmatprep.subr.mxu0 0.0
        %1773 = vmatpush1.msra.mxu0 0.0
        %1774 = vmatprep.subr.mxu0 0.0
        %1775 = vmatpush1.msra.mxu0 0.0
        %1776 = vmatprep.subr.mxu0 0.0
        %1777 = vmatpush1.msra.mxu0 0.0
        %1778 = vmatprep.subr.mxu0 0.0
        %1779 = vmatpush1.msra.mxu0 0.0
        %1780 = vmatprep.subr.mxu0 0.0
        %1781 = vmatpush1.msra.mxu0 0.0
        %1782 = vmatprep.subr.mxu0 0.0
        %1783 = vmatpush1.msra.mxu0 0.0
        %1784 = vmatprep.subr.mxu0 0.0
        %1785 = vmatpush1.msra.mxu0 0.0
        %1786 = vmatprep.subr.mxu0 0.0
        %1787 = vmatpush1.msra.mxu0 0.0
        %1788 = vmatprep.subr.mxu0 0.0
        %1789 = vmatpush1.msra.mxu0 0.0
        %1790 = vmatprep.subr.mxu0 0.0
        %1791 = vmatpush1.msra.mxu0 0.0
        %1792 = vmatprep.subr.mxu0 0.0
        %1793 = vmatpush1.msra.mxu0 0.0
        %1794 = vmatprep.subr.mxu0 0.0
        %1795 = vmatpush1.msra.mxu0 0.0
        %1796 = vmatprep.subr.mxu0 0.0
        %1797 = vmatpush1.msra.mxu0 0.0
        %1798 = vmatprep.subr.mxu0 0.0
        %1799 = vmatpush1.msra.mxu0 0.0
        %1800 = vmatprep.subr.mxu0 0.0
        %1801 = vmatpush1.msra.mxu0 0.0
        %1802 = vmatprep.subr.mxu0 0.0
        %1803 = vmatpush1.msra.mxu0 0.0
        %1804 = vmatprep.subr.mxu0 0.0
        %1805 = vmatpush1.msra.mxu0 0.0
        %1806 = vmatprep.subr.mxu0 0.0
        %1807 = vmatpush1.msra.mxu0 0.0
        %1808 = vmatprep.subr.mxu0 0.0
        %1809 = vmatpush1.msra.mxu0 0.0
        %1810 = vmatprep.subr.mxu0 0.0
        %1811 = vmatpush1.msra.mxu0 0.0
        %1812 = vmatprep.subr.mxu0 0.0
        %1813 = vmatpush1.msra.mxu0 0.0
        %1814 = vmatprep.mubr.f32.mxu0 0.0
        %1815 = vmatmul.mubr.f32.gmra.mrb[0].mxu0 %v1746
        %v1816 = vpop.f32.mrb[0].mxu0
        %v1817 = vadd.f32 0.0, %v1816
        %v1818 = vpop.f32.mrb[0].mxu0
        %1819 = vdwg.mxu0
        %v1820 = vsel %vm700, %v1817, 0.0
        %v1821 = vrot.slane %v1820, 4
        %v1822 = vadd.f32 %v1820, %v1821
        %v1823 = vrot.slane %v1822, 2
        %v1824 = vadd.f32 %v1822, %v1823
        %v1825 = vrot.slane %v1824, 1
        %v1826 = vadd.f32 %v1824, %v1825
        %v1827 = vmul.f32 %v1826, %v708
        %v1828 = vld [vmem:[%s3 + $0x28] sm:$0xf]
        %v1829 = vld [vmem:[%s3 + $0x2c] sm:$0xf]
        %v1832 = vunpack.c.l.b16 %v1828
        %v1833 = vunpack.c.l.b16 %v1829
        %v1834 = vpack.c.b16 %v1833, %v1832
        %v1837 = vsel %vm533, %v1827, 0
        %1839 = vmatprep.subr.bf16.mxu0 0
        %1840 = vmatpush1.bf16.msra.mxu0 %v1834
        %1841 = vmatprep.subr.bf16.mxu0 0
        %1842 = vmatpush1.bf16.msra.mxu0 0
        %1843 = vmatprep.subr.bf16.mxu0 0
        %1844 = vmatpush1.bf16.msra.mxu0 0
        %1845 = vmatprep.subr.bf16.mxu0 0
        %1846 = vmatpush1.bf16.msra.mxu0 0
        %1847 = vmatprep.subr.bf16.mxu0 0
        %1848 = vmatpush1.bf16.msra.mxu0 0
        %1849 = vmatprep.subr.bf16.mxu0 0
        %1850 = vmatpush1.bf16.msra.mxu0 0
        %1851 = vmatprep.subr.bf16.mxu0 0
        %1852 = vmatpush1.bf16.msra.mxu0 0
        %1853 = vmatprep.subr.bf16.mxu0 0
        %1854 = vmatpush1.bf16.msra.mxu0 0
        %1855 = vmatprep.subr.bf16.mxu0 0
        %1856 = vmatpush1.bf16.msra.mxu0 0
        %1857 = vmatprep.subr.bf16.mxu0 0
        %1858 = vmatpush1.bf16.msra.mxu0 0
        %1859 = vmatprep.subr.bf16.mxu0 0
        %1860 = vmatpush1.bf16.msra.mxu0 0
        %1861 = vmatprep.subr.bf16.mxu0 0
        %1862 = vmatpush1.bf16.msra.mxu0 0
        %1863 = vmatprep.subr.bf16.mxu0 0
        %1864 = vmatpush1.bf16.msra.mxu0 0
        %1865 = vmatprep.subr.bf16.mxu0 0
        %1866 = vmatpush1.bf16.msra.mxu0 0
        %1867 = vmatprep.subr.bf16.mxu0 0
        %1868 = vmatpush1.bf16.msra.mxu0 0
        %1869 = vmatprep.subr.bf16.mxu0 0
        %1870 = vmatpush1.bf16.msra.mxu0 0
        %1871 = vmatprep.mubr.f32.mxu0 0.0
        %1872 = vmatmul.mubr.f32.gmra.mrb[0].mxu0 %v1837
        %v1873 = vpop.f32.mrb[0].mxu0
        %v1874 = vadd.f32 0.0, %v1873
        %v1875 = vpop.f32.mrb[0].mxu0
        %1876 = vdwg.mxu0
        %v1877 = vadd.f32 %v1653, %v1874
        %1878 = vrot.lane.b32.xlu0 %v487, 32
        %v1879 = vpop.permute.xlu0 %1878
        %1880 = vrot.lane.b32.xlu0 %v489, 32
        %v1881 = vpop.permute.xlu0 %1880
        %v1882 = vsel %vm533, %v1879, 0
        %v1884 = vsel %vm533, %v1881, 0
        %1886 = vmatprep.subr.mxu0 0.0
        %1887 = vmatpush1.xpose.msra.mxu0 %v1884
        %1888 = vmatprep.subr.mxu0 0.0
        %1889 = vmatpush1.xpose.msra.mxu0 0.0
        %1890 = vmatprep.subr.mxu0 0.0
        %1891 = vmatpush1.xpose.msra.mxu0 0.0
        %1892 = vmatprep.subr.mxu0 0.0
        %1893 = vmatpush1.xpose.msra.mxu0 0.0
        %1894 = vmatprep.subr.mxu0 0.0
        %1895 = vmatpush1.xpose.msra.mxu0 0.0
        %1896 = vmatprep.subr.mxu0 0.0
        %1897 = vmatpush1.xpose.msra.mxu0 0.0
        %1898 = vmatprep.subr.mxu0 0.0
        %1899 = vmatpush1.xpose.msra.mxu0 0.0
        %1900 = vmatprep.subr.mxu0 0.0
        %1901 = vmatpush1.xpose.msra.mxu0 0.0
        %1902 = vmatprep.subr.mxu0 0.0
        %1903 = vmatpush1.xpose.msra.mxu0 0.0
        %1904 = vmatprep.subr.mxu0 0.0
        %1905 = vmatpush1.xpose.msra.mxu0 0.0
        %1906 = vmatprep.subr.mxu0 0.0
        %1907 = vmatpush1.xpose.msra.mxu0 0.0
        %1908 = vmatprep.subr.mxu0 0.0
        %1909 = vmatpush1.xpose.msra.mxu0 0.0
        %1910 = vmatprep.subr.mxu0 0.0
        %1911 = vmatpush1.xpose.msra.mxu0 0.0
        %1912 = vmatprep.subr.mxu0 0.0
        %1913 = vmatpush1.xpose.msra.mxu0 0.0
        %1914 = vmatprep.subr.mxu0 0.0
        %1915 = vmatpush1.xpose.msra.mxu0 0.0
        %1916 = vmatprep.subr.mxu0 0.0
        %1917 = vmatpush1.xpose.msra.mxu0 0.0
        %1918 = vmatprep.subr.mxu0 0.0
        %1919 = vmatpush1.xpose.msra.mxu0 0.0
        %1920 = vmatprep.subr.mxu0 0.0
        %1921 = vmatpush1.xpose.msra.mxu0 0.0
        %1922 = vmatprep.subr.mxu0 0.0
        %1923 = vmatpush1.xpose.msra.mxu0 0.0
        %1924 = vmatprep.subr.mxu0 0.0
        %1925 = vmatpush1.xpose.msra.mxu0 0.0
        %1926 = vmatprep.subr.mxu0 0.0
        %1927 = vmatpush1.xpose.msra.mxu0 0.0
        %1928 = vmatprep.subr.mxu0 0.0
        %1929 = vmatpush1.xpose.msra.mxu0 0.0
        %1930 = vmatprep.subr.mxu0 0.0
        %1931 = vmatpush1.xpose.msra.mxu0 0.0
        %1932 = vmatprep.subr.mxu0 0.0
        %1933 = vmatpush1.xpose.msra.mxu0 0.0
        %1934 = vmatprep.subr.mxu0 0.0
        %1935 = vmatpush1.xpose.msra.mxu0 0.0
        %1936 = vmatprep.subr.mxu0 0.0
        %1937 = vmatpush1.xpose.msra.mxu0 0.0
        %1938 = vmatprep.subr.mxu0 0.0
        %1939 = vmatpush1.xpose.msra.mxu0 0.0
        %1940 = vmatprep.subr.mxu0 0.0
        %1941 = vmatpush1.xpose.msra.mxu0 0.0
        %1942 = vmatprep.subr.mxu0 0.0
        %1943 = vmatpush1.xpose.msra.mxu0 0.0
        %1944 = vmatprep.subr.mxu0 0.0
        %1945 = vmatpush1.xpose.msra.mxu0 0.0
        %1946 = vmatprep.subr.mxu0 0.0
        %1947 = vmatpush1.xpose.msra.mxu0 0.0
        %1948 = vmatprep.subr.mxu0 0.0
        %1949 = vmatpush1.xpose.msra.mxu0 0.0
        %1950 = vmatprep.mubr.f32.mxu0 0.0
        %1951 = vmatmul.mubr.f32.gmra.mrb[0].mxu0 %v1882
        %v1952 = vpop.f32.mrb[0].mxu0
        %v1953 = vadd.f32 0.0, %v1952
        %v1954 = vpop.f32.mrb[0].mxu0
        %1955 = vdwg.mxu0
        %v1956 = vsel %vm610, %v1953, -inf
        %1957 = vmax.xlane.f32.xlu0 %v1956
        %v1958 = vpop.xlane.xlu0 %1957
        %v1959 = vsub.f32 %v1953, %v1958
        %v1960 = vmul.f32 %v1959, 1.442695
        %v1961 = vpow.pop %v1960
        %v1962 = vsel %vm610, %v1961, 0.0
        %1963 = vadd.xlane.f32.xlu0 %v1962
        %v1964 = vpop.xlane.xlu0 %1963
        %v1965 = vrcp.pop %v1964
        %v1966 = vmul.f32 %v1961, %v1965
        %1967 = vrot.lane.b32.xlu0 %v528, 32
        %v1968 = vpop.permute.xlu0 %1967
        %v1970 = vsel %vm622, %v1966, 0
        %v1972 = vsel %vm626, %v1968, 0
        %1974 = vmatprep.subr.mxu0 0.0
        %1975 = vmatpush1.msra.mxu0 %v1972
        %1976 = vmatprep.subr.mxu0 0.0
        %1977 = vmatpush1.msra.mxu0 0.0
        %1978 = vmatprep.subr.mxu0 0.0
        %1979 = vmatpush1.msra.mxu0 0.0
        %1980 = vmatprep.subr.mxu0 0.0
        %1981 = vmatpush1.msra.mxu0 0.0
        %1982 = vmatprep.subr.mxu0 0.0
        %1983 = vmatpush1.msra.mxu0 0.0
        %1984 = vmatprep.subr.mxu0 0.0
        %1985 = vmatpush1.msra.mxu0 0.0
        %1986 = vmatprep.subr.mxu0 0.0
        %1987 = vmatpush1.msra.mxu0 0.0
        %1988 = vmatprep.subr.mxu0 0.0
        %1989 = vmatpush1.msra.mxu0 0.0
        %1990 = vmatprep.subr.mxu0 0.0
        %1991 = vmatpush1.msra.mxu0 0.0
        %1992 = vmatprep.subr.mxu0 0.0
        %1993 = vmatpush1.msra.mxu0 0.0
        %1994 = vmatprep.subr.mxu0 0.0
        %1995 = vmatpush1.msra.mxu0 0.0
        %1996 = vmatprep.subr.mxu0 0.0
        %1997 = vmatpush1.msra.mxu0 0.0
        %1998 = vmatprep.subr.mxu0 0.0
        %1999 = vmatpush1.msra.mxu0 0.0
        %2000 = vmatprep.subr.mxu0 0.0
        %2001 = vmatpush1.msra.mxu0 0.0
        %2002 = vmatprep.subr.mxu0 0.0
        %2003 = vmatpush1.msra.mxu0 0.0
        %2004 = vmatprep.subr.mxu0 0.0
        %2005 = vmatpush1.msra.mxu0 0.0
        %2006 = vmatprep.subr.mxu0 0.0
        %2007 = vmatpush1.msra.mxu0 0.0
        %2008 = vmatprep.subr.mxu0 0.0
        %2009 = vmatpush1.msra.mxu0 0.0
        %2010 = vmatprep.subr.mxu0 0.0
        %2011 = vmatpush1.msra.mxu0 0.0
        %2012 = vmatprep.subr.mxu0 0.0
        %2013 = vmatpush1.msra.mxu0 0.0
        %2014 = vmatprep.subr.mxu0 0.0
        %2015 = vmatpush1.msra.mxu0 0.0
        %2016 = vmatprep.subr.mxu0 0.0
        %2017 = vmatpush1.msra.mxu0 0.0
        %2018 = vmatprep.subr.mxu0 0.0
        %2019 = vmatpush1.msra.mxu0 0.0
        %2020 = vmatprep.subr.mxu0 0.0
        %2021 = vmatpush1.msra.mxu0 0.0
        %2022 = vmatprep.subr.mxu0 0.0
        %2023 = vmatpush1.msra.mxu0 0.0
        %2024 = vmatprep.subr.mxu0 0.0
        %2025 = vmatpush1.msra.mxu0 0.0
        %2026 = vmatprep.subr.mxu0 0.0
        %2027 = vmatpush1.msra.mxu0 0.0
        %2028 = vmatprep.subr.mxu0 0.0
        %2029 = vmatpush1.msra.mxu0 0.0
        %2030 = vmatprep.subr.mxu0 0.0
        %2031 = vmatpush1.msra.mxu0 0.0
        %2032 = vmatprep.subr.mxu0 0.0
        %2033 = vmatpush1.msra.mxu0 0.0
        %2034 = vmatprep.subr.mxu0 0.0
        %2035 = vmatpush1.msra.mxu0 0.0
        %2036 = vmatprep.subr.mxu0 0.0
        %2037 = vmatpush1.msra.mxu0 0.0
        %2038 = vmatprep.mubr.f32.mxu0 0.0
        %2039 = vmatmul.mubr.f32.gmra.mrb[0].mxu0 %v1970
        %v2040 = vpop.f32.mrb[0].mxu0
        %v2041 = vadd.f32 0.0, %v2040
        %v2042 = vpop.f32.mrb[0].mxu0
        %2043 = vdwg.mxu0
        %v2044 = vsel %vm700, %v2041, 0.0
        %v2045 = vrot.slane %v2044, 4
        %v2046 = vadd.f32 %v2044, %v2045
        %v2047 = vrot.slane %v2046, 2
        %v2048 = vadd.f32 %v2046, %v2047
        %v2049 = vrot.slane %v2048, 1
        %v2050 = vadd.f32 %v2048, %v2049
        %v2051 = vmul.f32 %v2050, %v708
        %v2052 = vld [vmem:[%s3 + $0x30] sm:$0xf]
        %v2053 = vld [vmem:[%s3 + $0x34] sm:$0xf]
        %v2056 = vunpack.c.l.b16 %v2052
        %v2057 = vunpack.c.l.b16 %v2053
        %v2058 = vpack.c.b16 %v2057, %v2056
        %v2061 = vsel %vm533, %v2051, 0
        %2063 = vmatprep.subr.bf16.mxu0 0
        %2064 = vmatpush1.bf16.msra.mxu0 %v2058
        %2065 = vmatprep.subr.bf16.mxu0 0
        %2066 = vmatpush1.bf16.msra.mxu0 0
        %2067 = vmatprep.subr.bf16.mxu0 0
        %2068 = vmatpush1.bf16.msra.mxu0 0
        %2069 = vmatprep.subr.bf16.mxu0 0
        %2070 = vmatpush1.bf16.msra.mxu0 0
        %2071 = vmatprep.subr.bf16.mxu0 0
        %2072 = vmatpush1.bf16.msra.mxu0 0
        %2073 = vmatprep.subr.bf16.mxu0 0
        %2074 = vmatpush1.bf16.msra.mxu0 0
        %2075 = vmatprep.subr.bf16.mxu0 0
        %2076 = vmatpush1.bf16.msra.mxu0 0
        %2077 = vmatprep.subr.bf16.mxu0 0
        %2078 = vmatpush1.bf16.msra.mxu0 0
        %2079 = vmatprep.subr.bf16.mxu0 0
        %2080 = vmatpush1.bf16.msra.mxu0 0
        %2081 = vmatprep.subr.bf16.mxu0 0
        %2082 = vmatpush1.bf16.msra.mxu0 0
        %2083 = vmatprep.subr.bf16.mxu0 0
        %2084 = vmatpush1.bf16.msra.mxu0 0
        %2085 = vmatprep.subr.bf16.mxu0 0
        %2086 = vmatpush1.bf16.msra.mxu0 0
        %2087 = vmatprep.subr.bf16.mxu0 0
        %2088 = vmatpush1.bf16.msra.mxu0 0
        %2089 = vmatprep.subr.bf16.mxu0 0
        %2090 = vmatpush1.bf16.msra.mxu0 0
        %2091 = vmatprep.subr.bf16.mxu0 0
        %2092 = vmatpush1.bf16.msra.mxu0 0
        %2093 = vmatprep.subr.bf16.mxu0 0
        %2094 = vmatpush1.bf16.msra.mxu0 0
        %2095 = vmatprep.mubr.f32.mxu0 0.0
        %2096 = vmatmul.mubr.f32.gmra.mrb[0].mxu0 %v2061
        %v2097 = vpop.f32.mrb[0].mxu0
        %v2098 = vadd.f32 0.0, %v2097
        %v2099 = vpop.f32.mrb[0].mxu0
        %2100 = vdwg.mxu0
        %v2101 = vadd.f32 %v1877, %v2098
        %2102 = vrot.lane.b32.xlu0 %v487, 16
        %v2103 = vpop.permute.xlu0 %2102
        %2104 = vrot.lane.b32.xlu0 %v489, 16
        %v2105 = vpop.permute.xlu0 %2104
        %v2106 = vsel %vm533, %v2103, 0
        %v2108 = vsel %vm533, %v2105, 0
        %2110 = vmatprep.subr.mxu0 0.0
        %2111 = vmatpush1.xpose.msra.mxu0 %v2108
        %2112 = vmatprep.subr.mxu0 0.0
        %2113 = vmatpush1.xpose.msra.mxu0 0.0
        %2114 = vmatprep.subr.mxu0 0.0
        %2115 = vmatpush1.xpose.msra.mxu0 0.0
        %2116 = vmatprep.subr.mxu0 0.0
        %2117 = vmatpush1.xpose.msra.mxu0 0.0
        %2118 = vmatprep.subr.mxu0 0.0
        %2119 = vmatpush1.xpose.msra.mxu0 0.0
        %2120 = vmatprep.subr.mxu0 0.0
        %2121 = vmatpush1.xpose.msra.mxu0 0.0
        %2122 = vmatprep.subr.mxu0 0.0
        %2123 = vmatpush1.xpose.msra.mxu0 0.0
        %2124 = vmatprep.subr.mxu0 0.0
        %2125 = vmatpush1.xpose.msra.mxu0 0.0
        %2126 = vmatprep.subr.mxu0 0.0
        %2127 = vmatpush1.xpose.msra.mxu0 0.0
        %2128 = vmatprep.subr.mxu0 0.0
        %2129 = vmatpush1.xpose.msra.mxu0 0.0
        %2130 = vmatprep.subr.mxu0 0.0
        %2131 = vmatpush1.xpose.msra.mxu0 0.0
        %2132 = vmatprep.subr.mxu0 0.0
        %2133 = vmatpush1.xpose.msra.mxu0 0.0
        %2134 = vmatprep.subr.mxu0 0.0
        %2135 = vmatpush1.xpose.msra.mxu0 0.0
        %2136 = vmatprep.subr.mxu0 0.0
        %2137 = vmatpush1.xpose.msra.mxu0 0.0
        %2138 = vmatprep.subr.mxu0 0.0
        %2139 = vmatpush1.xpose.msra.mxu0 0.0
        %2140 = vmatprep.subr.mxu0 0.0
        %2141 = vmatpush1.xpose.msra.mxu0 0.0
        %2142 = vmatprep.subr.mxu0 0.0
        %2143 = vmatpush1.xpose.msra.mxu0 0.0
        %2144 = vmatprep.subr.mxu0 0.0
        %2145 = vmatpush1.xpose.msra.mxu0 0.0
        %2146 = vmatprep.subr.mxu0 0.0
        %2147 = vmatpush1.xpose.msra.mxu0 0.0
        %2148 = vmatprep.subr.mxu0 0.0
        %2149 = vmatpush1.xpose.msra.mxu0 0.0
        %2150 = vmatprep.subr.mxu0 0.0
        %2151 = vmatpush1.xpose.msra.mxu0 0.0
        %2152 = vmatprep.subr.mxu0 0.0
        %2153 = vmatpush1.xpose.msra.mxu0 0.0
        %2154 = vmatprep.subr.mxu0 0.0
        %2155 = vmatpush1.xpose.msra.mxu0 0.0
        %2156 = vmatprep.subr.mxu0 0.0
        %2157 = vmatpush1.xpose.msra.mxu0 0.0
        %2158 = vmatprep.subr.mxu0 0.0
        %2159 = vmatpush1.xpose.msra.mxu0 0.0
        %2160 = vmatprep.subr.mxu0 0.0
        %2161 = vmatpush1.xpose.msra.mxu0 0.0
        %2162 = vmatprep.subr.mxu0 0.0
        %2163 = vmatpush1.xpose.msra.mxu0 0.0
        %2164 = vmatprep.subr.mxu0 0.0
        %2165 = vmatpush1.xpose.msra.mxu0 0.0
        %2166 = vmatprep.subr.mxu0 0.0
        %2167 = vmatpush1.xpose.msra.mxu0 0.0
        %2168 = vmatprep.subr.mxu0 0.0
        %2169 = vmatpush1.xpose.msra.mxu0 0.0
        %2170 = vmatprep.subr.mxu0 0.0
        %2171 = vmatpush1.xpose.msra.mxu0 0.0
        %2172 = vmatprep.subr.mxu0 0.0
        %2173 = vmatpush1.xpose.msra.mxu0 0.0
        %2174 = vmatprep.mubr.f32.mxu0 0.0
        %2175 = vmatmul.mubr.f32.gmra.mrb[0].mxu0 %v2106
        %v2176 = vpop.f32.mrb[0].mxu0
        %v2177 = vadd.f32 0.0, %v2176
        %v2178 = vpop.f32.mrb[0].mxu0
        %2179 = vdwg.mxu0
        %v2180 = vsel %vm610, %v2177, -inf
        %2181 = vmax.xlane.f32.xlu0 %v2180
        %v2182 = vpop.xlane.xlu0 %2181
        %v2183 = vsub.f32 %v2177, %v2182
        %v2184 = vmul.f32 %v2183, 1.442695
        %v2185 = vpow.pop %v2184
        %v2186 = vsel %vm610, %v2185, 0.0
        %2187 = vadd.xlane.f32.xlu0 %v2186
        %v2188 = vpop.xlane.xlu0 %2187
        %v2189 = vrcp.pop %v2188
        %v2190 = vmul.f32 %v2185, %v2189
        %2191 = vrot.lane.b32.xlu0 %v528, 16
        %v2192 = vpop.permute.xlu0 %2191
        %v2194 = vsel %vm622, %v2190, 0
        %v2196 = vsel %vm626, %v2192, 0
        %2198 = vmatprep.subr.mxu0 0.0
        %2199 = vmatpush1.msra.mxu0 %v2196
        %2200 = vmatprep.subr.mxu0 0.0
        %2201 = vmatpush1.msra.mxu0 0.0
        %2202 = vmatprep.subr.mxu0 0.0
        %2203 = vmatpush1.msra.mxu0 0.0
        %2204 = vmatprep.subr.mxu0 0.0
        %2205 = vmatpush1.msra.mxu0 0.0
        %2206 = vmatprep.subr.mxu0 0.0
        %2207 = vmatpush1.msra.mxu0 0.0
        %2208 = vmatprep.subr.mxu0 0.0
        %2209 = vmatpush1.msra.mxu0 0.0
        %2210 = vmatprep.subr.mxu0 0.0
        %2211 = vmatpush1.msra.mxu0 0.0
        %2212 = vmatprep.subr.mxu0 0.0
        %2213 = vmatpush1.msra.mxu0 0.0
        %2214 = vmatprep.subr.mxu0 0.0
        %2215 = vmatpush1.msra.mxu0 0.0
        %2216 = vmatprep.subr.mxu0 0.0
        %2217 = vmatpush1.msra.mxu0 0.0
        %2218 = vmatprep.subr.mxu0 0.0
        %2219 = vmatpush1.msra.mxu0 0.0
        %2220 = vmatprep.subr.mxu0 0.0
        %2221 = vmatpush1.msra.mxu0 0.0
        %2222 = vmatprep.subr.mxu0 0.0
        %2223 = vmatpush1.msra.mxu0 0.0
        %2224 = vmatprep.subr.mxu0 0.0
        %2225 = vmatpush1.msra.mxu0 0.0
        %2226 = vmatprep.subr.mxu0 0.0
        %2227 = vmatpush1.msra.mxu0 0.0
        %2228 = vmatprep.subr.mxu0 0.0
        %2229 = vmatpush1.msra.mxu0 0.0
        %2230 = vmatprep.subr.mxu0 0.0
        %2231 = vmatpush1.msra.mxu0 0.0
        %2232 = vmatprep.subr.mxu0 0.0
        %2233 = vmatpush1.msra.mxu0 0.0
        %2234 = vmatprep.subr.mxu0 0.0
        %2235 = vmatpush1.msra.mxu0 0.0
        %2236 = vmatprep.subr.mxu0 0.0
        %2237 = vmatpush1.msra.mxu0 0.0
        %2238 = vmatprep.subr.mxu0 0.0
        %2239 = vmatpush1.msra.mxu0 0.0
        %2240 = vmatprep.subr.mxu0 0.0
        %2241 = vmatpush1.msra.mxu0 0.0
        %2242 = vmatprep.subr.mxu0 0.0
        %2243 = vmatpush1.msra.mxu0 0.0
        %2244 = vmatprep.subr.mxu0 0.0
        %2245 = vmatpush1.msra.mxu0 0.0
        %2246 = vmatprep.subr.mxu0 0.0
        %2247 = vmatpush1.msra.mxu0 0.0
        %2248 = vmatprep.subr.mxu0 0.0
        %2249 = vmatpush1.msra.mxu0 0.0
        %2250 = vmatprep.subr.mxu0 0.0
        %2251 = vmatpush1.msra.mxu0 0.0
        %2252 = vmatprep.subr.mxu0 0.0
        %2253 = vmatpush1.msra.mxu0 0.0
        %2254 = vmatprep.subr.mxu0 0.0
        %2255 = vmatpush1.msra.mxu0 0.0
        %2256 = vmatprep.subr.mxu0 0.0
        %2257 = vmatpush1.msra.mxu0 0.0
        %2258 = vmatprep.subr.mxu0 0.0
        %2259 = vmatpush1.msra.mxu0 0.0
        %2260 = vmatprep.subr.mxu0 0.0
        %2261 = vmatpush1.msra.mxu0 0.0
        %2262 = vmatprep.mubr.f32.mxu0 0.0
        %2263 = vmatmul.mubr.f32.gmra.mrb[0].mxu0 %v2194
        %v2264 = vpop.f32.mrb[0].mxu0
        %v2265 = vadd.f32 0.0, %v2264
        %v2266 = vpop.f32.mrb[0].mxu0
        %2267 = vdwg.mxu0
        %v2268 = vsel %vm700, %v2265, 0.0
        %v2269 = vrot.slane %v2268, 4
        %v2270 = vadd.f32 %v2268, %v2269
        %v2271 = vrot.slane %v2270, 2
        %v2272 = vadd.f32 %v2270, %v2271
        %v2273 = vrot.slane %v2272, 1
        %v2274 = vadd.f32 %v2272, %v2273
        %v2275 = vmul.f32 %v2274, %v708
        %v2276 = vld [vmem:[%s3 + $0x38] sm:$0xf]
        %v2277 = vld [vmem:[%s3 + $0x3c] sm:$0xf]
        %v2280 = vunpack.c.l.b16 %v2276
        %v2281 = vunpack.c.l.b16 %v2277
        %v2282 = vpack.c.b16 %v2281, %v2280
        %v2285 = vsel %vm533, %v2275, 0
        %2287 = vmatprep.subr.bf16.mxu0 0
        %2288 = vmatpush1.bf16.msra.mxu0 %v2282
        %2289 = vmatprep.subr.bf16.mxu0 0
        %2290 = vmatpush1.bf16.msra.mxu0 0
        %2291 = vmatprep.subr.bf16.mxu0 0
        %2292 = vmatpush1.bf16.msra.mxu0 0
        %2293 = vmatprep.subr.bf16.mxu0 0
        %2294 = vmatpush1.bf16.msra.mxu0 0
        %2295 = vmatprep.subr.bf16.mxu0 0
        %2296 = vmatpush1.bf16.msra.mxu0 0
        %2297 = vmatprep.subr.bf16.mxu0 0
        %2298 = vmatpush1.bf16.msra.mxu0 0
        %2299 = vmatprep.subr.bf16.mxu0 0
        %2300 = vmatpush1.bf16.msra.mxu0 0
        %2301 = vmatprep.subr.bf16.mxu0 0
        %2302 = vmatpush1.bf16.msra.mxu0 0
        %2303 = vmatprep.subr.bf16.mxu0 0
        %2304 = vmatpush1.bf16.msra.mxu0 0
        %2305 = vmatprep.subr.bf16.mxu0 0
        %2306 = vmatpush1.bf16.msra.mxu0 0
        %2307 = vmatprep.subr.bf16.mxu0 0
        %2308 = vmatpush1.bf16.msra.mxu0 0
        %2309 = vmatprep.subr.bf16.mxu0 0
        %2310 = vmatpush1.bf16.msra.mxu0 0
        %2311 = vmatprep.subr.bf16.mxu0 0
        %2312 = vmatpush1.bf16.msra.mxu0 0
        %2313 = vmatprep.subr.bf16.mxu0 0
        %2314 = vmatpush1.bf16.msra.mxu0 0
        %2315 = vmatprep.subr.bf16.mxu0 0
        %2316 = vmatpush1.bf16.msra.mxu0 0
        %2317 = vmatprep.subr.bf16.mxu0 0
        %2318 = vmatpush1.bf16.msra.mxu0 0
        %2319 = vmatprep.mubr.f32.mxu0 0.0
        %2320 = vmatmul.mubr.f32.gmra.mrb[0].mxu0 %v2285
        %v2321 = vpop.f32.mrb[0].mxu0
        %v2322 = vadd.f32 0.0, %v2321
        %v2323 = vpop.f32.mrb[0].mxu0
        %2324 = vdwg.mxu0
        %v2325 = vadd.f32 %v2101, %v2322
        %v2326 = vld [vmem:[%s4] sm:$0x1]
        %v2327 = vadd.f32 %v2325, %v2326
        %v2328 = vld [vmem:[%s5] sm:$0xf]
        %v2329 = vld [vmem:[%s5 + $0x4] sm:$0xf]
        %v2330 = vld [vmem:[%s5 + $0x8] sm:$0xf]
        %v2331 = vld [vmem:[%s5 + $0xc] sm:$0xf]
        %v2332 = vld [vmem:[%s5 + $0x10] sm:$0xf]
        %v2333 = vld [vmem:[%s5 + $0x14] sm:$0xf]
        %v2334 = vld [vmem:[%s5 + $0x18] sm:$0xf]
        %v2335 = vld [vmem:[%s5 + $0x1c] sm:$0xf]
        %v2336 = vld [vmem:[%s5 + $0x20] sm:$0xf]
        %v2337 = vld [vmem:[%s5 + $0x24] sm:$0xf]
        %v2338 = vld [vmem:[%s5 + $0x28] sm:$0xf]
        %v2339 = vld [vmem:[%s5 + $0x2c] sm:$0xf]
        %v2340 = vld [vmem:[%s5 + $0x30] sm:$0xf]
        %v2341 = vld [vmem:[%s5 + $0x34] sm:$0xf]
        %v2342 = vld [vmem:[%s5 + $0x38] sm:$0xf]
        %v2343 = vld [vmem:[%s5 + $0x3c] sm:$0xf]
        %v2344 = vld [vmem:[%s6] sm:$0x1]
        %v2361 = vunpack.c.l.b16 %v2328
        %v2362 = vunpack.c.l.b16 %v2329
        %v2363 = vunpack.c.l.b16 %v2330
        %v2364 = vunpack.c.l.b16 %v2331
        %v2365 = vunpack.c.l.b16 %v2332
        %v2366 = vunpack.c.l.b16 %v2333
        %v2367 = vunpack.c.l.b16 %v2334
        %v2368 = vunpack.c.l.b16 %v2335
        %v2369 = vunpack.c.l.b16 %v2336
        %v2370 = vunpack.c.l.b16 %v2337
        %v2371 = vunpack.c.l.b16 %v2338
        %v2372 = vunpack.c.l.b16 %v2339
        %v2373 = vunpack.c.l.b16 %v2340
        %v2374 = vunpack.c.l.b16 %v2341
        %v2375 = vunpack.c.l.b16 %v2342
        %v2376 = vunpack.c.l.b16 %v2343
        %v2377 = vpack.c.b16 %v2362, %v2361
        %v2378 = vpack.c.b16 %v2364, %v2363
        %v2379 = vpack.c.b16 %v2366, %v2365
        %v2380 = vpack.c.b16 %v2368, %v2367
        %v2381 = vpack.c.b16 %v2370, %v2369
        %v2382 = vpack.c.b16 %v2372, %v2371
        %v2383 = vpack.c.b16 %v2374, %v2373
        %v2384 = vpack.c.b16 %v2376, %v2375
        %2393 = vmatprep.subr.bf16.mxu0 0
        %2394 = vmatpush1.bf16.msra.mxu0 %v2377
        %2395 = vmatprep.subr.bf16.mxu0 0
        %2396 = vmatpush1.bf16.msra.mxu0 %v2378
        %2397 = vmatprep.subr.bf16.mxu0 0
        %2398 = vmatpush1.bf16.msra.mxu0 %v2379
        %2399 = vmatprep.subr.bf16.mxu0 0
        %2400 = vmatpush1.bf16.msra.mxu0 %v2380
        %2401 = vmatprep.subr.bf16.mxu0 0
        %2402 = vmatpush1.bf16.msra.mxu0 %v2381
        %2403 = vmatprep.subr.bf16.mxu0 0
        %2404 = vmatpush1.bf16.msra.mxu0 %v2382
        %2405 = vmatprep.subr.bf16.mxu0 0
        %2406 = vmatpush1.bf16.msra.mxu0 %v2383
        %2407 = vmatprep.subr.bf16.mxu0 0
        %2408 = vmatpush1.bf16.msra.mxu0 %v2384
        %2409 = vmatprep.subr.bf16.mxu0 0
        %2410 = vmatpush1.bf16.msra.mxu0 0
        %2411 = vmatprep.subr.bf16.mxu0 0
        %2412 = vmatpush1.bf16.msra.mxu0 0
        %2413 = vmatprep.subr.bf16.mxu0 0
        %2414 = vmatpush1.bf16.msra.mxu0 0
        %2415 = vmatprep.subr.bf16.mxu0 0
        %2416 = vmatpush1.bf16.msra.mxu0 0
        %2417 = vmatprep.subr.bf16.mxu0 0
        %2418 = vmatpush1.bf16.msra.mxu0 0
        %2419 = vmatprep.subr.bf16.mxu0 0
        %2420 = vmatpush1.bf16.msra.mxu0 0
        %2421 = vmatprep.subr.bf16.mxu0 0
        %2422 = vmatpush1.bf16.msra.mxu0 0
        %2423 = vmatprep.subr.bf16.mxu0 0
        %2424 = vmatpush1.bf16.msra.mxu0 0
        %2425 = vmatprep.mubr.f32.mxu0 0.0
        %2426 = vmatmul.mubr.f32.gmra.mrb[0].mxu0 %v2327
        %v2427 = vpop.f32.mrb[0].mxu0
        %v2428 = vadd.f32 %v2344, %v2427
        %v2429 = vpop.f32.mrb[0].mxu0
        %2430 = vdwg.mxu0
        %2431 = vst [vmem:[%s268] sm:$0x1] %v2428
        %s2432 = sand.u32 %s181, 1
        %s2433 = scalar_lea.sflag [#allocation3], %s2432
        %s2434 = sand.u32 %s181, 1
        %s2435 = scalar_lea.vmem [#allocation2], %s2434
        // Predicated region
        $region49: #{handwriting_feature_extractor.7} parent=47 // pred_check
          %p2436 = pneg %p191
        $region50: #{handwriting_feature_extractor.7} parent=47 // pred_check_branch
          %2438 = sbr.rel (%p2436) target = $region52
        $region51: #{handwriting_feature_extractor.7} parent=47 // pred_region
          %s2440 = ssub.s32 16, 16
          %2441 = vsyncadd %s2433, %s2440
          %s2442 = smul.addr %s21, 16
          %s2443 = scalar_lea.hbm %s7, %s2442
          %s2445 = sshll.u32 %s2435, 4
          %s2446 = int_to_ptr.vmem [resolvable:$true] %s2445
          %2448 = dma.vmem_to_hbm [thread:$0]  %s2446, 16, %s2443, %s2433
        $region52: #{handwriting_feature_extractor.7} parent=47 // pred_fallthru
          _
      $region48: #{handwriting_feature_extractor.7} parent=5 // pred_fallthru
        _
      %p2449 = scmp.le.s32.totalorder 2, %s16
      // Predicated region
      $region53: #{handwriting_feature_extractor.7} parent=5 // pred_check
        %p2450 = pneg %p2449
      $region54: #{handwriting_feature_extractor.7} parent=5 // pred_check_branch
        %2452 = sbr.rel (%p2450) target = $region56
      $region55: #{handwriting_feature_extractor.7} parent=5 // pred_region
        %s2453 = ssub.s32 %s16, 2
        // Predicated region
        $region57: #{handwriting_feature_extractor.7} parent=55 // pred_check
          %p2454 = pneg %p197
        $region58: #{handwriting_feature_extractor.7} parent=55 // pred_check_branch
          %2456 = sbr.rel (%p2454) target = $region60
        $region59: #{handwriting_feature_extractor.7} parent=55 // pred_region
          %s2457 = sand.u32 %s182, 1
          %s2458 = scalar_lea.sflag [#allocation3], %s2457
          %s2459 = sand.u32 %s182, 1
          %s2460 = scalar_lea.vmem [#allocation2], %s2459
          %2461 = dma.done %s2458, 16
        $region60: #{handwriting_feature_extractor.7} parent=55 // pred_fallthru
          _
      $region56: #{handwriting_feature_extractor.7} parent=5 // pred_fallthru
        _
    $region6: #{handwriting_feature_extractor.7} parent=1 // loop_footer
      %s20 = sadd.s32 1, %s16
    $region7: #{handwriting_feature_extractor.7} parent=1 // loop_footer_branch
      %15 = sbr.rel target = $region3
    $region8: #{handwriting_feature_extractor.7} parent=1 // loop_exit
      _
    %2462 = vsyncpa [#allocation3], 1
    %s2463 = scalar_lea.sflag [#allocation3], 1
    %2464 = vsyncpa %s2463, 1

</llo_original>
